<compile_context>
chip_gen: v7x
topology: tpu7x:2x2x1
jax: 0.10.0
libtpu: 0.0.40
codegen_flags: <defaults>
</compile_context>

<pallas_src>
import functools

import jax
import jax.numpy as jnp
import numpy as np
from jax.experimental import pallas as pl
from jax.experimental.pallas import tpu as pltpu


# ----------------------------------------------------------------- activation
def _mish(x):
    """Mish = x*tanh(softplus(x)) with a single exp and no cancellation.

    tanh(log1p(e^x)) == (e^2 + 2e) / (e^2 + 2e + 2), e = exp(x)   (exact).
    Preserves torch's softplus overflow threshold (20): mish(x) == x there.
    Shared by the Pallas kernel and the pure-JAX reference.
    """
    e = jnp.exp(jnp.minimum(x, 20.0))
    num = e * (e + 2.0)
    return jnp.where(x > 20.0, x, x * num / (num + 2.0))


# ------------------------------------------------------------- parameter prep
def _wmat(w_oihw):
    """torch conv weight (Cout, Cin, 3, 3) -> (9*Cin, Cout) for one im2col matmul.

    Row ordering is tap-major / cin-minor, matching the im2col column layout
    built inside the kernel.
    """
    cout, cin = w_oihw.shape[0], w_oihw.shape[1]
    return jnp.transpose(w_oihw, (2, 3, 1, 0)).reshape(9 * cin, cout)


def prepare_params(params, compute_dtype=jnp.bfloat16):
    """One-time layout + dtype conversion, hoisted out of the per-call forward."""
    prep = {
        "time_w": jnp.asarray(params["time_w"], jnp.float32).T,            # (T, C)
        "time_b": jnp.asarray(params["time_b"], jnp.float32).reshape(1, -1),
    }
    for i in range(1, 5):
        prep[f"w{i}"] = _wmat(jnp.asarray(params[f"conv{i}_w"],
                                          jnp.float32)).astype(compute_dtype)
        prep[f"b{i}"] = jnp.asarray(params[f"conv{i}_b"],
                                    jnp.float32).reshape(1, -1)            # f32 bias
    return prep


# --------------------------------------------------------------- VMEM sizing
@functools.lru_cache(maxsize=1)
def _physical_vmem_bytes():
    try:
        return int(pltpu.get_tpu_info().vmem_capacity_bytes)
    except Exception:
        return 64 * 1024 * 1024  # conservative fallback (v7x per-core VMEM)


# -------------------------------------------------------------- Pallas kernel
def _make_midblock_kernel(H, W, C):
    HW = H * W

    def kernel(x_ref, ot_ref,
               w1_ref, b1_ref, w2_ref, b2_ref,
               w3_ref, b3_ref, w4_ref, b4_ref,
               o_ref, pad_ref, col_ref):
        cdt = pad_ref.dtype  # compute dtype (bf16 in production, f32 for parity)

        def fill_pad(v_hwc):
            # 1-pixel replicate (edge) padding into the (H+2, W+2, C) scratch.
            pad_ref[1:H + 1, 1:W + 1, :] = v_hwc
            pad_ref[0:1, 1:W + 1, :] = v_hwc[0:1]
            pad_ref[H + 1:H + 2, 1:W + 1, :] = v_hwc[H - 1:H]
            pad_ref[:, 0:1, :] = pad_ref[:, 1:2, :]
            pad_ref[:, W + 1:W + 2, :] = pad_ref[:, W:W + 1, :]

        def fill_col():
            # im2col: (HW, 9C), tap-major / cin-minor columns (matches _wmat).
            for kh in range(3):
                for kw in range(3):
                    k = kh * 3 + kw
                    col_ref[:, k * C:(k + 1) * C] = (
                        pad_ref[kh:kh + H, kw:kw + W, :].reshape(HW, C))

        def conv(w_ref, b_ref):
            # Single K=9C MXU matmul per conv; f32 accumulation; f32 bias.
            return jnp.dot(col_ref[...], w_ref[...],
                           preferred_element_type=jnp.float32) + b_ref[...]

        x = x_ref[...]                                  # (H, W, C), compute dtype
        x_res = x.reshape(HW, C).astype(jnp.float32)    # residual term
        ot = ot_ref[...]                                # (1, C) f32 time embedding

        # conv1 and conv3 both read x: build its im2col once and reuse it.
        fill_pad(x)
        fill_col()
        a1 = _mish(conv(w1_ref, b1_ref)) + ot           # o = mish(conv1(x)) + ot
        a3 = _mish(conv(w3_ref, b3_ref)) + ot           # o = mish(conv3(x)) + ot

        fill_pad(a1.astype(cdt).reshape(H, W, C))
        fill_col()
        x0 = _mish(conv(w2_ref, b2_ref)) + x_res        # o = mish(conv2(o)) + x

        fill_pad(a3.astype(cdt).reshape(H, W, C))
        fill_col()
        out = _mish(conv(w4_ref, b4_ref)) + x0          # o = mish(conv4(o)) + x0

        o_ref[...] = out.astype(o_ref.dtype)

    return kernel


# --------------------------------------------------------------- MidBlock fwd
def midblock_forward(prep, x_nchw, t, nhwc_out=False):
    B, C, H, W = x_nchw.shape
    HW = H * W
    cdt = prep["w1"].dtype                      # compute dtype from prepped weights
    cbytes = jnp.dtype(cdt).itemsize

    x_nhwc = jnp.transpose(x_nchw, (0, 2, 3, 1)).astype(cdt)      # NCHW -> NHWC

    # time_mlp = Sequential(Mish(), Linear(T, C)) folded into the wrapper (XLA):
    # a (B,T)x(T,C) matmul is lane/sublane sparse; a dedicated pallas_call was
    # pure launch overhead.  Computed once (the module's second call is identical).
    o_time = (_mish(t.astype(jnp.float32)) @ prep["time_w"]
              + prep["time_b"]).reshape(B, 1, C)

    # VMEM budget: include pipeline buffer counts (2x per streamed operand),
    # scratches and live f32 temporaries; cap at ~80% of physical VMEM
    # (≈51 MiB on v7x, ≈102 MiB on v5e/v6e).
    est = (2 * 4 * 9 * C * C * cbytes          # 4 conv weights, double-buffered
           + 2 * H * W * C * cbytes            # input tile, double-buffered
           + 2 * HW * C * 4                    # f32 output tile, double-buffered
           + (H + 2) * (W + 2) * C * cbytes    # replicate-pad scratch
           + HW * 9 * C * cbytes               # im2col scratch
           + 8 * HW * C * 4                    # live f32 temporaries (a1,a3,x0,...)
           + 2 * 10 * C * 4)                   # biases + time embedding
    cap = int(0.8 * _physical_vmem_bytes())
    vmem_limit = int(min(max(int(1.25 * est), 32 * 1024 * 1024), cap))

    wspec = pl.BlockSpec((9 * C, C), lambda b: (0, 0))   # constant index map:
    bspec = pl.BlockSpec((1, C), lambda b: (0, 0))       # fetched once per core

    # TODO(synk): for B == 1 on v7x, add a halo'd row-tile grid axis so both
    # TensorCores get a "parallel" iteration; B >= 2 already keeps both busy.
    out_flat = pl.pallas_call(
        _make_midblock_kernel(H, W, C),
        out_shape=jax.ShapeDtypeStruct((B, HW, C), jnp.float32),
        grid=(B,),
        in_specs=[
            pl.BlockSpec((None, H, W, C), lambda b: (b, 0, 0, 0)),
            pl.BlockSpec((None, 1, C), lambda b: (b, 0, 0)),
            wspec, bspec, wspec, bspec, wspec, bspec, wspec, bspec,
        ],
        out_specs=pl.BlockSpec((None, HW, C), lambda b: (b, 0, 0)),
        scratch_shapes=[pltpu.VMEM((H + 2, W + 2, C), cdt),   # replicate-pad tile
                        pltpu.VMEM((HW, 9 * C), cdt)],        # shared im2col slab
        compiler_params=pltpu.CompilerParams(
            dimension_semantics=("parallel",),
            vmem_limit_bytes=vmem_limit),
    )(x_nhwc, o_time,
      prep["w1"], prep["b1"], prep["w2"], prep["b2"],
      prep["w3"], prep["b3"], prep["w4"], prep["b4"])

    out_nhwc = out_flat.reshape(B, H, W, C)
    if nhwc_out:
        return out_nhwc                                   # skip NCHW relayout
    return jnp.transpose(out_nhwc, (0, 3, 1, 2))          # module parity: NCHW


# --------------------------------------------------------- pure-JAX reference
def _ref_conv_mish(x_nhwc, w_oihw, b):
    xp = jnp.pad(x_nhwc, ((0, 0), (1, 1), (1, 1), (0, 0)), mode="edge")
    w = jnp.transpose(w_oihw, (2, 3, 1, 0))               # HWIO
    y = jax.lax.conv_general_dilated(
        xp, w, (1, 1), "VALID", dimension_numbers=("NHWC", "HWIO", "NHWC"))
    return _mish(y + b)


def midblock_reference(params, x_nchw, t):
    x = jnp.transpose(x_nchw, (0, 2, 3, 1))
    o_time = _mish(t) @ params["time_w"].T + params["time_b"]     # (B, C)
    ot = o_time[:, None, None, :]
    o = _ref_conv_mish(x, params["conv1_w"], params["conv1_b"]) + ot
    o = _ref_conv_mish(o, params["conv2_w"], params["conv2_b"]) + x
    x0 = o
    o = _ref_conv_mish(x, params["conv3_w"], params["conv3_b"]) + ot
    o = _ref_conv_mish(o, params["conv4_w"], params["conv4_b"]) + x0
    return jnp.transpose(o, (0, 3, 1, 2))


# ---------------------------------------------------------------------- setup
def init_params(key, c_in, c_out, t_dim):
    ks = jax.random.split(key, 6)

    def conv_p(k):
        k1, k2 = jax.random.split(k)
        w = jax.random.normal(k1, (c_out, c_in, 3, 3), jnp.float32) * 0.1
        b = jax.random.normal(k2, (c_out,), jnp.float32) * 0.1
        return w, b

    p = {}
    for i in range(1, 5):
        p[f"conv{i}_w"], p[f"conv{i}_b"] = conv_p(ks[i - 1])
    # torch Linear(time_embedding_dims, channels_in): weight (C_in, T), bias (C_in,)
    p["time_w"] = jax.random.normal(ks[4], (c_in, t_dim), jnp.float32) * 0.1
    p["time_b"] = jax.random.normal(ks[5], (c_in,), jnp.float32) * 0.1
    return p


if __name__ == "__main__":
    # channels_in == channels_out is required by the residual adds in forward()
    B, C, H, W, T = 2, 4, 16, 16, 8
    key = jax.random.PRNGKey(0)
    kx, kt, kp = jax.random.split(key, 3)
    x = jax.random.normal(kx, (B, C, H, W), jnp.float32)     # NCHW, like PyTorch
    t = jax.random.normal(kt, (B, T), jnp.float32)
    params = init_params(kp, C, C, T)

    ref = jax.block_until_ready(midblock_reference(params, x, t))
    fwd = jax.jit(midblock_forward)

    # f32 parity/debug mode: tight tolerance against the pure-JAX reference.
    prep_f32 = prepare_params(params, compute_dtype=jnp.float32)
    out_f32 = jax.block_until_ready(fwd(prep_f32, x, t))
    assert out_f32.shape == (B, C, H, W)
    np.testing.assert_allclose(np.asarray(out_f32), np.asarray(ref),
                               rtol=2e-4, atol=2e-4)

    # bf16 production mode (MXU-native on v5e/v6e/v7x): looser tolerance.
    prep_bf16 = prepare_params(params, compute_dtype=jnp.bfloat16)
    out_bf16 = jax.block_until_ready(fwd(prep_bf16, x, t))
    assert out_bf16.shape == (B, C, H, W)
    np.testing.assert_allclose(np.asarray(out_bf16), np.asarray(ref),
                               rtol=6e-2, atol=6e-2)

    print("KERNEL_OK")
</pallas_src>

<mosaic_0001>
module attributes {stable_mosaic.version = 11 : i64} {
  func.func @kernel(%arg0: i32, %arg1: memref<1x16x16x4xf32, #tpu.memory_space<vmem>>, %arg2: memref<1x1x4xf32, #tpu.memory_space<vmem>>, %arg3: memref<36x4xf32, #tpu.memory_space<vmem>>, %arg4: memref<1x4xf32, #tpu.memory_space<vmem>>, %arg5: memref<36x4xf32, #tpu.memory_space<vmem>>, %arg6: memref<1x4xf32, #tpu.memory_space<vmem>>, %arg7: memref<36x4xf32, #tpu.memory_space<vmem>>, %arg8: memref<1x4xf32, #tpu.memory_space<vmem>>, %arg9: memref<36x4xf32, #tpu.memory_space<vmem>>, %arg10: memref<1x4xf32, #tpu.memory_space<vmem>>, %arg11: memref<1x256x4xf32, #tpu.memory_space<vmem>>, %arg12: memref<18x18x4xf32, #tpu.memory_space<vmem>>, %arg13: memref<256x36xf32, #tpu.memory_space<vmem>>) attributes {dimension_semantics = [#tpu.dimension_semantics<parallel>], iteration_bounds = array<i64: 2>, scalar_prefetch = 0 : i64, scratch_operands = 2 : i64, tpu.core_type = #tpu.core_type<tc>, window_params = [{transform_indices = @transform_0, window_bounds = array<i64: 1, 16, 16, 4>}, {transform_indices = @transform_1, window_bounds = array<i64: 1, 1, 4>}, {pipeline_mode = #tpu.pipeline_mode<synchronous>, transform_indices = @transform_2, window_bounds = array<i64: 36, 4>}, {pipeline_mode = #tpu.pipeline_mode<synchronous>, transform_indices = @transform_3, window_bounds = array<i64: 1, 4>}, {pipeline_mode = #tpu.pipeline_mode<synchronous>, transform_indices = @transform_4, window_bounds = array<i64: 36, 4>}, {pipeline_mode = #tpu.pipeline_mode<synchronous>, transform_indices = @transform_5, window_bounds = array<i64: 1, 4>}, {pipeline_mode = #tpu.pipeline_mode<synchronous>, transform_indices = @transform_6, window_bounds = array<i64: 36, 4>}, {pipeline_mode = #tpu.pipeline_mode<synchronous>, transform_indices = @transform_7, window_bounds = array<i64: 1, 4>}, {pipeline_mode = #tpu.pipeline_mode<synchronous>, transform_indices = @transform_8, window_bounds = array<i64: 36, 4>}, {pipeline_mode = #tpu.pipeline_mode<synchronous>, transform_indices = @transform_9, window_bounds = array<i64: 1, 4>}, {transform_indices = @transform_10, window_bounds = array<i64: 1, 256, 4>}]} {
    %c0 = arith.constant 0 : index
    %c0_0 = arith.constant 0 : index
    %c0_1 = arith.constant 0 : index
    %c0_2 = arith.constant 0 : index
    %0 = vector.load %arg1[%c0, %c0_0, %c0_1, %c0_2] : memref<1x16x16x4xf32, #tpu.memory_space<vmem>>, vector<1x16x16x4xf32>
    %1 = vector.shape_cast %0 : vector<1x16x16x4xf32> to vector<16x16x4xf32>
    %2 = vector.shape_cast %1 : vector<16x16x4xf32> to vector<256x4xf32>
    %c0_3 = arith.constant 0 : index
    %c0_4 = arith.constant 0 : index
    %c0_5 = arith.constant 0 : index
    %3 = vector.load %arg2[%c0_3, %c0_4, %c0_5] : memref<1x1x4xf32, #tpu.memory_space<vmem>>, vector<1x1x4xf32>
    %4 = vector.shape_cast %3 : vector<1x1x4xf32> to vector<1x4xf32>
    %c1 = arith.constant 1 : index
    %c1_6 = arith.constant 1 : index
    %c0_7 = arith.constant 0 : index
    %5 = vector.load %arg12[%c1, %c1_6, %c0_7] : memref<18x18x4xf32, #tpu.memory_space<vmem>>, vector<16x16x4xf32>
    tpu.vector_store %arg12[%c1, %c1_6, %c0_7], %1 {strides = array<i32>} : memref<18x18x4xf32, #tpu.memory_space<vmem>>, vector<16x16x4xf32>,
    %6 = vector.extract_strided_slice %1 {offsets = [0, 0, 0], sizes = [1, 16, 4], strides = [1, 1, 1]} : vector<16x16x4xf32> to vector<1x16x4xf32>
    %c0_8 = arith.constant 0 : index
    %c1_9 = arith.constant 1 : index
    %c0_10 = arith.constant 0 : index
    %7 = vector.load %arg12[%c0_8, %c1_9, %c0_10] : memref<18x18x4xf32, #tpu.memory_space<vmem>>, vector<1x16x4xf32>
    tpu.vector_store %arg12[%c0_8, %c1_9, %c0_10], %6 {strides = array<i32>} : memref<18x18x4xf32, #tpu.memory_space<vmem>>, vector<1x16x4xf32>,
    %8 = vector.extract_strided_slice %1 {offsets = [15, 0, 0], sizes = [1, 16, 4], strides = [1, 1, 1]} : vector<16x16x4xf32> to vector<1x16x4xf32>
    %c17 = arith.constant 17 : index
    %c1_11 = arith.constant 1 : index
    %c0_12 = arith.constant 0 : index
    %9 = vector.load %arg12[%c17, %c1_11, %c0_12] : memref<18x18x4xf32, #tpu.memory_space<vmem>>, vector<1x16x4xf32>
    tpu.vector_store %arg12[%c17, %c1_11, %c0_12], %8 {strides = array<i32>} : memref<18x18x4xf32, #tpu.memory_space<vmem>>, vector<1x16x4xf32>,
    %c0_13 = arith.constant 0 : index
    %c1_14 = arith.constant 1 : index
    %c0_15 = arith.constant 0 : index
    %10 = vector.load %arg12[%c0_13, %c1_14, %c0_15] : memref<18x18x4xf32, #tpu.memory_space<vmem>>, vector<18x1x4xf32>
    %c0_16 = arith.constant 0 : index
    %c0_17 = arith.constant 0 : index
    %c0_18 = arith.constant 0 : index
    %11 = vector.load %arg12[%c0_16, %c0_17, %c0_18] : memref<18x18x4xf32, #tpu.memory_space<vmem>>, vector<18x1x4xf32>
    tpu.vector_store %arg12[%c0_16, %c0_17, %c0_18], %10 {strides = array<i32>} : memref<18x18x4xf32, #tpu.memory_space<vmem>>, vector<18x1x4xf32>,
    %c0_19 = arith.constant 0 : index
    %c16 = arith.constant 16 : index
    %c0_20 = arith.constant 0 : index
    %12 = vector.load %arg12[%c0_19, %c16, %c0_20] : memref<18x18x4xf32, #tpu.memory_space<vmem>>, vector<18x1x4xf32>
    %c0_21 = arith.constant 0 : index
    %c17_22 = arith.constant 17 : index
    %c0_23 = arith.constant 0 : index
    %13 = vector.load %arg12[%c0_21, %c17_22, %c0_23] : memref<18x18x4xf32, #tpu.memory_space<vmem>>, vector<18x1x4xf32>
    tpu.vector_store %arg12[%c0_21, %c17_22, %c0_23], %12 {strides = array<i32>} : memref<18x18x4xf32, #tpu.memory_space<vmem>>, vector<18x1x4xf32>,
    %c0_24 = arith.constant 0 : index
    %c0_25 = arith.constant 0 : index
    %c0_26 = arith.constant 0 : index
    %14 = vector.load %arg12[%c0_24, %c0_25, %c0_26] : memref<18x18x4xf32, #tpu.memory_space<vmem>>, vector<16x16x4xf32>
    %15 = vector.shape_cast %14 : vector<16x16x4xf32> to vector<256x4xf32>
    %c0_27 = arith.constant 0 : index
    %c0_28 = arith.constant 0 : index
    %16 = vector.load %arg13[%c0_27, %c0_28] : memref<256x36xf32, #tpu.memory_space<vmem>>, vector<256x4xf32>
    tpu.vector_store %arg13[%c0_27, %c0_28], %15 {strides = array<i32>} : memref<256x36xf32, #tpu.memory_space<vmem>>, vector<256x4xf32>,
    %c0_29 = arith.constant 0 : index
    %c1_30 = arith.constant 1 : index
    %c0_31 = arith.constant 0 : index
    %17 = vector.load %arg12[%c0_29, %c1_30, %c0_31] : memref<18x18x4xf32, #tpu.memory_space<vmem>>, vector<16x16x4xf32>
    %18 = vector.shape_cast %17 : vector<16x16x4xf32> to vector<256x4xf32>
    %c0_32 = arith.constant 0 : index
    %c4 = arith.constant 4 : index
    %19 = vector.load %arg13[%c0_32, %c4] : memref<256x36xf32, #tpu.memory_space<vmem>>, vector<256x4xf32>
    tpu.vector_store %arg13[%c0_32, %c4], %18 {strides = array<i32>} : memref<256x36xf32, #tpu.memory_space<vmem>>, vector<256x4xf32>,
    %c0_33 = arith.constant 0 : index
    %c2 = arith.constant 2 : index
    %c0_34 = arith.constant 0 : index
    %20 = vector.load %arg12[%c0_33, %c2, %c0_34] : memref<18x18x4xf32, #tpu.memory_space<vmem>>, vector<16x16x4xf32>
    %21 = vector.shape_cast %20 : vector<16x16x4xf32> to vector<256x4xf32>
    %c0_35 = arith.constant 0 : index
    %c8 = arith.constant 8 : index
    %22 = vector.load %arg13[%c0_35, %c8] : memref<256x36xf32, #tpu.memory_space<vmem>>, vector<256x4xf32>
    tpu.vector_store %arg13[%c0_35, %c8], %21 {strides = array<i32>} : memref<256x36xf32, #tpu.memory_space<vmem>>, vector<256x4xf32>,
    %c1_36 = arith.constant 1 : index
    %c0_37 = arith.constant 0 : index
    %c0_38 = arith.constant 0 : index
    %23 = vector.load %arg12[%c1_36, %c0_37, %c0_38] : memref<18x18x4xf32, #tpu.memory_space<vmem>>, vector<16x16x4xf32>
    %24 = vector.shape_cast %23 : vector<16x16x4xf32> to vector<256x4xf32>
    %c0_39 = arith.constant 0 : index
    %c12 = arith.constant 12 : index
    %25 = vector.load %arg13[%c0_39, %c12] : memref<256x36xf32, #tpu.memory_space<vmem>>, vector<256x4xf32>
    tpu.vector_store %arg13[%c0_39, %c12], %24 {strides = array<i32>} : memref<256x36xf32, #tpu.memory_space<vmem>>, vector<256x4xf32>,
    %c1_40 = arith.constant 1 : index
    %c1_41 = arith.constant 1 : index
    %c0_42 = arith.constant 0 : index
    %26 = vector.load %arg12[%c1_40, %c1_41, %c0_42] : memref<18x18x4xf32, #tpu.memory_space<vmem>>, vector<16x16x4xf32>
    %27 = vector.shape_cast %26 : vector<16x16x4xf32> to vector<256x4xf32>
    %c0_43 = arith.constant 0 : index
    %c16_44 = arith.constant 16 : index
    %28 = vector.load %arg13[%c0_43, %c16_44] : memref<256x36xf32, #tpu.memory_space<vmem>>, vector<256x4xf32>
    tpu.vector_store %arg13[%c0_43, %c16_44], %27 {strides = array<i32>} : memref<256x36xf32, #tpu.memory_space<vmem>>, vector<256x4xf32>,
    %c1_45 = arith.constant 1 : index
    %c2_46 = arith.constant 2 : index
    %c0_47 = arith.constant 0 : index
    %29 = vector.load %arg12[%c1_45, %c2_46, %c0_47] : memref<18x18x4xf32, #tpu.memory_space<vmem>>, vector<16x16x4xf32>
    %30 = vector.shape_cast %29 : vector<16x16x4xf32> to vector<256x4xf32>
    %c0_48 = arith.constant 0 : index
    %c20 = arith.constant 20 : index
    %31 = vector.load %arg13[%c0_48, %c20] : memref<256x36xf32, #tpu.memory_space<vmem>>, vector<256x4xf32>
    tpu.vector_store %arg13[%c0_48, %c20], %30 {strides = array<i32>} : memref<256x36xf32, #tpu.memory_space<vmem>>, vector<256x4xf32>,
    %c2_49 = arith.constant 2 : index
    %c0_50 = arith.constant 0 : index
    %c0_51 = arith.constant 0 : index
    %32 = vector.load %arg12[%c2_49, %c0_50, %c0_51] : memref<18x18x4xf32, #tpu.memory_space<vmem>>, vector<16x16x4xf32>
    %33 = vector.shape_cast %32 : vector<16x16x4xf32> to vector<256x4xf32>
    %c0_52 = arith.constant 0 : index
    %c24 = arith.constant 24 : index
    %34 = vector.load %arg13[%c0_52, %c24] : memref<256x36xf32, #tpu.memory_space<vmem>>, vector<256x4xf32>
    tpu.vector_store %arg13[%c0_52, %c24], %33 {strides = array<i32>} : memref<256x36xf32, #tpu.memory_space<vmem>>, vector<256x4xf32>,
    %c2_53 = arith.constant 2 : index
    %c1_54 = arith.constant 1 : index
    %c0_55 = arith.constant 0 : index
    %35 = vector.load %arg12[%c2_53, %c1_54, %c0_55] : memref<18x18x4xf32, #tpu.memory_space<vmem>>, vector<16x16x4xf32>
    %36 = vector.shape_cast %35 : vector<16x16x4xf32> to vector<256x4xf32>
    %c0_56 = arith.constant 0 : index
    %c28 = arith.constant 28 : index
    %37 = vector.load %arg13[%c0_56, %c28] : memref<256x36xf32, #tpu.memory_space<vmem>>, vector<256x4xf32>
    tpu.vector_store %arg13[%c0_56, %c28], %36 {strides = array<i32>} : memref<256x36xf32, #tpu.memory_space<vmem>>, vector<256x4xf32>,
    %c2_57 = arith.constant 2 : index
    %c2_58 = arith.constant 2 : index
    %c0_59 = arith.constant 0 : index
    %38 = vector.load %arg12[%c2_57, %c2_58, %c0_59] : memref<18x18x4xf32, #tpu.memory_space<vmem>>, vector<16x16x4xf32>
    %39 = vector.shape_cast %38 : vector<16x16x4xf32> to vector<256x4xf32>
    %c0_60 = arith.constant 0 : index
    %c32 = arith.constant 32 : index
    %40 = vector.load %arg13[%c0_60, %c32] : memref<256x36xf32, #tpu.memory_space<vmem>>, vector<256x4xf32>
    tpu.vector_store %arg13[%c0_60, %c32], %39 {strides = array<i32>} : memref<256x36xf32, #tpu.memory_space<vmem>>, vector<256x4xf32>,
    %c0_61 = arith.constant 0 : index
    %c0_62 = arith.constant 0 : index
    %41 = vector.load %arg13[%c0_61, %c0_62] : memref<256x36xf32, #tpu.memory_space<vmem>>, vector<256x36xf32>
    %c0_63 = arith.constant 0 : index
    %c0_64 = arith.constant 0 : index
    %42 = vector.load %arg3[%c0_63, %c0_64] : memref<36x4xf32, #tpu.memory_space<vmem>>, vector<36x4xf32>
    %cst = arith.constant dense<0.000000e+00> : vector<256x4xf32>
    %43 = tpu.matmul %41, %42, %cst {dimension_numbers = #tpu.dot_dimension_numbers<[1], [0], [0], [1], [0, 0, 1, 1], [], []>} : vector<256x36xf32>, vector<36x4xf32>, vector<256x4xf32> -> vector<256x4xf32>
    %c0_65 = arith.constant 0 : index
    %c0_66 = arith.constant 0 : index
    %44 = vector.load %arg4[%c0_65, %c0_66] : memref<1x4xf32, #tpu.memory_space<vmem>>, vector<1x4xf32>
    %45 = vector.broadcast %44 : vector<1x4xf32> to vector<256x4xf32>
    %46 = arith.addf %43, %45 : vector<256x4xf32>
    %cst_67 = arith.constant 2.000000e+01 : f32
    %47 = vector.broadcast %cst_67 : f32 to vector<256x4xf32>
    %48 = arith.minimumf %46, %47 : vector<256x4xf32>
    %49 = math.exp %48 : vector<256x4xf32>
    %cst_68 = arith.constant 2.000000e+00 : f32
    %50 = vector.broadcast %cst_68 : f32 to vector<256x4xf32>
    %51 = arith.addf %49, %50 : vector<256x4xf32>
    %52 = arith.mulf %49, %51 : vector<256x4xf32>
    %cst_69 = arith.constant 2.000000e+01 : f32
    %53 = vector.broadcast %cst_69 : f32 to vector<256x4xf32>
    %54 = arith.cmpf ogt, %46, %53 : vector<256x4xf32>
    %55 = arith.mulf %46, %52 : vector<256x4xf32>
    %cst_70 = arith.constant 2.000000e+00 : f32
    %56 = vector.broadcast %cst_70 : f32 to vector<256x4xf32>
    %57 = arith.addf %52, %56 : vector<256x4xf32>
    %58 = arith.divf %55, %57 : vector<256x4xf32>
    %59 = arith.select %54, %46, %58 : vector<256x4xi1>, vector<256x4xf32>
    %60 = vector.broadcast %4 : vector<1x4xf32> to vector<256x4xf32>
    %61 = arith.addf %59, %60 : vector<256x4xf32>
    %c0_71 = arith.constant 0 : index
    %c0_72 = arith.constant 0 : index
    %62 = vector.load %arg13[%c0_71, %c0_72] : memref<256x36xf32, #tpu.memory_space<vmem>>, vector<256x36xf32>
    %c0_73 = arith.constant 0 : index
    %c0_74 = arith.constant 0 : index
    %63 = vector.load %arg7[%c0_73, %c0_74] : memref<36x4xf32, #tpu.memory_space<vmem>>, vector<36x4xf32>
    %cst_75 = arith.constant dense<0.000000e+00> : vector<256x4xf32>
    %64 = tpu.matmul %62, %63, %cst_75 {dimension_numbers = #tpu.dot_dimension_numbers<[1], [0], [0], [1], [0, 0, 1, 1], [], []>} : vector<256x36xf32>, vector<36x4xf32>, vector<256x4xf32> -> vector<256x4xf32>
    %c0_76 = arith.constant 0 : index
    %c0_77 = arith.constant 0 : index
    %65 = vector.load %arg8[%c0_76, %c0_77] : memref<1x4xf32, #tpu.memory_space<vmem>>, vector<1x4xf32>
    %66 = vector.broadcast %65 : vector<1x4xf32> to vector<256x4xf32>
    %67 = arith.addf %64, %66 : vector<256x4xf32>
    %cst_78 = arith.constant 2.000000e+01 : f32
    %68 = vector.broadcast %cst_78 : f32 to vector<256x4xf32>
    %69 = arith.minimumf %67, %68 : vector<256x4xf32>
    %70 = math.exp %69 : vector<256x4xf32>
    %cst_79 = arith.constant 2.000000e+00 : f32
    %71 = vector.broadcast %cst_79 : f32 to vector<256x4xf32>
    %72 = arith.addf %70, %71 : vector<256x4xf32>
    %73 = arith.mulf %70, %72 : vector<256x4xf32>
    %cst_80 = arith.constant 2.000000e+01 : f32
    %74 = vector.broadcast %cst_80 : f32 to vector<256x4xf32>
    %75 = arith.cmpf ogt, %67, %74 : vector<256x4xf32>
    %76 = arith.mulf %67, %73 : vector<256x4xf32>
    %cst_81 = arith.constant 2.000000e+00 : f32
    %77 = vector.broadcast %cst_81 : f32 to vector<256x4xf32>
    %78 = arith.addf %73, %77 : vector<256x4xf32>
    %79 = arith.divf %76, %78 : vector<256x4xf32>
    %80 = arith.select %75, %67, %79 : vector<256x4xi1>, vector<256x4xf32>
    %81 = vector.broadcast %4 : vector<1x4xf32> to vector<256x4xf32>
    %82 = arith.addf %80, %81 : vector<256x4xf32>
    %83 = vector.shape_cast %61 : vector<256x4xf32> to vector<16x16x4xf32>
    %c1_82 = arith.constant 1 : index
    %c1_83 = arith.constant 1 : index
    %c0_84 = arith.constant 0 : index
    %84 = vector.load %arg12[%c1_82, %c1_83, %c0_84] : memref<18x18x4xf32, #tpu.memory_space<vmem>>, vector<16x16x4xf32>
    tpu.vector_store %arg12[%c1_82, %c1_83, %c0_84], %83 {strides = array<i32>} : memref<18x18x4xf32, #tpu.memory_space<vmem>>, vector<16x16x4xf32>,
    %85 = vector.extract_strided_slice %83 {offsets = [0, 0, 0], sizes = [1, 16, 4], strides = [1, 1, 1]} : vector<16x16x4xf32> to vector<1x16x4xf32>
    %c0_85 = arith.constant 0 : index
    %c1_86 = arith.constant 1 : index
    %c0_87 = arith.constant 0 : index
    %86 = vector.load %arg12[%c0_85, %c1_86, %c0_87] : memref<18x18x4xf32, #tpu.memory_space<vmem>>, vector<1x16x4xf32>
    tpu.vector_store %arg12[%c0_85, %c1_86, %c0_87], %85 {strides = array<i32>} : memref<18x18x4xf32, #tpu.memory_space<vmem>>, vector<1x16x4xf32>,
    %87 = vector.extract_strided_slice %83 {offsets = [15, 0, 0], sizes = [1, 16, 4], strides = [1, 1, 1]} : vector<16x16x4xf32> to vector<1x16x4xf32>
    %c17_88 = arith.constant 17 : index
    %c1_89 = arith.constant 1 : index
    %c0_90 = arith.constant 0 : index
    %88 = vector.load %arg12[%c17_88, %c1_89, %c0_90] : memref<18x18x4xf32, #tpu.memory_space<vmem>>, vector<1x16x4xf32>
    tpu.vector_store %arg12[%c17_88, %c1_89, %c0_90], %87 {strides = array<i32>} : memref<18x18x4xf32, #tpu.memory_space<vmem>>, vector<1x16x4xf32>,
    %c0_91 = arith.constant 0 : index
    %c1_92 = arith.constant 1 : index
    %c0_93 = arith.constant 0 : index
    %89 = vector.load %arg12[%c0_91, %c1_92, %c0_93] : memref<18x18x4xf32, #tpu.memory_space<vmem>>, vector<18x1x4xf32>
    %c0_94 = arith.constant 0 : index
    %c0_95 = arith.constant 0 : index
    %c0_96 = arith.constant 0 : index
    %90 = vector.load %arg12[%c0_94, %c0_95, %c0_96] : memref<18x18x4xf32, #tpu.memory_space<vmem>>, vector<18x1x4xf32>
    tpu.vector_store %arg12[%c0_94, %c0_95, %c0_96], %89 {strides = array<i32>} : memref<18x18x4xf32, #tpu.memory_space<vmem>>, vector<18x1x4xf32>,
    %c0_97 = arith.constant 0 : index
    %c16_98 = arith.constant 16 : index
    %c0_99 = arith.constant 0 : index
    %91 = vector.load %arg12[%c0_97, %c16_98, %c0_99] : memref<18x18x4xf32, #tpu.memory_space<vmem>>, vector<18x1x4xf32>
    %c0_100 = arith.constant 0 : index
    %c17_101 = arith.constant 17 : index
    %c0_102 = arith.constant 0 : index
    %92 = vector.load %arg12[%c0_100, %c17_101, %c0_102] : memref<18x18x4xf32, #tpu.memory_space<vmem>>, vector<18x1x4xf32>
    tpu.vector_store %arg12[%c0_100, %c17_101, %c0_102], %91 {strides = array<i32>} : memref<18x18x4xf32, #tpu.memory_space<vmem>>, vector<18x1x4xf32>,
    %c0_103 = arith.constant 0 : index
    %c0_104 = arith.constant 0 : index
    %c0_105 = arith.constant 0 : index
    %93 = vector.load %arg12[%c0_103, %c0_104, %c0_105] : memref<18x18x4xf32, #tpu.memory_space<vmem>>, vector<16x16x4xf32>
    %94 = vector.shape_cast %93 : vector<16x16x4xf32> to vector<256x4xf32>
    %c0_106 = arith.constant 0 : index
    %c0_107 = arith.constant 0 : index
    %95 = vector.load %arg13[%c0_106, %c0_107] : memref<256x36xf32, #tpu.memory_space<vmem>>, vector<256x4xf32>
    tpu.vector_store %arg13[%c0_106, %c0_107], %94 {strides = array<i32>} : memref<256x36xf32, #tpu.memory_space<vmem>>, vector<256x4xf32>,
    %c0_108 = arith.constant 0 : index
    %c1_109 = arith.constant 1 : index
    %c0_110 = arith.constant 0 : index
    %96 = vector.load %arg12[%c0_108, %c1_109, %c0_110] : memref<18x18x4xf32, #tpu.memory_space<vmem>>, vector<16x16x4xf32>
    %97 = vector.shape_cast %96 : vector<16x16x4xf32> to vector<256x4xf32>
    %c0_111 = arith.constant 0 : index
    %c4_112 = arith.constant 4 : index
    %98 = vector.load %arg13[%c0_111, %c4_112] : memref<256x36xf32, #tpu.memory_space<vmem>>, vector<256x4xf32>
    tpu.vector_store %arg13[%c0_111, %c4_112], %97 {strides = array<i32>} : memref<256x36xf32, #tpu.memory_space<vmem>>, vector<256x4xf32>,
    %c0_113 = arith.constant 0 : index
    %c2_114 = arith.constant 2 : index
    %c0_115 = arith.constant 0 : index
    %99 = vector.load %arg12[%c0_113, %c2_114, %c0_115] : memref<18x18x4xf32, #tpu.memory_space<vmem>>, vector<16x16x4xf32>
    %100 = vector.shape_cast %99 : vector<16x16x4xf32> to vector<256x4xf32>
    %c0_116 = arith.constant 0 : index
    %c8_117 = arith.constant 8 : index
    %101 = vector.load %arg13[%c0_116, %c8_117] : memref<256x36xf32, #tpu.memory_space<vmem>>, vector<256x4xf32>
    tpu.vector_store %arg13[%c0_116, %c8_117], %100 {strides = array<i32>} : memref<256x36xf32, #tpu.memory_space<vmem>>, vector<256x4xf32>,
    %c1_118 = arith.constant 1 : index
    %c0_119 = arith.constant 0 : index
    %c0_120 = arith.constant 0 : index
    %102 = vector.load %arg12[%c1_118, %c0_119, %c0_120] : memref<18x18x4xf32, #tpu.memory_space<vmem>>, vector<16x16x4xf32>
    %103 = vector.shape_cast %102 : vector<16x16x4xf32> to vector<256x4xf32>
    %c0_121 = arith.constant 0 : index
    %c12_122 = arith.constant 12 : index
    %104 = vector.load %arg13[%c0_121, %c12_122] : memref<256x36xf32, #tpu.memory_space<vmem>>, vector<256x4xf32>
    tpu.vector_store %arg13[%c0_121, %c12_122], %103 {strides = array<i32>} : memref<256x36xf32, #tpu.memory_space<vmem>>, vector<256x4xf32>,
    %c1_123 = arith.constant 1 : index
    %c1_124 = arith.constant 1 : index
    %c0_125 = arith.constant 0 : index
    %105 = vector.load %arg12[%c1_123, %c1_124, %c0_125] : memref<18x18x4xf32, #tpu.memory_space<vmem>>, vector<16x16x4xf32>
    %106 = vector.shape_cast %105 : vector<16x16x4xf32> to vector<256x4xf32>
    %c0_126 = arith.constant 0 : index
    %c16_127 = arith.constant 16 : index
    %107 = vector.load %arg13[%c0_126, %c16_127] : memref<256x36xf32, #tpu.memory_space<vmem>>, vector<256x4xf32>
    tpu.vector_store %arg13[%c0_126, %c16_127], %106 {strides = array<i32>} : memref<256x36xf32, #tpu.memory_space<vmem>>, vector<256x4xf32>,
    %c1_128 = arith.constant 1 : index
    %c2_129 = arith.constant 2 : index
    %c0_130 = arith.constant 0 : index
    %108 = vector.load %arg12[%c1_128, %c2_129, %c0_130] : memref<18x18x4xf32, #tpu.memory_space<vmem>>, vector<16x16x4xf32>
    %109 = vector.shape_cast %108 : vector<16x16x4xf32> to vector<256x4xf32>
    %c0_131 = arith.constant 0 : index
    %c20_132 = arith.constant 20 : index
    %110 = vector.load %arg13[%c0_131, %c20_132] : memref<256x36xf32, #tpu.memory_space<vmem>>, vector<256x4xf32>
    tpu.vector_store %arg13[%c0_131, %c20_132], %109 {strides = array<i32>} : memref<256x36xf32, #tpu.memory_space<vmem>>, vector<256x4xf32>,
    %c2_133 = arith.constant 2 : index
    %c0_134 = arith.constant 0 : index
    %c0_135 = arith.constant 0 : index
    %111 = vector.load %arg12[%c2_133, %c0_134, %c0_135] : memref<18x18x4xf32, #tpu.memory_space<vmem>>, vector<16x16x4xf32>
    %112 = vector.shape_cast %111 : vector<16x16x4xf32> to vector<256x4xf32>
    %c0_136 = arith.constant 0 : index
    %c24_137 = arith.constant 24 : index
    %113 = vector.load %arg13[%c0_136, %c24_137] : memref<256x36xf32, #tpu.memory_space<vmem>>, vector<256x4xf32>
    tpu.vector_store %arg13[%c0_136, %c24_137], %112 {strides = array<i32>} : memref<256x36xf32, #tpu.memory_space<vmem>>, vector<256x4xf32>,
    %c2_138 = arith.constant 2 : index
    %c1_139 = arith.constant 1 : index
    %c0_140 = arith.constant 0 : index
    %114 = vector.load %arg12[%c2_138, %c1_139, %c0_140] : memref<18x18x4xf32, #tpu.memory_space<vmem>>, vector<16x16x4xf32>
    %115 = vector.shape_cast %114 : vector<16x16x4xf32> to vector<256x4xf32>
    %c0_141 = arith.constant 0 : index
    %c28_142 = arith.constant 28 : index
    %116 = vector.load %arg13[%c0_141, %c28_142] : memref<256x36xf32, #tpu.memory_space<vmem>>, vector<256x4xf32>
    tpu.vector_store %arg13[%c0_141, %c28_142], %115 {strides = array<i32>} : memref<256x36xf32, #tpu.memory_space<vmem>>, vector<256x4xf32>,
    %c2_143 = arith.constant 2 : index
    %c2_144 = arith.constant 2 : index
    %c0_145 = arith.constant 0 : index
    %117 = vector.load %arg12[%c2_143, %c2_144, %c0_145] : memref<18x18x4xf32, #tpu.memory_space<vmem>>, vector<16x16x4xf32>
    %118 = vector.shape_cast %117 : vector<16x16x4xf32> to vector<256x4xf32>
    %c0_146 = arith.constant 0 : index
    %c32_147 = arith.constant 32 : index
    %119 = vector.load %arg13[%c0_146, %c32_147] : memref<256x36xf32, #tpu.memory_space<vmem>>, vector<256x4xf32>
    tpu.vector_store %arg13[%c0_146, %c32_147], %118 {strides = array<i32>} : memref<256x36xf32, #tpu.memory_space<vmem>>, vector<256x4xf32>,
    %c0_148 = arith.constant 0 : index
    %c0_149 = arith.constant 0 : index
    %120 = vector.load %arg13[%c0_148, %c0_149] : memref<256x36xf32, #tpu.memory_space<vmem>>, vector<256x36xf32>
    %c0_150 = arith.constant 0 : index
    %c0_151 = arith.constant 0 : index
    %121 = vector.load %arg5[%c0_150, %c0_151] : memref<36x4xf32, #tpu.memory_space<vmem>>, vector<36x4xf32>
    %cst_152 = arith.constant dense<0.000000e+00> : vector<256x4xf32>
    %122 = tpu.matmul %120, %121, %cst_152 {dimension_numbers = #tpu.dot_dimension_numbers<[1], [0], [0], [1], [0, 0, 1, 1], [], []>} : vector<256x36xf32>, vector<36x4xf32>, vector<256x4xf32> -> vector<256x4xf32>
    %c0_153 = arith.constant 0 : index
    %c0_154 = arith.constant 0 : index
    %123 = vector.load %arg6[%c0_153, %c0_154] : memref<1x4xf32, #tpu.memory_space<vmem>>, vector<1x4xf32>
    %124 = vector.broadcast %123 : vector<1x4xf32> to vector<256x4xf32>
    %125 = arith.addf %122, %124 : vector<256x4xf32>
    %cst_155 = arith.constant 2.000000e+01 : f32
    %126 = vector.broadcast %cst_155 : f32 to vector<256x4xf32>
    %127 = arith.minimumf %125, %126 : vector<256x4xf32>
    %128 = math.exp %127 : vector<256x4xf32>
    %cst_156 = arith.constant 2.000000e+00 : f32
    %129 = vector.broadcast %cst_156 : f32 to vector<256x4xf32>
    %130 = arith.addf %128, %129 : vector<256x4xf32>
    %131 = arith.mulf %128, %130 : vector<256x4xf32>
    %cst_157 = arith.constant 2.000000e+01 : f32
    %132 = vector.broadcast %cst_157 : f32 to vector<256x4xf32>
    %133 = arith.cmpf ogt, %125, %132 : vector<256x4xf32>
    %134 = arith.mulf %125, %131 : vector<256x4xf32>
    %cst_158 = arith.constant 2.000000e+00 : f32
    %135 = vector.broadcast %cst_158 : f32 to vector<256x4xf32>
    %136 = arith.addf %131, %135 : vector<256x4xf32>
    %137 = arith.divf %134, %136 : vector<256x4xf32>
    %138 = arith.select %133, %125, %137 : vector<256x4xi1>, vector<256x4xf32>
    %139 = arith.addf %138, %2 : vector<256x4xf32>
    %140 = vector.shape_cast %82 : vector<256x4xf32> to vector<16x16x4xf32>
    %c1_159 = arith.constant 1 : index
    %c1_160 = arith.constant 1 : index
    %c0_161 = arith.constant 0 : index
    %141 = vector.load %arg12[%c1_159, %c1_160, %c0_161] : memref<18x18x4xf32, #tpu.memory_space<vmem>>, vector<16x16x4xf32>
    tpu.vector_store %arg12[%c1_159, %c1_160, %c0_161], %140 {strides = array<i32>} : memref<18x18x4xf32, #tpu.memory_space<vmem>>, vector<16x16x4xf32>,
    %142 = vector.extract_strided_slice %140 {offsets = [0, 0, 0], sizes = [1, 16, 4], strides = [1, 1, 1]} : vector<16x16x4xf32> to vector<1x16x4xf32>
    %c0_162 = arith.constant 0 : index
    %c1_163 = arith.constant 1 : index
    %c0_164 = arith.constant 0 : index
    %143 = vector.load %arg12[%c0_162, %c1_163, %c0_164] : memref<18x18x4xf32, #tpu.memory_space<vmem>>, vector<1x16x4xf32>
    tpu.vector_store %arg12[%c0_162, %c1_163, %c0_164], %142 {strides = array<i32>} : memref<18x18x4xf32, #tpu.memory_space<vmem>>, vector<1x16x4xf32>,
    %144 = vector.extract_strided_slice %140 {offsets = [15, 0, 0], sizes = [1, 16, 4], strides = [1, 1, 1]} : vector<16x16x4xf32> to vector<1x16x4xf32>
    %c17_165 = arith.constant 17 : index
    %c1_166 = arith.constant 1 : index
    %c0_167 = arith.constant 0 : index
    %145 = vector.load %arg12[%c17_165, %c1_166, %c0_167] : memref<18x18x4xf32, #tpu.memory_space<vmem>>, vector<1x16x4xf32>
    tpu.vector_store %arg12[%c17_165, %c1_166, %c0_167], %144 {strides = array<i32>} : memref<18x18x4xf32, #tpu.memory_space<vmem>>, vector<1x16x4xf32>,
    %c0_168 = arith.constant 0 : index
    %c1_169 = arith.constant 1 : index
    %c0_170 = arith.constant 0 : index
    %146 = vector.load %arg12[%c0_168, %c1_169, %c0_170] : memref<18x18x4xf32, #tpu.memory_space<vmem>>, vector<18x1x4xf32>
    %c0_171 = arith.constant 0 : index
    %c0_172 = arith.constant 0 : index
    %c0_173 = arith.constant 0 : index
    %147 = vector.load %arg12[%c0_171, %c0_172, %c0_173] : memref<18x18x4xf32, #tpu.memory_space<vmem>>, vector<18x1x4xf32>
    tpu.vector_store %arg12[%c0_171, %c0_172, %c0_173], %146 {strides = array<i32>} : memref<18x18x4xf32, #tpu.memory_space<vmem>>, vector<18x1x4xf32>,
    %c0_174 = arith.constant 0 : index
    %c16_175 = arith.constant 16 : index
    %c0_176 = arith.constant 0 : index
    %148 = vector.load %arg12[%c0_174, %c16_175, %c0_176] : memref<18x18x4xf32, #tpu.memory_space<vmem>>, vector<18x1x4xf32>
    %c0_177 = arith.constant 0 : index
    %c17_178 = arith.constant 17 : index
    %c0_179 = arith.constant 0 : index
    %149 = vector.load %arg12[%c0_177, %c17_178, %c0_179] : memref<18x18x4xf32, #tpu.memory_space<vmem>>, vector<18x1x4xf32>
    tpu.vector_store %arg12[%c0_177, %c17_178, %c0_179], %148 {strides = array<i32>} : memref<18x18x4xf32, #tpu.memory_space<vmem>>, vector<18x1x4xf32>,
    %c0_180 = arith.constant 0 : index
    %c0_181 = arith.constant 0 : index
    %c0_182 = arith.constant 0 : index
    %150 = vector.load %arg12[%c0_180, %c0_181, %c0_182] : memref<18x18x4xf32, #tpu.memory_space<vmem>>, vector<16x16x4xf32>
    %151 = vector.shape_cast %150 : vector<16x16x4xf32> to vector<256x4xf32>
    %c0_183 = arith.constant 0 : index
    %c0_184 = arith.constant 0 : index
    %152 = vector.load %arg13[%c0_183, %c0_184] : memref<256x36xf32, #tpu.memory_space<vmem>>, vector<256x4xf32>
    tpu.vector_store %arg13[%c0_183, %c0_184], %151 {strides = array<i32>} : memref<256x36xf32, #tpu.memory_space<vmem>>, vector<256x4xf32>,
    %c0_185 = arith.constant 0 : index
    %c1_186 = arith.constant 1 : index
    %c0_187 = arith.constant 0 : index
    %153 = vector.load %arg12[%c0_185, %c1_186, %c0_187] : memref<18x18x4xf32, #tpu.memory_space<vmem>>, vector<16x16x4xf32>
    %154 = vector.shape_cast %153 : vector<16x16x4xf32> to vector<256x4xf32>
    %c0_188 = arith.constant 0 : index
    %c4_189 = arith.constant 4 : index
    %155 = vector.load %arg13[%c0_188, %c4_189] : memref<256x36xf32, #tpu.memory_space<vmem>>, vector<256x4xf32>
    tpu.vector_store %arg13[%c0_188, %c4_189], %154 {strides = array<i32>} : memref<256x36xf32, #tpu.memory_space<vmem>>, vector<256x4xf32>,
    %c0_190 = arith.constant 0 : index
    %c2_191 = arith.constant 2 : index
    %c0_192 = arith.constant 0 : index
    %156 = vector.load %arg12[%c0_190, %c2_191, %c0_192] : memref<18x18x4xf32, #tpu.memory_space<vmem>>, vector<16x16x4xf32>
    %157 = vector.shape_cast %156 : vector<16x16x4xf32> to vector<256x4xf32>
    %c0_193 = arith.constant 0 : index
    %c8_194 = arith.constant 8 : index
    %158 = vector.load %arg13[%c0_193, %c8_194] : memref<256x36xf32, #tpu.memory_space<vmem>>, vector<256x4xf32>
    tpu.vector_store %arg13[%c0_193, %c8_194], %157 {strides = array<i32>} : memref<256x36xf32, #tpu.memory_space<vmem>>, vector<256x4xf32>,
    %c1_195 = arith.constant 1 : index
    %c0_196 = arith.constant 0 : index
    %c0_197 = arith.constant 0 : index
    %159 = vector.load %arg12[%c1_195, %c0_196, %c0_197] : memref<18x18x4xf32, #tpu.memory_space<vmem>>, vector<16x16x4xf32>
    %160 = vector.shape_cast %159 : vector<16x16x4xf32> to vector<256x4xf32>
    %c0_198 = arith.constant 0 : index
    %c12_199 = arith.constant 12 : index
    %161 = vector.load %arg13[%c0_198, %c12_199] : memref<256x36xf32, #tpu.memory_space<vmem>>, vector<256x4xf32>
    tpu.vector_store %arg13[%c0_198, %c12_199], %160 {strides = array<i32>} : memref<256x36xf32, #tpu.memory_space<vmem>>, vector<256x4xf32>,
    %c1_200 = arith.constant 1 : index
    %c1_201 = arith.constant 1 : index
    %c0_202 = arith.constant 0 : index
    %162 = vector.load %arg12[%c1_200, %c1_201, %c0_202] : memref<18x18x4xf32, #tpu.memory_space<vmem>>, vector<16x16x4xf32>
    %163 = vector.shape_cast %162 : vector<16x16x4xf32> to vector<256x4xf32>
    %c0_203 = arith.constant 0 : index
    %c16_204 = arith.constant 16 : index
    %164 = vector.load %arg13[%c0_203, %c16_204] : memref<256x36xf32, #tpu.memory_space<vmem>>, vector<256x4xf32>
    tpu.vector_store %arg13[%c0_203, %c16_204], %163 {strides = array<i32>} : memref<256x36xf32, #tpu.memory_space<vmem>>, vector<256x4xf32>,
    %c1_205 = arith.constant 1 : index
    %c2_206 = arith.constant 2 : index
    %c0_207 = arith.constant 0 : index
    %165 = vector.load %arg12[%c1_205, %c2_206, %c0_207] : memref<18x18x4xf32, #tpu.memory_space<vmem>>, vector<16x16x4xf32>
    %166 = vector.shape_cast %165 : vector<16x16x4xf32> to vector<256x4xf32>
    %c0_208 = arith.constant 0 : index
    %c20_209 = arith.constant 20 : index
    %167 = vector.load %arg13[%c0_208, %c20_209] : memref<256x36xf32, #tpu.memory_space<vmem>>, vector<256x4xf32>
    tpu.vector_store %arg13[%c0_208, %c20_209], %166 {strides = array<i32>} : memref<256x36xf32, #tpu.memory_space<vmem>>, vector<256x4xf32>,
    %c2_210 = arith.constant 2 : index
    %c0_211 = arith.constant 0 : index
    %c0_212 = arith.constant 0 : index
    %168 = vector.load %arg12[%c2_210, %c0_211, %c0_212] : memref<18x18x4xf32, #tpu.memory_space<vmem>>, vector<16x16x4xf32>
    %169 = vector.shape_cast %168 : vector<16x16x4xf32> to vector<256x4xf32>
    %c0_213 = arith.constant 0 : index
    %c24_214 = arith.constant 24 : index
    %170 = vector.load %arg13[%c0_213, %c24_214] : memref<256x36xf32, #tpu.memory_space<vmem>>, vector<256x4xf32>
    tpu.vector_store %arg13[%c0_213, %c24_214], %169 {strides = array<i32>} : memref<256x36xf32, #tpu.memory_space<vmem>>, vector<256x4xf32>,
    %c2_215 = arith.constant 2 : index
    %c1_216 = arith.constant 1 : index
    %c0_217 = arith.constant 0 : index
    %171 = vector.load %arg12[%c2_215, %c1_216, %c0_217] : memref<18x18x4xf32, #tpu.memory_space<vmem>>, vector<16x16x4xf32>
    %172 = vector.shape_cast %171 : vector<16x16x4xf32> to vector<256x4xf32>
    %c0_218 = arith.constant 0 : index
    %c28_219 = arith.constant 28 : index
    %173 = vector.load %arg13[%c0_218, %c28_219] : memref<256x36xf32, #tpu.memory_space<vmem>>, vector<256x4xf32>
    tpu.vector_store %arg13[%c0_218, %c28_219], %172 {strides = array<i32>} : memref<256x36xf32, #tpu.memory_space<vmem>>, vector<256x4xf32>,
    %c2_220 = arith.constant 2 : index
    %c2_221 = arith.constant 2 : index
    %c0_222 = arith.constant 0 : index
    %174 = vector.load %arg12[%c2_220, %c2_221, %c0_222] : memref<18x18x4xf32, #tpu.memory_space<vmem>>, vector<16x16x4xf32>
    %175 = vector.shape_cast %174 : vector<16x16x4xf32> to vector<256x4xf32>
    %c0_223 = arith.constant 0 : index
    %c32_224 = arith.constant 32 : index
    %176 = vector.load %arg13[%c0_223, %c32_224] : memref<256x36xf32, #tpu.memory_space<vmem>>, vector<256x4xf32>
    tpu.vector_store %arg13[%c0_223, %c32_224], %175 {strides = array<i32>} : memref<256x36xf32, #tpu.memory_space<vmem>>, vector<256x4xf32>,
    %c0_225 = arith.constant 0 : index
    %c0_226 = arith.constant 0 : index
    %177 = vector.load %arg13[%c0_225, %c0_226] : memref<256x36xf32, #tpu.memory_space<vmem>>, vector<256x36xf32>
    %c0_227 = arith.constant 0 : index
    %c0_228 = arith.constant 0 : index
    %178 = vector.load %arg9[%c0_227, %c0_228] : memref<36x4xf32, #tpu.memory_space<vmem>>, vector<36x4xf32>
    %cst_229 = arith.constant dense<0.000000e+00> : vector<256x4xf32>
    %179 = tpu.matmul %177, %178, %cst_229 {dimension_numbers = #tpu.dot_dimension_numbers<[1], [0], [0], [1], [0, 0, 1, 1], [], []>} : vector<256x36xf32>, vector<36x4xf32>, vector<256x4xf32> -> vector<256x4xf32>
    %c0_230 = arith.constant 0 : index
    %c0_231 = arith.constant 0 : index
    %180 = vector.load %arg10[%c0_230, %c0_231] : memref<1x4xf32, #tpu.memory_space<vmem>>, vector<1x4xf32>
    %181 = vector.broadcast %180 : vector<1x4xf32> to vector<256x4xf32>
    %182 = arith.addf %179, %181 : vector<256x4xf32>
    %cst_232 = arith.constant 2.000000e+01 : f32
    %183 = vector.broadcast %cst_232 : f32 to vector<256x4xf32>
    %184 = arith.minimumf %182, %183 : vector<256x4xf32>
    %185 = math.exp %184 : vector<256x4xf32>
    %cst_233 = arith.constant 2.000000e+00 : f32
    %186 = vector.broadcast %cst_233 : f32 to vector<256x4xf32>
    %187 = arith.addf %185, %186 : vector<256x4xf32>
    %188 = arith.mulf %185, %187 : vector<256x4xf32>
    %cst_234 = arith.constant 2.000000e+01 : f32
    %189 = vector.broadcast %cst_234 : f32 to vector<256x4xf32>
    %190 = arith.cmpf ogt, %182, %189 : vector<256x4xf32>
    %191 = arith.mulf %182, %188 : vector<256x4xf32>
    %cst_235 = arith.constant 2.000000e+00 : f32
    %192 = vector.broadcast %cst_235 : f32 to vector<256x4xf32>
    %193 = arith.addf %188, %192 : vector<256x4xf32>
    %194 = arith.divf %191, %193 : vector<256x4xf32>
    %195 = arith.select %190, %182, %194 : vector<256x4xi1>, vector<256x4xf32>
    %196 = arith.addf %195, %139 : vector<256x4xf32>
    %c0_236 = arith.constant 0 : index
    %c0_237 = arith.constant 0 : index
    %c0_238 = arith.constant 0 : index
    %197 = vector.load %arg11[%c0_236, %c0_237, %c0_238] : memref<1x256x4xf32, #tpu.memory_space<vmem>>, vector<1x256x4xf32>
    %198 = vector.shape_cast %197 : vector<1x256x4xf32> to vector<256x4xf32>
    %199 = vector.shape_cast %196 : vector<256x4xf32> to vector<1x256x4xf32>
    tpu.vector_store %arg11[%c0_236, %c0_237, %c0_238], %199 {strides = array<i32>} : memref<1x256x4xf32, #tpu.memory_space<vmem>>, vector<1x256x4xf32>,
    return
  }
  func.func @transform_0(%arg0: i32) -> (i32, i32, i32, i32) {
    %c0_i32 = arith.constant 0 : i32
    %c0_i32_0 = arith.constant 0 : i32
    %c0_i32_1 = arith.constant 0 : i32
    %c0_i32_2 = arith.constant 0 : i32
    return %arg0, %c0_i32, %c0_i32_0, %c0_i32_1 : i32, i32, i32, i32
  }
  func.func @transform_1(%arg0: i32) -> (i32, i32, i32) {
    %c0_i32 = arith.constant 0 : i32
    %c0_i32_0 = arith.constant 0 : i32
    %c0_i32_1 = arith.constant 0 : i32
    return %arg0, %c0_i32, %c0_i32_0 : i32, i32, i32
  }
  func.func @transform_2(%arg0: i32) -> (i32, i32) {
    %c0_i32 = arith.constant 0 : i32
    %c0_i32_0 = arith.constant 0 : i32
    %c0_i32_1 = arith.constant 0 : i32
    return %c0_i32, %c0_i32_0 : i32, i32
  }
  func.func @transform_3(%arg0: i32) -> (i32, i32) {
    %c0_i32 = arith.constant 0 : i32
    %c0_i32_0 = arith.constant 0 : i32
    %c0_i32_1 = arith.constant 0 : i32
    return %c0_i32, %c0_i32_0 : i32, i32
  }
  func.func @transform_4(%arg0: i32) -> (i32, i32) {
    %c0_i32 = arith.constant 0 : i32
    %c0_i32_0 = arith.constant 0 : i32
    %c0_i32_1 = arith.constant 0 : i32
    return %c0_i32, %c0_i32_0 : i32, i32
  }
  func.func @transform_5(%arg0: i32) -> (i32, i32) {
    %c0_i32 = arith.constant 0 : i32
    %c0_i32_0 = arith.constant 0 : i32
    %c0_i32_1 = arith.constant 0 : i32
    return %c0_i32, %c0_i32_0 : i32, i32
  }
  func.func @transform_6(%arg0: i32) -> (i32, i32) {
    %c0_i32 = arith.constant 0 : i32
    %c0_i32_0 = arith.constant 0 : i32
    %c0_i32_1 = arith.constant 0 : i32
    return %c0_i32, %c0_i32_0 : i32, i32
  }
  func.func @transform_7(%arg0: i32) -> (i32, i32) {
    %c0_i32 = arith.constant 0 : i32
    %c0_i32_0 = arith.constant 0 : i32
    %c0_i32_1 = arith.constant 0 : i32
    return %c0_i32, %c0_i32_0 : i32, i32
  }
  func.func @transform_8(%arg0: i32) -> (i32, i32) {
    %c0_i32 = arith.constant 0 : i32
    %c0_i32_0 = arith.constant 0 : i32
    %c0_i32_1 = arith.constant 0 : i32
    return %c0_i32, %c0_i32_0 : i32, i32
  }
  func.func @transform_9(%arg0: i32) -> (i32, i32) {
    %c0_i32 = arith.constant 0 : i32
    %c0_i32_0 = arith.constant 0 : i32
    %c0_i32_1 = arith.constant 0 : i32
    return %c0_i32, %c0_i32_0 : i32, i32
  }
  func.func @transform_10(%arg0: i32) -> (i32, i32, i32) {
    %c0_i32 = arith.constant 0 : i32
    %c0_i32_0 = arith.constant 0 : i32
    %c0_i32_1 = arith.constant 0 : i32
    return %arg0, %c0_i32, %c0_i32_0 : i32, i32, i32
  }
}

</mosaic_0001>

<llo_original>
// kernel: midblock_forward.1
$region0: #{midblock_forward.1}
  #allocation0 [shape = 'u32[]', space=smem, size = 0x4, offset = 0x4, fixed_abs, tag = 'smem constant byte address 0x4 - core index']
  #allocation1 [shape = 'u32[144,128]{1,0:T(1,128)}', space=vmem, size = 0x12000, scoped, tag = 'internal scratch']
  #allocation2 [shape = 'f32[18,18,4]{2,1,0:T(8,128)}', space=vmem, size = 0x36000, scoped, tag = 'scratch operand']
  #allocation3 [shape = 'f32[256,36]{1,0:T(8,128)}', space=vmem, size = 0x20000, scoped, tag = 'scratch operand']
  %s0 = inlined_call_operand.vmem [shape: f32[2,16,16,4], index: 0, kind: input, shape index: {}]
  %s1 = inlined_call_operand.vmem [shape: f32[2,1,4], index: 1, kind: input, shape index: {}]
  %s2 = inlined_call_operand.vmem [shape: f32[36,4], index: 2, kind: input, shape index: {}]
  %s3 = inlined_call_operand.vmem [shape: f32[1,4], index: 3, kind: input, shape index: {}]
  %s4 = inlined_call_operand.vmem [shape: f32[36,4], index: 4, kind: input, shape index: {}]
  %s5 = inlined_call_operand.vmem [shape: f32[1,4], index: 5, kind: input, shape index: {}]
  %s6 = inlined_call_operand.vmem [shape: f32[36,4], index: 6, kind: input, shape index: {}]
  %s7 = inlined_call_operand.vmem [shape: f32[1,4], index: 7, kind: input, shape index: {}]
  %s8 = inlined_call_operand.vmem [shape: f32[36,4], index: 8, kind: input, shape index: {}]
  %s9 = inlined_call_operand.vmem [shape: f32[1,4], index: 9, kind: input, shape index: {}]
  %s10 = inlined_call_operand.vmem [shape: f32[2,256,4], index: 10, kind: output, shape index: {}]
  %s11 = sld [smem:[#allocation0]]
  $region73: #{midblock_forward.1} parent=0
    _
  %s13 = ssub.s32 1, %s11
  %s14 = scalar_select 0, %s13, %s11
  loop: start=0, step=1, limit=4
  $region2: #{midblock_forward.1} parent=0 // loop_pre_header
    _
  $region3: #{midblock_forward.1} parent=0 // loop_header
    %s16 = sphi 0, %s20
    %p17 = scmp.ge.s32.totalorder %s16, 4
    %s26 = sphi 0, %s28
    %s29 = sphi 0, %s26
    %s30 = sphi 0, %s29
    %s46 = sphi 0, %s30
    %s52 = sphi 0, %s54
    %s55 = sphi 0, %s52
    %s56 = sphi 0, %s55
    %s72 = sphi 0, %s56
    %s76 = sphi 0, %s76
    %s78 = sphi 0, %s76
    %s79 = sphi 0, %s78
    %s93 = sphi 0, %s79
    %s97 = sphi 0, %s97
    %s99 = sphi 0, %s97
    %s100 = sphi 0, %s99
    %s114 = sphi 0, %s100
    %s118 = sphi 0, %s118
    %s120 = sphi 0, %s118
    %s121 = sphi 0, %s120
    %s135 = sphi 0, %s121
    %s139 = sphi 0, %s139
    %s141 = sphi 0, %s139
    %s142 = sphi 0, %s141
    %s156 = sphi 0, %s142
    %s160 = sphi 0, %s160
    %s162 = sphi 0, %s160
    %s163 = sphi 0, %s162
    %s177 = sphi 0, %s163
    %s181 = sphi 0, %s181
    %s183 = sphi 0, %s181
    %s184 = sphi 0, %s183
    %s198 = sphi 0, %s184
    %s202 = sphi 0, %s202
    %s204 = sphi 0, %s202
    %s205 = sphi 0, %s204
    %s219 = sphi 0, %s205
    %s223 = sphi 0, %s223
    %s225 = sphi 0, %s223
    %s226 = sphi 0, %s225
    %s240 = sphi 0, %s226
    %s246 = sphi 0, %s248
    %s249 = sphi 0, %s246
    %s250 = sphi 0, %s249
    %s266 = sphi 0, %s250
  $region4: #{midblock_forward.1} parent=0 // loop_header_branch
    %19 = sbr.rel (%p17) target = $region8
  $region5: #{midblock_forward.1} parent=0 // loop_body
    %s21 = ssub.s32 %s16, 1
    %s22 = ssub.s32 %s16, 2
    %s23 = sadd.s32 %s16, 1
    %s24 = ssub.s32 %s16, %s23
    %p25 = scmp.eq.s32.totalorder %s24, 0
    %s27 = sadd.s32 %s26, 1
    %s28 = scalar_select %p25, %s26, %s27
    %p31 = pneg %p25
    %p32 = scmp.eq.s32.totalorder %s16, 1
    %p33 = por %p31, %p32
    %p34 = scmp.ne.s32.totalorder %s26, %s29
    %p35 = scmp.eq.s32.totalorder %s16, 0
    %p36 = por %p34, %p35
    %p37 = scmp.ne.s32.totalorder %s26, %s29
    %p38 = scmp.eq.s32.totalorder %s21, 1
    %p39 = por %p37, %p38
    %p40 = scmp.ne.s32.totalorder %s29, %s30
    %p41 = scmp.eq.s32.totalorder %s21, 0
    %p42 = por %p40, %p41
    %p43 = scmp.ne.s32.totalorder %s29, %s30
    %p44 = scmp.eq.s32.totalorder %s22, 1
    %p45 = por %p43, %p44
    %p47 = scmp.ne.s32.totalorder %s30, %s46
    %p48 = scmp.eq.s32.totalorder %s22, 0
    %p49 = por %p47, %p48
    %s50 = ssub.s32 %s16, %s23
    %p51 = scmp.eq.s32.totalorder %s50, 0
    %s53 = sadd.s32 %s52, 1
    %s54 = scalar_select %p51, %s52, %s53
    %p57 = pneg %p51
    %p58 = scmp.eq.s32.totalorder %s16, 1
    %p59 = por %p57, %p58
    %p60 = scmp.ne.s32.totalorder %s52, %s55
    %p61 = scmp.eq.s32.totalorder %s16, 0
    %p62 = por %p60, %p61
    %p63 = scmp.ne.s32.totalorder %s52, %s55
    %p64 = scmp.eq.s32.totalorder %s21, 1
    %p65 = por %p63, %p64
    %p66 = scmp.ne.s32.totalorder %s55, %s56
    %p67 = scmp.eq.s32.totalorder %s21, 0
    %p68 = por %p66, %p67
    %p69 = scmp.ne.s32.totalorder %s55, %s56
    %p70 = scmp.eq.s32.totalorder %s22, 1
    %p71 = por %p69, %p70
    %p73 = scmp.ne.s32.totalorder %s56, %s72
    %p74 = scmp.eq.s32.totalorder %s22, 0
    %p75 = por %p73, %p74
    %s77 = sadd.s32 %s76, 1
    %p80 = scmp.eq.s32.totalorder %s16, 1
    %p81 = scmp.ne.s32.totalorder %s76, %s78
    %p82 = scmp.eq.s32.totalorder %s16, 0
    %p83 = por %p81, %p82
    %p84 = scmp.ne.s32.totalorder %s76, %s78
    %p85 = scmp.eq.s32.totalorder %s21, 1
    %p86 = por %p84, %p85
    %p87 = scmp.ne.s32.totalorder %s78, %s79
    %p88 = scmp.eq.s32.totalorder %s21, 0
    %p89 = por %p87, %p88
    %p90 = scmp.ne.s32.totalorder %s78, %s79
    %p91 = scmp.eq.s32.totalorder %s22, 1
    %p92 = por %p90, %p91
    %p94 = scmp.ne.s32.totalorder %s79, %s93
    %p95 = scmp.eq.s32.totalorder %s22, 0
    %p96 = por %p94, %p95
    %s98 = sadd.s32 %s97, 1
    %p101 = scmp.eq.s32.totalorder %s16, 1
    %p102 = scmp.ne.s32.totalorder %s97, %s99
    %p103 = scmp.eq.s32.totalorder %s16, 0
    %p104 = por %p102, %p103
    %p105 = scmp.ne.s32.totalorder %s97, %s99
    %p106 = scmp.eq.s32.totalorder %s21, 1
    %p107 = por %p105, %p106
    %p108 = scmp.ne.s32.totalorder %s99, %s100
    %p109 = scmp.eq.s32.totalorder %s21, 0
    %p110 = por %p108, %p109
    %p111 = scmp.ne.s32.totalorder %s99, %s100
    %p112 = scmp.eq.s32.totalorder %s22, 1
    %p113 = por %p111, %p112
    %p115 = scmp.ne.s32.totalorder %s100, %s114
    %p116 = scmp.eq.s32.totalorder %s22, 0
    %p117 = por %p115, %p116
    %s119 = sadd.s32 %s118, 1
    %p122 = scmp.eq.s32.totalorder %s16, 1
    %p123 = scmp.ne.s32.totalorder %s118, %s120
    %p124 = scmp.eq.s32.totalorder %s16, 0
    %p125 = por %p123, %p124
    %p126 = scmp.ne.s32.totalorder %s118, %s120
    %p127 = scmp.eq.s32.totalorder %s21, 1
    %p128 = por %p126, %p127
    %p129 = scmp.ne.s32.totalorder %s120, %s121
    %p130 = scmp.eq.s32.totalorder %s21, 0
    %p131 = por %p129, %p130
    %p132 = scmp.ne.s32.totalorder %s120, %s121
    %p133 = scmp.eq.s32.totalorder %s22, 1
    %p134 = por %p132, %p133
    %p136 = scmp.ne.s32.totalorder %s121, %s135
    %p137 = scmp.eq.s32.totalorder %s22, 0
    %p138 = por %p136, %p137
    %s140 = sadd.s32 %s139, 1
    %p143 = scmp.eq.s32.totalorder %s16, 1
    %p144 = scmp.ne.s32.totalorder %s139, %s141
    %p145 = scmp.eq.s32.totalorder %s16, 0
    %p146 = por %p144, %p145
    %p147 = scmp.ne.s32.totalorder %s139, %s141
    %p148 = scmp.eq.s32.totalorder %s21, 1
    %p149 = por %p147, %p148
    %p150 = scmp.ne.s32.totalorder %s141, %s142
    %p151 = scmp.eq.s32.totalorder %s21, 0
    %p152 = por %p150, %p151
    %p153 = scmp.ne.s32.totalorder %s141, %s142
    %p154 = scmp.eq.s32.totalorder %s22, 1
    %p155 = por %p153, %p154
    %p157 = scmp.ne.s32.totalorder %s142, %s156
    %p158 = scmp.eq.s32.totalorder %s22, 0
    %p159 = por %p157, %p158
    %s161 = sadd.s32 %s160, 1
    %p164 = scmp.eq.s32.totalorder %s16, 1
    %p165 = scmp.ne.s32.totalorder %s160, %s162
    %p166 = scmp.eq.s32.totalorder %s16, 0
    %p167 = por %p165, %p166
    %p168 = scmp.ne.s32.totalorder %s160, %s162
    %p169 = scmp.eq.s32.totalorder %s21, 1
    %p170 = por %p168, %p169
    %p171 = scmp.ne.s32.totalorder %s162, %s163
    %p172 = scmp.eq.s32.totalorder %s21, 0
    %p173 = por %p171, %p172
    %p174 = scmp.ne.s32.totalorder %s162, %s163
    %p175 = scmp.eq.s32.totalorder %s22, 1
    %p176 = por %p174, %p175
    %p178 = scmp.ne.s32.totalorder %s163, %s177
    %p179 = scmp.eq.s32.totalorder %s22, 0
    %p180 = por %p178, %p179
    %s182 = sadd.s32 %s181, 1
    %p185 = scmp.eq.s32.totalorder %s16, 1
    %p186 = scmp.ne.s32.totalorder %s181, %s183
    %p187 = scmp.eq.s32.totalorder %s16, 0
    %p188 = por %p186, %p187
    %p189 = scmp.ne.s32.totalorder %s181, %s183
    %p190 = scmp.eq.s32.totalorder %s21, 1
    %p191 = por %p189, %p190
    %p192 = scmp.ne.s32.totalorder %s183, %s184
    %p193 = scmp.eq.s32.totalorder %s21, 0
    %p194 = por %p192, %p193
    %p195 = scmp.ne.s32.totalorder %s183, %s184
    %p196 = scmp.eq.s32.totalorder %s22, 1
    %p197 = por %p195, %p196
    %p199 = scmp.ne.s32.totalorder %s184, %s198
    %p200 = scmp.eq.s32.totalorder %s22, 0
    %p201 = por %p199, %p200
    %s203 = sadd.s32 %s202, 1
    %p206 = scmp.eq.s32.totalorder %s16, 1
    %p207 = scmp.ne.s32.totalorder %s202, %s204
    %p208 = scmp.eq.s32.totalorder %s16, 0
    %p209 = por %p207, %p208
    %p210 = scmp.ne.s32.totalorder %s202, %s204
    %p211 = scmp.eq.s32.totalorder %s21, 1
    %p212 = por %p210, %p211
    %p213 = scmp.ne.s32.totalorder %s204, %s205
    %p214 = scmp.eq.s32.totalorder %s21, 0
    %p215 = por %p213, %p214
    %p216 = scmp.ne.s32.totalorder %s204, %s205
    %p217 = scmp.eq.s32.totalorder %s22, 1
    %p218 = por %p216, %p217
    %p220 = scmp.ne.s32.totalorder %s205, %s219
    %p221 = scmp.eq.s32.totalorder %s22, 0
    %p222 = por %p220, %p221
    %s224 = sadd.s32 %s223, 1
    %p227 = scmp.eq.s32.totalorder %s16, 1
    %p228 = scmp.ne.s32.totalorder %s223, %s225
    %p229 = scmp.eq.s32.totalorder %s16, 0
    %p230 = por %p228, %p229
    %p231 = scmp.ne.s32.totalorder %s223, %s225
    %p232 = scmp.eq.s32.totalorder %s21, 1
    %p233 = por %p231, %p232
    %p234 = scmp.ne.s32.totalorder %s225, %s226
    %p235 = scmp.eq.s32.totalorder %s21, 0
    %p236 = por %p234, %p235
    %p237 = scmp.ne.s32.totalorder %s225, %s226
    %p238 = scmp.eq.s32.totalorder %s22, 1
    %p239 = por %p237, %p238
    %p241 = scmp.ne.s32.totalorder %s226, %s240
    %p242 = scmp.eq.s32.totalorder %s22, 0
    %p243 = por %p241, %p242
    %s244 = ssub.s32 %s16, %s23
    %p245 = scmp.eq.s32.totalorder %s244, 0
    %s247 = sadd.s32 %s246, 1
    %s248 = scalar_select %p245, %s246, %s247
    %p251 = pneg %p245
    %p252 = scmp.eq.s32.totalorder %s16, 1
    %p253 = por %p251, %p252
    %p254 = scmp.ne.s32.totalorder %s246, %s249
    %p255 = scmp.eq.s32.totalorder %s16, 0
    %p256 = por %p254, %p255
    %p257 = scmp.ne.s32.totalorder %s246, %s249
    %p258 = scmp.eq.s32.totalorder %s21, 1
    %p259 = por %p257, %p258
    %p260 = scmp.ne.s32.totalorder %s249, %s250
    %p261 = scmp.eq.s32.totalorder %s21, 0
    %p262 = por %p260, %p261
    %p263 = scmp.ne.s32.totalorder %s249, %s250
    %p264 = scmp.eq.s32.totalorder %s22, 1
    %p265 = por %p263, %p264
    %p267 = scmp.ne.s32.totalorder %s250, %s266
    %p268 = scmp.eq.s32.totalorder %s22, 0
    %p269 = por %p267, %p268
    %p270 = scmp.le.s32.totalorder 1, %s16
    %p271 = scmp.lt.s32.totalorder %s16, 3
    %p272 = pnand %p270, %p271
    %p273 = pneg %p272
    // Predicated region
    $region9: #{midblock_forward.1} parent=5 // pred_check
      _
    $region10: #{midblock_forward.1} parent=5 // pred_check_branch
      %275 = sbr.rel (%p272) target = $region12
    $region11: #{midblock_forward.1} parent=5 // pred_region
      %s276 = ssub.s32 %s16, 1
      // Predicated region
      $region13: #{midblock_forward.1} parent=11 // pred_check
        %p277 = pneg %p89
      $region14: #{midblock_forward.1} parent=11 // pred_check_branch
        %279 = sbr.rel (%p277) target = $region16
      $region15: #{midblock_forward.1} parent=11 // pred_region
        _
      $region16: #{midblock_forward.1} parent=11 // pred_fallthru
        _
      // Predicated region
      $region17: #{midblock_forward.1} parent=11 // pred_check
        %p280 = pneg %p110
      $region18: #{midblock_forward.1} parent=11 // pred_check_branch
        %282 = sbr.rel (%p280) target = $region20
      $region19: #{midblock_forward.1} parent=11 // pred_region
        _
      $region20: #{midblock_forward.1} parent=11 // pred_fallthru
        _
      // Predicated region
      $region21: #{midblock_forward.1} parent=11 // pred_check
        %p283 = pneg %p131
      $region22: #{midblock_forward.1} parent=11 // pred_check_branch
        %285 = sbr.rel (%p283) target = $region24
      $region23: #{midblock_forward.1} parent=11 // pred_region
        _
      $region24: #{midblock_forward.1} parent=11 // pred_fallthru
        _
      // Predicated region
      $region25: #{midblock_forward.1} parent=11 // pred_check
        %p286 = pneg %p152
      $region26: #{midblock_forward.1} parent=11 // pred_check_branch
        %288 = sbr.rel (%p286) target = $region28
      $region27: #{midblock_forward.1} parent=11 // pred_region
        _
      $region28: #{midblock_forward.1} parent=11 // pred_fallthru
        _
      // Predicated region
      $region29: #{midblock_forward.1} parent=11 // pred_check
        %p289 = pneg %p173
      $region30: #{midblock_forward.1} parent=11 // pred_check_branch
        %291 = sbr.rel (%p289) target = $region32
      $region31: #{midblock_forward.1} parent=11 // pred_region
        _
      $region32: #{midblock_forward.1} parent=11 // pred_fallthru
        _
      // Predicated region
      $region33: #{midblock_forward.1} parent=11 // pred_check
        %p292 = pneg %p194
      $region34: #{midblock_forward.1} parent=11 // pred_check_branch
        %294 = sbr.rel (%p292) target = $region36
      $region35: #{midblock_forward.1} parent=11 // pred_region
        _
      $region36: #{midblock_forward.1} parent=11 // pred_fallthru
        _
      // Predicated region
      $region37: #{midblock_forward.1} parent=11 // pred_check
        %p295 = pneg %p215
      $region38: #{midblock_forward.1} parent=11 // pred_check_branch
        %297 = sbr.rel (%p295) target = $region40
      $region39: #{midblock_forward.1} parent=11 // pred_region
        _
      $region40: #{midblock_forward.1} parent=11 // pred_fallthru
        _
      // Predicated region
      $region41: #{midblock_forward.1} parent=11 // pred_check
        %p298 = pneg %p236
      $region42: #{midblock_forward.1} parent=11 // pred_check_branch
        %300 = sbr.rel (%p298) target = $region44
      $region43: #{midblock_forward.1} parent=11 // pred_region
        _
      $region44: #{midblock_forward.1} parent=11 // pred_fallthru
        _
    $region12: #{midblock_forward.1} parent=5 // pred_fallthru
      _
    %p301 = scmp.lt.s32.totalorder %s16, 2
    // Predicated region
    $region45: #{midblock_forward.1} parent=5 // pred_check
      %p302 = pneg %p301
    $region46: #{midblock_forward.1} parent=5 // pred_check_branch
      %304 = sbr.rel (%p302) target = $region48
    $region47: #{midblock_forward.1} parent=5 // pred_region
      // Predicated region
      $region49: #{midblock_forward.1} parent=47 // pred_check
        %p305 = pneg %p36
      $region50: #{midblock_forward.1} parent=47 // pred_check_branch
        %307 = sbr.rel (%p305) target = $region52
      $region51: #{midblock_forward.1} parent=47 // pred_region
        %p308 = scmp.lt.s32.totalorder %s16, 1
        %s309 = scalar_select %p308, %s16, 1
        %s310 = smul.addr %s309, 32
        %s311 = smul.addr %s310, 8
        %s312 = scalar_lea.vmem %s0, %s311
      $region52: #{midblock_forward.1} parent=47 // pred_fallthru
        _
      // Predicated region
      $region53: #{midblock_forward.1} parent=47 // pred_check
        %p313 = pneg %p62
      $region54: #{midblock_forward.1} parent=47 // pred_check_branch
        %315 = sbr.rel (%p313) target = $region56
      $region55: #{midblock_forward.1} parent=47 // pred_region
        %p316 = scmp.lt.s32.totalorder %s16, 1
        %s317 = scalar_select %p316, %s16, 1
        %s318 = scalar_lea.vmem %s1, %s317
      $region56: #{midblock_forward.1} parent=47 // pred_fallthru
        _
    $region48: #{midblock_forward.1} parent=5 // pred_fallthru
      _
    %p319 = scmp.le.s32.totalorder 1, %s16
    %p320 = scmp.lt.s32.totalorder %s16, 3
    %p321 = pnand %p319, %p320
    %p322 = pneg %p321
    // Predicated region
    $region57: #{midblock_forward.1} parent=5 // pred_check
      _
    $region58: #{midblock_forward.1} parent=5 // pred_check_branch
      %324 = sbr.rel (%p321) target = $region60
    $region59: #{midblock_forward.1} parent=5 // pred_region
      %s325 = ssub.s32 %s16, 1
      %p326 = scmp.lt.s32.totalorder %s21, 1
      %s327 = scalar_select %p326, %s21, 1
      %s328 = smul.addr %s327, 32
      %s329 = smul.addr %s328, 8
      %s330 = scalar_lea.vmem %s0, %s329
      %p331 = pneg %p42
      %p332 = pneg %p39
      %p333 = scmp.lt.s32.totalorder %s21, 1
      %s334 = scalar_select %p333, %s21, 1
      %s335 = scalar_lea.vmem %s1, %s334
      %p336 = pneg %p68
      %p337 = pneg %p65
      %p338 = pneg %p89
      %p339 = pneg %p86
      %p340 = pneg %p110
      %p341 = pneg %p107
      %p342 = pneg %p131
      %p343 = pneg %p128
      %p344 = pneg %p152
      %p345 = pneg %p149
      %p346 = pneg %p173
      %p347 = pneg %p170
      %p348 = pneg %p194
      %p349 = pneg %p191
      %p350 = pneg %p215
      %p351 = pneg %p212
      %p352 = pneg %p236
      %p353 = pneg %p233
      %p354 = pneg %p262
      %p355 = pneg %p259
      %p356 = scmp.lt.s32.totalorder %s21, 1
      %s357 = scalar_select %p356, %s21, 1
      %s358 = smul.addr %s357, 32
      %s359 = smul.addr %s358, 8
      %s360 = scalar_lea.vmem %s10, %s359
      %p361 = scmp.lt.s32.totalorder %s21, 1
      %s362 = scalar_select %p361, %s21, 1
      %s363 = smul.addr %s362, 32
      %s364 = smul.addr %s363, 8
      %s365 = scalar_lea.vmem %s0, %s364
      %p366 = scmp.lt.s32.totalorder %s21, 1
      %s367 = scalar_select %p366, %s21, 1
      %s368 = scalar_lea.vmem %s1, %s367
      %p369 = scmp.lt.s32.totalorder %s21, 1
      %s370 = scalar_select %p369, %s21, 1
      %s371 = smul.addr %s370, 32
      %s372 = smul.addr %s371, 8
      %s373 = scalar_lea.vmem %s10, %s372
      %v374 = vld [vmem:[%s365] sm:$0xff]
      %v375 = vld [vmem:[%s365 + $0x8] sm:$0xff]
      %v376 = vld [vmem:[%s365 + $0x10] sm:$0xff]
      %v377 = vld [vmem:[%s365 + $0x18] sm:$0xff]
      %v378 = vld [vmem:[%s365 + $0x20] sm:$0xff]
      %v379 = vld [vmem:[%s365 + $0x28] sm:$0xff]
      %v380 = vld [vmem:[%s365 + $0x30] sm:$0xff]
      %v381 = vld [vmem:[%s365 + $0x38] sm:$0xff]
      %v382 = vld [vmem:[%s365 + $0x40] sm:$0xff]
      %v383 = vld [vmem:[%s365 + $0x48] sm:$0xff]
      %v384 = vld [vmem:[%s365 + $0x50] sm:$0xff]
      %v385 = vld [vmem:[%s365 + $0x58] sm:$0xff]
      %v386 = vld [vmem:[%s365 + $0x60] sm:$0xff]
      %v387 = vld [vmem:[%s365 + $0x68] sm:$0xff]
      %v388 = vld [vmem:[%s365 + $0x70] sm:$0xff]
      %v389 = vld [vmem:[%s365 + $0x78] sm:$0xff]
      %v390 = vld [vmem:[%s365 + $0x80] sm:$0xff]
      %v391 = vld [vmem:[%s365 + $0x88] sm:$0xff]
      %v392 = vld [vmem:[%s365 + $0x90] sm:$0xff]
      %v393 = vld [vmem:[%s365 + $0x98] sm:$0xff]
      %v394 = vld [vmem:[%s365 + $0xa0] sm:$0xff]
      %v395 = vld [vmem:[%s365 + $0xa8] sm:$0xff]
      %v396 = vld [vmem:[%s365 + $0xb0] sm:$0xff]
      %v397 = vld [vmem:[%s365 + $0xb8] sm:$0xff]
      %v398 = vld [vmem:[%s365 + $0xc0] sm:$0xff]
      %v399 = vld [vmem:[%s365 + $0xc8] sm:$0xff]
      %v400 = vld [vmem:[%s365 + $0xd0] sm:$0xff]
      %v401 = vld [vmem:[%s365 + $0xd8] sm:$0xff]
      %v402 = vld [vmem:[%s365 + $0xe0] sm:$0xff]
      %v403 = vld [vmem:[%s365 + $0xe8] sm:$0xff]
      %v404 = vld [vmem:[%s365 + $0xf0] sm:$0xff]
      %v405 = vld [vmem:[%s365 + $0xf8] sm:$0xff]
      %v406 = vld [vmem:[%s368] sm:$0x1]
      %s407 = scalar_lea.vmem [#allocation2], 24
      %vm408 = vcmask 31744
      %409 = vst.msk [vmem:[%s407 + $0x1] sm:$0xff] %vm408, %v374
      %410 = vst.msk [vmem:[%s407 + $0x9] sm:$0xff] %vm408, %v375
      %411 = vst.msk [vmem:[%s407 + $0x19] sm:$0xff] %vm408, %v376
      %412 = vst.msk [vmem:[%s407 + $0x21] sm:$0xff] %vm408, %v377
      %413 = vst.msk [vmem:[%s407 + $0x31] sm:$0xff] %vm408, %v378
      %414 = vst.msk [vmem:[%s407 + $0x39] sm:$0xff] %vm408, %v379
      %415 = vst.msk [vmem:[%s407 + $0x49] sm:$0xff] %vm408, %v380
      %416 = vst.msk [vmem:[%s407 + $0x51] sm:$0xff] %vm408, %v381
      %417 = vst.msk [vmem:[%s407 + $0x61] sm:$0xff] %vm408, %v382
      %418 = vst.msk [vmem:[%s407 + $0x69] sm:$0xff] %vm408, %v383
      %419 = vst.msk [vmem:[%s407 + $0x79] sm:$0xff] %vm408, %v384
      %420 = vst.msk [vmem:[%s407 + $0x81] sm:$0xff] %vm408, %v385
      %421 = vst.msk [vmem:[%s407 + $0x91] sm:$0xff] %vm408, %v386
      %422 = vst.msk [vmem:[%s407 + $0x99] sm:$0xff] %vm408, %v387
      %423 = vst.msk [vmem:[%s407 + $0xa9] sm:$0xff] %vm408, %v388
      %424 = vst.msk [vmem:[%s407 + $0xb1] sm:$0xff] %vm408, %v389
      %425 = vst.msk [vmem:[%s407 + $0xc1] sm:$0xff] %vm408, %v390
      %426 = vst.msk [vmem:[%s407 + $0xc9] sm:$0xff] %vm408, %v391
      %427 = vst.msk [vmem:[%s407 + $0xd9] sm:$0xff] %vm408, %v392
      %428 = vst.msk [vmem:[%s407 + $0xe1] sm:$0xff] %vm408, %v393
      %429 = vst.msk [vmem:[%s407 + $0xf1] sm:$0xff] %vm408, %v394
      %430 = vst.msk [vmem:[%s407 + $0xf9] sm:$0xff] %vm408, %v395
      %431 = vst.msk [vmem:[%s407 + $0x109] sm:$0xff] %vm408, %v396
      %432 = vst.msk [vmem:[%s407 + $0x111] sm:$0xff] %vm408, %v397
      %433 = vst.msk [vmem:[%s407 + $0x121] sm:$0xff] %vm408, %v398
      %434 = vst.msk [vmem:[%s407 + $0x129] sm:$0xff] %vm408, %v399
      %435 = vst.msk [vmem:[%s407 + $0x139] sm:$0xff] %vm408, %v400
      %436 = vst.msk [vmem:[%s407 + $0x141] sm:$0xff] %vm408, %v401
      %437 = vst.msk [vmem:[%s407 + $0x151] sm:$0xff] %vm408, %v402
      %438 = vst.msk [vmem:[%s407 + $0x159] sm:$0xff] %vm408, %v403
      %439 = vst.msk [vmem:[%s407 + $0x169] sm:$0xff] %vm408, %v404
      %440 = vst.msk [vmem:[%s407 + $0x171] sm:$0xff] %vm408, %v405
      %441 = vst.msk [vmem:[#allocation2 + $0x1] sm:$0xff] %vm408, %v374
      %442 = vst.msk [vmem:[#allocation2 + $0x9] sm:$0xff] %vm408, %v375
      %s443 = scalar_lea.vmem [#allocation2], 408
      %444 = vst.msk [vmem:[%s443 + $0x1] sm:$0xff] %vm408, %v404
      %445 = vst.msk [vmem:[%s443 + $0x9] sm:$0xff] %vm408, %v405
      %v446 = vld [vmem:[#allocation2 + $0x1] sm:$0x1]
      %v447 = vld [vmem:[#allocation2 + $0x19] sm:$0x1]
      %v448 = vld [vmem:[#allocation2 + $0x31] sm:$0x1]
      %v449 = vld [vmem:[#allocation2 + $0x49] sm:$0x1]
      %v450 = vld [vmem:[#allocation2 + $0x61] sm:$0x1]
      %v451 = vld [vmem:[#allocation2 + $0x79] sm:$0x1]
      %v452 = vld [vmem:[#allocation2 + $0x91] sm:$0x1]
      %v453 = vld [vmem:[#allocation2 + $0xa9] sm:$0x1]
      %v454 = vld [vmem:[#allocation2 + $0xc1] sm:$0x1]
      %v455 = vld [vmem:[#allocation2 + $0xd9] sm:$0x1]
      %v456 = vld [vmem:[#allocation2 + $0xf1] sm:$0x1]
      %v457 = vld [vmem:[#allocation2 + $0x109] sm:$0x1]
      %v458 = vld [vmem:[#allocation2 + $0x121] sm:$0x1]
      %v459 = vld [vmem:[#allocation2 + $0x139] sm:$0x1]
      %v460 = vld [vmem:[#allocation2 + $0x151] sm:$0x1]
      %v461 = vld [vmem:[#allocation2 + $0x169] sm:$0x1]
      %v462 = vld [vmem:[#allocation2 + $0x181] sm:$0x1]
      %v463 = vld [vmem:[#allocation2 + $0x199] sm:$0x1]
      %vm464 = vcmask 24576
      %465 = vst.msk [vmem:[#allocation2] sm:$0x1] %vm464, %v446
      %466 = vst.msk [vmem:[#allocation2 + $0x18] sm:$0x1] %vm464, %v447
      %467 = vst.msk [vmem:[#allocation2 + $0x30] sm:$0x1] %vm464, %v448
      %468 = vst.msk [vmem:[#allocation2 + $0x48] sm:$0x1] %vm464, %v449
      %469 = vst.msk [vmem:[#allocation2 + $0x60] sm:$0x1] %vm464, %v450
      %470 = vst.msk [vmem:[#allocation2 + $0x78] sm:$0x1] %vm464, %v451
      %471 = vst.msk [vmem:[#allocation2 + $0x90] sm:$0x1] %vm464, %v452
      %472 = vst.msk [vmem:[#allocation2 + $0xa8] sm:$0x1] %vm464, %v453
      %473 = vst.msk [vmem:[#allocation2 + $0xc0] sm:$0x1] %vm464, %v454
      %474 = vst.msk [vmem:[#allocation2 + $0xd8] sm:$0x1] %vm464, %v455
      %475 = vst.msk [vmem:[#allocation2 + $0xf0] sm:$0x1] %vm464, %v456
      %476 = vst.msk [vmem:[#allocation2 + $0x108] sm:$0x1] %vm464, %v457
      %477 = vst.msk [vmem:[#allocation2 + $0x120] sm:$0x1] %vm464, %v458
      %478 = vst.msk [vmem:[#allocation2 + $0x138] sm:$0x1] %vm464, %v459
      %479 = vst.msk [vmem:[#allocation2 + $0x150] sm:$0x1] %vm464, %v460
      %480 = vst.msk [vmem:[#allocation2 + $0x168] sm:$0x1] %vm464, %v461
      %481 = vst.msk [vmem:[#allocation2 + $0x180] sm:$0x1] %vm464, %v462
      %482 = vst.msk [vmem:[#allocation2 + $0x198] sm:$0x1] %vm464, %v463
      %v483 = vld [vmem:[#allocation2 + $0x10] sm:$0x1]
      %v484 = vld [vmem:[#allocation2 + $0x28] sm:$0x1]
      %v485 = vld [vmem:[#allocation2 + $0x40] sm:$0x1]
      %v486 = vld [vmem:[#allocation2 + $0x58] sm:$0x1]
      %v487 = vld [vmem:[#allocation2 + $0x70] sm:$0x1]
      %v488 = vld [vmem:[#allocation2 + $0x88] sm:$0x1]
      %v489 = vld [vmem:[#allocation2 + $0xa0] sm:$0x1]
      %v490 = vld [vmem:[#allocation2 + $0xb8] sm:$0x1]
      %v491 = vld [vmem:[#allocation2 + $0xd0] sm:$0x1]
      %v492 = vld [vmem:[#allocation2 + $0xe8] sm:$0x1]
      %v493 = vld [vmem:[#allocation2 + $0x100] sm:$0x1]
      %v494 = vld [vmem:[#allocation2 + $0x118] sm:$0x1]
      %v495 = vld [vmem:[#allocation2 + $0x130] sm:$0x1]
      %v496 = vld [vmem:[#allocation2 + $0x148] sm:$0x1]
      %v497 = vld [vmem:[#allocation2 + $0x160] sm:$0x1]
      %v498 = vld [vmem:[#allocation2 + $0x178] sm:$0x1]
      %v499 = vld [vmem:[#allocation2 + $0x190] sm:$0x1]
      %v500 = vld [vmem:[#allocation2 + $0x1a8] sm:$0x1]
      %501 = vst.msk [vmem:[#allocation2 + $0x11] sm:$0x1] %vm464, %v483
      %502 = vst.msk [vmem:[#allocation2 + $0x29] sm:$0x1] %vm464, %v484
      %503 = vst.msk [vmem:[#allocation2 + $0x41] sm:$0x1] %vm464, %v485
      %504 = vst.msk [vmem:[#allocation2 + $0x59] sm:$0x1] %vm464, %v486
      %505 = vst.msk [vmem:[#allocation2 + $0x71] sm:$0x1] %vm464, %v487
      %506 = vst.msk [vmem:[#allocation2 + $0x89] sm:$0x1] %vm464, %v488
      %507 = vst.msk [vmem:[#allocation2 + $0xa1] sm:$0x1] %vm464, %v489
      %508 = vst.msk [vmem:[#allocation2 + $0xb9] sm:$0x1] %vm464, %v490
      %509 = vst.msk [vmem:[#allocation2 + $0xd1] sm:$0x1] %vm464, %v491
      %510 = vst.msk [vmem:[#allocation2 + $0xe9] sm:$0x1] %vm464, %v492
      %511 = vst.msk [vmem:[#allocation2 + $0x101] sm:$0x1] %vm464, %v493
      %512 = vst.msk [vmem:[#allocation2 + $0x119] sm:$0x1] %vm464, %v494
      %513 = vst.msk [vmem:[#allocation2 + $0x131] sm:$0x1] %vm464, %v495
      %514 = vst.msk [vmem:[#allocation2 + $0x149] sm:$0x1] %vm464, %v496
      %515 = vst.msk [vmem:[#allocation2 + $0x161] sm:$0x1] %vm464, %v497
      %516 = vst.msk [vmem:[#allocation2 + $0x179] sm:$0x1] %vm464, %v498
      %517 = vst.msk [vmem:[#allocation2 + $0x191] sm:$0x1] %vm464, %v499
      %518 = vst.msk [vmem:[#allocation2 + $0x1a9] sm:$0x1] %vm464, %v500
      %v519 = vld [vmem:[#allocation2] sm:$0xff]
      %v520 = vld [vmem:[#allocation2 + $0x8] sm:$0xff]
      %v521 = vld [vmem:[#allocation2 + $0x18] sm:$0xff]
      %v522 = vld [vmem:[#allocation2 + $0x20] sm:$0xff]
      %v523 = vld [vmem:[#allocation2 + $0x30] sm:$0xff]
      %v524 = vld [vmem:[#allocation2 + $0x38] sm:$0xff]
      %v525 = vld [vmem:[#allocation2 + $0x48] sm:$0xff]
      %v526 = vld [vmem:[#allocation2 + $0x50] sm:$0xff]
      %v527 = vld [vmem:[#allocation2 + $0x60] sm:$0xff]
      %v528 = vld [vmem:[#allocation2 + $0x68] sm:$0xff]
      %v529 = vld [vmem:[#allocation2 + $0x78] sm:$0xff]
      %v530 = vld [vmem:[#allocation2 + $0x80] sm:$0xff]
      %v531 = vld [vmem:[#allocation2 + $0x90] sm:$0xff]
      %v532 = vld [vmem:[#allocation2 + $0x98] sm:$0xff]
      %v533 = vld [vmem:[#allocation2 + $0xa8] sm:$0xff]
      %v534 = vld [vmem:[#allocation2 + $0xb0] sm:$0xff]
      %v535 = vld [vmem:[#allocation2 + $0xc0] sm:$0xff]
      %v536 = vld [vmem:[#allocation2 + $0xc8] sm:$0xff]
      %v537 = vld [vmem:[#allocation2 + $0xd8] sm:$0xff]
      %v538 = vld [vmem:[#allocation2 + $0xe0] sm:$0xff]
      %v539 = vld [vmem:[#allocation2 + $0xf0] sm:$0xff]
      %v540 = vld [vmem:[#allocation2 + $0xf8] sm:$0xff]
      %v541 = vld [vmem:[#allocation2 + $0x108] sm:$0xff]
      %v542 = vld [vmem:[#allocation2 + $0x110] sm:$0xff]
      %v543 = vld [vmem:[#allocation2 + $0x120] sm:$0xff]
      %v544 = vld [vmem:[#allocation2 + $0x128] sm:$0xff]
      %v545 = vld [vmem:[#allocation2 + $0x138] sm:$0xff]
      %v546 = vld [vmem:[#allocation2 + $0x140] sm:$0xff]
      %v547 = vld [vmem:[#allocation2 + $0x150] sm:$0xff]
      %v548 = vld [vmem:[#allocation2 + $0x158] sm:$0xff]
      %v549 = vld [vmem:[#allocation2 + $0x168] sm:$0xff]
      %v550 = vld [vmem:[#allocation2 + $0x170] sm:$0xff]
      %551 = vst.msk [vmem:[#allocation3] sm:$0xff] %vm408, %v519
      %552 = vst.msk [vmem:[#allocation3 + $0x8] sm:$0xff] %vm408, %v520
      %553 = vst.msk [vmem:[#allocation3 + $0x10] sm:$0xff] %vm408, %v521
      %554 = vst.msk [vmem:[#allocation3 + $0x18] sm:$0xff] %vm408, %v522
      %555 = vst.msk [vmem:[#allocation3 + $0x20] sm:$0xff] %vm408, %v523
      %556 = vst.msk [vmem:[#allocation3 + $0x28] sm:$0xff] %vm408, %v524
      %557 = vst.msk [vmem:[#allocation3 + $0x30] sm:$0xff] %vm408, %v525
      %558 = vst.msk [vmem:[#allocation3 + $0x38] sm:$0xff] %vm408, %v526
      %559 = vst.msk [vmem:[#allocation3 + $0x40] sm:$0xff] %vm408, %v527
      %560 = vst.msk [vmem:[#allocation3 + $0x48] sm:$0xff] %vm408, %v528
      %561 = vst.msk [vmem:[#allocation3 + $0x50] sm:$0xff] %vm408, %v529
      %562 = vst.msk [vmem:[#allocation3 + $0x58] sm:$0xff] %vm408, %v530
      %563 = vst.msk [vmem:[#allocation3 + $0x60] sm:$0xff] %vm408, %v531
      %564 = vst.msk [vmem:[#allocation3 + $0x68] sm:$0xff] %vm408, %v532
      %565 = vst.msk [vmem:[#allocation3 + $0x70] sm:$0xff] %vm408, %v533
      %566 = vst.msk [vmem:[#allocation3 + $0x78] sm:$0xff] %vm408, %v534
      %567 = vst.msk [vmem:[#allocation3 + $0x80] sm:$0xff] %vm408, %v535
      %568 = vst.msk [vmem:[#allocation3 + $0x88] sm:$0xff] %vm408, %v536
      %569 = vst.msk [vmem:[#allocation3 + $0x90] sm:$0xff] %vm408, %v537
      %570 = vst.msk [vmem:[#allocation3 + $0x98] sm:$0xff] %vm408, %v538
      %571 = vst.msk [vmem:[#allocation3 + $0xa0] sm:$0xff] %vm408, %v539
      %572 = vst.msk [vmem:[#allocation3 + $0xa8] sm:$0xff] %vm408, %v540
      %573 = vst.msk [vmem:[#allocation3 + $0xb0] sm:$0xff] %vm408, %v541
      %574 = vst.msk [vmem:[#allocation3 + $0xb8] sm:$0xff] %vm408, %v542
      %575 = vst.msk [vmem:[#allocation3 + $0xc0] sm:$0xff] %vm408, %v543
      %576 = vst.msk [vmem:[#allocation3 + $0xc8] sm:$0xff] %vm408, %v544
      %577 = vst.msk [vmem:[#allocation3 + $0xd0] sm:$0xff] %vm408, %v545
      %578 = vst.msk [vmem:[#allocation3 + $0xd8] sm:$0xff] %vm408, %v546
      %579 = vst.msk [vmem:[#allocation3 + $0xe0] sm:$0xff] %vm408, %v547
      %580 = vst.msk [vmem:[#allocation3 + $0xe8] sm:$0xff] %vm408, %v548
      %581 = vst.msk [vmem:[#allocation3 + $0xf0] sm:$0xff] %vm408, %v549
      %582 = vst.msk [vmem:[#allocation3 + $0xf8] sm:$0xff] %vm408, %v550
      %v583 = vld [vmem:[#allocation2 + $0x1] sm:$0xff]
      %v584 = vld [vmem:[#allocation2 + $0x9] sm:$0xff]
      %v585 = vld [vmem:[#allocation2 + $0x19] sm:$0xff]
      %v586 = vld [vmem:[#allocation2 + $0x21] sm:$0xff]
      %v587 = vld [vmem:[#allocation2 + $0x31] sm:$0xff]
      %v588 = vld [vmem:[#allocation2 + $0x39] sm:$0xff]
      %v589 = vld [vmem:[#allocation2 + $0x49] sm:$0xff]
      %v590 = vld [vmem:[#allocation2 + $0x51] sm:$0xff]
      %v591 = vld [vmem:[#allocation2 + $0x61] sm:$0xff]
      %v592 = vld [vmem:[#allocation2 + $0x69] sm:$0xff]
      %v593 = vld [vmem:[#allocation2 + $0x79] sm:$0xff]
      %v594 = vld [vmem:[#allocation2 + $0x81] sm:$0xff]
      %v595 = vld [vmem:[#allocation2 + $0x91] sm:$0xff]
      %v596 = vld [vmem:[#allocation2 + $0x99] sm:$0xff]
      %v597 = vld [vmem:[#allocation2 + $0xa9] sm:$0xff]
      %v598 = vld [vmem:[#allocation2 + $0xb1] sm:$0xff]
      %v599 = vld [vmem:[#allocation2 + $0xc1] sm:$0xff]
      %v600 = vld [vmem:[#allocation2 + $0xc9] sm:$0xff]
      %v601 = vld [vmem:[#allocation2 + $0xd9] sm:$0xff]
      %v602 = vld [vmem:[#allocation2 + $0xe1] sm:$0xff]
      %v603 = vld [vmem:[#allocation2 + $0xf1] sm:$0xff]
      %v604 = vld [vmem:[#allocation2 + $0xf9] sm:$0xff]
      %v605 = vld [vmem:[#allocation2 + $0x109] sm:$0xff]
      %v606 = vld [vmem:[#allocation2 + $0x111] sm:$0xff]
      %v607 = vld [vmem:[#allocation2 + $0x121] sm:$0xff]
      %v608 = vld [vmem:[#allocation2 + $0x129] sm:$0xff]
      %v609 = vld [vmem:[#allocation2 + $0x139] sm:$0xff]
      %v610 = vld [vmem:[#allocation2 + $0x141] sm:$0xff]
      %v611 = vld [vmem:[#allocation2 + $0x151] sm:$0xff]
      %v612 = vld [vmem:[#allocation2 + $0x159] sm:$0xff]
      %v613 = vld [vmem:[#allocation2 + $0x169] sm:$0xff]
      %v614 = vld [vmem:[#allocation2 + $0x171] sm:$0xff]
      %647 = vrot.lane.b32.xlu0 %v583, 4
      %v648 = vpop.permute.xlu0 %647
      %649 = vrot.lane.b32.xlu0 %v584, 4
      %v650 = vpop.permute.xlu0 %649
      %651 = vrot.lane.b32.xlu0 %v585, 4
      %v652 = vpop.permute.xlu0 %651
      %653 = vrot.lane.b32.xlu0 %v586, 4
      %v654 = vpop.permute.xlu0 %653
      %655 = vrot.lane.b32.xlu0 %v587, 4
      %v656 = vpop.permute.xlu0 %655
      %657 = vrot.lane.b32.xlu0 %v588, 4
      %v658 = vpop.permute.xlu0 %657
      %659 = vrot.lane.b32.xlu0 %v589, 4
      %v660 = vpop.permute.xlu0 %659
      %661 = vrot.lane.b32.xlu0 %v590, 4
      %v662 = vpop.permute.xlu0 %661
      %663 = vrot.lane.b32.xlu0 %v591, 4
      %v664 = vpop.permute.xlu0 %663
      %665 = vrot.lane.b32.xlu0 %v592, 4
      %v666 = vpop.permute.xlu0 %665
      %667 = vrot.lane.b32.xlu0 %v593, 4
      %v668 = vpop.permute.xlu0 %667
      %669 = vrot.lane.b32.xlu0 %v594, 4
      %v670 = vpop.permute.xlu0 %669
      %671 = vrot.lane.b32.xlu0 %v595, 4
      %v672 = vpop.permute.xlu0 %671
      %673 = vrot.lane.b32.xlu0 %v596, 4
      %v674 = vpop.permute.xlu0 %673
      %675 = vrot.lane.b32.xlu0 %v597, 4
      %v676 = vpop.permute.xlu0 %675
      %677 = vrot.lane.b32.xlu0 %v598, 4
      %v678 = vpop.permute.xlu0 %677
      %679 = vrot.lane.b32.xlu0 %v599, 4
      %v680 = vpop.permute.xlu0 %679
      %681 = vrot.lane.b32.xlu0 %v600, 4
      %v682 = vpop.permute.xlu0 %681
      %683 = vrot.lane.b32.xlu0 %v601, 4
      %v684 = vpop.permute.xlu0 %683
      %685 = vrot.lane.b32.xlu0 %v602, 4
      %v686 = vpop.permute.xlu0 %685
      %687 = vrot.lane.b32.xlu0 %v603, 4
      %v688 = vpop.permute.xlu0 %687
      %689 = vrot.lane.b32.xlu0 %v604, 4
      %v690 = vpop.permute.xlu0 %689
      %691 = vrot.lane.b32.xlu0 %v605, 4
      %v692 = vpop.permute.xlu0 %691
      %693 = vrot.lane.b32.xlu0 %v606, 4
      %v694 = vpop.permute.xlu0 %693
      %695 = vrot.lane.b32.xlu0 %v607, 4
      %v696 = vpop.permute.xlu0 %695
      %697 = vrot.lane.b32.xlu0 %v608, 4
      %v698 = vpop.permute.xlu0 %697
      %699 = vrot.lane.b32.xlu0 %v609, 4
      %v700 = vpop.permute.xlu0 %699
      %701 = vrot.lane.b32.xlu0 %v610, 4
      %v702 = vpop.permute.xlu0 %701
      %703 = vrot.lane.b32.xlu0 %v611, 4
      %v704 = vpop.permute.xlu0 %703
      %705 = vrot.lane.b32.xlu0 %v612, 4
      %v706 = vpop.permute.xlu0 %705
      %707 = vrot.lane.b32.xlu0 %v613, 4
      %v708 = vpop.permute.xlu0 %707
      %709 = vrot.lane.b32.xlu0 %v614, 4
      %v710 = vpop.permute.xlu0 %709
      %vm743 = vcmask 64544
      %744 = vst.msk [vmem:[#allocation3] sm:$0xff] %vm743, %v648
      %745 = vst.msk [vmem:[#allocation3 + $0x8] sm:$0xff] %vm743, %v650
      %746 = vst.msk [vmem:[#allocation3 + $0x10] sm:$0xff] %vm743, %v652
      %747 = vst.msk [vmem:[#allocation3 + $0x18] sm:$0xff] %vm743, %v654
      %748 = vst.msk [vmem:[#allocation3 + $0x20] sm:$0xff] %vm743, %v656
      %749 = vst.msk [vmem:[#allocation3 + $0x28] sm:$0xff] %vm743, %v658
      %750 = vst.msk [vmem:[#allocation3 + $0x30] sm:$0xff] %vm743, %v660
      %751 = vst.msk [vmem:[#allocation3 + $0x38] sm:$0xff] %vm743, %v662
      %752 = vst.msk [vmem:[#allocation3 + $0x40] sm:$0xff] %vm743, %v664
      %753 = vst.msk [vmem:[#allocation3 + $0x48] sm:$0xff] %vm743, %v666
      %754 = vst.msk [vmem:[#allocation3 + $0x50] sm:$0xff] %vm743, %v668
      %755 = vst.msk [vmem:[#allocation3 + $0x58] sm:$0xff] %vm743, %v670
      %756 = vst.msk [vmem:[#allocation3 + $0x60] sm:$0xff] %vm743, %v672
      %757 = vst.msk [vmem:[#allocation3 + $0x68] sm:$0xff] %vm743, %v674
      %758 = vst.msk [vmem:[#allocation3 + $0x70] sm:$0xff] %vm743, %v676
      %759 = vst.msk [vmem:[#allocation3 + $0x78] sm:$0xff] %vm743, %v678
      %760 = vst.msk [vmem:[#allocation3 + $0x80] sm:$0xff] %vm743, %v680
      %761 = vst.msk [vmem:[#allocation3 + $0x88] sm:$0xff] %vm743, %v682
      %762 = vst.msk [vmem:[#allocation3 + $0x90] sm:$0xff] %vm743, %v684
      %763 = vst.msk [vmem:[#allocation3 + $0x98] sm:$0xff] %vm743, %v686
      %764 = vst.msk [vmem:[#allocation3 + $0xa0] sm:$0xff] %vm743, %v688
      %765 = vst.msk [vmem:[#allocation3 + $0xa8] sm:$0xff] %vm743, %v690
      %766 = vst.msk [vmem:[#allocation3 + $0xb0] sm:$0xff] %vm743, %v692
      %767 = vst.msk [vmem:[#allocation3 + $0xb8] sm:$0xff] %vm743, %v694
      %768 = vst.msk [vmem:[#allocation3 + $0xc0] sm:$0xff] %vm743, %v696
      %769 = vst.msk [vmem:[#allocation3 + $0xc8] sm:$0xff] %vm743, %v698
      %770 = vst.msk [vmem:[#allocation3 + $0xd0] sm:$0xff] %vm743, %v700
      %771 = vst.msk [vmem:[#allocation3 + $0xd8] sm:$0xff] %vm743, %v702
      %772 = vst.msk [vmem:[#allocation3 + $0xe0] sm:$0xff] %vm743, %v704
      %773 = vst.msk [vmem:[#allocation3 + $0xe8] sm:$0xff] %vm743, %v706
      %774 = vst.msk [vmem:[#allocation3 + $0xf0] sm:$0xff] %vm743, %v708
      %775 = vst.msk [vmem:[#allocation3 + $0xf8] sm:$0xff] %vm743, %v710
      %v776 = vld [vmem:[#allocation2 + $0x2] sm:$0xff]
      %v777 = vld [vmem:[#allocation2 + $0xa] sm:$0xff]
      %v778 = vld [vmem:[#allocation2 + $0x1a] sm:$0xff]
      %v779 = vld [vmem:[#allocation2 + $0x22] sm:$0xff]
      %v780 = vld [vmem:[#allocation2 + $0x32] sm:$0xff]
      %v781 = vld [vmem:[#allocation2 + $0x3a] sm:$0xff]
      %v782 = vld [vmem:[#allocation2 + $0x4a] sm:$0xff]
      %v783 = vld [vmem:[#allocation2 + $0x52] sm:$0xff]
      %v784 = vld [vmem:[#allocation2 + $0x62] sm:$0xff]
      %v785 = vld [vmem:[#allocation2 + $0x6a] sm:$0xff]
      %v786 = vld [vmem:[#allocation2 + $0x7a] sm:$0xff]
      %v787 = vld [vmem:[#allocation2 + $0x82] sm:$0xff]
      %v788 = vld [vmem:[#allocation2 + $0x92] sm:$0xff]
      %v789 = vld [vmem:[#allocation2 + $0x9a] sm:$0xff]
      %v790 = vld [vmem:[#allocation2 + $0xaa] sm:$0xff]
      %v791 = vld [vmem:[#allocation2 + $0xb2] sm:$0xff]
      %v792 = vld [vmem:[#allocation2 + $0xc2] sm:$0xff]
      %v793 = vld [vmem:[#allocation2 + $0xca] sm:$0xff]
      %v794 = vld [vmem:[#allocation2 + $0xda] sm:$0xff]
      %v795 = vld [vmem:[#allocation2 + $0xe2] sm:$0xff]
      %v796 = vld [vmem:[#allocation2 + $0xf2] sm:$0xff]
      %v797 = vld [vmem:[#allocation2 + $0xfa] sm:$0xff]
      %v798 = vld [vmem:[#allocation2 + $0x10a] sm:$0xff]
      %v799 = vld [vmem:[#allocation2 + $0x112] sm:$0xff]
      %v800 = vld [vmem:[#allocation2 + $0x122] sm:$0xff]
      %v801 = vld [vmem:[#allocation2 + $0x12a] sm:$0xff]
      %v802 = vld [vmem:[#allocation2 + $0x13a] sm:$0xff]
      %v803 = vld [vmem:[#allocation2 + $0x142] sm:$0xff]
      %v804 = vld [vmem:[#allocation2 + $0x152] sm:$0xff]
      %v805 = vld [vmem:[#allocation2 + $0x15a] sm:$0xff]
      %v806 = vld [vmem:[#allocation2 + $0x16a] sm:$0xff]
      %v807 = vld [vmem:[#allocation2 + $0x172] sm:$0xff]
      %840 = vrot.lane.b32.xlu0 %v776, 8
      %v841 = vpop.permute.xlu0 %840
      %842 = vrot.lane.b32.xlu0 %v777, 8
      %v843 = vpop.permute.xlu0 %842
      %844 = vrot.lane.b32.xlu0 %v778, 8
      %v845 = vpop.permute.xlu0 %844
      %846 = vrot.lane.b32.xlu0 %v779, 8
      %v847 = vpop.permute.xlu0 %846
      %848 = vrot.lane.b32.xlu0 %v780, 8
      %v849 = vpop.permute.xlu0 %848
      %850 = vrot.lane.b32.xlu0 %v781, 8
      %v851 = vpop.permute.xlu0 %850
      %852 = vrot.lane.b32.xlu0 %v782, 8
      %v853 = vpop.permute.xlu0 %852
      %854 = vrot.lane.b32.xlu0 %v783, 8
      %v855 = vpop.permute.xlu0 %854
      %856 = vrot.lane.b32.xlu0 %v784, 8
      %v857 = vpop.permute.xlu0 %856
      %858 = vrot.lane.b32.xlu0 %v785, 8
      %v859 = vpop.permute.xlu0 %858
      %860 = vrot.lane.b32.xlu0 %v786, 8
      %v861 = vpop.permute.xlu0 %860
      %862 = vrot.lane.b32.xlu0 %v787, 8
      %v863 = vpop.permute.xlu0 %862
      %864 = vrot.lane.b32.xlu0 %v788, 8
      %v865 = vpop.permute.xlu0 %864
      %866 = vrot.lane.b32.xlu0 %v789, 8
      %v867 = vpop.permute.xlu0 %866
      %868 = vrot.lane.b32.xlu0 %v790, 8
      %v869 = vpop.permute.xlu0 %868
      %870 = vrot.lane.b32.xlu0 %v791, 8
      %v871 = vpop.permute.xlu0 %870
      %872 = vrot.lane.b32.xlu0 %v792, 8
      %v873 = vpop.permute.xlu0 %872
      %874 = vrot.lane.b32.xlu0 %v793, 8
      %v875 = vpop.permute.xlu0 %874
      %876 = vrot.lane.b32.xlu0 %v794, 8
      %v877 = vpop.permute.xlu0 %876
      %878 = vrot.lane.b32.xlu0 %v795, 8
      %v879 = vpop.permute.xlu0 %878
      %880 = vrot.lane.b32.xlu0 %v796, 8
      %v881 = vpop.permute.xlu0 %880
      %882 = vrot.lane.b32.xlu0 %v797, 8
      %v883 = vpop.permute.xlu0 %882
      %884 = vrot.lane.b32.xlu0 %v798, 8
      %v885 = vpop.permute.xlu0 %884
      %886 = vrot.lane.b32.xlu0 %v799, 8
      %v887 = vpop.permute.xlu0 %886
      %888 = vrot.lane.b32.xlu0 %v800, 8
      %v889 = vpop.permute.xlu0 %888
      %890 = vrot.lane.b32.xlu0 %v801, 8
      %v891 = vpop.permute.xlu0 %890
      %892 = vrot.lane.b32.xlu0 %v802, 8
      %v893 = vpop.permute.xlu0 %892
      %894 = vrot.lane.b32.xlu0 %v803, 8
      %v895 = vpop.permute.xlu0 %894
      %896 = vrot.lane.b32.xlu0 %v804, 8
      %v897 = vpop.permute.xlu0 %896
      %898 = vrot.lane.b32.xlu0 %v805, 8
      %v899 = vpop.permute.xlu0 %898
      %900 = vrot.lane.b32.xlu0 %v806, 8
      %v901 = vpop.permute.xlu0 %900
      %902 = vrot.lane.b32.xlu0 %v807, 8
      %v903 = vpop.permute.xlu0 %902
      %vm936 = vcmask 97344
      %937 = vst.msk [vmem:[#allocation3] sm:$0xff] %vm936, %v841
      %938 = vst.msk [vmem:[#allocation3 + $0x8] sm:$0xff] %vm936, %v843
      %939 = vst.msk [vmem:[#allocation3 + $0x10] sm:$0xff] %vm936, %v845
      %940 = vst.msk [vmem:[#allocation3 + $0x18] sm:$0xff] %vm936, %v847
      %941 = vst.msk [vmem:[#allocation3 + $0x20] sm:$0xff] %vm936, %v849
      %942 = vst.msk [vmem:[#allocation3 + $0x28] sm:$0xff] %vm936, %v851
      %943 = vst.msk [vmem:[#allocation3 + $0x30] sm:$0xff] %vm936, %v853
      %944 = vst.msk [vmem:[#allocation3 + $0x38] sm:$0xff] %vm936, %v855
      %945 = vst.msk [vmem:[#allocation3 + $0x40] sm:$0xff] %vm936, %v857
      %946 = vst.msk [vmem:[#allocation3 + $0x48] sm:$0xff] %vm936, %v859
      %947 = vst.msk [vmem:[#allocation3 + $0x50] sm:$0xff] %vm936, %v861
      %948 = vst.msk [vmem:[#allocation3 + $0x58] sm:$0xff] %vm936, %v863
      %949 = vst.msk [vmem:[#allocation3 + $0x60] sm:$0xff] %vm936, %v865
      %950 = vst.msk [vmem:[#allocation3 + $0x68] sm:$0xff] %vm936, %v867
      %951 = vst.msk [vmem:[#allocation3 + $0x70] sm:$0xff] %vm936, %v869
      %952 = vst.msk [vmem:[#allocation3 + $0x78] sm:$0xff] %vm936, %v871
      %953 = vst.msk [vmem:[#allocation3 + $0x80] sm:$0xff] %vm936, %v873
      %954 = vst.msk [vmem:[#allocation3 + $0x88] sm:$0xff] %vm936, %v875
      %955 = vst.msk [vmem:[#allocation3 + $0x90] sm:$0xff] %vm936, %v877
      %956 = vst.msk [vmem:[#allocation3 + $0x98] sm:$0xff] %vm936, %v879
      %957 = vst.msk [vmem:[#allocation3 + $0xa0] sm:$0xff] %vm936, %v881
      %958 = vst.msk [vmem:[#allocation3 + $0xa8] sm:$0xff] %vm936, %v883
      %959 = vst.msk [vmem:[#allocation3 + $0xb0] sm:$0xff] %vm936, %v885
      %960 = vst.msk [vmem:[#allocation3 + $0xb8] sm:$0xff] %vm936, %v887
      %961 = vst.msk [vmem:[#allocation3 + $0xc0] sm:$0xff] %vm936, %v889
      %962 = vst.msk [vmem:[#allocation3 + $0xc8] sm:$0xff] %vm936, %v891
      %963 = vst.msk [vmem:[#allocation3 + $0xd0] sm:$0xff] %vm936, %v893
      %964 = vst.msk [vmem:[#allocation3 + $0xd8] sm:$0xff] %vm936, %v895
      %965 = vst.msk [vmem:[#allocation3 + $0xe0] sm:$0xff] %vm936, %v897
      %966 = vst.msk [vmem:[#allocation3 + $0xe8] sm:$0xff] %vm936, %v899
      %967 = vst.msk [vmem:[#allocation3 + $0xf0] sm:$0xff] %vm936, %v901
      %968 = vst.msk [vmem:[#allocation3 + $0xf8] sm:$0xff] %vm936, %v903
      %v969 = vld [vmem:[%s407] sm:$0xff]
      %v970 = vld [vmem:[%s407 + $0x8] sm:$0xff]
      %v971 = vld [vmem:[%s407 + $0x18] sm:$0xff]
      %v972 = vld [vmem:[%s407 + $0x20] sm:$0xff]
      %v973 = vld [vmem:[%s407 + $0x30] sm:$0xff]
      %v974 = vld [vmem:[%s407 + $0x38] sm:$0xff]
      %v975 = vld [vmem:[%s407 + $0x48] sm:$0xff]
      %v976 = vld [vmem:[%s407 + $0x50] sm:$0xff]
      %v977 = vld [vmem:[%s407 + $0x60] sm:$0xff]
      %v978 = vld [vmem:[%s407 + $0x68] sm:$0xff]
      %v979 = vld [vmem:[%s407 + $0x78] sm:$0xff]
      %v980 = vld [vmem:[%s407 + $0x80] sm:$0xff]
      %v981 = vld [vmem:[%s407 + $0x90] sm:$0xff]
      %v982 = vld [vmem:[%s407 + $0x98] sm:$0xff]
      %v983 = vld [vmem:[%s407 + $0xa8] sm:$0xff]
      %v984 = vld [vmem:[%s407 + $0xb0] sm:$0xff]
      %v985 = vld [vmem:[%s407 + $0xc0] sm:$0xff]
      %v986 = vld [vmem:[%s407 + $0xc8] sm:$0xff]
      %v987 = vld [vmem:[%s407 + $0xd8] sm:$0xff]
      %v988 = vld [vmem:[%s407 + $0xe0] sm:$0xff]
      %v989 = vld [vmem:[%s407 + $0xf0] sm:$0xff]
      %v990 = vld [vmem:[%s407 + $0xf8] sm:$0xff]
      %v991 = vld [vmem:[%s407 + $0x108] sm:$0xff]
      %v992 = vld [vmem:[%s407 + $0x110] sm:$0xff]
      %v993 = vld [vmem:[%s407 + $0x120] sm:$0xff]
      %v994 = vld [vmem:[%s407 + $0x128] sm:$0xff]
      %v995 = vld [vmem:[%s407 + $0x138] sm:$0xff]
      %v996 = vld [vmem:[%s407 + $0x140] sm:$0xff]
      %v997 = vld [vmem:[%s407 + $0x150] sm:$0xff]
      %v998 = vld [vmem:[%s407 + $0x158] sm:$0xff]
      %v999 = vld [vmem:[%s407 + $0x168] sm:$0xff]
      %v1000 = vld [vmem:[%s407 + $0x170] sm:$0xff]
      %1033 = vrot.lane.b32.xlu0 %v969, 12
      %v1034 = vpop.permute.xlu0 %1033
      %1035 = vrot.lane.b32.xlu0 %v970, 12
      %v1036 = vpop.permute.xlu0 %1035
      %1037 = vrot.lane.b32.xlu0 %v971, 12
      %v1038 = vpop.permute.xlu0 %1037
      %1039 = vrot.lane.b32.xlu0 %v972, 12
      %v1040 = vpop.permute.xlu0 %1039
      %1041 = vrot.lane.b32.xlu0 %v973, 12
      %v1042 = vpop.permute.xlu0 %1041
      %1043 = vrot.lane.b32.xlu0 %v974, 12
      %v1044 = vpop.permute.xlu0 %1043
      %1045 = vrot.lane.b32.xlu0 %v975, 12
      %v1046 = vpop.permute.xlu0 %1045
      %1047 = vrot.lane.b32.xlu0 %v976, 12
      %v1048 = vpop.permute.xlu0 %1047
      %1049 = vrot.lane.b32.xlu0 %v977, 12
      %v1050 = vpop.permute.xlu0 %1049
      %1051 = vrot.lane.b32.xlu0 %v978, 12
      %v1052 = vpop.permute.xlu0 %1051
      %1053 = vrot.lane.b32.xlu0 %v979, 12
      %v1054 = vpop.permute.xlu0 %1053
      %1055 = vrot.lane.b32.xlu0 %v980, 12
      %v1056 = vpop.permute.xlu0 %1055
      %1057 = vrot.lane.b32.xlu0 %v981, 12
      %v1058 = vpop.permute.xlu0 %1057
      %1059 = vrot.lane.b32.xlu0 %v982, 12
      %v1060 = vpop.permute.xlu0 %1059
      %1061 = vrot.lane.b32.xlu0 %v983, 12
      %v1062 = vpop.permute.xlu0 %1061
      %1063 = vrot.lane.b32.xlu0 %v984, 12
      %v1064 = vpop.permute.xlu0 %1063
      %1065 = vrot.lane.b32.xlu0 %v985, 12
      %v1066 = vpop.permute.xlu0 %1065
      %1067 = vrot.lane.b32.xlu0 %v986, 12
      %v1068 = vpop.permute.xlu0 %1067
      %1069 = vrot.lane.b32.xlu0 %v987, 12
      %v1070 = vpop.permute.xlu0 %1069
      %1071 = vrot.lane.b32.xlu0 %v988, 12
      %v1072 = vpop.permute.xlu0 %1071
      %1073 = vrot.lane.b32.xlu0 %v989, 12
      %v1074 = vpop.permute.xlu0 %1073
      %1075 = vrot.lane.b32.xlu0 %v990, 12
      %v1076 = vpop.permute.xlu0 %1075
      %1077 = vrot.lane.b32.xlu0 %v991, 12
      %v1078 = vpop.permute.xlu0 %1077
      %1079 = vrot.lane.b32.xlu0 %v992, 12
      %v1080 = vpop.permute.xlu0 %1079
      %1081 = vrot.lane.b32.xlu0 %v993, 12
      %v1082 = vpop.permute.xlu0 %1081
      %1083 = vrot.lane.b32.xlu0 %v994, 12
      %v1084 = vpop.permute.xlu0 %1083
      %1085 = vrot.lane.b32.xlu0 %v995, 12
      %v1086 = vpop.permute.xlu0 %1085
      %1087 = vrot.lane.b32.xlu0 %v996, 12
      %v1088 = vpop.permute.xlu0 %1087
      %1089 = vrot.lane.b32.xlu0 %v997, 12
      %v1090 = vpop.permute.xlu0 %1089
      %1091 = vrot.lane.b32.xlu0 %v998, 12
      %v1092 = vpop.permute.xlu0 %1091
      %1093 = vrot.lane.b32.xlu0 %v999, 12
      %v1094 = vpop.permute.xlu0 %1093
      %1095 = vrot.lane.b32.xlu0 %v1000, 12
      %v1096 = vpop.permute.xlu0 %1095
      %vm1129 = vcmask 130144
      %1130 = vst.msk [vmem:[#allocation3] sm:$0xff] %vm1129, %v1034
      %1131 = vst.msk [vmem:[#allocation3 + $0x8] sm:$0xff] %vm1129, %v1036
      %1132 = vst.msk [vmem:[#allocation3 + $0x10] sm:$0xff] %vm1129, %v1038
      %1133 = vst.msk [vmem:[#allocation3 + $0x18] sm:$0xff] %vm1129, %v1040
      %1134 = vst.msk [vmem:[#allocation3 + $0x20] sm:$0xff] %vm1129, %v1042
      %1135 = vst.msk [vmem:[#allocation3 + $0x28] sm:$0xff] %vm1129, %v1044
      %1136 = vst.msk [vmem:[#allocation3 + $0x30] sm:$0xff] %vm1129, %v1046
      %1137 = vst.msk [vmem:[#allocation3 + $0x38] sm:$0xff] %vm1129, %v1048
      %1138 = vst.msk [vmem:[#allocation3 + $0x40] sm:$0xff] %vm1129, %v1050
      %1139 = vst.msk [vmem:[#allocation3 + $0x48] sm:$0xff] %vm1129, %v1052
      %1140 = vst.msk [vmem:[#allocation3 + $0x50] sm:$0xff] %vm1129, %v1054
      %1141 = vst.msk [vmem:[#allocation3 + $0x58] sm:$0xff] %vm1129, %v1056
      %1142 = vst.msk [vmem:[#allocation3 + $0x60] sm:$0xff] %vm1129, %v1058
      %1143 = vst.msk [vmem:[#allocation3 + $0x68] sm:$0xff] %vm1129, %v1060
      %1144 = vst.msk [vmem:[#allocation3 + $0x70] sm:$0xff] %vm1129, %v1062
      %1145 = vst.msk [vmem:[#allocation3 + $0x78] sm:$0xff] %vm1129, %v1064
      %1146 = vst.msk [vmem:[#allocation3 + $0x80] sm:$0xff] %vm1129, %v1066
      %1147 = vst.msk [vmem:[#allocation3 + $0x88] sm:$0xff] %vm1129, %v1068
      %1148 = vst.msk [vmem:[#allocation3 + $0x90] sm:$0xff] %vm1129, %v1070
      %1149 = vst.msk [vmem:[#allocation3 + $0x98] sm:$0xff] %vm1129, %v1072
      %1150 = vst.msk [vmem:[#allocation3 + $0xa0] sm:$0xff] %vm1129, %v1074
      %1151 = vst.msk [vmem:[#allocation3 + $0xa8] sm:$0xff] %vm1129, %v1076
      %1152 = vst.msk [vmem:[#allocation3 + $0xb0] sm:$0xff] %vm1129, %v1078
      %1153 = vst.msk [vmem:[#allocation3 + $0xb8] sm:$0xff] %vm1129, %v1080
      %1154 = vst.msk [vmem:[#allocation3 + $0xc0] sm:$0xff] %vm1129, %v1082
      %1155 = vst.msk [vmem:[#allocation3 + $0xc8] sm:$0xff] %vm1129, %v1084
      %1156 = vst.msk [vmem:[#allocation3 + $0xd0] sm:$0xff] %vm1129, %v1086
      %1157 = vst.msk [vmem:[#allocation3 + $0xd8] sm:$0xff] %vm1129, %v1088
      %1158 = vst.msk [vmem:[#allocation3 + $0xe0] sm:$0xff] %vm1129, %v1090
      %1159 = vst.msk [vmem:[#allocation3 + $0xe8] sm:$0xff] %vm1129, %v1092
      %1160 = vst.msk [vmem:[#allocation3 + $0xf0] sm:$0xff] %vm1129, %v1094
      %1161 = vst.msk [vmem:[#allocation3 + $0xf8] sm:$0xff] %vm1129, %v1096
      %v1162 = vld [vmem:[%s407 + $0x1] sm:$0xff]
      %v1163 = vld [vmem:[%s407 + $0x9] sm:$0xff]
      %v1164 = vld [vmem:[%s407 + $0x19] sm:$0xff]
      %v1165 = vld [vmem:[%s407 + $0x21] sm:$0xff]
      %v1166 = vld [vmem:[%s407 + $0x31] sm:$0xff]
      %v1167 = vld [vmem:[%s407 + $0x39] sm:$0xff]
      %v1168 = vld [vmem:[%s407 + $0x49] sm:$0xff]
      %v1169 = vld [vmem:[%s407 + $0x51] sm:$0xff]
      %v1170 = vld [vmem:[%s407 + $0x61] sm:$0xff]
      %v1171 = vld [vmem:[%s407 + $0x69] sm:$0xff]
      %v1172 = vld [vmem:[%s407 + $0x79] sm:$0xff]
      %v1173 = vld [vmem:[%s407 + $0x81] sm:$0xff]
      %v1174 = vld [vmem:[%s407 + $0x91] sm:$0xff]
      %v1175 = vld [vmem:[%s407 + $0x99] sm:$0xff]
      %v1176 = vld [vmem:[%s407 + $0xa9] sm:$0xff]
      %v1177 = vld [vmem:[%s407 + $0xb1] sm:$0xff]
      %v1178 = vld [vmem:[%s407 + $0xc1] sm:$0xff]
      %v1179 = vld [vmem:[%s407 + $0xc9] sm:$0xff]
      %v1180 = vld [vmem:[%s407 + $0xd9] sm:$0xff]
      %v1181 = vld [vmem:[%s407 + $0xe1] sm:$0xff]
      %v1182 = vld [vmem:[%s407 + $0xf1] sm:$0xff]
      %v1183 = vld [vmem:[%s407 + $0xf9] sm:$0xff]
      %v1184 = vld [vmem:[%s407 + $0x109] sm:$0xff]
      %v1185 = vld [vmem:[%s407 + $0x111] sm:$0xff]
      %v1186 = vld [vmem:[%s407 + $0x121] sm:$0xff]
      %v1187 = vld [vmem:[%s407 + $0x129] sm:$0xff]
      %v1188 = vld [vmem:[%s407 + $0x139] sm:$0xff]
      %v1189 = vld [vmem:[%s407 + $0x141] sm:$0xff]
      %v1190 = vld [vmem:[%s407 + $0x151] sm:$0xff]
      %v1191 = vld [vmem:[%s407 + $0x159] sm:$0xff]
      %v1192 = vld [vmem:[%s407 + $0x169] sm:$0xff]
      %v1193 = vld [vmem:[%s407 + $0x171] sm:$0xff]
      %1226 = vrot.lane.b32.xlu0 %v1162, 16
      %v1227 = vpop.permute.xlu0 %1226
      %1228 = vrot.lane.b32.xlu0 %v1163, 16
      %v1229 = vpop.permute.xlu0 %1228
      %1230 = vrot.lane.b32.xlu0 %v1164, 16
      %v1231 = vpop.permute.xlu0 %1230
      %1232 = vrot.lane.b32.xlu0 %v1165, 16
      %v1233 = vpop.permute.xlu0 %1232
      %1234 = vrot.lane.b32.xlu0 %v1166, 16
      %v1235 = vpop.permute.xlu0 %1234
      %1236 = vrot.lane.b32.xlu0 %v1167, 16
      %v1237 = vpop.permute.xlu0 %1236
      %1238 = vrot.lane.b32.xlu0 %v1168, 16
      %v1239 = vpop.permute.xlu0 %1238
      %1240 = vrot.lane.b32.xlu0 %v1169, 16
      %v1241 = vpop.permute.xlu0 %1240
      %1242 = vrot.lane.b32.xlu0 %v1170, 16
      %v1243 = vpop.permute.xlu0 %1242
      %1244 = vrot.lane.b32.xlu0 %v1171, 16
      %v1245 = vpop.permute.xlu0 %1244
      %1246 = vrot.lane.b32.xlu0 %v1172, 16
      %v1247 = vpop.permute.xlu0 %1246
      %1248 = vrot.lane.b32.xlu0 %v1173, 16
      %v1249 = vpop.permute.xlu0 %1248
      %1250 = vrot.lane.b32.xlu0 %v1174, 16
      %v1251 = vpop.permute.xlu0 %1250
      %1252 = vrot.lane.b32.xlu0 %v1175, 16
      %v1253 = vpop.permute.xlu0 %1252
      %1254 = vrot.lane.b32.xlu0 %v1176, 16
      %v1255 = vpop.permute.xlu0 %1254
      %1256 = vrot.lane.b32.xlu0 %v1177, 16
      %v1257 = vpop.permute.xlu0 %1256
      %1258 = vrot.lane.b32.xlu0 %v1178, 16
      %v1259 = vpop.permute.xlu0 %1258
      %1260 = vrot.lane.b32.xlu0 %v1179, 16
      %v1261 = vpop.permute.xlu0 %1260
      %1262 = vrot.lane.b32.xlu0 %v1180, 16
      %v1263 = vpop.permute.xlu0 %1262
      %1264 = vrot.lane.b32.xlu0 %v1181, 16
      %v1265 = vpop.permute.xlu0 %1264
      %1266 = vrot.lane.b32.xlu0 %v1182, 16
      %v1267 = vpop.permute.xlu0 %1266
      %1268 = vrot.lane.b32.xlu0 %v1183, 16
      %v1269 = vpop.permute.xlu0 %1268
      %1270 = vrot.lane.b32.xlu0 %v1184, 16
      %v1271 = vpop.permute.xlu0 %1270
      %1272 = vrot.lane.b32.xlu0 %v1185, 16
      %v1273 = vpop.permute.xlu0 %1272
      %1274 = vrot.lane.b32.xlu0 %v1186, 16
      %v1275 = vpop.permute.xlu0 %1274
      %1276 = vrot.lane.b32.xlu0 %v1187, 16
      %v1277 = vpop.permute.xlu0 %1276
      %1278 = vrot.lane.b32.xlu0 %v1188, 16
      %v1279 = vpop.permute.xlu0 %1278
      %1280 = vrot.lane.b32.xlu0 %v1189, 16
      %v1281 = vpop.permute.xlu0 %1280
      %1282 = vrot.lane.b32.xlu0 %v1190, 16
      %v1283 = vpop.permute.xlu0 %1282
      %1284 = vrot.lane.b32.xlu0 %v1191, 16
      %v1285 = vpop.permute.xlu0 %1284
      %1286 = vrot.lane.b32.xlu0 %v1192, 16
      %v1287 = vpop.permute.xlu0 %1286
      %1288 = vrot.lane.b32.xlu0 %v1193, 16
      %v1289 = vpop.permute.xlu0 %1288
      %vm1322 = vcmask 162944
      %1323 = vst.msk [vmem:[#allocation3] sm:$0xff] %vm1322, %v1227
      %1324 = vst.msk [vmem:[#allocation3 + $0x8] sm:$0xff] %vm1322, %v1229
      %1325 = vst.msk [vmem:[#allocation3 + $0x10] sm:$0xff] %vm1322, %v1231
      %1326 = vst.msk [vmem:[#allocation3 + $0x18] sm:$0xff] %vm1322, %v1233
      %1327 = vst.msk [vmem:[#allocation3 + $0x20] sm:$0xff] %vm1322, %v1235
      %1328 = vst.msk [vmem:[#allocation3 + $0x28] sm:$0xff] %vm1322, %v1237
      %1329 = vst.msk [vmem:[#allocation3 + $0x30] sm:$0xff] %vm1322, %v1239
      %1330 = vst.msk [vmem:[#allocation3 + $0x38] sm:$0xff] %vm1322, %v1241
      %1331 = vst.msk [vmem:[#allocation3 + $0x40] sm:$0xff] %vm1322, %v1243
      %1332 = vst.msk [vmem:[#allocation3 + $0x48] sm:$0xff] %vm1322, %v1245
      %1333 = vst.msk [vmem:[#allocation3 + $0x50] sm:$0xff] %vm1322, %v1247
      %1334 = vst.msk [vmem:[#allocation3 + $0x58] sm:$0xff] %vm1322, %v1249
      %1335 = vst.msk [vmem:[#allocation3 + $0x60] sm:$0xff] %vm1322, %v1251
      %1336 = vst.msk [vmem:[#allocation3 + $0x68] sm:$0xff] %vm1322, %v1253
      %1337 = vst.msk [vmem:[#allocation3 + $0x70] sm:$0xff] %vm1322, %v1255
      %1338 = vst.msk [vmem:[#allocation3 + $0x78] sm:$0xff] %vm1322, %v1257
      %1339 = vst.msk [vmem:[#allocation3 + $0x80] sm:$0xff] %vm1322, %v1259
      %1340 = vst.msk [vmem:[#allocation3 + $0x88] sm:$0xff] %vm1322, %v1261
      %1341 = vst.msk [vmem:[#allocation3 + $0x90] sm:$0xff] %vm1322, %v1263
      %1342 = vst.msk [vmem:[#allocation3 + $0x98] sm:$0xff] %vm1322, %v1265
      %1343 = vst.msk [vmem:[#allocation3 + $0xa0] sm:$0xff] %vm1322, %v1267
      %1344 = vst.msk [vmem:[#allocation3 + $0xa8] sm:$0xff] %vm1322, %v1269
      %1345 = vst.msk [vmem:[#allocation3 + $0xb0] sm:$0xff] %vm1322, %v1271
      %1346 = vst.msk [vmem:[#allocation3 + $0xb8] sm:$0xff] %vm1322, %v1273
      %1347 = vst.msk [vmem:[#allocation3 + $0xc0] sm:$0xff] %vm1322, %v1275
      %1348 = vst.msk [vmem:[#allocation3 + $0xc8] sm:$0xff] %vm1322, %v1277
      %1349 = vst.msk [vmem:[#allocation3 + $0xd0] sm:$0xff] %vm1322, %v1279
      %1350 = vst.msk [vmem:[#allocation3 + $0xd8] sm:$0xff] %vm1322, %v1281
      %1351 = vst.msk [vmem:[#allocation3 + $0xe0] sm:$0xff] %vm1322, %v1283
      %1352 = vst.msk [vmem:[#allocation3 + $0xe8] sm:$0xff] %vm1322, %v1285
      %1353 = vst.msk [vmem:[#allocation3 + $0xf0] sm:$0xff] %vm1322, %v1287
      %1354 = vst.msk [vmem:[#allocation3 + $0xf8] sm:$0xff] %vm1322, %v1289
      %v1355 = vld [vmem:[%s407 + $0x2] sm:$0xff]
      %v1356 = vld [vmem:[%s407 + $0xa] sm:$0xff]
      %v1357 = vld [vmem:[%s407 + $0x1a] sm:$0xff]
      %v1358 = vld [vmem:[%s407 + $0x22] sm:$0xff]
      %v1359 = vld [vmem:[%s407 + $0x32] sm:$0xff]
      %v1360 = vld [vmem:[%s407 + $0x3a] sm:$0xff]
      %v1361 = vld [vmem:[%s407 + $0x4a] sm:$0xff]
      %v1362 = vld [vmem:[%s407 + $0x52] sm:$0xff]
      %v1363 = vld [vmem:[%s407 + $0x62] sm:$0xff]
      %v1364 = vld [vmem:[%s407 + $0x6a] sm:$0xff]
      %v1365 = vld [vmem:[%s407 + $0x7a] sm:$0xff]
      %v1366 = vld [vmem:[%s407 + $0x82] sm:$0xff]
      %v1367 = vld [vmem:[%s407 + $0x92] sm:$0xff]
      %v1368 = vld [vmem:[%s407 + $0x9a] sm:$0xff]
      %v1369 = vld [vmem:[%s407 + $0xaa] sm:$0xff]
      %v1370 = vld [vmem:[%s407 + $0xb2] sm:$0xff]
      %v1371 = vld [vmem:[%s407 + $0xc2] sm:$0xff]
      %v1372 = vld [vmem:[%s407 + $0xca] sm:$0xff]
      %v1373 = vld [vmem:[%s407 + $0xda] sm:$0xff]
      %v1374 = vld [vmem:[%s407 + $0xe2] sm:$0xff]
      %v1375 = vld [vmem:[%s407 + $0xf2] sm:$0xff]
      %v1376 = vld [vmem:[%s407 + $0xfa] sm:$0xff]
      %v1377 = vld [vmem:[%s407 + $0x10a] sm:$0xff]
      %v1378 = vld [vmem:[%s407 + $0x112] sm:$0xff]
      %v1379 = vld [vmem:[%s407 + $0x122] sm:$0xff]
      %v1380 = vld [vmem:[%s407 + $0x12a] sm:$0xff]
      %v1381 = vld [vmem:[%s407 + $0x13a] sm:$0xff]
      %v1382 = vld [vmem:[%s407 + $0x142] sm:$0xff]
      %v1383 = vld [vmem:[%s407 + $0x152] sm:$0xff]
      %v1384 = vld [vmem:[%s407 + $0x15a] sm:$0xff]
      %v1385 = vld [vmem:[%s407 + $0x16a] sm:$0xff]
      %v1386 = vld [vmem:[%s407 + $0x172] sm:$0xff]
      %1419 = vrot.lane.b32.xlu0 %v1355, 20
      %v1420 = vpop.permute.xlu0 %1419
      %1421 = vrot.lane.b32.xlu0 %v1356, 20
      %v1422 = vpop.permute.xlu0 %1421
      %1423 = vrot.lane.b32.xlu0 %v1357, 20
      %v1424 = vpop.permute.xlu0 %1423
      %1425 = vrot.lane.b32.xlu0 %v1358, 20
      %v1426 = vpop.permute.xlu0 %1425
      %1427 = vrot.lane.b32.xlu0 %v1359, 20
      %v1428 = vpop.permute.xlu0 %1427
      %1429 = vrot.lane.b32.xlu0 %v1360, 20
      %v1430 = vpop.permute.xlu0 %1429
      %1431 = vrot.lane.b32.xlu0 %v1361, 20
      %v1432 = vpop.permute.xlu0 %1431
      %1433 = vrot.lane.b32.xlu0 %v1362, 20
      %v1434 = vpop.permute.xlu0 %1433
      %1435 = vrot.lane.b32.xlu0 %v1363, 20
      %v1436 = vpop.permute.xlu0 %1435
      %1437 = vrot.lane.b32.xlu0 %v1364, 20
      %v1438 = vpop.permute.xlu0 %1437
      %1439 = vrot.lane.b32.xlu0 %v1365, 20
      %v1440 = vpop.permute.xlu0 %1439
      %1441 = vrot.lane.b32.xlu0 %v1366, 20
      %v1442 = vpop.permute.xlu0 %1441
      %1443 = vrot.lane.b32.xlu0 %v1367, 20
      %v1444 = vpop.permute.xlu0 %1443
      %1445 = vrot.lane.b32.xlu0 %v1368, 20
      %v1446 = vpop.permute.xlu0 %1445
      %1447 = vrot.lane.b32.xlu0 %v1369, 20
      %v1448 = vpop.permute.xlu0 %1447
      %1449 = vrot.lane.b32.xlu0 %v1370, 20
      %v1450 = vpop.permute.xlu0 %1449
      %1451 = vrot.lane.b32.xlu0 %v1371, 20
      %v1452 = vpop.permute.xlu0 %1451
      %1453 = vrot.lane.b32.xlu0 %v1372, 20
      %v1454 = vpop.permute.xlu0 %1453
      %1455 = vrot.lane.b32.xlu0 %v1373, 20
      %v1456 = vpop.permute.xlu0 %1455
      %1457 = vrot.lane.b32.xlu0 %v1374, 20
      %v1458 = vpop.permute.xlu0 %1457
      %1459 = vrot.lane.b32.xlu0 %v1375, 20
      %v1460 = vpop.permute.xlu0 %1459
      %1461 = vrot.lane.b32.xlu0 %v1376, 20
      %v1462 = vpop.permute.xlu0 %1461
      %1463 = vrot.lane.b32.xlu0 %v1377, 20
      %v1464 = vpop.permute.xlu0 %1463
      %1465 = vrot.lane.b32.xlu0 %v1378, 20
      %v1466 = vpop.permute.xlu0 %1465
      %1467 = vrot.lane.b32.xlu0 %v1379, 20
      %v1468 = vpop.permute.xlu0 %1467
      %1469 = vrot.lane.b32.xlu0 %v1380, 20
      %v1470 = vpop.permute.xlu0 %1469
      %1471 = vrot.lane.b32.xlu0 %v1381, 20
      %v1472 = vpop.permute.xlu0 %1471
      %1473 = vrot.lane.b32.xlu0 %v1382, 20
      %v1474 = vpop.permute.xlu0 %1473
      %1475 = vrot.lane.b32.xlu0 %v1383, 20
      %v1476 = vpop.permute.xlu0 %1475
      %1477 = vrot.lane.b32.xlu0 %v1384, 20
      %v1478 = vpop.permute.xlu0 %1477
      %1479 = vrot.lane.b32.xlu0 %v1385, 20
      %v1480 = vpop.permute.xlu0 %1479
      %1481 = vrot.lane.b32.xlu0 %v1386, 20
      %v1482 = vpop.permute.xlu0 %1481
      %vm1515 = vcmask 195744
      %1516 = vst.msk [vmem:[#allocation3] sm:$0xff] %vm1515, %v1420
      %1517 = vst.msk [vmem:[#allocation3 + $0x8] sm:$0xff] %vm1515, %v1422
      %1518 = vst.msk [vmem:[#allocation3 + $0x10] sm:$0xff] %vm1515, %v1424
      %1519 = vst.msk [vmem:[#allocation3 + $0x18] sm:$0xff] %vm1515, %v1426
      %1520 = vst.msk [vmem:[#allocation3 + $0x20] sm:$0xff] %vm1515, %v1428
      %1521 = vst.msk [vmem:[#allocation3 + $0x28] sm:$0xff] %vm1515, %v1430
      %1522 = vst.msk [vmem:[#allocation3 + $0x30] sm:$0xff] %vm1515, %v1432
      %1523 = vst.msk [vmem:[#allocation3 + $0x38] sm:$0xff] %vm1515, %v1434
      %1524 = vst.msk [vmem:[#allocation3 + $0x40] sm:$0xff] %vm1515, %v1436
      %1525 = vst.msk [vmem:[#allocation3 + $0x48] sm:$0xff] %vm1515, %v1438
      %1526 = vst.msk [vmem:[#allocation3 + $0x50] sm:$0xff] %vm1515, %v1440
      %1527 = vst.msk [vmem:[#allocation3 + $0x58] sm:$0xff] %vm1515, %v1442
      %1528 = vst.msk [vmem:[#allocation3 + $0x60] sm:$0xff] %vm1515, %v1444
      %1529 = vst.msk [vmem:[#allocation3 + $0x68] sm:$0xff] %vm1515, %v1446
      %1530 = vst.msk [vmem:[#allocation3 + $0x70] sm:$0xff] %vm1515, %v1448
      %1531 = vst.msk [vmem:[#allocation3 + $0x78] sm:$0xff] %vm1515, %v1450
      %1532 = vst.msk [vmem:[#allocation3 + $0x80] sm:$0xff] %vm1515, %v1452
      %1533 = vst.msk [vmem:[#allocation3 + $0x88] sm:$0xff] %vm1515, %v1454
      %1534 = vst.msk [vmem:[#allocation3 + $0x90] sm:$0xff] %vm1515, %v1456
      %1535 = vst.msk [vmem:[#allocation3 + $0x98] sm:$0xff] %vm1515, %v1458
      %1536 = vst.msk [vmem:[#allocation3 + $0xa0] sm:$0xff] %vm1515, %v1460
      %1537 = vst.msk [vmem:[#allocation3 + $0xa8] sm:$0xff] %vm1515, %v1462
      %1538 = vst.msk [vmem:[#allocation3 + $0xb0] sm:$0xff] %vm1515, %v1464
      %1539 = vst.msk [vmem:[#allocation3 + $0xb8] sm:$0xff] %vm1515, %v1466
      %1540 = vst.msk [vmem:[#allocation3 + $0xc0] sm:$0xff] %vm1515, %v1468
      %1541 = vst.msk [vmem:[#allocation3 + $0xc8] sm:$0xff] %vm1515, %v1470
      %1542 = vst.msk [vmem:[#allocation3 + $0xd0] sm:$0xff] %vm1515, %v1472
      %1543 = vst.msk [vmem:[#allocation3 + $0xd8] sm:$0xff] %vm1515, %v1474
      %1544 = vst.msk [vmem:[#allocation3 + $0xe0] sm:$0xff] %vm1515, %v1476
      %1545 = vst.msk [vmem:[#allocation3 + $0xe8] sm:$0xff] %vm1515, %v1478
      %1546 = vst.msk [vmem:[#allocation3 + $0xf0] sm:$0xff] %vm1515, %v1480
      %1547 = vst.msk [vmem:[#allocation3 + $0xf8] sm:$0xff] %vm1515, %v1482
      %s1548 = scalar_lea.vmem [#allocation2], 48
      %v1549 = vld [vmem:[%s1548] sm:$0xff]
      %v1550 = vld [vmem:[%s1548 + $0x8] sm:$0xff]
      %v1551 = vld [vmem:[%s1548 + $0x18] sm:$0xff]
      %v1552 = vld [vmem:[%s1548 + $0x20] sm:$0xff]
      %v1553 = vld [vmem:[%s1548 + $0x30] sm:$0xff]
      %v1554 = vld [vmem:[%s1548 + $0x38] sm:$0xff]
      %v1555 = vld [vmem:[%s1548 + $0x48] sm:$0xff]
      %v1556 = vld [vmem:[%s1548 + $0x50] sm:$0xff]
      %v1557 = vld [vmem:[%s1548 + $0x60] sm:$0xff]
      %v1558 = vld [vmem:[%s1548 + $0x68] sm:$0xff]
      %v1559 = vld [vmem:[%s1548 + $0x78] sm:$0xff]
      %v1560 = vld [vmem:[%s1548 + $0x80] sm:$0xff]
      %v1561 = vld [vmem:[%s1548 + $0x90] sm:$0xff]
      %v1562 = vld [vmem:[%s1548 + $0x98] sm:$0xff]
      %v1563 = vld [vmem:[%s1548 + $0xa8] sm:$0xff]
      %v1564 = vld [vmem:[%s1548 + $0xb0] sm:$0xff]
      %v1565 = vld [vmem:[%s1548 + $0xc0] sm:$0xff]
      %v1566 = vld [vmem:[%s1548 + $0xc8] sm:$0xff]
      %v1567 = vld [vmem:[%s1548 + $0xd8] sm:$0xff]
      %v1568 = vld [vmem:[%s1548 + $0xe0] sm:$0xff]
      %v1569 = vld [vmem:[%s1548 + $0xf0] sm:$0xff]
      %v1570 = vld [vmem:[%s1548 + $0xf8] sm:$0xff]
      %v1571 = vld [vmem:[%s1548 + $0x108] sm:$0xff]
      %v1572 = vld [vmem:[%s1548 + $0x110] sm:$0xff]
      %v1573 = vld [vmem:[%s1548 + $0x120] sm:$0xff]
      %v1574 = vld [vmem:[%s1548 + $0x128] sm:$0xff]
      %v1575 = vld [vmem:[%s1548 + $0x138] sm:$0xff]
      %v1576 = vld [vmem:[%s1548 + $0x140] sm:$0xff]
      %v1577 = vld [vmem:[%s1548 + $0x150] sm:$0xff]
      %v1578 = vld [vmem:[%s1548 + $0x158] sm:$0xff]
      %v1579 = vld [vmem:[%s1548 + $0x168] sm:$0xff]
      %v1580 = vld [vmem:[%s1548 + $0x170] sm:$0xff]
      %1613 = vrot.lane.b32.xlu0 %v1549, 24
      %v1614 = vpop.permute.xlu0 %1613
      %1615 = vrot.lane.b32.xlu0 %v1550, 24
      %v1616 = vpop.permute.xlu0 %1615
      %1617 = vrot.lane.b32.xlu0 %v1551, 24
      %v1618 = vpop.permute.xlu0 %1617
      %1619 = vrot.lane.b32.xlu0 %v1552, 24
      %v1620 = vpop.permute.xlu0 %1619
      %1621 = vrot.lane.b32.xlu0 %v1553, 24
      %v1622 = vpop.permute.xlu0 %1621
      %1623 = vrot.lane.b32.xlu0 %v1554, 24
      %v1624 = vpop.permute.xlu0 %1623
      %1625 = vrot.lane.b32.xlu0 %v1555, 24
      %v1626 = vpop.permute.xlu0 %1625
      %1627 = vrot.lane.b32.xlu0 %v1556, 24
      %v1628 = vpop.permute.xlu0 %1627
      %1629 = vrot.lane.b32.xlu0 %v1557, 24
      %v1630 = vpop.permute.xlu0 %1629
      %1631 = vrot.lane.b32.xlu0 %v1558, 24
      %v1632 = vpop.permute.xlu0 %1631
      %1633 = vrot.lane.b32.xlu0 %v1559, 24
      %v1634 = vpop.permute.xlu0 %1633
      %1635 = vrot.lane.b32.xlu0 %v1560, 24
      %v1636 = vpop.permute.xlu0 %1635
      %1637 = vrot.lane.b32.xlu0 %v1561, 24
      %v1638 = vpop.permute.xlu0 %1637
      %1639 = vrot.lane.b32.xlu0 %v1562, 24
      %v1640 = vpop.permute.xlu0 %1639
      %1641 = vrot.lane.b32.xlu0 %v1563, 24
      %v1642 = vpop.permute.xlu0 %1641
      %1643 = vrot.lane.b32.xlu0 %v1564, 24
      %v1644 = vpop.permute.xlu0 %1643
      %1645 = vrot.lane.b32.xlu0 %v1565, 24
      %v1646 = vpop.permute.xlu0 %1645
      %1647 = vrot.lane.b32.xlu0 %v1566, 24
      %v1648 = vpop.permute.xlu0 %1647
      %1649 = vrot.lane.b32.xlu0 %v1567, 24
      %v1650 = vpop.permute.xlu0 %1649
      %1651 = vrot.lane.b32.xlu0 %v1568, 24
      %v1652 = vpop.permute.xlu0 %1651
      %1653 = vrot.lane.b32.xlu0 %v1569, 24
      %v1654 = vpop.permute.xlu0 %1653
      %1655 = vrot.lane.b32.xlu0 %v1570, 24
      %v1656 = vpop.permute.xlu0 %1655
      %1657 = vrot.lane.b32.xlu0 %v1571, 24
      %v1658 = vpop.permute.xlu0 %1657
      %1659 = vrot.lane.b32.xlu0 %v1572, 24
      %v1660 = vpop.permute.xlu0 %1659
      %1661 = vrot.lane.b32.xlu0 %v1573, 24
      %v1662 = vpop.permute.xlu0 %1661
      %1663 = vrot.lane.b32.xlu0 %v1574, 24
      %v1664 = vpop.permute.xlu0 %1663
      %1665 = vrot.lane.b32.xlu0 %v1575, 24
      %v1666 = vpop.permute.xlu0 %1665
      %1667 = vrot.lane.b32.xlu0 %v1576, 24
      %v1668 = vpop.permute.xlu0 %1667
      %1669 = vrot.lane.b32.xlu0 %v1577, 24
      %v1670 = vpop.permute.xlu0 %1669
      %1671 = vrot.lane.b32.xlu0 %v1578, 24
      %v1672 = vpop.permute.xlu0 %1671
      %1673 = vrot.lane.b32.xlu0 %v1579, 24
      %v1674 = vpop.permute.xlu0 %1673
      %1675 = vrot.lane.b32.xlu0 %v1580, 24
      %v1676 = vpop.permute.xlu0 %1675
      %vm1709 = vcmask 228544
      %1710 = vst.msk [vmem:[#allocation3] sm:$0xff] %vm1709, %v1614
      %1711 = vst.msk [vmem:[#allocation3 + $0x8] sm:$0xff] %vm1709, %v1616
      %1712 = vst.msk [vmem:[#allocation3 + $0x10] sm:$0xff] %vm1709, %v1618
      %1713 = vst.msk [vmem:[#allocation3 + $0x18] sm:$0xff] %vm1709, %v1620
      %1714 = vst.msk [vmem:[#allocation3 + $0x20] sm:$0xff] %vm1709, %v1622
      %1715 = vst.msk [vmem:[#allocation3 + $0x28] sm:$0xff] %vm1709, %v1624
      %1716 = vst.msk [vmem:[#allocation3 + $0x30] sm:$0xff] %vm1709, %v1626
      %1717 = vst.msk [vmem:[#allocation3 + $0x38] sm:$0xff] %vm1709, %v1628
      %1718 = vst.msk [vmem:[#allocation3 + $0x40] sm:$0xff] %vm1709, %v1630
      %1719 = vst.msk [vmem:[#allocation3 + $0x48] sm:$0xff] %vm1709, %v1632
      %1720 = vst.msk [vmem:[#allocation3 + $0x50] sm:$0xff] %vm1709, %v1634
      %1721 = vst.msk [vmem:[#allocation3 + $0x58] sm:$0xff] %vm1709, %v1636
      %1722 = vst.msk [vmem:[#allocation3 + $0x60] sm:$0xff] %vm1709, %v1638
      %1723 = vst.msk [vmem:[#allocation3 + $0x68] sm:$0xff] %vm1709, %v1640
      %1724 = vst.msk [vmem:[#allocation3 + $0x70] sm:$0xff] %vm1709, %v1642
      %1725 = vst.msk [vmem:[#allocation3 + $0x78] sm:$0xff] %vm1709, %v1644
      %1726 = vst.msk [vmem:[#allocation3 + $0x80] sm:$0xff] %vm1709, %v1646
      %1727 = vst.msk [vmem:[#allocation3 + $0x88] sm:$0xff] %vm1709, %v1648
      %1728 = vst.msk [vmem:[#allocation3 + $0x90] sm:$0xff] %vm1709, %v1650
      %1729 = vst.msk [vmem:[#allocation3 + $0x98] sm:$0xff] %vm1709, %v1652
      %1730 = vst.msk [vmem:[#allocation3 + $0xa0] sm:$0xff] %vm1709, %v1654
      %1731 = vst.msk [vmem:[#allocation3 + $0xa8] sm:$0xff] %vm1709, %v1656
      %1732 = vst.msk [vmem:[#allocation3 + $0xb0] sm:$0xff] %vm1709, %v1658
      %1733 = vst.msk [vmem:[#allocation3 + $0xb8] sm:$0xff] %vm1709, %v1660
      %1734 = vst.msk [vmem:[#allocation3 + $0xc0] sm:$0xff] %vm1709, %v1662
      %1735 = vst.msk [vmem:[#allocation3 + $0xc8] sm:$0xff] %vm1709, %v1664
      %1736 = vst.msk [vmem:[#allocation3 + $0xd0] sm:$0xff] %vm1709, %v1666
      %1737 = vst.msk [vmem:[#allocation3 + $0xd8] sm:$0xff] %vm1709, %v1668
      %1738 = vst.msk [vmem:[#allocation3 + $0xe0] sm:$0xff] %vm1709, %v1670
      %1739 = vst.msk [vmem:[#allocation3 + $0xe8] sm:$0xff] %vm1709, %v1672
      %1740 = vst.msk [vmem:[#allocation3 + $0xf0] sm:$0xff] %vm1709, %v1674
      %1741 = vst.msk [vmem:[#allocation3 + $0xf8] sm:$0xff] %vm1709, %v1676
      %v1742 = vld [vmem:[%s1548 + $0x1] sm:$0xff]
      %v1743 = vld [vmem:[%s1548 + $0x9] sm:$0xff]
      %v1744 = vld [vmem:[%s1548 + $0x19] sm:$0xff]
      %v1745 = vld [vmem:[%s1548 + $0x21] sm:$0xff]
      %v1746 = vld [vmem:[%s1548 + $0x31] sm:$0xff]
      %v1747 = vld [vmem:[%s1548 + $0x39] sm:$0xff]
      %v1748 = vld [vmem:[%s1548 + $0x49] sm:$0xff]
      %v1749 = vld [vmem:[%s1548 + $0x51] sm:$0xff]
      %v1750 = vld [vmem:[%s1548 + $0x61] sm:$0xff]
      %v1751 = vld [vmem:[%s1548 + $0x69] sm:$0xff]
      %v1752 = vld [vmem:[%s1548 + $0x79] sm:$0xff]
      %v1753 = vld [vmem:[%s1548 + $0x81] sm:$0xff]
      %v1754 = vld [vmem:[%s1548 + $0x91] sm:$0xff]
      %v1755 = vld [vmem:[%s1548 + $0x99] sm:$0xff]
      %v1756 = vld [vmem:[%s1548 + $0xa9] sm:$0xff]
      %v1757 = vld [vmem:[%s1548 + $0xb1] sm:$0xff]
      %v1758 = vld [vmem:[%s1548 + $0xc1] sm:$0xff]
      %v1759 = vld [vmem:[%s1548 + $0xc9] sm:$0xff]
      %v1760 = vld [vmem:[%s1548 + $0xd9] sm:$0xff]
      %v1761 = vld [vmem:[%s1548 + $0xe1] sm:$0xff]
      %v1762 = vld [vmem:[%s1548 + $0xf1] sm:$0xff]
      %v1763 = vld [vmem:[%s1548 + $0xf9] sm:$0xff]
      %v1764 = vld [vmem:[%s1548 + $0x109] sm:$0xff]
      %v1765 = vld [vmem:[%s1548 + $0x111] sm:$0xff]
      %v1766 = vld [vmem:[%s1548 + $0x121] sm:$0xff]
      %v1767 = vld [vmem:[%s1548 + $0x129] sm:$0xff]
      %v1768 = vld [vmem:[%s1548 + $0x139] sm:$0xff]
      %v1769 = vld [vmem:[%s1548 + $0x141] sm:$0xff]
      %v1770 = vld [vmem:[%s1548 + $0x151] sm:$0xff]
      %v1771 = vld [vmem:[%s1548 + $0x159] sm:$0xff]
      %v1772 = vld [vmem:[%s1548 + $0x169] sm:$0xff]
      %v1773 = vld [vmem:[%s1548 + $0x171] sm:$0xff]
      %1806 = vrot.lane.b32.xlu0 %v1742, 28
      %v1807 = vpop.permute.xlu0 %1806
      %1808 = vrot.lane.b32.xlu0 %v1743, 28
      %v1809 = vpop.permute.xlu0 %1808
      %1810 = vrot.lane.b32.xlu0 %v1744, 28
      %v1811 = vpop.permute.xlu0 %1810
      %1812 = vrot.lane.b32.xlu0 %v1745, 28
      %v1813 = vpop.permute.xlu0 %1812
      %1814 = vrot.lane.b32.xlu0 %v1746, 28
      %v1815 = vpop.permute.xlu0 %1814
      %1816 = vrot.lane.b32.xlu0 %v1747, 28
      %v1817 = vpop.permute.xlu0 %1816
      %1818 = vrot.lane.b32.xlu0 %v1748, 28
      %v1819 = vpop.permute.xlu0 %1818
      %1820 = vrot.lane.b32.xlu0 %v1749, 28
      %v1821 = vpop.permute.xlu0 %1820
      %1822 = vrot.lane.b32.xlu0 %v1750, 28
      %v1823 = vpop.permute.xlu0 %1822
      %1824 = vrot.lane.b32.xlu0 %v1751, 28
      %v1825 = vpop.permute.xlu0 %1824
      %1826 = vrot.lane.b32.xlu0 %v1752, 28
      %v1827 = vpop.permute.xlu0 %1826
      %1828 = vrot.lane.b32.xlu0 %v1753, 28
      %v1829 = vpop.permute.xlu0 %1828
      %1830 = vrot.lane.b32.xlu0 %v1754, 28
      %v1831 = vpop.permute.xlu0 %1830
      %1832 = vrot.lane.b32.xlu0 %v1755, 28
      %v1833 = vpop.permute.xlu0 %1832
      %1834 = vrot.lane.b32.xlu0 %v1756, 28
      %v1835 = vpop.permute.xlu0 %1834
      %1836 = vrot.lane.b32.xlu0 %v1757, 28
      %v1837 = vpop.permute.xlu0 %1836
      %1838 = vrot.lane.b32.xlu0 %v1758, 28
      %v1839 = vpop.permute.xlu0 %1838
      %1840 = vrot.lane.b32.xlu0 %v1759, 28
      %v1841 = vpop.permute.xlu0 %1840
      %1842 = vrot.lane.b32.xlu0 %v1760, 28
      %v1843 = vpop.permute.xlu0 %1842
      %1844 = vrot.lane.b32.xlu0 %v1761, 28
      %v1845 = vpop.permute.xlu0 %1844
      %1846 = vrot.lane.b32.xlu0 %v1762, 28
      %v1847 = vpop.permute.xlu0 %1846
      %1848 = vrot.lane.b32.xlu0 %v1763, 28
      %v1849 = vpop.permute.xlu0 %1848
      %1850 = vrot.lane.b32.xlu0 %v1764, 28
      %v1851 = vpop.permute.xlu0 %1850
      %1852 = vrot.lane.b32.xlu0 %v1765, 28
      %v1853 = vpop.permute.xlu0 %1852
      %1854 = vrot.lane.b32.xlu0 %v1766, 28
      %v1855 = vpop.permute.xlu0 %1854
      %1856 = vrot.lane.b32.xlu0 %v1767, 28
      %v1857 = vpop.permute.xlu0 %1856
      %1858 = vrot.lane.b32.xlu0 %v1768, 28
      %v1859 = vpop.permute.xlu0 %1858
      %1860 = vrot.lane.b32.xlu0 %v1769, 28
      %v1861 = vpop.permute.xlu0 %1860
      %1862 = vrot.lane.b32.xlu0 %v1770, 28
      %v1863 = vpop.permute.xlu0 %1862
      %1864 = vrot.lane.b32.xlu0 %v1771, 28
      %v1865 = vpop.permute.xlu0 %1864
      %1866 = vrot.lane.b32.xlu0 %v1772, 28
      %v1867 = vpop.permute.xlu0 %1866
      %1868 = vrot.lane.b32.xlu0 %v1773, 28
      %v1869 = vpop.permute.xlu0 %1868
      %vm1902 = vcmask 261344
      %1903 = vst.msk [vmem:[#allocation3] sm:$0xff] %vm1902, %v1807
      %1904 = vst.msk [vmem:[#allocation3 + $0x8] sm:$0xff] %vm1902, %v1809
      %1905 = vst.msk [vmem:[#allocation3 + $0x10] sm:$0xff] %vm1902, %v1811
      %1906 = vst.msk [vmem:[#allocation3 + $0x18] sm:$0xff] %vm1902, %v1813
      %1907 = vst.msk [vmem:[#allocation3 + $0x20] sm:$0xff] %vm1902, %v1815
      %1908 = vst.msk [vmem:[#allocation3 + $0x28] sm:$0xff] %vm1902, %v1817
      %1909 = vst.msk [vmem:[#allocation3 + $0x30] sm:$0xff] %vm1902, %v1819
      %1910 = vst.msk [vmem:[#allocation3 + $0x38] sm:$0xff] %vm1902, %v1821
      %1911 = vst.msk [vmem:[#allocation3 + $0x40] sm:$0xff] %vm1902, %v1823
      %1912 = vst.msk [vmem:[#allocation3 + $0x48] sm:$0xff] %vm1902, %v1825
      %1913 = vst.msk [vmem:[#allocation3 + $0x50] sm:$0xff] %vm1902, %v1827
      %1914 = vst.msk [vmem:[#allocation3 + $0x58] sm:$0xff] %vm1902, %v1829
      %1915 = vst.msk [vmem:[#allocation3 + $0x60] sm:$0xff] %vm1902, %v1831
      %1916 = vst.msk [vmem:[#allocation3 + $0x68] sm:$0xff] %vm1902, %v1833
      %1917 = vst.msk [vmem:[#allocation3 + $0x70] sm:$0xff] %vm1902, %v1835
      %1918 = vst.msk [vmem:[#allocation3 + $0x78] sm:$0xff] %vm1902, %v1837
      %1919 = vst.msk [vmem:[#allocation3 + $0x80] sm:$0xff] %vm1902, %v1839
      %1920 = vst.msk [vmem:[#allocation3 + $0x88] sm:$0xff] %vm1902, %v1841
      %1921 = vst.msk [vmem:[#allocation3 + $0x90] sm:$0xff] %vm1902, %v1843
      %1922 = vst.msk [vmem:[#allocation3 + $0x98] sm:$0xff] %vm1902, %v1845
      %1923 = vst.msk [vmem:[#allocation3 + $0xa0] sm:$0xff] %vm1902, %v1847
      %1924 = vst.msk [vmem:[#allocation3 + $0xa8] sm:$0xff] %vm1902, %v1849
      %1925 = vst.msk [vmem:[#allocation3 + $0xb0] sm:$0xff] %vm1902, %v1851
      %1926 = vst.msk [vmem:[#allocation3 + $0xb8] sm:$0xff] %vm1902, %v1853
      %1927 = vst.msk [vmem:[#allocation3 + $0xc0] sm:$0xff] %vm1902, %v1855
      %1928 = vst.msk [vmem:[#allocation3 + $0xc8] sm:$0xff] %vm1902, %v1857
      %1929 = vst.msk [vmem:[#allocation3 + $0xd0] sm:$0xff] %vm1902, %v1859
      %1930 = vst.msk [vmem:[#allocation3 + $0xd8] sm:$0xff] %vm1902, %v1861
      %1931 = vst.msk [vmem:[#allocation3 + $0xe0] sm:$0xff] %vm1902, %v1863
      %1932 = vst.msk [vmem:[#allocation3 + $0xe8] sm:$0xff] %vm1902, %v1865
      %1933 = vst.msk [vmem:[#allocation3 + $0xf0] sm:$0xff] %vm1902, %v1867
      %1934 = vst.msk [vmem:[#allocation3 + $0xf8] sm:$0xff] %vm1902, %v1869
      %v1935 = vld [vmem:[%s1548 + $0x2] sm:$0xff]
      %v1936 = vld [vmem:[%s1548 + $0xa] sm:$0xff]
      %v1937 = vld [vmem:[%s1548 + $0x1a] sm:$0xff]
      %v1938 = vld [vmem:[%s1548 + $0x22] sm:$0xff]
      %v1939 = vld [vmem:[%s1548 + $0x32] sm:$0xff]
      %v1940 = vld [vmem:[%s1548 + $0x3a] sm:$0xff]
      %v1941 = vld [vmem:[%s1548 + $0x4a] sm:$0xff]
      %v1942 = vld [vmem:[%s1548 + $0x52] sm:$0xff]
      %v1943 = vld [vmem:[%s1548 + $0x62] sm:$0xff]
      %v1944 = vld [vmem:[%s1548 + $0x6a] sm:$0xff]
      %v1945 = vld [vmem:[%s1548 + $0x7a] sm:$0xff]
      %v1946 = vld [vmem:[%s1548 + $0x82] sm:$0xff]
      %v1947 = vld [vmem:[%s1548 + $0x92] sm:$0xff]
      %v1948 = vld [vmem:[%s1548 + $0x9a] sm:$0xff]
      %v1949 = vld [vmem:[%s1548 + $0xaa] sm:$0xff]
      %v1950 = vld [vmem:[%s1548 + $0xb2] sm:$0xff]
      %v1951 = vld [vmem:[%s1548 + $0xc2] sm:$0xff]
      %v1952 = vld [vmem:[%s1548 + $0xca] sm:$0xff]
      %v1953 = vld [vmem:[%s1548 + $0xda] sm:$0xff]
      %v1954 = vld [vmem:[%s1548 + $0xe2] sm:$0xff]
      %v1955 = vld [vmem:[%s1548 + $0xf2] sm:$0xff]
      %v1956 = vld [vmem:[%s1548 + $0xfa] sm:$0xff]
      %v1957 = vld [vmem:[%s1548 + $0x10a] sm:$0xff]
      %v1958 = vld [vmem:[%s1548 + $0x112] sm:$0xff]
      %v1959 = vld [vmem:[%s1548 + $0x122] sm:$0xff]
      %v1960 = vld [vmem:[%s1548 + $0x12a] sm:$0xff]
      %v1961 = vld [vmem:[%s1548 + $0x13a] sm:$0xff]
      %v1962 = vld [vmem:[%s1548 + $0x142] sm:$0xff]
      %v1963 = vld [vmem:[%s1548 + $0x152] sm:$0xff]
      %v1964 = vld [vmem:[%s1548 + $0x15a] sm:$0xff]
      %v1965 = vld [vmem:[%s1548 + $0x16a] sm:$0xff]
      %v1966 = vld [vmem:[%s1548 + $0x172] sm:$0xff]
      %1999 = vrot.lane.b32.xlu0 %v1935, 32
      %v2000 = vpop.permute.xlu0 %1999
      %2001 = vrot.lane.b32.xlu0 %v1936, 32
      %v2002 = vpop.permute.xlu0 %2001
      %2003 = vrot.lane.b32.xlu0 %v1937, 32
      %v2004 = vpop.permute.xlu0 %2003
      %2005 = vrot.lane.b32.xlu0 %v1938, 32
      %v2006 = vpop.permute.xlu0 %2005
      %2007 = vrot.lane.b32.xlu0 %v1939, 32
      %v2008 = vpop.permute.xlu0 %2007
      %2009 = vrot.lane.b32.xlu0 %v1940, 32
      %v2010 = vpop.permute.xlu0 %2009
      %2011 = vrot.lane.b32.xlu0 %v1941, 32
      %v2012 = vpop.permute.xlu0 %2011
      %2013 = vrot.lane.b32.xlu0 %v1942, 32
      %v2014 = vpop.permute.xlu0 %2013
      %2015 = vrot.lane.b32.xlu0 %v1943, 32
      %v2016 = vpop.permute.xlu0 %2015
      %2017 = vrot.lane.b32.xlu0 %v1944, 32
      %v2018 = vpop.permute.xlu0 %2017
      %2019 = vrot.lane.b32.xlu0 %v1945, 32
      %v2020 = vpop.permute.xlu0 %2019
      %2021 = vrot.lane.b32.xlu0 %v1946, 32
      %v2022 = vpop.permute.xlu0 %2021
      %2023 = vrot.lane.b32.xlu0 %v1947, 32
      %v2024 = vpop.permute.xlu0 %2023
      %2025 = vrot.lane.b32.xlu0 %v1948, 32
      %v2026 = vpop.permute.xlu0 %2025
      %2027 = vrot.lane.b32.xlu0 %v1949, 32
      %v2028 = vpop.permute.xlu0 %2027
      %2029 = vrot.lane.b32.xlu0 %v1950, 32
      %v2030 = vpop.permute.xlu0 %2029
      %2031 = vrot.lane.b32.xlu0 %v1951, 32
      %v2032 = vpop.permute.xlu0 %2031
      %2033 = vrot.lane.b32.xlu0 %v1952, 32
      %v2034 = vpop.permute.xlu0 %2033
      %2035 = vrot.lane.b32.xlu0 %v1953, 32
      %v2036 = vpop.permute.xlu0 %2035
      %2037 = vrot.lane.b32.xlu0 %v1954, 32
      %v2038 = vpop.permute.xlu0 %2037
      %2039 = vrot.lane.b32.xlu0 %v1955, 32
      %v2040 = vpop.permute.xlu0 %2039
      %2041 = vrot.lane.b32.xlu0 %v1956, 32
      %v2042 = vpop.permute.xlu0 %2041
      %2043 = vrot.lane.b32.xlu0 %v1957, 32
      %v2044 = vpop.permute.xlu0 %2043
      %2045 = vrot.lane.b32.xlu0 %v1958, 32
      %v2046 = vpop.permute.xlu0 %2045
      %2047 = vrot.lane.b32.xlu0 %v1959, 32
      %v2048 = vpop.permute.xlu0 %2047
      %2049 = vrot.lane.b32.xlu0 %v1960, 32
      %v2050 = vpop.permute.xlu0 %2049
      %2051 = vrot.lane.b32.xlu0 %v1961, 32
      %v2052 = vpop.permute.xlu0 %2051
      %2053 = vrot.lane.b32.xlu0 %v1962, 32
      %v2054 = vpop.permute.xlu0 %2053
      %2055 = vrot.lane.b32.xlu0 %v1963, 32
      %v2056 = vpop.permute.xlu0 %2055
      %2057 = vrot.lane.b32.xlu0 %v1964, 32
      %v2058 = vpop.permute.xlu0 %2057
      %2059 = vrot.lane.b32.xlu0 %v1965, 32
      %v2060 = vpop.permute.xlu0 %2059
      %2061 = vrot.lane.b32.xlu0 %v1966, 32
      %v2062 = vpop.permute.xlu0 %2061
      %vm2095 = vcmask 294144
      %2096 = vst.msk [vmem:[#allocation3] sm:$0xff] %vm2095, %v2000
      %2097 = vst.msk [vmem:[#allocation3 + $0x8] sm:$0xff] %vm2095, %v2002
      %2098 = vst.msk [vmem:[#allocation3 + $0x10] sm:$0xff] %vm2095, %v2004
      %2099 = vst.msk [vmem:[#allocation3 + $0x18] sm:$0xff] %vm2095, %v2006
      %2100 = vst.msk [vmem:[#allocation3 + $0x20] sm:$0xff] %vm2095, %v2008
      %2101 = vst.msk [vmem:[#allocation3 + $0x28] sm:$0xff] %vm2095, %v2010
      %2102 = vst.msk [vmem:[#allocation3 + $0x30] sm:$0xff] %vm2095, %v2012
      %2103 = vst.msk [vmem:[#allocation3 + $0x38] sm:$0xff] %vm2095, %v2014
      %2104 = vst.msk [vmem:[#allocation3 + $0x40] sm:$0xff] %vm2095, %v2016
      %2105 = vst.msk [vmem:[#allocation3 + $0x48] sm:$0xff] %vm2095, %v2018
      %2106 = vst.msk [vmem:[#allocation3 + $0x50] sm:$0xff] %vm2095, %v2020
      %2107 = vst.msk [vmem:[#allocation3 + $0x58] sm:$0xff] %vm2095, %v2022
      %2108 = vst.msk [vmem:[#allocation3 + $0x60] sm:$0xff] %vm2095, %v2024
      %2109 = vst.msk [vmem:[#allocation3 + $0x68] sm:$0xff] %vm2095, %v2026
      %2110 = vst.msk [vmem:[#allocation3 + $0x70] sm:$0xff] %vm2095, %v2028
      %2111 = vst.msk [vmem:[#allocation3 + $0x78] sm:$0xff] %vm2095, %v2030
      %2112 = vst.msk [vmem:[#allocation3 + $0x80] sm:$0xff] %vm2095, %v2032
      %2113 = vst.msk [vmem:[#allocation3 + $0x88] sm:$0xff] %vm2095, %v2034
      %2114 = vst.msk [vmem:[#allocation3 + $0x90] sm:$0xff] %vm2095, %v2036
      %2115 = vst.msk [vmem:[#allocation3 + $0x98] sm:$0xff] %vm2095, %v2038
      %2116 = vst.msk [vmem:[#allocation3 + $0xa0] sm:$0xff] %vm2095, %v2040
      %2117 = vst.msk [vmem:[#allocation3 + $0xa8] sm:$0xff] %vm2095, %v2042
      %2118 = vst.msk [vmem:[#allocation3 + $0xb0] sm:$0xff] %vm2095, %v2044
      %2119 = vst.msk [vmem:[#allocation3 + $0xb8] sm:$0xff] %vm2095, %v2046
      %2120 = vst.msk [vmem:[#allocation3 + $0xc0] sm:$0xff] %vm2095, %v2048
      %2121 = vst.msk [vmem:[#allocation3 + $0xc8] sm:$0xff] %vm2095, %v2050
      %2122 = vst.msk [vmem:[#allocation3 + $0xd0] sm:$0xff] %vm2095, %v2052
      %2123 = vst.msk [vmem:[#allocation3 + $0xd8] sm:$0xff] %vm2095, %v2054
      %2124 = vst.msk [vmem:[#allocation3 + $0xe0] sm:$0xff] %vm2095, %v2056
      %2125 = vst.msk [vmem:[#allocation3 + $0xe8] sm:$0xff] %vm2095, %v2058
      %2126 = vst.msk [vmem:[#allocation3 + $0xf0] sm:$0xff] %vm2095, %v2060
      %2127 = vst.msk [vmem:[#allocation3 + $0xf8] sm:$0xff] %vm2095, %v2062
      %v2128 = vld [vmem:[#allocation3] sm:$0xff]
      %v2129 = vld [vmem:[#allocation3 + $0x8] sm:$0xff]
      %v2130 = vld [vmem:[#allocation3 + $0x10] sm:$0xff]
      %v2131 = vld [vmem:[#allocation3 + $0x18] sm:$0xff]
      %v2132 = vld [vmem:[#allocation3 + $0x20] sm:$0xff]
      %v2133 = vld [vmem:[#allocation3 + $0x28] sm:$0xff]
      %v2134 = vld [vmem:[#allocation3 + $0x30] sm:$0xff]
      %v2135 = vld [vmem:[#allocation3 + $0x38] sm:$0xff]
      %v2136 = vld [vmem:[#allocation3 + $0x40] sm:$0xff]
      %v2137 = vld [vmem:[#allocation3 + $0x48] sm:$0xff]
      %v2138 = vld [vmem:[#allocation3 + $0x50] sm:$0xff]
      %v2139 = vld [vmem:[#allocation3 + $0x58] sm:$0xff]
      %v2140 = vld [vmem:[#allocation3 + $0x60] sm:$0xff]
      %v2141 = vld [vmem:[#allocation3 + $0x68] sm:$0xff]
      %v2142 = vld [vmem:[#allocation3 + $0x70] sm:$0xff]
      %v2143 = vld [vmem:[#allocation3 + $0x78] sm:$0xff]
      %v2144 = vld [vmem:[#allocation3 + $0x80] sm:$0xff]
      %v2145 = vld [vmem:[#allocation3 + $0x88] sm:$0xff]
      %v2146 = vld [vmem:[#allocation3 + $0x90] sm:$0xff]
      %v2147 = vld [vmem:[#allocation3 + $0x98] sm:$0xff]
      %v2148 = vld [vmem:[#allocation3 + $0xa0] sm:$0xff]
      %v2149 = vld [vmem:[#allocation3 + $0xa8] sm:$0xff]
      %v2150 = vld [vmem:[#allocation3 + $0xb0] sm:$0xff]
      %v2151 = vld [vmem:[#allocation3 + $0xb8] sm:$0xff]
      %v2152 = vld [vmem:[#allocation3 + $0xc0] sm:$0xff]
      %v2153 = vld [vmem:[#allocation3 + $0xc8] sm:$0xff]
      %v2154 = vld [vmem:[#allocation3 + $0xd0] sm:$0xff]
      %v2155 = vld [vmem:[#allocation3 + $0xd8] sm:$0xff]
      %v2156 = vld [vmem:[#allocation3 + $0xe0] sm:$0xff]
      %v2157 = vld [vmem:[#allocation3 + $0xe8] sm:$0xff]
      %v2158 = vld [vmem:[#allocation3 + $0xf0] sm:$0xff]
      %v2159 = vld [vmem:[#allocation3 + $0xf8] sm:$0xff]
      %v2160 = vld [vmem:[%s2] sm:$0xff]
      %v2161 = vld [vmem:[%s2 + $0x8] sm:$0xff]
      %v2162 = vld [vmem:[%s2 + $0x10] sm:$0xff]
      %v2163 = vld [vmem:[%s2 + $0x18] sm:$0xff]
      %v2164 = vld [vmem:[%s2 + $0x20] sm:$0xf]
      %v2165 = vld [vmem:[%s3] sm:$0x1]
      %v2167 = vlaneseq
      %v2168 = vshrl.u32 %v2167, 7
      %v2169 = vsub.s32 0, %v2168
      %v2170 = vrot.slane %v2165, %v2169
      %vm2172 = vcmask 293888
      %v2174 = vsel %vm2172, %v2128, 0
      %v2177 = vsel %vm2172, %v2129, 0
      %v2180 = vsel %vm2172, %v2130, 0
      %v2183 = vsel %vm2172, %v2131, 0
      %v2186 = vsel %vm2172, %v2132, 0
      %v2189 = vsel %vm2172, %v2133, 0
      %v2192 = vsel %vm2172, %v2134, 0
      %v2195 = vsel %vm2172, %v2135, 0
      %v2198 = vsel %vm2172, %v2136, 0
      %v2201 = vsel %vm2172, %v2137, 0
      %v2204 = vsel %vm2172, %v2138, 0
      %v2207 = vsel %vm2172, %v2139, 0
      %v2210 = vsel %vm2172, %v2140, 0
      %v2213 = vsel %vm2172, %v2141, 0
      %v2216 = vsel %vm2172, %v2142, 0
      %v2219 = vsel %vm2172, %v2143, 0
      %v2222 = vsel %vm2172, %v2144, 0
      %v2225 = vsel %vm2172, %v2145, 0
      %v2228 = vsel %vm2172, %v2146, 0
      %v2231 = vsel %vm2172, %v2147, 0
      %v2234 = vsel %vm2172, %v2148, 0
      %v2237 = vsel %vm2172, %v2149, 0
      %v2240 = vsel %vm2172, %v2150, 0
      %v2243 = vsel %vm2172, %v2151, 0
      %v2246 = vsel %vm2172, %v2152, 0
      %v2249 = vsel %vm2172, %v2153, 0
      %v2252 = vsel %vm2172, %v2154, 0
      %v2255 = vsel %vm2172, %v2155, 0
      %v2258 = vsel %vm2172, %v2156, 0
      %v2261 = vsel %vm2172, %v2157, 0
      %v2264 = vsel %vm2172, %v2158, 0
      %v2267 = vsel %vm2172, %v2159, 0
      %vm2269 = vcmask 1043456
      %v2271 = vsel %vm2269, %v2164, 0
      %2273 = vmatprep.subr.mxu0 0.0
      %2274 = vmatpush1.msra.mxu0 %v2160
      %2275 = vmatprep.subr.mxu0 0.0
      %2276 = vmatpush1.msra.mxu0 %v2161
      %2277 = vmatprep.subr.mxu0 0.0
      %2278 = vmatpush1.msra.mxu0 %v2162
      %2279 = vmatprep.subr.mxu0 0.0
      %2280 = vmatpush1.msra.mxu0 %v2163
      %2281 = vmatprep.subr.mxu0 0.0
      %2282 = vmatpush1.msra.mxu0 %v2271
      %2283 = vmatprep.subr.mxu0 0.0
      %2284 = vmatpush1.msra.mxu0 0.0
      %2285 = vmatprep.subr.mxu0 0.0
      %2286 = vmatpush1.msra.mxu0 0.0
      %2287 = vmatprep.subr.mxu0 0.0
      %2288 = vmatpush1.msra.mxu0 0.0
      %2289 = vmatprep.subr.mxu0 0.0
      %2290 = vmatpush1.msra.mxu0 0.0
      %2291 = vmatprep.subr.mxu0 0.0
      %2292 = vmatpush1.msra.mxu0 0.0
      %2293 = vmatprep.subr.mxu0 0.0
      %2294 = vmatpush1.msra.mxu0 0.0
      %2295 = vmatprep.subr.mxu0 0.0
      %2296 = vmatpush1.msra.mxu0 0.0
      %2297 = vmatprep.subr.mxu0 0.0
      %2298 = vmatpush1.msra.mxu0 0.0
      %2299 = vmatprep.subr.mxu0 0.0
      %2300 = vmatpush1.msra.mxu0 0.0
      %2301 = vmatprep.subr.mxu0 0.0
      %2302 = vmatpush1.msra.mxu0 0.0
      %2303 = vmatprep.subr.mxu0 0.0
      %2304 = vmatpush1.msra.mxu0 0.0
      %2305 = vmatprep.subr.mxu0 0.0
      %2306 = vmatpush1.msra.mxu0 0.0
      %2307 = vmatprep.subr.mxu0 0.0
      %2308 = vmatpush1.msra.mxu0 0.0
      %2309 = vmatprep.subr.mxu0 0.0
      %2310 = vmatpush1.msra.mxu0 0.0
      %2311 = vmatprep.subr.mxu0 0.0
      %2312 = vmatpush1.msra.mxu0 0.0
      %2313 = vmatprep.subr.mxu0 0.0
      %2314 = vmatpush1.msra.mxu0 0.0
      %2315 = vmatprep.subr.mxu0 0.0
      %2316 = vmatpush1.msra.mxu0 0.0
      %2317 = vmatprep.subr.mxu0 0.0
      %2318 = vmatpush1.msra.mxu0 0.0
      %2319 = vmatprep.subr.mxu0 0.0
      %2320 = vmatpush1.msra.mxu0 0.0
      %2321 = vmatprep.subr.mxu0 0.0
      %2322 = vmatpush1.msra.mxu0 0.0
      %2323 = vmatprep.subr.mxu0 0.0
      %2324 = vmatpush1.msra.mxu0 0.0
      %2325 = vmatprep.subr.mxu0 0.0
      %2326 = vmatpush1.msra.mxu0 0.0
      %2327 = vmatprep.subr.mxu0 0.0
      %2328 = vmatpush1.msra.mxu0 0.0
      %2329 = vmatprep.subr.mxu0 0.0
      %2330 = vmatpush1.msra.mxu0 0.0
      %2331 = vmatprep.subr.mxu0 0.0
      %2332 = vmatpush1.msra.mxu0 0.0
      %2333 = vmatprep.subr.mxu0 0.0
      %2334 = vmatpush1.msra.mxu0 0.0
      %2335 = vmatprep.subr.mxu0 0.0
      %2336 = vmatpush1.msra.mxu0 0.0
      %2337 = vmatprep.mubr.f32.mxu0 0.0
      %2338 = vmatmul.mubr.f32.gmra.mrb[0].mxu0 %v2174
      %v2339 = vpop.f32.mrb[0].mxu0
      %v2340 = vadd.f32 %v2170, %v2339
      %v2341 = vpop.f32.mrb[0].mxu0
      %2342 = vmatprep.mubr.f32.mxu0 0.0
      %2343 = vmatmul.mubr.f32.gmra.mrb[0].mxu0 %v2177
      %v2344 = vpop.f32.mrb[0].mxu0
      %v2345 = vadd.f32 %v2170, %v2344
      %v2346 = vpop.f32.mrb[0].mxu0
      %2347 = vmatprep.mubr.f32.mxu0 0.0
      %2348 = vmatmul.mubr.f32.gmra.mrb[0].mxu0 %v2180
      %v2349 = vpop.f32.mrb[0].mxu0
      %v2350 = vadd.f32 %v2170, %v2349
      %v2351 = vpop.f32.mrb[0].mxu0
      %2352 = vmatprep.mubr.f32.mxu0 0.0
      %2353 = vmatmul.mubr.f32.gmra.mrb[0].mxu0 %v2183
      %v2354 = vpop.f32.mrb[0].mxu0
      %v2355 = vadd.f32 %v2170, %v2354
      %v2356 = vpop.f32.mrb[0].mxu0
      %2357 = vmatprep.mubr.f32.mxu0 0.0
      %2358 = vmatmul.mubr.f32.gmra.mrb[0].mxu0 %v2186
      %v2359 = vpop.f32.mrb[0].mxu0
      %v2360 = vadd.f32 %v2170, %v2359
      %v2361 = vpop.f32.mrb[0].mxu0
      %2362 = vmatprep.mubr.f32.mxu0 0.0
      %2363 = vmatmul.mubr.f32.gmra.mrb[0].mxu0 %v2189
      %v2364 = vpop.f32.mrb[0].mxu0
      %v2365 = vadd.f32 %v2170, %v2364
      %v2366 = vpop.f32.mrb[0].mxu0
      %2367 = vmatprep.mubr.f32.mxu0 0.0
      %2368 = vmatmul.mubr.f32.gmra.mrb[0].mxu0 %v2192
      %v2369 = vpop.f32.mrb[0].mxu0
      %v2370 = vadd.f32 %v2170, %v2369
      %v2371 = vpop.f32.mrb[0].mxu0
      %2372 = vmatprep.mubr.f32.mxu0 0.0
      %2373 = vmatmul.mubr.f32.gmra.mrb[0].mxu0 %v2195
      %v2374 = vpop.f32.mrb[0].mxu0
      %v2375 = vadd.f32 %v2170, %v2374
      %v2376 = vpop.f32.mrb[0].mxu0
      %2377 = vmatprep.mubr.f32.mxu0 0.0
      %2378 = vmatmul.mubr.f32.gmra.mrb[0].mxu0 %v2198
      %v2379 = vpop.f32.mrb[0].mxu0
      %v2380 = vadd.f32 %v2170, %v2379
      %v2381 = vpop.f32.mrb[0].mxu0
      %2382 = vmatprep.mubr.f32.mxu0 0.0
      %2383 = vmatmul.mubr.f32.gmra.mrb[0].mxu0 %v2201
      %v2384 = vpop.f32.mrb[0].mxu0
      %v2385 = vadd.f32 %v2170, %v2384
      %v2386 = vpop.f32.mrb[0].mxu0
      %2387 = vmatprep.mubr.f32.mxu0 0.0
      %2388 = vmatmul.mubr.f32.gmra.mrb[0].mxu0 %v2204
      %v2389 = vpop.f32.mrb[0].mxu0
      %v2390 = vadd.f32 %v2170, %v2389
      %v2391 = vpop.f32.mrb[0].mxu0
      %2392 = vmatprep.mubr.f32.mxu0 0.0
      %2393 = vmatmul.mubr.f32.gmra.mrb[0].mxu0 %v2207
      %v2394 = vpop.f32.mrb[0].mxu0
      %v2395 = vadd.f32 %v2170, %v2394
      %v2396 = vpop.f32.mrb[0].mxu0
      %2397 = vmatprep.mubr.f32.mxu0 0.0
      %2398 = vmatmul.mubr.f32.gmra.mrb[0].mxu0 %v2210
      %v2399 = vpop.f32.mrb[0].mxu0
      %v2400 = vadd.f32 %v2170, %v2399
      %v2401 = vpop.f32.mrb[0].mxu0
      %2402 = vmatprep.mubr.f32.mxu0 0.0
      %2403 = vmatmul.mubr.f32.gmra.mrb[0].mxu0 %v2213
      %v2404 = vpop.f32.mrb[0].mxu0
      %v2405 = vadd.f32 %v2170, %v2404
      %v2406 = vpop.f32.mrb[0].mxu0
      %2407 = vmatprep.mubr.f32.mxu0 0.0
      %2408 = vmatmul.mubr.f32.gmra.mrb[0].mxu0 %v2216
      %v2409 = vpop.f32.mrb[0].mxu0
      %v2410 = vadd.f32 %v2170, %v2409
      %v2411 = vpop.f32.mrb[0].mxu0
      %2412 = vmatprep.mubr.f32.mxu0 0.0
      %2413 = vmatmul.mubr.f32.gmra.mrb[0].mxu0 %v2219
      %v2414 = vpop.f32.mrb[0].mxu0
      %v2415 = vadd.f32 %v2170, %v2414
      %v2416 = vpop.f32.mrb[0].mxu0
      %2417 = vmatprep.mubr.f32.mxu0 0.0
      %2418 = vmatmul.mubr.f32.gmra.mrb[0].mxu0 %v2222
      %v2419 = vpop.f32.mrb[0].mxu0
      %v2420 = vadd.f32 %v2170, %v2419
      %v2421 = vpop.f32.mrb[0].mxu0
      %2422 = vmatprep.mubr.f32.mxu0 0.0
      %2423 = vmatmul.mubr.f32.gmra.mrb[0].mxu0 %v2225
      %v2424 = vpop.f32.mrb[0].mxu0
      %v2425 = vadd.f32 %v2170, %v2424
      %v2426 = vpop.f32.mrb[0].mxu0
      %2427 = vmatprep.mubr.f32.mxu0 0.0
      %2428 = vmatmul.mubr.f32.gmra.mrb[0].mxu0 %v2228
      %v2429 = vpop.f32.mrb[0].mxu0
      %v2430 = vadd.f32 %v2170, %v2429
      %v2431 = vpop.f32.mrb[0].mxu0
      %2432 = vmatprep.mubr.f32.mxu0 0.0
      %2433 = vmatmul.mubr.f32.gmra.mrb[0].mxu0 %v2231
      %v2434 = vpop.f32.mrb[0].mxu0
      %v2435 = vadd.f32 %v2170, %v2434
      %v2436 = vpop.f32.mrb[0].mxu0
      %2437 = vmatprep.mubr.f32.mxu0 0.0
      %2438 = vmatmul.mubr.f32.gmra.mrb[0].mxu0 %v2234
      %v2439 = vpop.f32.mrb[0].mxu0
      %v2440 = vadd.f32 %v2170, %v2439
      %v2441 = vpop.f32.mrb[0].mxu0
      %2442 = vmatprep.mubr.f32.mxu0 0.0
      %2443 = vmatmul.mubr.f32.gmra.mrb[0].mxu0 %v2237
      %v2444 = vpop.f32.mrb[0].mxu0
      %v2445 = vadd.f32 %v2170, %v2444
      %v2446 = vpop.f32.mrb[0].mxu0
      %2447 = vmatprep.mubr.f32.mxu0 0.0
      %2448 = vmatmul.mubr.f32.gmra.mrb[0].mxu0 %v2240
      %v2449 = vpop.f32.mrb[0].mxu0
      %v2450 = vadd.f32 %v2170, %v2449
      %v2451 = vpop.f32.mrb[0].mxu0
      %2452 = vmatprep.mubr.f32.mxu0 0.0
      %2453 = vmatmul.mubr.f32.gmra.mrb[0].mxu0 %v2243
      %v2454 = vpop.f32.mrb[0].mxu0
      %v2455 = vadd.f32 %v2170, %v2454
      %v2456 = vpop.f32.mrb[0].mxu0
      %2457 = vmatprep.mubr.f32.mxu0 0.0
      %2458 = vmatmul.mubr.f32.gmra.mrb[0].mxu0 %v2246
      %v2459 = vpop.f32.mrb[0].mxu0
      %v2460 = vadd.f32 %v2170, %v2459
      %v2461 = vpop.f32.mrb[0].mxu0
      %2462 = vmatprep.mubr.f32.mxu0 0.0
      %2463 = vmatmul.mubr.f32.gmra.mrb[0].mxu0 %v2249
      %v2464 = vpop.f32.mrb[0].mxu0
      %v2465 = vadd.f32 %v2170, %v2464
      %v2466 = vpop.f32.mrb[0].mxu0
      %2467 = vmatprep.mubr.f32.mxu0 0.0
      %2468 = vmatmul.mubr.f32.gmra.mrb[0].mxu0 %v2252
      %v2469 = vpop.f32.mrb[0].mxu0
      %v2470 = vadd.f32 %v2170, %v2469
      %v2471 = vpop.f32.mrb[0].mxu0
      %2472 = vmatprep.mubr.f32.mxu0 0.0
      %2473 = vmatmul.mubr.f32.gmra.mrb[0].mxu0 %v2255
      %v2474 = vpop.f32.mrb[0].mxu0
      %v2475 = vadd.f32 %v2170, %v2474
      %v2476 = vpop.f32.mrb[0].mxu0
      %2477 = vmatprep.mubr.f32.mxu0 0.0
      %2478 = vmatmul.mubr.f32.gmra.mrb[0].mxu0 %v2258
      %v2479 = vpop.f32.mrb[0].mxu0
      %v2480 = vadd.f32 %v2170, %v2479
      %v2481 = vpop.f32.mrb[0].mxu0
      %2482 = vmatprep.mubr.f32.mxu0 0.0
      %2483 = vmatmul.mubr.f32.gmra.mrb[0].mxu0 %v2261
      %v2484 = vpop.f32.mrb[0].mxu0
      %v2485 = vadd.f32 %v2170, %v2484
      %v2486 = vpop.f32.mrb[0].mxu0
      %2487 = vmatprep.mubr.f32.mxu0 0.0
      %2488 = vmatmul.mubr.f32.gmra.mrb[0].mxu0 %v2264
      %v2489 = vpop.f32.mrb[0].mxu0
      %v2490 = vadd.f32 %v2170, %v2489
      %v2491 = vpop.f32.mrb[0].mxu0
      %2492 = vmatprep.mubr.f32.mxu0 0.0
      %2493 = vmatmul.mubr.f32.gmra.mrb[0].mxu0 %v2267
      %v2494 = vpop.f32.mrb[0].mxu0
      %v2495 = vadd.f32 %v2170, %v2494
      %v2496 = vpop.f32.mrb[0].mxu0
      %2497 = vdwg.mxu0
      %v2498 = vmin.f32 %v2340, 20.0
      %v2499 = vmin.f32 %v2345, 20.0
      %v2500 = vmin.f32 %v2350, 20.0
      %v2501 = vmin.f32 %v2355, 20.0
      %v2502 = vmin.f32 %v2360, 20.0
      %v2503 = vmin.f32 %v2365, 20.0
      %v2504 = vmin.f32 %v2370, 20.0
      %v2505 = vmin.f32 %v2375, 20.0
      %v2506 = vmin.f32 %v2380, 20.0
      %v2507 = vmin.f32 %v2385, 20.0
      %v2508 = vmin.f32 %v2390, 20.0
      %v2509 = vmin.f32 %v2395, 20.0
      %v2510 = vmin.f32 %v2400, 20.0
      %v2511 = vmin.f32 %v2405, 20.0
      %v2512 = vmin.f32 %v2410, 20.0
      %v2513 = vmin.f32 %v2415, 20.0
      %v2514 = vmin.f32 %v2420, 20.0
      %v2515 = vmin.f32 %v2425, 20.0
      %v2516 = vmin.f32 %v2430, 20.0
      %v2517 = vmin.f32 %v2435, 20.0
      %v2518 = vmin.f32 %v2440, 20.0
      %v2519 = vmin.f32 %v2445, 20.0
      %v2520 = vmin.f32 %v2450, 20.0
      %v2521 = vmin.f32 %v2455, 20.0
      %v2522 = vmin.f32 %v2460, 20.0
      %v2523 = vmin.f32 %v2465, 20.0
      %v2524 = vmin.f32 %v2470, 20.0
      %v2525 = vmin.f32 %v2475, 20.0
      %v2526 = vmin.f32 %v2480, 20.0
      %v2527 = vmin.f32 %v2485, 20.0
      %v2528 = vmin.f32 %v2490, 20.0
      %v2529 = vmin.f32 %v2495, 20.0
      %v2530 = vmul.f32 %v2498, 1.442695
      %v2531 = vpow.pop %v2530
      %v2532 = vmul.f32 %v2499, 1.442695
      %v2533 = vpow.pop %v2532
      %v2534 = vmul.f32 %v2500, 1.442695
      %v2535 = vpow.pop %v2534
      %v2536 = vmul.f32 %v2501, 1.442695
      %v2537 = vpow.pop %v2536
      %v2538 = vmul.f32 %v2502, 1.442695
      %v2539 = vpow.pop %v2538
      %v2540 = vmul.f32 %v2503, 1.442695
      %v2541 = vpow.pop %v2540
      %v2542 = vmul.f32 %v2504, 1.442695
      %v2543 = vpow.pop %v2542
      %v2544 = vmul.f32 %v2505, 1.442695
      %v2545 = vpow.pop %v2544
      %v2546 = vmul.f32 %v2506, 1.442695
      %v2547 = vpow.pop %v2546
      %v2548 = vmul.f32 %v2507, 1.442695
      %v2549 = vpow.pop %v2548
      %v2550 = vmul.f32 %v2508, 1.442695
      %v2551 = vpow.pop %v2550
      %v2552 = vmul.f32 %v2509, 1.442695
      %v2553 = vpow.pop %v2552
      %v2554 = vmul.f32 %v2510, 1.442695
      %v2555 = vpow.pop %v2554
      %v2556 = vmul.f32 %v2511, 1.442695
      %v2557 = vpow.pop %v2556
      %v2558 = vmul.f32 %v2512, 1.442695
      %v2559 = vpow.pop %v2558
      %v2560 = vmul.f32 %v2513, 1.442695
      %v2561 = vpow.pop %v2560
      %v2562 = vmul.f32 %v2514, 1.442695
      %v2563 = vpow.pop %v2562
      %v2564 = vmul.f32 %v2515, 1.442695
      %v2565 = vpow.pop %v2564
      %v2566 = vmul.f32 %v2516, 1.442695
      %v2567 = vpow.pop %v2566
      %v2568 = vmul.f32 %v2517, 1.442695
      %v2569 = vpow.pop %v2568
      %v2570 = vmul.f32 %v2518, 1.442695
      %v2571 = vpow.pop %v2570
      %v2572 = vmul.f32 %v2519, 1.442695
      %v2573 = vpow.pop %v2572
      %v2574 = vmul.f32 %v2520, 1.442695
      %v2575 = vpow.pop %v2574
      %v2576 = vmul.f32 %v2521, 1.442695
      %v2577 = vpow.pop %v2576
      %v2578 = vmul.f32 %v2522, 1.442695
      %v2579 = vpow.pop %v2578
      %v2580 = vmul.f32 %v2523, 1.442695
      %v2581 = vpow.pop %v2580
      %v2582 = vmul.f32 %v2524, 1.442695
      %v2583 = vpow.pop %v2582
      %v2584 = vmul.f32 %v2525, 1.442695
      %v2585 = vpow.pop %v2584
      %v2586 = vmul.f32 %v2526, 1.442695
      %v2587 = vpow.pop %v2586
      %v2588 = vmul.f32 %v2527, 1.442695
      %v2589 = vpow.pop %v2588
      %v2590 = vmul.f32 %v2528, 1.442695
      %v2591 = vpow.pop %v2590
      %v2592 = vmul.f32 %v2529, 1.442695
      %v2593 = vpow.pop %v2592
      %v2594 = vadd.f32 %v2531, 2.0
      %v2595 = vadd.f32 %v2533, 2.0
      %v2596 = vadd.f32 %v2535, 2.0
      %v2597 = vadd.f32 %v2537, 2.0
      %v2598 = vadd.f32 %v2539, 2.0
      %v2599 = vadd.f32 %v2541, 2.0
      %v2600 = vadd.f32 %v2543, 2.0
      %v2601 = vadd.f32 %v2545, 2.0
      %v2602 = vadd.f32 %v2547, 2.0
      %v2603 = vadd.f32 %v2549, 2.0
      %v2604 = vadd.f32 %v2551, 2.0
      %v2605 = vadd.f32 %v2553, 2.0
      %v2606 = vadd.f32 %v2555, 2.0
      %v2607 = vadd.f32 %v2557, 2.0
      %v2608 = vadd.f32 %v2559, 2.0
      %v2609 = vadd.f32 %v2561, 2.0
      %v2610 = vadd.f32 %v2563, 2.0
      %v2611 = vadd.f32 %v2565, 2.0
      %v2612 = vadd.f32 %v2567, 2.0
      %v2613 = vadd.f32 %v2569, 2.0
      %v2614 = vadd.f32 %v2571, 2.0
      %v2615 = vadd.f32 %v2573, 2.0
      %v2616 = vadd.f32 %v2575, 2.0
      %v2617 = vadd.f32 %v2577, 2.0
      %v2618 = vadd.f32 %v2579, 2.0
      %v2619 = vadd.f32 %v2581, 2.0
      %v2620 = vadd.f32 %v2583, 2.0
      %v2621 = vadd.f32 %v2585, 2.0
      %v2622 = vadd.f32 %v2587, 2.0
      %v2623 = vadd.f32 %v2589, 2.0
      %v2624 = vadd.f32 %v2591, 2.0
      %v2625 = vadd.f32 %v2593, 2.0
      %v2626 = vmul.f32 %v2531, %v2594
      %v2627 = vmul.f32 %v2533, %v2595
      %v2628 = vmul.f32 %v2535, %v2596
      %v2629 = vmul.f32 %v2537, %v2597
      %v2630 = vmul.f32 %v2539, %v2598
      %v2631 = vmul.f32 %v2541, %v2599
      %v2632 = vmul.f32 %v2543, %v2600
      %v2633 = vmul.f32 %v2545, %v2601
      %v2634 = vmul.f32 %v2547, %v2602
      %v2635 = vmul.f32 %v2549, %v2603
      %v2636 = vmul.f32 %v2551, %v2604
      %v2637 = vmul.f32 %v2553, %v2605
      %v2638 = vmul.f32 %v2555, %v2606
      %v2639 = vmul.f32 %v2557, %v2607
      %v2640 = vmul.f32 %v2559, %v2608
      %v2641 = vmul.f32 %v2561, %v2609
      %v2642 = vmul.f32 %v2563, %v2610
      %v2643 = vmul.f32 %v2565, %v2611
      %v2644 = vmul.f32 %v2567, %v2612
      %v2645 = vmul.f32 %v2569, %v2613
      %v2646 = vmul.f32 %v2571, %v2614
      %v2647 = vmul.f32 %v2573, %v2615
      %v2648 = vmul.f32 %v2575, %v2616
      %v2649 = vmul.f32 %v2577, %v2617
      %v2650 = vmul.f32 %v2579, %v2618
      %v2651 = vmul.f32 %v2581, %v2619
      %v2652 = vmul.f32 %v2583, %v2620
      %v2653 = vmul.f32 %v2585, %v2621
      %v2654 = vmul.f32 %v2587, %v2622
      %v2655 = vmul.f32 %v2589, %v2623
      %v2656 = vmul.f32 %v2591, %v2624
      %v2657 = vmul.f32 %v2593, %v2625
      %vm2658 = vcmp.gt.f32.partialorder %v2340, 20.0
      %vm2659 = vcmp.gt.f32.partialorder %v2345, 20.0
      %vm2660 = vcmp.gt.f32.partialorder %v2350, 20.0
      %vm2661 = vcmp.gt.f32.partialorder %v2355, 20.0
      %vm2662 = vcmp.gt.f32.partialorder %v2360, 20.0
      %vm2663 = vcmp.gt.f32.partialorder %v2365, 20.0
      %vm2664 = vcmp.gt.f32.partialorder %v2370, 20.0
      %vm2665 = vcmp.gt.f32.partialorder %v2375, 20.0
      %vm2666 = vcmp.gt.f32.partialorder %v2380, 20.0
      %vm2667 = vcmp.gt.f32.partialorder %v2385, 20.0
      %vm2668 = vcmp.gt.f32.partialorder %v2390, 20.0
      %vm2669 = vcmp.gt.f32.partialorder %v2395, 20.0
      %vm2670 = vcmp.gt.f32.partialorder %v2400, 20.0
      %vm2671 = vcmp.gt.f32.partialorder %v2405, 20.0
      %vm2672 = vcmp.gt.f32.partialorder %v2410, 20.0
      %vm2673 = vcmp.gt.f32.partialorder %v2415, 20.0
      %vm2674 = vcmp.gt.f32.partialorder %v2420, 20.0
      %vm2675 = vcmp.gt.f32.partialorder %v2425, 20.0
      %vm2676 = vcmp.gt.f32.partialorder %v2430, 20.0
      %vm2677 = vcmp.gt.f32.partialorder %v2435, 20.0
      %vm2678 = vcmp.gt.f32.partialorder %v2440, 20.0
      %vm2679 = vcmp.gt.f32.partialorder %v2445, 20.0
      %vm2680 = vcmp.gt.f32.partialorder %v2450, 20.0
      %vm2681 = vcmp.gt.f32.partialorder %v2455, 20.0
      %vm2682 = vcmp.gt.f32.partialorder %v2460, 20.0
      %vm2683 = vcmp.gt.f32.partialorder %v2465, 20.0
      %vm2684 = vcmp.gt.f32.partialorder %v2470, 20.0
      %vm2685 = vcmp.gt.f32.partialorder %v2475, 20.0
      %vm2686 = vcmp.gt.f32.partialorder %v2480, 20.0
      %vm2687 = vcmp.gt.f32.partialorder %v2485, 20.0
      %vm2688 = vcmp.gt.f32.partialorder %v2490, 20.0
      %vm2689 = vcmp.gt.f32.partialorder %v2495, 20.0
      %v2690 = vmul.f32 %v2340, %v2626
      %v2691 = vmul.f32 %v2345, %v2627
      %v2692 = vmul.f32 %v2350, %v2628
      %v2693 = vmul.f32 %v2355, %v2629
      %v2694 = vmul.f32 %v2360, %v2630
      %v2695 = vmul.f32 %v2365, %v2631
      %v2696 = vmul.f32 %v2370, %v2632
      %v2697 = vmul.f32 %v2375, %v2633
      %v2698 = vmul.f32 %v2380, %v2634
      %v2699 = vmul.f32 %v2385, %v2635
      %v2700 = vmul.f32 %v2390, %v2636
      %v2701 = vmul.f32 %v2395, %v2637
      %v2702 = vmul.f32 %v2400, %v2638
      %v2703 = vmul.f32 %v2405, %v2639
      %v2704 = vmul.f32 %v2410, %v2640
      %v2705 = vmul.f32 %v2415, %v2641
      %v2706 = vmul.f32 %v2420, %v2642
      %v2707 = vmul.f32 %v2425, %v2643
      %v2708 = vmul.f32 %v2430, %v2644
      %v2709 = vmul.f32 %v2435, %v2645
      %v2710 = vmul.f32 %v2440, %v2646
      %v2711 = vmul.f32 %v2445, %v2647
      %v2712 = vmul.f32 %v2450, %v2648
      %v2713 = vmul.f32 %v2455, %v2649
      %v2714 = vmul.f32 %v2460, %v2650
      %v2715 = vmul.f32 %v2465, %v2651
      %v2716 = vmul.f32 %v2470, %v2652
      %v2717 = vmul.f32 %v2475, %v2653
      %v2718 = vmul.f32 %v2480, %v2654
      %v2719 = vmul.f32 %v2485, %v2655
      %v2720 = vmul.f32 %v2490, %v2656
      %v2721 = vmul.f32 %v2495, %v2657
      %v2722 = vadd.f32 %v2626, 2.0
      %v2723 = vadd.f32 %v2627, 2.0
      %v2724 = vadd.f32 %v2628, 2.0
      %v2725 = vadd.f32 %v2629, 2.0
      %v2726 = vadd.f32 %v2630, 2.0
      %v2727 = vadd.f32 %v2631, 2.0
      %v2728 = vadd.f32 %v2632, 2.0
      %v2729 = vadd.f32 %v2633, 2.0
      %v2730 = vadd.f32 %v2634, 2.0
      %v2731 = vadd.f32 %v2635, 2.0
      %v2732 = vadd.f32 %v2636, 2.0
      %v2733 = vadd.f32 %v2637, 2.0
      %v2734 = vadd.f32 %v2638, 2.0
      %v2735 = vadd.f32 %v2639, 2.0
      %v2736 = vadd.f32 %v2640, 2.0
      %v2737 = vadd.f32 %v2641, 2.0
      %v2738 = vadd.f32 %v2642, 2.0
      %v2739 = vadd.f32 %v2643, 2.0
      %v2740 = vadd.f32 %v2644, 2.0
      %v2741 = vadd.f32 %v2645, 2.0
      %v2742 = vadd.f32 %v2646, 2.0
      %v2743 = vadd.f32 %v2647, 2.0
      %v2744 = vadd.f32 %v2648, 2.0
      %v2745 = vadd.f32 %v2649, 2.0
      %v2746 = vadd.f32 %v2650, 2.0
      %v2747 = vadd.f32 %v2651, 2.0
      %v2748 = vadd.f32 %v2652, 2.0
      %v2749 = vadd.f32 %v2653, 2.0
      %v2750 = vadd.f32 %v2654, 2.0
      %v2751 = vadd.f32 %v2655, 2.0
      %v2752 = vadd.f32 %v2656, 2.0
      %v2753 = vadd.f32 %v2657, 2.0
      %v2754 = vrcp.pop %v2722
      %v2755 = vmul.f32 %v2690, %v2754
      %v2756 = vrcp.pop %v2723
      %v2757 = vmul.f32 %v2691, %v2756
      %v2758 = vrcp.pop %v2724
      %v2759 = vmul.f32 %v2692, %v2758
      %v2760 = vrcp.pop %v2725
      %v2761 = vmul.f32 %v2693, %v2760
      %v2762 = vrcp.pop %v2726
      %v2763 = vmul.f32 %v2694, %v2762
      %v2764 = vrcp.pop %v2727
      %v2765 = vmul.f32 %v2695, %v2764
      %v2766 = vrcp.pop %v2728
      %v2767 = vmul.f32 %v2696, %v2766
      %v2768 = vrcp.pop %v2729
      %v2769 = vmul.f32 %v2697, %v2768
      %v2770 = vrcp.pop %v2730
      %v2771 = vmul.f32 %v2698, %v2770
      %v2772 = vrcp.pop %v2731
      %v2773 = vmul.f32 %v2699, %v2772
      %v2774 = vrcp.pop %v2732
      %v2775 = vmul.f32 %v2700, %v2774
      %v2776 = vrcp.pop %v2733
      %v2777 = vmul.f32 %v2701, %v2776
      %v2778 = vrcp.pop %v2734
      %v2779 = vmul.f32 %v2702, %v2778
      %v2780 = vrcp.pop %v2735
      %v2781 = vmul.f32 %v2703, %v2780
      %v2782 = vrcp.pop %v2736
      %v2783 = vmul.f32 %v2704, %v2782
      %v2784 = vrcp.pop %v2737
      %v2785 = vmul.f32 %v2705, %v2784
      %v2786 = vrcp.pop %v2738
      %v2787 = vmul.f32 %v2706, %v2786
      %v2788 = vrcp.pop %v2739
      %v2789 = vmul.f32 %v2707, %v2788
      %v2790 = vrcp.pop %v2740
      %v2791 = vmul.f32 %v2708, %v2790
      %v2792 = vrcp.pop %v2741
      %v2793 = vmul.f32 %v2709, %v2792
      %v2794 = vrcp.pop %v2742
      %v2795 = vmul.f32 %v2710, %v2794
      %v2796 = vrcp.pop %v2743
      %v2797 = vmul.f32 %v2711, %v2796
      %v2798 = vrcp.pop %v2744
      %v2799 = vmul.f32 %v2712, %v2798
      %v2800 = vrcp.pop %v2745
      %v2801 = vmul.f32 %v2713, %v2800
      %v2802 = vrcp.pop %v2746
      %v2803 = vmul.f32 %v2714, %v2802
      %v2804 = vrcp.pop %v2747
      %v2805 = vmul.f32 %v2715, %v2804
      %v2806 = vrcp.pop %v2748
      %v2807 = vmul.f32 %v2716, %v2806
      %v2808 = vrcp.pop %v2749
      %v2809 = vmul.f32 %v2717, %v2808
      %v2810 = vrcp.pop %v2750
      %v2811 = vmul.f32 %v2718, %v2810
      %v2812 = vrcp.pop %v2751
      %v2813 = vmul.f32 %v2719, %v2812
      %v2814 = vrcp.pop %v2752
      %v2815 = vmul.f32 %v2720, %v2814
      %v2816 = vrcp.pop %v2753
      %v2817 = vmul.f32 %v2721, %v2816
      %v2818 = vsel %vm2658, %v2340, %v2755
      %v2819 = vsel %vm2659, %v2345, %v2757
      %v2820 = vsel %vm2660, %v2350, %v2759
      %v2821 = vsel %vm2661, %v2355, %v2761
      %v2822 = vsel %vm2662, %v2360, %v2763
      %v2823 = vsel %vm2663, %v2365, %v2765
      %v2824 = vsel %vm2664, %v2370, %v2767
      %v2825 = vsel %vm2665, %v2375, %v2769
      %v2826 = vsel %vm2666, %v2380, %v2771
      %v2827 = vsel %vm2667, %v2385, %v2773
      %v2828 = vsel %vm2668, %v2390, %v2775
      %v2829 = vsel %vm2669, %v2395, %v2777
      %v2830 = vsel %vm2670, %v2400, %v2779
      %v2831 = vsel %vm2671, %v2405, %v2781
      %v2832 = vsel %vm2672, %v2410, %v2783
      %v2833 = vsel %vm2673, %v2415, %v2785
      %v2834 = vsel %vm2674, %v2420, %v2787
      %v2835 = vsel %vm2675, %v2425, %v2789
      %v2836 = vsel %vm2676, %v2430, %v2791
      %v2837 = vsel %vm2677, %v2435, %v2793
      %v2838 = vsel %vm2678, %v2440, %v2795
      %v2839 = vsel %vm2679, %v2445, %v2797
      %v2840 = vsel %vm2680, %v2450, %v2799
      %v2841 = vsel %vm2681, %v2455, %v2801
      %v2842 = vsel %vm2682, %v2460, %v2803
      %v2843 = vsel %vm2683, %v2465, %v2805
      %v2844 = vsel %vm2684, %v2470, %v2807
      %v2845 = vsel %vm2685, %v2475, %v2809
      %v2846 = vsel %vm2686, %v2480, %v2811
      %v2847 = vsel %vm2687, %v2485, %v2813
      %v2848 = vsel %vm2688, %v2490, %v2815
      %v2849 = vsel %vm2689, %v2495, %v2817
      %v2851 = vlaneseq
      %v2852 = vshrl.u32 %v2851, 7
      %v2853 = vsub.s32 0, %v2852
      %v2854 = vrot.slane %v406, %v2853
      %v2856 = vadd.f32 %v2818, %v2854
      %v2857 = vadd.f32 %v2819, %v2854
      %v2858 = vadd.f32 %v2820, %v2854
      %v2859 = vadd.f32 %v2821, %v2854
      %v2860 = vadd.f32 %v2822, %v2854
      %v2861 = vadd.f32 %v2823, %v2854
      %v2862 = vadd.f32 %v2824, %v2854
      %v2863 = vadd.f32 %v2825, %v2854
      %v2864 = vadd.f32 %v2826, %v2854
      %v2865 = vadd.f32 %v2827, %v2854
      %v2866 = vadd.f32 %v2828, %v2854
      %v2867 = vadd.f32 %v2829, %v2854
      %v2868 = vadd.f32 %v2830, %v2854
      %v2869 = vadd.f32 %v2831, %v2854
      %v2870 = vadd.f32 %v2832, %v2854
      %v2871 = vadd.f32 %v2833, %v2854
      %v2872 = vadd.f32 %v2834, %v2854
      %v2873 = vadd.f32 %v2835, %v2854
      %v2874 = vadd.f32 %v2836, %v2854
      %v2875 = vadd.f32 %v2837, %v2854
      %v2876 = vadd.f32 %v2838, %v2854
      %v2877 = vadd.f32 %v2839, %v2854
      %v2878 = vadd.f32 %v2840, %v2854
      %v2879 = vadd.f32 %v2841, %v2854
      %v2880 = vadd.f32 %v2842, %v2854
      %v2881 = vadd.f32 %v2843, %v2854
      %v2882 = vadd.f32 %v2844, %v2854
      %v2883 = vadd.f32 %v2845, %v2854
      %v2884 = vadd.f32 %v2846, %v2854
      %v2885 = vadd.f32 %v2847, %v2854
      %v2886 = vadd.f32 %v2848, %v2854
      %v2887 = vadd.f32 %v2849, %v2854
      %v2888 = vld [vmem:[%s6] sm:$0xff]
      %v2889 = vld [vmem:[%s6 + $0x8] sm:$0xff]
      %v2890 = vld [vmem:[%s6 + $0x10] sm:$0xff]
      %v2891 = vld [vmem:[%s6 + $0x18] sm:$0xff]
      %v2892 = vld [vmem:[%s6 + $0x20] sm:$0xf]
      %v2893 = vld [vmem:[%s7] sm:$0x1]
      %v2895 = vlaneseq
      %v2896 = vshrl.u32 %v2895, 7
      %v2897 = vsub.s32 0, %v2896
      %v2898 = vrot.slane %v2893, %v2897
      %v2901 = vsel %vm2269, %v2892, 0
      %2903 = vmatprep.subr.mxu0 0.0
      %2904 = vmatpush1.msra.mxu0 %v2888
      %2905 = vmatprep.subr.mxu0 0.0
      %2906 = vmatpush1.msra.mxu0 %v2889
      %2907 = vmatprep.subr.mxu0 0.0
      %2908 = vmatpush1.msra.mxu0 %v2890
      %2909 = vmatprep.subr.mxu0 0.0
      %2910 = vmatpush1.msra.mxu0 %v2891
      %2911 = vmatprep.subr.mxu0 0.0
      %2912 = vmatpush1.msra.mxu0 %v2901
      %2913 = vmatprep.subr.mxu0 0.0
      %2914 = vmatpush1.msra.mxu0 0.0
      %2915 = vmatprep.subr.mxu0 0.0
      %2916 = vmatpush1.msra.mxu0 0.0
      %2917 = vmatprep.subr.mxu0 0.0
      %2918 = vmatpush1.msra.mxu0 0.0
      %2919 = vmatprep.subr.mxu0 0.0
      %2920 = vmatpush1.msra.mxu0 0.0
      %2921 = vmatprep.subr.mxu0 0.0
      %2922 = vmatpush1.msra.mxu0 0.0
      %2923 = vmatprep.subr.mxu0 0.0
      %2924 = vmatpush1.msra.mxu0 0.0
      %2925 = vmatprep.subr.mxu0 0.0
      %2926 = vmatpush1.msra.mxu0 0.0
      %2927 = vmatprep.subr.mxu0 0.0
      %2928 = vmatpush1.msra.mxu0 0.0
      %2929 = vmatprep.subr.mxu0 0.0
      %2930 = vmatpush1.msra.mxu0 0.0
      %2931 = vmatprep.subr.mxu0 0.0
      %2932 = vmatpush1.msra.mxu0 0.0
      %2933 = vmatprep.subr.mxu0 0.0
      %2934 = vmatpush1.msra.mxu0 0.0
      %2935 = vmatprep.subr.mxu0 0.0
      %2936 = vmatpush1.msra.mxu0 0.0
      %2937 = vmatprep.subr.mxu0 0.0
      %2938 = vmatpush1.msra.mxu0 0.0
      %2939 = vmatprep.subr.mxu0 0.0
      %2940 = vmatpush1.msra.mxu0 0.0
      %2941 = vmatprep.subr.mxu0 0.0
      %2942 = vmatpush1.msra.mxu0 0.0
      %2943 = vmatprep.subr.mxu0 0.0
      %2944 = vmatpush1.msra.mxu0 0.0
      %2945 = vmatprep.subr.mxu0 0.0
      %2946 = vmatpush1.msra.mxu0 0.0
      %2947 = vmatprep.subr.mxu0 0.0
      %2948 = vmatpush1.msra.mxu0 0.0
      %2949 = vmatprep.subr.mxu0 0.0
      %2950 = vmatpush1.msra.mxu0 0.0
      %2951 = vmatprep.subr.mxu0 0.0
      %2952 = vmatpush1.msra.mxu0 0.0
      %2953 = vmatprep.subr.mxu0 0.0
      %2954 = vmatpush1.msra.mxu0 0.0
      %2955 = vmatprep.subr.mxu0 0.0
      %2956 = vmatpush1.msra.mxu0 0.0
      %2957 = vmatprep.subr.mxu0 0.0
      %2958 = vmatpush1.msra.mxu0 0.0
      %2959 = vmatprep.subr.mxu0 0.0
      %2960 = vmatpush1.msra.mxu0 0.0
      %2961 = vmatprep.subr.mxu0 0.0
      %2962 = vmatpush1.msra.mxu0 0.0
      %2963 = vmatprep.subr.mxu0 0.0
      %2964 = vmatpush1.msra.mxu0 0.0
      %2965 = vmatprep.subr.mxu0 0.0
      %2966 = vmatpush1.msra.mxu0 0.0
      %2967 = vmatprep.mubr.f32.mxu0 0.0
      %2968 = vmatmul.mubr.f32.gmra.mrb[0].mxu0 %v2174
      %v2969 = vpop.f32.mrb[0].mxu0
      %v2970 = vadd.f32 %v2898, %v2969
      %v2971 = vpop.f32.mrb[0].mxu0
      %2972 = vmatprep.mubr.f32.mxu0 0.0
      %2973 = vmatmul.mubr.f32.gmra.mrb[0].mxu0 %v2177
      %v2974 = vpop.f32.mrb[0].mxu0
      %v2975 = vadd.f32 %v2898, %v2974
      %v2976 = vpop.f32.mrb[0].mxu0
      %2977 = vmatprep.mubr.f32.mxu0 0.0
      %2978 = vmatmul.mubr.f32.gmra.mrb[0].mxu0 %v2180
      %v2979 = vpop.f32.mrb[0].mxu0
      %v2980 = vadd.f32 %v2898, %v2979
      %v2981 = vpop.f32.mrb[0].mxu0
      %2982 = vmatprep.mubr.f32.mxu0 0.0
      %2983 = vmatmul.mubr.f32.gmra.mrb[0].mxu0 %v2183
      %v2984 = vpop.f32.mrb[0].mxu0
      %v2985 = vadd.f32 %v2898, %v2984
      %v2986 = vpop.f32.mrb[0].mxu0
      %2987 = vmatprep.mubr.f32.mxu0 0.0
      %2988 = vmatmul.mubr.f32.gmra.mrb[0].mxu0 %v2186
      %v2989 = vpop.f32.mrb[0].mxu0
      %v2990 = vadd.f32 %v2898, %v2989
      %v2991 = vpop.f32.mrb[0].mxu0
      %2992 = vmatprep.mubr.f32.mxu0 0.0
      %2993 = vmatmul.mubr.f32.gmra.mrb[0].mxu0 %v2189
      %v2994 = vpop.f32.mrb[0].mxu0
      %v2995 = vadd.f32 %v2898, %v2994
      %v2996 = vpop.f32.mrb[0].mxu0
      %2997 = vmatprep.mubr.f32.mxu0 0.0
      %2998 = vmatmul.mubr.f32.gmra.mrb[0].mxu0 %v2192
      %v2999 = vpop.f32.mrb[0].mxu0
      %v3000 = vadd.f32 %v2898, %v2999
      %v3001 = vpop.f32.mrb[0].mxu0
      %3002 = vmatprep.mubr.f32.mxu0 0.0
      %3003 = vmatmul.mubr.f32.gmra.mrb[0].mxu0 %v2195
      %v3004 = vpop.f32.mrb[0].mxu0
      %v3005 = vadd.f32 %v2898, %v3004
      %v3006 = vpop.f32.mrb[0].mxu0
      %3007 = vmatprep.mubr.f32.mxu0 0.0
      %3008 = vmatmul.mubr.f32.gmra.mrb[0].mxu0 %v2198
      %v3009 = vpop.f32.mrb[0].mxu0
      %v3010 = vadd.f32 %v2898, %v3009
      %v3011 = vpop.f32.mrb[0].mxu0
      %3012 = vmatprep.mubr.f32.mxu0 0.0
      %3013 = vmatmul.mubr.f32.gmra.mrb[0].mxu0 %v2201
      %v3014 = vpop.f32.mrb[0].mxu0
      %v3015 = vadd.f32 %v2898, %v3014
      %v3016 = vpop.f32.mrb[0].mxu0
      %3017 = vmatprep.mubr.f32.mxu0 0.0
      %3018 = vmatmul.mubr.f32.gmra.mrb[0].mxu0 %v2204
      %v3019 = vpop.f32.mrb[0].mxu0
      %v3020 = vadd.f32 %v2898, %v3019
      %v3021 = vpop.f32.mrb[0].mxu0
      %3022 = vmatprep.mubr.f32.mxu0 0.0
      %3023 = vmatmul.mubr.f32.gmra.mrb[0].mxu0 %v2207
      %v3024 = vpop.f32.mrb[0].mxu0
      %v3025 = vadd.f32 %v2898, %v3024
      %v3026 = vpop.f32.mrb[0].mxu0
      %3027 = vmatprep.mubr.f32.mxu0 0.0
      %3028 = vmatmul.mubr.f32.gmra.mrb[0].mxu0 %v2210
      %v3029 = vpop.f32.mrb[0].mxu0
      %v3030 = vadd.f32 %v2898, %v3029
      %v3031 = vpop.f32.mrb[0].mxu0
      %3032 = vmatprep.mubr.f32.mxu0 0.0
      %3033 = vmatmul.mubr.f32.gmra.mrb[0].mxu0 %v2213
      %v3034 = vpop.f32.mrb[0].mxu0
      %v3035 = vadd.f32 %v2898, %v3034
      %v3036 = vpop.f32.mrb[0].mxu0
      %3037 = vmatprep.mubr.f32.mxu0 0.0
      %3038 = vmatmul.mubr.f32.gmra.mrb[0].mxu0 %v2216
      %v3039 = vpop.f32.mrb[0].mxu0
      %v3040 = vadd.f32 %v2898, %v3039
      %v3041 = vpop.f32.mrb[0].mxu0
      %3042 = vmatprep.mubr.f32.mxu0 0.0
      %3043 = vmatmul.mubr.f32.gmra.mrb[0].mxu0 %v2219
      %v3044 = vpop.f32.mrb[0].mxu0
      %v3045 = vadd.f32 %v2898, %v3044
      %v3046 = vpop.f32.mrb[0].mxu0
      %3047 = vmatprep.mubr.f32.mxu0 0.0
      %3048 = vmatmul.mubr.f32.gmra.mrb[0].mxu0 %v2222
      %v3049 = vpop.f32.mrb[0].mxu0
      %v3050 = vadd.f32 %v2898, %v3049
      %v3051 = vpop.f32.mrb[0].mxu0
      %3052 = vmatprep.mubr.f32.mxu0 0.0
      %3053 = vmatmul.mubr.f32.gmra.mrb[0].mxu0 %v2225
      %v3054 = vpop.f32.mrb[0].mxu0
      %v3055 = vadd.f32 %v2898, %v3054
      %v3056 = vpop.f32.mrb[0].mxu0
      %3057 = vmatprep.mubr.f32.mxu0 0.0
      %3058 = vmatmul.mubr.f32.gmra.mrb[0].mxu0 %v2228
      %v3059 = vpop.f32.mrb[0].mxu0
      %v3060 = vadd.f32 %v2898, %v3059
      %v3061 = vpop.f32.mrb[0].mxu0
      %3062 = vmatprep.mubr.f32.mxu0 0.0
      %3063 = vmatmul.mubr.f32.gmra.mrb[0].mxu0 %v2231
      %v3064 = vpop.f32.mrb[0].mxu0
      %v3065 = vadd.f32 %v2898, %v3064
      %v3066 = vpop.f32.mrb[0].mxu0
      %3067 = vmatprep.mubr.f32.mxu0 0.0
      %3068 = vmatmul.mubr.f32.gmra.mrb[0].mxu0 %v2234
      %v3069 = vpop.f32.mrb[0].mxu0
      %v3070 = vadd.f32 %v2898, %v3069
      %v3071 = vpop.f32.mrb[0].mxu0
      %3072 = vmatprep.mubr.f32.mxu0 0.0
      %3073 = vmatmul.mubr.f32.gmra.mrb[0].mxu0 %v2237
      %v3074 = vpop.f32.mrb[0].mxu0
      %v3075 = vadd.f32 %v2898, %v3074
      %v3076 = vpop.f32.mrb[0].mxu0
      %3077 = vmatprep.mubr.f32.mxu0 0.0
      %3078 = vmatmul.mubr.f32.gmra.mrb[0].mxu0 %v2240
      %v3079 = vpop.f32.mrb[0].mxu0
      %v3080 = vadd.f32 %v2898, %v3079
      %v3081 = vpop.f32.mrb[0].mxu0
      %3082 = vmatprep.mubr.f32.mxu0 0.0
      %3083 = vmatmul.mubr.f32.gmra.mrb[0].mxu0 %v2243
      %v3084 = vpop.f32.mrb[0].mxu0
      %v3085 = vadd.f32 %v2898, %v3084
      %v3086 = vpop.f32.mrb[0].mxu0
      %3087 = vmatprep.mubr.f32.mxu0 0.0
      %3088 = vmatmul.mubr.f32.gmra.mrb[0].mxu0 %v2246
      %v3089 = vpop.f32.mrb[0].mxu0
      %v3090 = vadd.f32 %v2898, %v3089
      %v3091 = vpop.f32.mrb[0].mxu0
      %3092 = vmatprep.mubr.f32.mxu0 0.0
      %3093 = vmatmul.mubr.f32.gmra.mrb[0].mxu0 %v2249
      %v3094 = vpop.f32.mrb[0].mxu0
      %v3095 = vadd.f32 %v2898, %v3094
      %v3096 = vpop.f32.mrb[0].mxu0
      %3097 = vmatprep.mubr.f32.mxu0 0.0
      %3098 = vmatmul.mubr.f32.gmra.mrb[0].mxu0 %v2252
      %v3099 = vpop.f32.mrb[0].mxu0
      %v3100 = vadd.f32 %v2898, %v3099
      %v3101 = vpop.f32.mrb[0].mxu0
      %3102 = vmatprep.mubr.f32.mxu0 0.0
      %3103 = vmatmul.mubr.f32.gmra.mrb[0].mxu0 %v2255
      %v3104 = vpop.f32.mrb[0].mxu0
      %v3105 = vadd.f32 %v2898, %v3104
      %v3106 = vpop.f32.mrb[0].mxu0
      %3107 = vmatprep.mubr.f32.mxu0 0.0
      %3108 = vmatmul.mubr.f32.gmra.mrb[0].mxu0 %v2258
      %v3109 = vpop.f32.mrb[0].mxu0
      %v3110 = vadd.f32 %v2898, %v3109
      %v3111 = vpop.f32.mrb[0].mxu0
      %3112 = vmatprep.mubr.f32.mxu0 0.0
      %3113 = vmatmul.mubr.f32.gmra.mrb[0].mxu0 %v2261
      %v3114 = vpop.f32.mrb[0].mxu0
      %v3115 = vadd.f32 %v2898, %v3114
      %v3116 = vpop.f32.mrb[0].mxu0
      %3117 = vmatprep.mubr.f32.mxu0 0.0
      %3118 = vmatmul.mubr.f32.gmra.mrb[0].mxu0 %v2264
      %v3119 = vpop.f32.mrb[0].mxu0
      %v3120 = vadd.f32 %v2898, %v3119
      %v3121 = vpop.f32.mrb[0].mxu0
      %3122 = vmatprep.mubr.f32.mxu0 0.0
      %3123 = vmatmul.mubr.f32.gmra.mrb[0].mxu0 %v2267
      %v3124 = vpop.f32.mrb[0].mxu0
      %v3125 = vadd.f32 %v2898, %v3124
      %v3126 = vpop.f32.mrb[0].mxu0
      %3127 = vdwg.mxu0
      %v3128 = vmin.f32 %v2970, 20.0
      %v3129 = vmin.f32 %v2975, 20.0
      %v3130 = vmin.f32 %v2980, 20.0
      %v3131 = vmin.f32 %v2985, 20.0
      %v3132 = vmin.f32 %v2990, 20.0
      %v3133 = vmin.f32 %v2995, 20.0
      %v3134 = vmin.f32 %v3000, 20.0
      %v3135 = vmin.f32 %v3005, 20.0
      %v3136 = vmin.f32 %v3010, 20.0
      %v3137 = vmin.f32 %v3015, 20.0
      %v3138 = vmin.f32 %v3020, 20.0
      %v3139 = vmin.f32 %v3025, 20.0
      %v3140 = vmin.f32 %v3030, 20.0
      %v3141 = vmin.f32 %v3035, 20.0
      %v3142 = vmin.f32 %v3040, 20.0
      %v3143 = vmin.f32 %v3045, 20.0
      %v3144 = vmin.f32 %v3050, 20.0
      %v3145 = vmin.f32 %v3055, 20.0
      %v3146 = vmin.f32 %v3060, 20.0
      %v3147 = vmin.f32 %v3065, 20.0
      %v3148 = vmin.f32 %v3070, 20.0
      %v3149 = vmin.f32 %v3075, 20.0
      %v3150 = vmin.f32 %v3080, 20.0
      %v3151 = vmin.f32 %v3085, 20.0
      %v3152 = vmin.f32 %v3090, 20.0
      %v3153 = vmin.f32 %v3095, 20.0
      %v3154 = vmin.f32 %v3100, 20.0
      %v3155 = vmin.f32 %v3105, 20.0
      %v3156 = vmin.f32 %v3110, 20.0
      %v3157 = vmin.f32 %v3115, 20.0
      %v3158 = vmin.f32 %v3120, 20.0
      %v3159 = vmin.f32 %v3125, 20.0
      %v3160 = vmul.f32 %v3128, 1.442695
      %v3161 = vpow.pop %v3160
      %v3162 = vmul.f32 %v3129, 1.442695
      %v3163 = vpow.pop %v3162
      %v3164 = vmul.f32 %v3130, 1.442695
      %v3165 = vpow.pop %v3164
      %v3166 = vmul.f32 %v3131, 1.442695
      %v3167 = vpow.pop %v3166
      %v3168 = vmul.f32 %v3132, 1.442695
      %v3169 = vpow.pop %v3168
      %v3170 = vmul.f32 %v3133, 1.442695
      %v3171 = vpow.pop %v3170
      %v3172 = vmul.f32 %v3134, 1.442695
      %v3173 = vpow.pop %v3172
      %v3174 = vmul.f32 %v3135, 1.442695
      %v3175 = vpow.pop %v3174
      %v3176 = vmul.f32 %v3136, 1.442695
      %v3177 = vpow.pop %v3176
      %v3178 = vmul.f32 %v3137, 1.442695
      %v3179 = vpow.pop %v3178
      %v3180 = vmul.f32 %v3138, 1.442695
      %v3181 = vpow.pop %v3180
      %v3182 = vmul.f32 %v3139, 1.442695
      %v3183 = vpow.pop %v3182
      %v3184 = vmul.f32 %v3140, 1.442695
      %v3185 = vpow.pop %v3184
      %v3186 = vmul.f32 %v3141, 1.442695
      %v3187 = vpow.pop %v3186
      %v3188 = vmul.f32 %v3142, 1.442695
      %v3189 = vpow.pop %v3188
      %v3190 = vmul.f32 %v3143, 1.442695
      %v3191 = vpow.pop %v3190
      %v3192 = vmul.f32 %v3144, 1.442695
      %v3193 = vpow.pop %v3192
      %v3194 = vmul.f32 %v3145, 1.442695
      %v3195 = vpow.pop %v3194
      %v3196 = vmul.f32 %v3146, 1.442695
      %v3197 = vpow.pop %v3196
      %v3198 = vmul.f32 %v3147, 1.442695
      %v3199 = vpow.pop %v3198
      %v3200 = vmul.f32 %v3148, 1.442695
      %v3201 = vpow.pop %v3200
      %v3202 = vmul.f32 %v3149, 1.442695
      %v3203 = vpow.pop %v3202
      %v3204 = vmul.f32 %v3150, 1.442695
      %v3205 = vpow.pop %v3204
      %v3206 = vmul.f32 %v3151, 1.442695
      %v3207 = vpow.pop %v3206
      %v3208 = vmul.f32 %v3152, 1.442695
      %v3209 = vpow.pop %v3208
      %v3210 = vmul.f32 %v3153, 1.442695
      %v3211 = vpow.pop %v3210
      %v3212 = vmul.f32 %v3154, 1.442695
      %v3213 = vpow.pop %v3212
      %v3214 = vmul.f32 %v3155, 1.442695
      %v3215 = vpow.pop %v3214
      %v3216 = vmul.f32 %v3156, 1.442695
      %v3217 = vpow.pop %v3216
      %v3218 = vmul.f32 %v3157, 1.442695
      %v3219 = vpow.pop %v3218
      %v3220 = vmul.f32 %v3158, 1.442695
      %v3221 = vpow.pop %v3220
      %v3222 = vmul.f32 %v3159, 1.442695
      %v3223 = vpow.pop %v3222
      %v3224 = vadd.f32 %v3161, 2.0
      %v3225 = vadd.f32 %v3163, 2.0
      %v3226 = vadd.f32 %v3165, 2.0
      %v3227 = vadd.f32 %v3167, 2.0
      %v3228 = vadd.f32 %v3169, 2.0
      %v3229 = vadd.f32 %v3171, 2.0
      %v3230 = vadd.f32 %v3173, 2.0
      %v3231 = vadd.f32 %v3175, 2.0
      %v3232 = vadd.f32 %v3177, 2.0
      %v3233 = vadd.f32 %v3179, 2.0
      %v3234 = vadd.f32 %v3181, 2.0
      %v3235 = vadd.f32 %v3183, 2.0
      %v3236 = vadd.f32 %v3185, 2.0
      %v3237 = vadd.f32 %v3187, 2.0
      %v3238 = vadd.f32 %v3189, 2.0
      %v3239 = vadd.f32 %v3191, 2.0
      %v3240 = vadd.f32 %v3193, 2.0
      %v3241 = vadd.f32 %v3195, 2.0
      %v3242 = vadd.f32 %v3197, 2.0
      %v3243 = vadd.f32 %v3199, 2.0
      %v3244 = vadd.f32 %v3201, 2.0
      %v3245 = vadd.f32 %v3203, 2.0
      %v3246 = vadd.f32 %v3205, 2.0
      %v3247 = vadd.f32 %v3207, 2.0
      %v3248 = vadd.f32 %v3209, 2.0
      %v3249 = vadd.f32 %v3211, 2.0
      %v3250 = vadd.f32 %v3213, 2.0
      %v3251 = vadd.f32 %v3215, 2.0
      %v3252 = vadd.f32 %v3217, 2.0
      %v3253 = vadd.f32 %v3219, 2.0
      %v3254 = vadd.f32 %v3221, 2.0
      %v3255 = vadd.f32 %v3223, 2.0
      %v3256 = vmul.f32 %v3161, %v3224
      %v3257 = vmul.f32 %v3163, %v3225
      %v3258 = vmul.f32 %v3165, %v3226
      %v3259 = vmul.f32 %v3167, %v3227
      %v3260 = vmul.f32 %v3169, %v3228
      %v3261 = vmul.f32 %v3171, %v3229
      %v3262 = vmul.f32 %v3173, %v3230
      %v3263 = vmul.f32 %v3175, %v3231
      %v3264 = vmul.f32 %v3177, %v3232
      %v3265 = vmul.f32 %v3179, %v3233
      %v3266 = vmul.f32 %v3181, %v3234
      %v3267 = vmul.f32 %v3183, %v3235
      %v3268 = vmul.f32 %v3185, %v3236
      %v3269 = vmul.f32 %v3187, %v3237
      %v3270 = vmul.f32 %v3189, %v3238
      %v3271 = vmul.f32 %v3191, %v3239
      %v3272 = vmul.f32 %v3193, %v3240
      %v3273 = vmul.f32 %v3195, %v3241
      %v3274 = vmul.f32 %v3197, %v3242
      %v3275 = vmul.f32 %v3199, %v3243
      %v3276 = vmul.f32 %v3201, %v3244
      %v3277 = vmul.f32 %v3203, %v3245
      %v3278 = vmul.f32 %v3205, %v3246
      %v3279 = vmul.f32 %v3207, %v3247
      %v3280 = vmul.f32 %v3209, %v3248
      %v3281 = vmul.f32 %v3211, %v3249
      %v3282 = vmul.f32 %v3213, %v3250
      %v3283 = vmul.f32 %v3215, %v3251
      %v3284 = vmul.f32 %v3217, %v3252
      %v3285 = vmul.f32 %v3219, %v3253
      %v3286 = vmul.f32 %v3221, %v3254
      %v3287 = vmul.f32 %v3223, %v3255
      %vm3288 = vcmp.gt.f32.partialorder %v2970, 20.0
      %vm3289 = vcmp.gt.f32.partialorder %v2975, 20.0
      %vm3290 = vcmp.gt.f32.partialorder %v2980, 20.0
      %vm3291 = vcmp.gt.f32.partialorder %v2985, 20.0
      %vm3292 = vcmp.gt.f32.partialorder %v2990, 20.0
      %vm3293 = vcmp.gt.f32.partialorder %v2995, 20.0
      %vm3294 = vcmp.gt.f32.partialorder %v3000, 20.0
      %vm3295 = vcmp.gt.f32.partialorder %v3005, 20.0
      %vm3296 = vcmp.gt.f32.partialorder %v3010, 20.0
      %vm3297 = vcmp.gt.f32.partialorder %v3015, 20.0
      %vm3298 = vcmp.gt.f32.partialorder %v3020, 20.0
      %vm3299 = vcmp.gt.f32.partialorder %v3025, 20.0
      %vm3300 = vcmp.gt.f32.partialorder %v3030, 20.0
      %vm3301 = vcmp.gt.f32.partialorder %v3035, 20.0
      %vm3302 = vcmp.gt.f32.partialorder %v3040, 20.0
      %vm3303 = vcmp.gt.f32.partialorder %v3045, 20.0
      %vm3304 = vcmp.gt.f32.partialorder %v3050, 20.0
      %vm3305 = vcmp.gt.f32.partialorder %v3055, 20.0
      %vm3306 = vcmp.gt.f32.partialorder %v3060, 20.0
      %vm3307 = vcmp.gt.f32.partialorder %v3065, 20.0
      %vm3308 = vcmp.gt.f32.partialorder %v3070, 20.0
      %vm3309 = vcmp.gt.f32.partialorder %v3075, 20.0
      %vm3310 = vcmp.gt.f32.partialorder %v3080, 20.0
      %vm3311 = vcmp.gt.f32.partialorder %v3085, 20.0
      %vm3312 = vcmp.gt.f32.partialorder %v3090, 20.0
      %vm3313 = vcmp.gt.f32.partialorder %v3095, 20.0
      %vm3314 = vcmp.gt.f32.partialorder %v3100, 20.0
      %vm3315 = vcmp.gt.f32.partialorder %v3105, 20.0
      %vm3316 = vcmp.gt.f32.partialorder %v3110, 20.0
      %vm3317 = vcmp.gt.f32.partialorder %v3115, 20.0
      %vm3318 = vcmp.gt.f32.partialorder %v3120, 20.0
      %vm3319 = vcmp.gt.f32.partialorder %v3125, 20.0
      %v3320 = vmul.f32 %v2970, %v3256
      %v3321 = vmul.f32 %v2975, %v3257
      %v3322 = vmul.f32 %v2980, %v3258
      %v3323 = vmul.f32 %v2985, %v3259
      %v3324 = vmul.f32 %v2990, %v3260
      %v3325 = vmul.f32 %v2995, %v3261
      %v3326 = vmul.f32 %v3000, %v3262
      %v3327 = vmul.f32 %v3005, %v3263
      %v3328 = vmul.f32 %v3010, %v3264
      %v3329 = vmul.f32 %v3015, %v3265
      %v3330 = vmul.f32 %v3020, %v3266
      %v3331 = vmul.f32 %v3025, %v3267
      %v3332 = vmul.f32 %v3030, %v3268
      %v3333 = vmul.f32 %v3035, %v3269
      %v3334 = vmul.f32 %v3040, %v3270
      %v3335 = vmul.f32 %v3045, %v3271
      %v3336 = vmul.f32 %v3050, %v3272
      %v3337 = vmul.f32 %v3055, %v3273
      %v3338 = vmul.f32 %v3060, %v3274
      %v3339 = vmul.f32 %v3065, %v3275
      %v3340 = vmul.f32 %v3070, %v3276
      %v3341 = vmul.f32 %v3075, %v3277
      %v3342 = vmul.f32 %v3080, %v3278
      %v3343 = vmul.f32 %v3085, %v3279
      %v3344 = vmul.f32 %v3090, %v3280
      %v3345 = vmul.f32 %v3095, %v3281
      %v3346 = vmul.f32 %v3100, %v3282
      %v3347 = vmul.f32 %v3105, %v3283
      %v3348 = vmul.f32 %v3110, %v3284
      %v3349 = vmul.f32 %v3115, %v3285
      %v3350 = vmul.f32 %v3120, %v3286
      %v3351 = vmul.f32 %v3125, %v3287
      %v3352 = vadd.f32 %v3256, 2.0
      %v3353 = vadd.f32 %v3257, 2.0
      %v3354 = vadd.f32 %v3258, 2.0
      %v3355 = vadd.f32 %v3259, 2.0
      %v3356 = vadd.f32 %v3260, 2.0
      %v3357 = vadd.f32 %v3261, 2.0
      %v3358 = vadd.f32 %v3262, 2.0
      %v3359 = vadd.f32 %v3263, 2.0
      %v3360 = vadd.f32 %v3264, 2.0
      %v3361 = vadd.f32 %v3265, 2.0
      %v3362 = vadd.f32 %v3266, 2.0
      %v3363 = vadd.f32 %v3267, 2.0
      %v3364 = vadd.f32 %v3268, 2.0
      %v3365 = vadd.f32 %v3269, 2.0
      %v3366 = vadd.f32 %v3270, 2.0
      %v3367 = vadd.f32 %v3271, 2.0
      %v3368 = vadd.f32 %v3272, 2.0
      %v3369 = vadd.f32 %v3273, 2.0
      %v3370 = vadd.f32 %v3274, 2.0
      %v3371 = vadd.f32 %v3275, 2.0
      %v3372 = vadd.f32 %v3276, 2.0
      %v3373 = vadd.f32 %v3277, 2.0
      %v3374 = vadd.f32 %v3278, 2.0
      %v3375 = vadd.f32 %v3279, 2.0
      %v3376 = vadd.f32 %v3280, 2.0
      %v3377 = vadd.f32 %v3281, 2.0
      %v3378 = vadd.f32 %v3282, 2.0
      %v3379 = vadd.f32 %v3283, 2.0
      %v3380 = vadd.f32 %v3284, 2.0
      %v3381 = vadd.f32 %v3285, 2.0
      %v3382 = vadd.f32 %v3286, 2.0
      %v3383 = vadd.f32 %v3287, 2.0
      %v3384 = vrcp.pop %v3352
      %v3385 = vmul.f32 %v3320, %v3384
      %v3386 = vrcp.pop %v3353
      %v3387 = vmul.f32 %v3321, %v3386
      %v3388 = vrcp.pop %v3354
      %v3389 = vmul.f32 %v3322, %v3388
      %v3390 = vrcp.pop %v3355
      %v3391 = vmul.f32 %v3323, %v3390
      %v3392 = vrcp.pop %v3356
      %v3393 = vmul.f32 %v3324, %v3392
      %v3394 = vrcp.pop %v3357
      %v3395 = vmul.f32 %v3325, %v3394
      %v3396 = vrcp.pop %v3358
      %v3397 = vmul.f32 %v3326, %v3396
      %v3398 = vrcp.pop %v3359
      %v3399 = vmul.f32 %v3327, %v3398
      %v3400 = vrcp.pop %v3360
      %v3401 = vmul.f32 %v3328, %v3400
      %v3402 = vrcp.pop %v3361
      %v3403 = vmul.f32 %v3329, %v3402
      %v3404 = vrcp.pop %v3362
      %v3405 = vmul.f32 %v3330, %v3404
      %v3406 = vrcp.pop %v3363
      %v3407 = vmul.f32 %v3331, %v3406
      %v3408 = vrcp.pop %v3364
      %v3409 = vmul.f32 %v3332, %v3408
      %v3410 = vrcp.pop %v3365
      %v3411 = vmul.f32 %v3333, %v3410
      %v3412 = vrcp.pop %v3366
      %v3413 = vmul.f32 %v3334, %v3412
      %v3414 = vrcp.pop %v3367
      %v3415 = vmul.f32 %v3335, %v3414
      %v3416 = vrcp.pop %v3368
      %v3417 = vmul.f32 %v3336, %v3416
      %v3418 = vrcp.pop %v3369
      %v3419 = vmul.f32 %v3337, %v3418
      %v3420 = vrcp.pop %v3370
      %v3421 = vmul.f32 %v3338, %v3420
      %v3422 = vrcp.pop %v3371
      %v3423 = vmul.f32 %v3339, %v3422
      %v3424 = vrcp.pop %v3372
      %v3425 = vmul.f32 %v3340, %v3424
      %v3426 = vrcp.pop %v3373
      %v3427 = vmul.f32 %v3341, %v3426
      %v3428 = vrcp.pop %v3374
      %v3429 = vmul.f32 %v3342, %v3428
      %v3430 = vrcp.pop %v3375
      %v3431 = vmul.f32 %v3343, %v3430
      %v3432 = vrcp.pop %v3376
      %v3433 = vmul.f32 %v3344, %v3432
      %v3434 = vrcp.pop %v3377
      %v3435 = vmul.f32 %v3345, %v3434
      %v3436 = vrcp.pop %v3378
      %v3437 = vmul.f32 %v3346, %v3436
      %v3438 = vrcp.pop %v3379
      %v3439 = vmul.f32 %v3347, %v3438
      %v3440 = vrcp.pop %v3380
      %v3441 = vmul.f32 %v3348, %v3440
      %v3442 = vrcp.pop %v3381
      %v3443 = vmul.f32 %v3349, %v3442
      %v3444 = vrcp.pop %v3382
      %v3445 = vmul.f32 %v3350, %v3444
      %v3446 = vrcp.pop %v3383
      %v3447 = vmul.f32 %v3351, %v3446
      %v3448 = vsel %vm3288, %v2970, %v3385
      %v3449 = vsel %vm3289, %v2975, %v3387
      %v3450 = vsel %vm3290, %v2980, %v3389
      %v3451 = vsel %vm3291, %v2985, %v3391
      %v3452 = vsel %vm3292, %v2990, %v3393
      %v3453 = vsel %vm3293, %v2995, %v3395
      %v3454 = vsel %vm3294, %v3000, %v3397
      %v3455 = vsel %vm3295, %v3005, %v3399
      %v3456 = vsel %vm3296, %v3010, %v3401
      %v3457 = vsel %vm3297, %v3015, %v3403
      %v3458 = vsel %vm3298, %v3020, %v3405
      %v3459 = vsel %vm3299, %v3025, %v3407
      %v3460 = vsel %vm3300, %v3030, %v3409
      %v3461 = vsel %vm3301, %v3035, %v3411
      %v3462 = vsel %vm3302, %v3040, %v3413
      %v3463 = vsel %vm3303, %v3045, %v3415
      %v3464 = vsel %vm3304, %v3050, %v3417
      %v3465 = vsel %vm3305, %v3055, %v3419
      %v3466 = vsel %vm3306, %v3060, %v3421
      %v3467 = vsel %vm3307, %v3065, %v3423
      %v3468 = vsel %vm3308, %v3070, %v3425
      %v3469 = vsel %vm3309, %v3075, %v3427
      %v3470 = vsel %vm3310, %v3080, %v3429
      %v3471 = vsel %vm3311, %v3085, %v3431
      %v3472 = vsel %vm3312, %v3090, %v3433
      %v3473 = vsel %vm3313, %v3095, %v3435
      %v3474 = vsel %vm3314, %v3100, %v3437
      %v3475 = vsel %vm3315, %v3105, %v3439
      %v3476 = vsel %vm3316, %v3110, %v3441
      %v3477 = vsel %vm3317, %v3115, %v3443
      %v3478 = vsel %vm3318, %v3120, %v3445
      %v3479 = vsel %vm3319, %v3125, %v3447
      %v3480 = vadd.f32 %v3448, %v2854
      %v3481 = vadd.f32 %v3449, %v2854
      %v3482 = vadd.f32 %v3450, %v2854
      %v3483 = vadd.f32 %v3451, %v2854
      %v3484 = vadd.f32 %v3452, %v2854
      %v3485 = vadd.f32 %v3453, %v2854
      %v3486 = vadd.f32 %v3454, %v2854
      %v3487 = vadd.f32 %v3455, %v2854
      %v3488 = vadd.f32 %v3456, %v2854
      %v3489 = vadd.f32 %v3457, %v2854
      %v3490 = vadd.f32 %v3458, %v2854
      %v3491 = vadd.f32 %v3459, %v2854
      %v3492 = vadd.f32 %v3460, %v2854
      %v3493 = vadd.f32 %v3461, %v2854
      %v3494 = vadd.f32 %v3462, %v2854
      %v3495 = vadd.f32 %v3463, %v2854
      %v3496 = vadd.f32 %v3464, %v2854
      %v3497 = vadd.f32 %v3465, %v2854
      %v3498 = vadd.f32 %v3466, %v2854
      %v3499 = vadd.f32 %v3467, %v2854
      %v3500 = vadd.f32 %v3468, %v2854
      %v3501 = vadd.f32 %v3469, %v2854
      %v3502 = vadd.f32 %v3470, %v2854
      %v3503 = vadd.f32 %v3471, %v2854
      %v3504 = vadd.f32 %v3472, %v2854
      %v3505 = vadd.f32 %v3473, %v2854
      %v3506 = vadd.f32 %v3474, %v2854
      %v3507 = vadd.f32 %v3475, %v2854
      %v3508 = vadd.f32 %v3476, %v2854
      %v3509 = vadd.f32 %v3477, %v2854
      %v3510 = vadd.f32 %v3478, %v2854
      %v3511 = vadd.f32 %v3479, %v2854
      %3512 = vst.msk [vmem:[%s407 + $0x1] sm:$0xff] %vm408, %v2856
      %3513 = vst.msk [vmem:[%s407 + $0x9] sm:$0xff] %vm408, %v2857
      %3514 = vst.msk [vmem:[%s407 + $0x19] sm:$0xff] %vm408, %v2858
      %3515 = vst.msk [vmem:[%s407 + $0x21] sm:$0xff] %vm408, %v2859
      %3516 = vst.msk [vmem:[%s407 + $0x31] sm:$0xff] %vm408, %v2860
      %3517 = vst.msk [vmem:[%s407 + $0x39] sm:$0xff] %vm408, %v2861
      %3518 = vst.msk [vmem:[%s407 + $0x49] sm:$0xff] %vm408, %v2862
      %3519 = vst.msk [vmem:[%s407 + $0x51] sm:$0xff] %vm408, %v2863
      %3520 = vst.msk [vmem:[%s407 + $0x61] sm:$0xff] %vm408, %v2864
      %3521 = vst.msk [vmem:[%s407 + $0x69] sm:$0xff] %vm408, %v2865
      %3522 = vst.msk [vmem:[%s407 + $0x79] sm:$0xff] %vm408, %v2866
      %3523 = vst.msk [vmem:[%s407 + $0x81] sm:$0xff] %vm408, %v2867
      %3524 = vst.msk [vmem:[%s407 + $0x91] sm:$0xff] %vm408, %v2868
      %3525 = vst.msk [vmem:[%s407 + $0x99] sm:$0xff] %vm408, %v2869
      %3526 = vst.msk [vmem:[%s407 + $0xa9] sm:$0xff] %vm408, %v2870
      %3527 = vst.msk [vmem:[%s407 + $0xb1] sm:$0xff] %vm408, %v2871
      %3528 = vst.msk [vmem:[%s407 + $0xc1] sm:$0xff] %vm408, %v2872
      %3529 = vst.msk [vmem:[%s407 + $0xc9] sm:$0xff] %vm408, %v2873
      %3530 = vst.msk [vmem:[%s407 + $0xd9] sm:$0xff] %vm408, %v2874
      %3531 = vst.msk [vmem:[%s407 + $0xe1] sm:$0xff] %vm408, %v2875
      %3532 = vst.msk [vmem:[%s407 + $0xf1] sm:$0xff] %vm408, %v2876
      %3533 = vst.msk [vmem:[%s407 + $0xf9] sm:$0xff] %vm408, %v2877
      %3534 = vst.msk [vmem:[%s407 + $0x109] sm:$0xff] %vm408, %v2878
      %3535 = vst.msk [vmem:[%s407 + $0x111] sm:$0xff] %vm408, %v2879
      %3536 = vst.msk [vmem:[%s407 + $0x121] sm:$0xff] %vm408, %v2880
      %3537 = vst.msk [vmem:[%s407 + $0x129] sm:$0xff] %vm408, %v2881
      %3538 = vst.msk [vmem:[%s407 + $0x139] sm:$0xff] %vm408, %v2882
      %3539 = vst.msk [vmem:[%s407 + $0x141] sm:$0xff] %vm408, %v2883
      %3540 = vst.msk [vmem:[%s407 + $0x151] sm:$0xff] %vm408, %v2884
      %3541 = vst.msk [vmem:[%s407 + $0x159] sm:$0xff] %vm408, %v2885
      %3542 = vst.msk [vmem:[%s407 + $0x169] sm:$0xff] %vm408, %v2886
      %3543 = vst.msk [vmem:[%s407 + $0x171] sm:$0xff] %vm408, %v2887
      %3544 = vst.msk [vmem:[#allocation2 + $0x1] sm:$0xff] %vm408, %v2856
      %3545 = vst.msk [vmem:[#allocation2 + $0x9] sm:$0xff] %vm408, %v2857
      %3546 = vst.msk [vmem:[%s443 + $0x1] sm:$0xff] %vm408, %v2886
      %3547 = vst.msk [vmem:[%s443 + $0x9] sm:$0xff] %vm408, %v2887
      %v3548 = vld [vmem:[#allocation2 + $0x1] sm:$0x1]
      %v3549 = vld [vmem:[#allocation2 + $0x19] sm:$0x1]
      %v3550 = vld [vmem:[#allocation2 + $0x31] sm:$0x1]
      %v3551 = vld [vmem:[#allocation2 + $0x49] sm:$0x1]
      %v3552 = vld [vmem:[#allocation2 + $0x61] sm:$0x1]
      %v3553 = vld [vmem:[#allocation2 + $0x79] sm:$0x1]
      %v3554 = vld [vmem:[#allocation2 + $0x91] sm:$0x1]
      %v3555 = vld [vmem:[#allocation2 + $0xa9] sm:$0x1]
      %v3556 = vld [vmem:[#allocation2 + $0xc1] sm:$0x1]
      %v3557 = vld [vmem:[#allocation2 + $0xd9] sm:$0x1]
      %v3558 = vld [vmem:[#allocation2 + $0xf1] sm:$0x1]
      %v3559 = vld [vmem:[#allocation2 + $0x109] sm:$0x1]
      %v3560 = vld [vmem:[#allocation2 + $0x121] sm:$0x1]
      %v3561 = vld [vmem:[#allocation2 + $0x139] sm:$0x1]
      %v3562 = vld [vmem:[#allocation2 + $0x151] sm:$0x1]
      %v3563 = vld [vmem:[#allocation2 + $0x169] sm:$0x1]
      %v3564 = vld [vmem:[#allocation2 + $0x181] sm:$0x1]
      %v3565 = vld [vmem:[#allocation2 + $0x199] sm:$0x1]
      %3566 = vst.msk [vmem:[#allocation2] sm:$0x1] %vm464, %v3548
      %3567 = vst.msk [vmem:[#allocation2 + $0x18] sm:$0x1] %vm464, %v3549
      %3568 = vst.msk [vmem:[#allocation2 + $0x30] sm:$0x1] %vm464, %v3550
      %3569 = vst.msk [vmem:[#allocation2 + $0x48] sm:$0x1] %vm464, %v3551
      %3570 = vst.msk [vmem:[#allocation2 + $0x60] sm:$0x1] %vm464, %v3552
      %3571 = vst.msk [vmem:[#allocation2 + $0x78] sm:$0x1] %vm464, %v3553
      %3572 = vst.msk [vmem:[#allocation2 + $0x90] sm:$0x1] %vm464, %v3554
      %3573 = vst.msk [vmem:[#allocation2 + $0xa8] sm:$0x1] %vm464, %v3555
      %3574 = vst.msk [vmem:[#allocation2 + $0xc0] sm:$0x1] %vm464, %v3556
      %3575 = vst.msk [vmem:[#allocation2 + $0xd8] sm:$0x1] %vm464, %v3557
      %3576 = vst.msk [vmem:[#allocation2 + $0xf0] sm:$0x1] %vm464, %v3558
      %3577 = vst.msk [vmem:[#allocation2 + $0x108] sm:$0x1] %vm464, %v3559
      %3578 = vst.msk [vmem:[#allocation2 + $0x120] sm:$0x1] %vm464, %v3560
      %3579 = vst.msk [vmem:[#allocation2 + $0x138] sm:$0x1] %vm464, %v3561
      %3580 = vst.msk [vmem:[#allocation2 + $0x150] sm:$0x1] %vm464, %v3562
      %3581 = vst.msk [vmem:[#allocation2 + $0x168] sm:$0x1] %vm464, %v3563
      %3582 = vst.msk [vmem:[#allocation2 + $0x180] sm:$0x1] %vm464, %v3564
      %3583 = vst.msk [vmem:[#allocation2 + $0x198] sm:$0x1] %vm464, %v3565
      %v3584 = vld [vmem:[#allocation2 + $0x10] sm:$0x1]
      %v3585 = vld [vmem:[#allocation2 + $0x28] sm:$0x1]
      %v3586 = vld [vmem:[#allocation2 + $0x40] sm:$0x1]
      %v3587 = vld [vmem:[#allocation2 + $0x58] sm:$0x1]
      %v3588 = vld [vmem:[#allocation2 + $0x70] sm:$0x1]
      %v3589 = vld [vmem:[#allocation2 + $0x88] sm:$0x1]
      %v3590 = vld [vmem:[#allocation2 + $0xa0] sm:$0x1]
      %v3591 = vld [vmem:[#allocation2 + $0xb8] sm:$0x1]
      %v3592 = vld [vmem:[#allocation2 + $0xd0] sm:$0x1]
      %v3593 = vld [vmem:[#allocation2 + $0xe8] sm:$0x1]
      %v3594 = vld [vmem:[#allocation2 + $0x100] sm:$0x1]
      %v3595 = vld [vmem:[#allocation2 + $0x118] sm:$0x1]
      %v3596 = vld [vmem:[#allocation2 + $0x130] sm:$0x1]
      %v3597 = vld [vmem:[#allocation2 + $0x148] sm:$0x1]
      %v3598 = vld [vmem:[#allocation2 + $0x160] sm:$0x1]
      %v3599 = vld [vmem:[#allocation2 + $0x178] sm:$0x1]
      %v3600 = vld [vmem:[#allocation2 + $0x190] sm:$0x1]
      %v3601 = vld [vmem:[#allocation2 + $0x1a8] sm:$0x1]
      %3602 = vst.msk [vmem:[#allocation2 + $0x11] sm:$0x1] %vm464, %v3584
      %3603 = vst.msk [vmem:[#allocation2 + $0x29] sm:$0x1] %vm464, %v3585
      %3604 = vst.msk [vmem:[#allocation2 + $0x41] sm:$0x1] %vm464, %v3586
      %3605 = vst.msk [vmem:[#allocation2 + $0x59] sm:$0x1] %vm464, %v3587
      %3606 = vst.msk [vmem:[#allocation2 + $0x71] sm:$0x1] %vm464, %v3588
      %3607 = vst.msk [vmem:[#allocation2 + $0x89] sm:$0x1] %vm464, %v3589
      %3608 = vst.msk [vmem:[#allocation2 + $0xa1] sm:$0x1] %vm464, %v3590
      %3609 = vst.msk [vmem:[#allocation2 + $0xb9] sm:$0x1] %vm464, %v3591
      %3610 = vst.msk [vmem:[#allocation2 + $0xd1] sm:$0x1] %vm464, %v3592
      %3611 = vst.msk [vmem:[#allocation2 + $0xe9] sm:$0x1] %vm464, %v3593
      %3612 = vst.msk [vmem:[#allocation2 + $0x101] sm:$0x1] %vm464, %v3594
      %3613 = vst.msk [vmem:[#allocation2 + $0x119] sm:$0x1] %vm464, %v3595
      %3614 = vst.msk [vmem:[#allocation2 + $0x131] sm:$0x1] %vm464, %v3596
      %3615 = vst.msk [vmem:[#allocation2 + $0x149] sm:$0x1] %vm464, %v3597
      %3616 = vst.msk [vmem:[#allocation2 + $0x161] sm:$0x1] %vm464, %v3598
      %3617 = vst.msk [vmem:[#allocation2 + $0x179] sm:$0x1] %vm464, %v3599
      %3618 = vst.msk [vmem:[#allocation2 + $0x191] sm:$0x1] %vm464, %v3600
      %3619 = vst.msk [vmem:[#allocation2 + $0x1a9] sm:$0x1] %vm464, %v3601
      %v3620 = vld [vmem:[#allocation2] sm:$0xff]
      %v3621 = vld [vmem:[#allocation2 + $0x8] sm:$0xff]
      %v3622 = vld [vmem:[#allocation2 + $0x18] sm:$0xff]
      %v3623 = vld [vmem:[#allocation2 + $0x20] sm:$0xff]
      %v3624 = vld [vmem:[#allocation2 + $0x30] sm:$0xff]
      %v3625 = vld [vmem:[#allocation2 + $0x38] sm:$0xff]
      %v3626 = vld [vmem:[#allocation2 + $0x48] sm:$0xff]
      %v3627 = vld [vmem:[#allocation2 + $0x50] sm:$0xff]
      %v3628 = vld [vmem:[#allocation2 + $0x60] sm:$0xff]
      %v3629 = vld [vmem:[#allocation2 + $0x68] sm:$0xff]
      %v3630 = vld [vmem:[#allocation2 + $0x78] sm:$0xff]
      %v3631 = vld [vmem:[#allocation2 + $0x80] sm:$0xff]
      %v3632 = vld [vmem:[#allocation2 + $0x90] sm:$0xff]
      %v3633 = vld [vmem:[#allocation2 + $0x98] sm:$0xff]
      %v3634 = vld [vmem:[#allocation2 + $0xa8] sm:$0xff]
      %v3635 = vld [vmem:[#allocation2 + $0xb0] sm:$0xff]
      %v3636 = vld [vmem:[#allocation2 + $0xc0] sm:$0xff]
      %v3637 = vld [vmem:[#allocation2 + $0xc8] sm:$0xff]
      %v3638 = vld [vmem:[#allocation2 + $0xd8] sm:$0xff]
      %v3639 = vld [vmem:[#allocation2 + $0xe0] sm:$0xff]
      %v3640 = vld [vmem:[#allocation2 + $0xf0] sm:$0xff]
      %v3641 = vld [vmem:[#allocation2 + $0xf8] sm:$0xff]
      %v3642 = vld [vmem:[#allocation2 + $0x108] sm:$0xff]
      %v3643 = vld [vmem:[#allocation2 + $0x110] sm:$0xff]
      %v3644 = vld [vmem:[#allocation2 + $0x120] sm:$0xff]
      %v3645 = vld [vmem:[#allocation2 + $0x128] sm:$0xff]
      %v3646 = vld [vmem:[#allocation2 + $0x138] sm:$0xff]
      %v3647 = vld [vmem:[#allocation2 + $0x140] sm:$0xff]
      %v3648 = vld [vmem:[#allocation2 + $0x150] sm:$0xff]
      %v3649 = vld [vmem:[#allocation2 + $0x158] sm:$0xff]
      %v3650 = vld [vmem:[#allocation2 + $0x168] sm:$0xff]
      %v3651 = vld [vmem:[#allocation2 + $0x170] sm:$0xff]
      %3652 = vst.msk [vmem:[#allocation3] sm:$0xff] %vm408, %v3620
      %3653 = vst.msk [vmem:[#allocation3 + $0x8] sm:$0xff] %vm408, %v3621
      %3654 = vst.msk [vmem:[#allocation3 + $0x10] sm:$0xff] %vm408, %v3622
      %3655 = vst.msk [vmem:[#allocation3 + $0x18] sm:$0xff] %vm408, %v3623
      %3656 = vst.msk [vmem:[#allocation3 + $0x20] sm:$0xff] %vm408, %v3624
      %3657 = vst.msk [vmem:[#allocation3 + $0x28] sm:$0xff] %vm408, %v3625
      %3658 = vst.msk [vmem:[#allocation3 + $0x30] sm:$0xff] %vm408, %v3626
      %3659 = vst.msk [vmem:[#allocation3 + $0x38] sm:$0xff] %vm408, %v3627
      %3660 = vst.msk [vmem:[#allocation3 + $0x40] sm:$0xff] %vm408, %v3628
      %3661 = vst.msk [vmem:[#allocation3 + $0x48] sm:$0xff] %vm408, %v3629
      %3662 = vst.msk [vmem:[#allocation3 + $0x50] sm:$0xff] %vm408, %v3630
      %3663 = vst.msk [vmem:[#allocation3 + $0x58] sm:$0xff] %vm408, %v3631
      %3664 = vst.msk [vmem:[#allocation3 + $0x60] sm:$0xff] %vm408, %v3632
      %3665 = vst.msk [vmem:[#allocation3 + $0x68] sm:$0xff] %vm408, %v3633
      %3666 = vst.msk [vmem:[#allocation3 + $0x70] sm:$0xff] %vm408, %v3634
      %3667 = vst.msk [vmem:[#allocation3 + $0x78] sm:$0xff] %vm408, %v3635
      %3668 = vst.msk [vmem:[#allocation3 + $0x80] sm:$0xff] %vm408, %v3636
      %3669 = vst.msk [vmem:[#allocation3 + $0x88] sm:$0xff] %vm408, %v3637
      %3670 = vst.msk [vmem:[#allocation3 + $0x90] sm:$0xff] %vm408, %v3638
      %3671 = vst.msk [vmem:[#allocation3 + $0x98] sm:$0xff] %vm408, %v3639
      %3672 = vst.msk [vmem:[#allocation3 + $0xa0] sm:$0xff] %vm408, %v3640
      %3673 = vst.msk [vmem:[#allocation3 + $0xa8] sm:$0xff] %vm408, %v3641
      %3674 = vst.msk [vmem:[#allocation3 + $0xb0] sm:$0xff] %vm408, %v3642
      %3675 = vst.msk [vmem:[#allocation3 + $0xb8] sm:$0xff] %vm408, %v3643
      %3676 = vst.msk [vmem:[#allocation3 + $0xc0] sm:$0xff] %vm408, %v3644
      %3677 = vst.msk [vmem:[#allocation3 + $0xc8] sm:$0xff] %vm408, %v3645
      %3678 = vst.msk [vmem:[#allocation3 + $0xd0] sm:$0xff] %vm408, %v3646
      %3679 = vst.msk [vmem:[#allocation3 + $0xd8] sm:$0xff] %vm408, %v3647
      %3680 = vst.msk [vmem:[#allocation3 + $0xe0] sm:$0xff] %vm408, %v3648
      %3681 = vst.msk [vmem:[#allocation3 + $0xe8] sm:$0xff] %vm408, %v3649
      %3682 = vst.msk [vmem:[#allocation3 + $0xf0] sm:$0xff] %vm408, %v3650
      %3683 = vst.msk [vmem:[#allocation3 + $0xf8] sm:$0xff] %vm408, %v3651
      %v3684 = vld [vmem:[#allocation2 + $0x1] sm:$0xff]
      %v3685 = vld [vmem:[#allocation2 + $0x9] sm:$0xff]
      %v3686 = vld [vmem:[#allocation2 + $0x19] sm:$0xff]
      %v3687 = vld [vmem:[#allocation2 + $0x21] sm:$0xff]
      %v3688 = vld [vmem:[#allocation2 + $0x31] sm:$0xff]
      %v3689 = vld [vmem:[#allocation2 + $0x39] sm:$0xff]
      %v3690 = vld [vmem:[#allocation2 + $0x49] sm:$0xff]
      %v3691 = vld [vmem:[#allocation2 + $0x51] sm:$0xff]
      %v3692 = vld [vmem:[#allocation2 + $0x61] sm:$0xff]
      %v3693 = vld [vmem:[#allocation2 + $0x69] sm:$0xff]
      %v3694 = vld [vmem:[#allocation2 + $0x79] sm:$0xff]
      %v3695 = vld [vmem:[#allocation2 + $0x81] sm:$0xff]
      %v3696 = vld [vmem:[#allocation2 + $0x91] sm:$0xff]
      %v3697 = vld [vmem:[#allocation2 + $0x99] sm:$0xff]
      %v3698 = vld [vmem:[#allocation2 + $0xa9] sm:$0xff]
      %v3699 = vld [vmem:[#allocation2 + $0xb1] sm:$0xff]
      %v3700 = vld [vmem:[#allocation2 + $0xc1] sm:$0xff]
      %v3701 = vld [vmem:[#allocation2 + $0xc9] sm:$0xff]
      %v3702 = vld [vmem:[#allocation2 + $0xd9] sm:$0xff]
      %v3703 = vld [vmem:[#allocation2 + $0xe1] sm:$0xff]
      %v3704 = vld [vmem:[#allocation2 + $0xf1] sm:$0xff]
      %v3705 = vld [vmem:[#allocation2 + $0xf9] sm:$0xff]
      %v3706 = vld [vmem:[#allocation2 + $0x109] sm:$0xff]
      %v3707 = vld [vmem:[#allocation2 + $0x111] sm:$0xff]
      %v3708 = vld [vmem:[#allocation2 + $0x121] sm:$0xff]
      %v3709 = vld [vmem:[#allocation2 + $0x129] sm:$0xff]
      %v3710 = vld [vmem:[#allocation2 + $0x139] sm:$0xff]
      %v3711 = vld [vmem:[#allocation2 + $0x141] sm:$0xff]
      %v3712 = vld [vmem:[#allocation2 + $0x151] sm:$0xff]
      %v3713 = vld [vmem:[#allocation2 + $0x159] sm:$0xff]
      %v3714 = vld [vmem:[#allocation2 + $0x169] sm:$0xff]
      %v3715 = vld [vmem:[#allocation2 + $0x171] sm:$0xff]
      %3748 = vrot.lane.b32.xlu0 %v3684, 4
      %v3749 = vpop.permute.xlu0 %3748
      %3750 = vrot.lane.b32.xlu0 %v3685, 4
      %v3751 = vpop.permute.xlu0 %3750
      %3752 = vrot.lane.b32.xlu0 %v3686, 4
      %v3753 = vpop.permute.xlu0 %3752
      %3754 = vrot.lane.b32.xlu0 %v3687, 4
      %v3755 = vpop.permute.xlu0 %3754
      %3756 = vrot.lane.b32.xlu0 %v3688, 4
      %v3757 = vpop.permute.xlu0 %3756
      %3758 = vrot.lane.b32.xlu0 %v3689, 4
      %v3759 = vpop.permute.xlu0 %3758
      %3760 = vrot.lane.b32.xlu0 %v3690, 4
      %v3761 = vpop.permute.xlu0 %3760
      %3762 = vrot.lane.b32.xlu0 %v3691, 4
      %v3763 = vpop.permute.xlu0 %3762
      %3764 = vrot.lane.b32.xlu0 %v3692, 4
      %v3765 = vpop.permute.xlu0 %3764
      %3766 = vrot.lane.b32.xlu0 %v3693, 4
      %v3767 = vpop.permute.xlu0 %3766
      %3768 = vrot.lane.b32.xlu0 %v3694, 4
      %v3769 = vpop.permute.xlu0 %3768
      %3770 = vrot.lane.b32.xlu0 %v3695, 4
      %v3771 = vpop.permute.xlu0 %3770
      %3772 = vrot.lane.b32.xlu0 %v3696, 4
      %v3773 = vpop.permute.xlu0 %3772
      %3774 = vrot.lane.b32.xlu0 %v3697, 4
      %v3775 = vpop.permute.xlu0 %3774
      %3776 = vrot.lane.b32.xlu0 %v3698, 4
      %v3777 = vpop.permute.xlu0 %3776
      %3778 = vrot.lane.b32.xlu0 %v3699, 4
      %v3779 = vpop.permute.xlu0 %3778
      %3780 = vrot.lane.b32.xlu0 %v3700, 4
      %v3781 = vpop.permute.xlu0 %3780
      %3782 = vrot.lane.b32.xlu0 %v3701, 4
      %v3783 = vpop.permute.xlu0 %3782
      %3784 = vrot.lane.b32.xlu0 %v3702, 4
      %v3785 = vpop.permute.xlu0 %3784
      %3786 = vrot.lane.b32.xlu0 %v3703, 4
      %v3787 = vpop.permute.xlu0 %3786
      %3788 = vrot.lane.b32.xlu0 %v3704, 4
      %v3789 = vpop.permute.xlu0 %3788
      %3790 = vrot.lane.b32.xlu0 %v3705, 4
      %v3791 = vpop.permute.xlu0 %3790
      %3792 = vrot.lane.b32.xlu0 %v3706, 4
      %v3793 = vpop.permute.xlu0 %3792
      %3794 = vrot.lane.b32.xlu0 %v3707, 4
      %v3795 = vpop.permute.xlu0 %3794
      %3796 = vrot.lane.b32.xlu0 %v3708, 4
      %v3797 = vpop.permute.xlu0 %3796
      %3798 = vrot.lane.b32.xlu0 %v3709, 4
      %v3799 = vpop.permute.xlu0 %3798
      %3800 = vrot.lane.b32.xlu0 %v3710, 4
      %v3801 = vpop.permute.xlu0 %3800
      %3802 = vrot.lane.b32.xlu0 %v3711, 4
      %v3803 = vpop.permute.xlu0 %3802
      %3804 = vrot.lane.b32.xlu0 %v3712, 4
      %v3805 = vpop.permute.xlu0 %3804
      %3806 = vrot.lane.b32.xlu0 %v3713, 4
      %v3807 = vpop.permute.xlu0 %3806
      %3808 = vrot.lane.b32.xlu0 %v3714, 4
      %v3809 = vpop.permute.xlu0 %3808
      %3810 = vrot.lane.b32.xlu0 %v3715, 4
      %v3811 = vpop.permute.xlu0 %3810
      %3844 = vst.msk [vmem:[#allocation3] sm:$0xff] %vm743, %v3749
      %3845 = vst.msk [vmem:[#allocation3 + $0x8] sm:$0xff] %vm743, %v3751
      %3846 = vst.msk [vmem:[#allocation3 + $0x10] sm:$0xff] %vm743, %v3753
      %3847 = vst.msk [vmem:[#allocation3 + $0x18] sm:$0xff] %vm743, %v3755
      %3848 = vst.msk [vmem:[#allocation3 + $0x20] sm:$0xff] %vm743, %v3757
      %3849 = vst.msk [vmem:[#allocation3 + $0x28] sm:$0xff] %vm743, %v3759
      %3850 = vst.msk [vmem:[#allocation3 + $0x30] sm:$0xff] %vm743, %v3761
      %3851 = vst.msk [vmem:[#allocation3 + $0x38] sm:$0xff] %vm743, %v3763
      %3852 = vst.msk [vmem:[#allocation3 + $0x40] sm:$0xff] %vm743, %v3765
      %3853 = vst.msk [vmem:[#allocation3 + $0x48] sm:$0xff] %vm743, %v3767
      %3854 = vst.msk [vmem:[#allocation3 + $0x50] sm:$0xff] %vm743, %v3769
      %3855 = vst.msk [vmem:[#allocation3 + $0x58] sm:$0xff] %vm743, %v3771
      %3856 = vst.msk [vmem:[#allocation3 + $0x60] sm:$0xff] %vm743, %v3773
      %3857 = vst.msk [vmem:[#allocation3 + $0x68] sm:$0xff] %vm743, %v3775
      %3858 = vst.msk [vmem:[#allocation3 + $0x70] sm:$0xff] %vm743, %v3777
      %3859 = vst.msk [vmem:[#allocation3 + $0x78] sm:$0xff] %vm743, %v3779
      %3860 = vst.msk [vmem:[#allocation3 + $0x80] sm:$0xff] %vm743, %v3781
      %3861 = vst.msk [vmem:[#allocation3 + $0x88] sm:$0xff] %vm743, %v3783
      %3862 = vst.msk [vmem:[#allocation3 + $0x90] sm:$0xff] %vm743, %v3785
      %3863 = vst.msk [vmem:[#allocation3 + $0x98] sm:$0xff] %vm743, %v3787
      %3864 = vst.msk [vmem:[#allocation3 + $0xa0] sm:$0xff] %vm743, %v3789
      %3865 = vst.msk [vmem:[#allocation3 + $0xa8] sm:$0xff] %vm743, %v3791
      %3866 = vst.msk [vmem:[#allocation3 + $0xb0] sm:$0xff] %vm743, %v3793
      %3867 = vst.msk [vmem:[#allocation3 + $0xb8] sm:$0xff] %vm743, %v3795
      %3868 = vst.msk [vmem:[#allocation3 + $0xc0] sm:$0xff] %vm743, %v3797
      %3869 = vst.msk [vmem:[#allocation3 + $0xc8] sm:$0xff] %vm743, %v3799
      %3870 = vst.msk [vmem:[#allocation3 + $0xd0] sm:$0xff] %vm743, %v3801
      %3871 = vst.msk [vmem:[#allocation3 + $0xd8] sm:$0xff] %vm743, %v3803
      %3872 = vst.msk [vmem:[#allocation3 + $0xe0] sm:$0xff] %vm743, %v3805
      %3873 = vst.msk [vmem:[#allocation3 + $0xe8] sm:$0xff] %vm743, %v3807
      %3874 = vst.msk [vmem:[#allocation3 + $0xf0] sm:$0xff] %vm743, %v3809
      %3875 = vst.msk [vmem:[#allocation3 + $0xf8] sm:$0xff] %vm743, %v3811
      %v3876 = vld [vmem:[#allocation2 + $0x2] sm:$0xff]
      %v3877 = vld [vmem:[#allocation2 + $0xa] sm:$0xff]
      %v3878 = vld [vmem:[#allocation2 + $0x1a] sm:$0xff]
      %v3879 = vld [vmem:[#allocation2 + $0x22] sm:$0xff]
      %v3880 = vld [vmem:[#allocation2 + $0x32] sm:$0xff]
      %v3881 = vld [vmem:[#allocation2 + $0x3a] sm:$0xff]
      %v3882 = vld [vmem:[#allocation2 + $0x4a] sm:$0xff]
      %v3883 = vld [vmem:[#allocation2 + $0x52] sm:$0xff]
      %v3884 = vld [vmem:[#allocation2 + $0x62] sm:$0xff]
      %v3885 = vld [vmem:[#allocation2 + $0x6a] sm:$0xff]
      %v3886 = vld [vmem:[#allocation2 + $0x7a] sm:$0xff]
      %v3887 = vld [vmem:[#allocation2 + $0x82] sm:$0xff]
      %v3888 = vld [vmem:[#allocation2 + $0x92] sm:$0xff]
      %v3889 = vld [vmem:[#allocation2 + $0x9a] sm:$0xff]
      %v3890 = vld [vmem:[#allocation2 + $0xaa] sm:$0xff]
      %v3891 = vld [vmem:[#allocation2 + $0xb2] sm:$0xff]
      %v3892 = vld [vmem:[#allocation2 + $0xc2] sm:$0xff]
      %v3893 = vld [vmem:[#allocation2 + $0xca] sm:$0xff]
      %v3894 = vld [vmem:[#allocation2 + $0xda] sm:$0xff]
      %v3895 = vld [vmem:[#allocation2 + $0xe2] sm:$0xff]
      %v3896 = vld [vmem:[#allocation2 + $0xf2] sm:$0xff]
      %v3897 = vld [vmem:[#allocation2 + $0xfa] sm:$0xff]
      %v3898 = vld [vmem:[#allocation2 + $0x10a] sm:$0xff]
      %v3899 = vld [vmem:[#allocation2 + $0x112] sm:$0xff]
      %v3900 = vld [vmem:[#allocation2 + $0x122] sm:$0xff]
      %v3901 = vld [vmem:[#allocation2 + $0x12a] sm:$0xff]
      %v3902 = vld [vmem:[#allocation2 + $0x13a] sm:$0xff]
      %v3903 = vld [vmem:[#allocation2 + $0x142] sm:$0xff]
      %v3904 = vld [vmem:[#allocation2 + $0x152] sm:$0xff]
      %v3905 = vld [vmem:[#allocation2 + $0x15a] sm:$0xff]
      %v3906 = vld [vmem:[#allocation2 + $0x16a] sm:$0xff]
      %v3907 = vld [vmem:[#allocation2 + $0x172] sm:$0xff]
      %3940 = vrot.lane.b32.xlu0 %v3876, 8
      %v3941 = vpop.permute.xlu0 %3940
      %3942 = vrot.lane.b32.xlu0 %v3877, 8
      %v3943 = vpop.permute.xlu0 %3942
      %3944 = vrot.lane.b32.xlu0 %v3878, 8
      %v3945 = vpop.permute.xlu0 %3944
      %3946 = vrot.lane.b32.xlu0 %v3879, 8
      %v3947 = vpop.permute.xlu0 %3946
      %3948 = vrot.lane.b32.xlu0 %v3880, 8
      %v3949 = vpop.permute.xlu0 %3948
      %3950 = vrot.lane.b32.xlu0 %v3881, 8
      %v3951 = vpop.permute.xlu0 %3950
      %3952 = vrot.lane.b32.xlu0 %v3882, 8
      %v3953 = vpop.permute.xlu0 %3952
      %3954 = vrot.lane.b32.xlu0 %v3883, 8
      %v3955 = vpop.permute.xlu0 %3954
      %3956 = vrot.lane.b32.xlu0 %v3884, 8
      %v3957 = vpop.permute.xlu0 %3956
      %3958 = vrot.lane.b32.xlu0 %v3885, 8
      %v3959 = vpop.permute.xlu0 %3958
      %3960 = vrot.lane.b32.xlu0 %v3886, 8
      %v3961 = vpop.permute.xlu0 %3960
      %3962 = vrot.lane.b32.xlu0 %v3887, 8
      %v3963 = vpop.permute.xlu0 %3962
      %3964 = vrot.lane.b32.xlu0 %v3888, 8
      %v3965 = vpop.permute.xlu0 %3964
      %3966 = vrot.lane.b32.xlu0 %v3889, 8
      %v3967 = vpop.permute.xlu0 %3966
      %3968 = vrot.lane.b32.xlu0 %v3890, 8
      %v3969 = vpop.permute.xlu0 %3968
      %3970 = vrot.lane.b32.xlu0 %v3891, 8
      %v3971 = vpop.permute.xlu0 %3970
      %3972 = vrot.lane.b32.xlu0 %v3892, 8
      %v3973 = vpop.permute.xlu0 %3972
      %3974 = vrot.lane.b32.xlu0 %v3893, 8
      %v3975 = vpop.permute.xlu0 %3974
      %3976 = vrot.lane.b32.xlu0 %v3894, 8
      %v3977 = vpop.permute.xlu0 %3976
      %3978 = vrot.lane.b32.xlu0 %v3895, 8
      %v3979 = vpop.permute.xlu0 %3978
      %3980 = vrot.lane.b32.xlu0 %v3896, 8
      %v3981 = vpop.permute.xlu0 %3980
      %3982 = vrot.lane.b32.xlu0 %v3897, 8
      %v3983 = vpop.permute.xlu0 %3982
      %3984 = vrot.lane.b32.xlu0 %v3898, 8
      %v3985 = vpop.permute.xlu0 %3984
      %3986 = vrot.lane.b32.xlu0 %v3899, 8
      %v3987 = vpop.permute.xlu0 %3986
      %3988 = vrot.lane.b32.xlu0 %v3900, 8
      %v3989 = vpop.permute.xlu0 %3988
      %3990 = vrot.lane.b32.xlu0 %v3901, 8
      %v3991 = vpop.permute.xlu0 %3990
      %3992 = vrot.lane.b32.xlu0 %v3902, 8
      %v3993 = vpop.permute.xlu0 %3992
      %3994 = vrot.lane.b32.xlu0 %v3903, 8
      %v3995 = vpop.permute.xlu0 %3994
      %3996 = vrot.lane.b32.xlu0 %v3904, 8
      %v3997 = vpop.permute.xlu0 %3996
      %3998 = vrot.lane.b32.xlu0 %v3905, 8
      %v3999 = vpop.permute.xlu0 %3998
      %4000 = vrot.lane.b32.xlu0 %v3906, 8
      %v4001 = vpop.permute.xlu0 %4000
      %4002 = vrot.lane.b32.xlu0 %v3907, 8
      %v4003 = vpop.permute.xlu0 %4002
      %4036 = vst.msk [vmem:[#allocation3] sm:$0xff] %vm936, %v3941
      %4037 = vst.msk [vmem:[#allocation3 + $0x8] sm:$0xff] %vm936, %v3943
      %4038 = vst.msk [vmem:[#allocation3 + $0x10] sm:$0xff] %vm936, %v3945
      %4039 = vst.msk [vmem:[#allocation3 + $0x18] sm:$0xff] %vm936, %v3947
      %4040 = vst.msk [vmem:[#allocation3 + $0x20] sm:$0xff] %vm936, %v3949
      %4041 = vst.msk [vmem:[#allocation3 + $0x28] sm:$0xff] %vm936, %v3951
      %4042 = vst.msk [vmem:[#allocation3 + $0x30] sm:$0xff] %vm936, %v3953
      %4043 = vst.msk [vmem:[#allocation3 + $0x38] sm:$0xff] %vm936, %v3955
      %4044 = vst.msk [vmem:[#allocation3 + $0x40] sm:$0xff] %vm936, %v3957
      %4045 = vst.msk [vmem:[#allocation3 + $0x48] sm:$0xff] %vm936, %v3959
      %4046 = vst.msk [vmem:[#allocation3 + $0x50] sm:$0xff] %vm936, %v3961
      %4047 = vst.msk [vmem:[#allocation3 + $0x58] sm:$0xff] %vm936, %v3963
      %4048 = vst.msk [vmem:[#allocation3 + $0x60] sm:$0xff] %vm936, %v3965
      %4049 = vst.msk [vmem:[#allocation3 + $0x68] sm:$0xff] %vm936, %v3967
      %4050 = vst.msk [vmem:[#allocation3 + $0x70] sm:$0xff] %vm936, %v3969
      %4051 = vst.msk [vmem:[#allocation3 + $0x78] sm:$0xff] %vm936, %v3971
      %4052 = vst.msk [vmem:[#allocation3 + $0x80] sm:$0xff] %vm936, %v3973
      %4053 = vst.msk [vmem:[#allocation3 + $0x88] sm:$0xff] %vm936, %v3975
      %4054 = vst.msk [vmem:[#allocation3 + $0x90] sm:$0xff] %vm936, %v3977
      %4055 = vst.msk [vmem:[#allocation3 + $0x98] sm:$0xff] %vm936, %v3979
      %4056 = vst.msk [vmem:[#allocation3 + $0xa0] sm:$0xff] %vm936, %v3981
      %4057 = vst.msk [vmem:[#allocation3 + $0xa8] sm:$0xff] %vm936, %v3983
      %4058 = vst.msk [vmem:[#allocation3 + $0xb0] sm:$0xff] %vm936, %v3985
      %4059 = vst.msk [vmem:[#allocation3 + $0xb8] sm:$0xff] %vm936, %v3987
      %4060 = vst.msk [vmem:[#allocation3 + $0xc0] sm:$0xff] %vm936, %v3989
      %4061 = vst.msk [vmem:[#allocation3 + $0xc8] sm:$0xff] %vm936, %v3991
      %4062 = vst.msk [vmem:[#allocation3 + $0xd0] sm:$0xff] %vm936, %v3993
      %4063 = vst.msk [vmem:[#allocation3 + $0xd8] sm:$0xff] %vm936, %v3995
      %4064 = vst.msk [vmem:[#allocation3 + $0xe0] sm:$0xff] %vm936, %v3997
      %4065 = vst.msk [vmem:[#allocation3 + $0xe8] sm:$0xff] %vm936, %v3999
      %4066 = vst.msk [vmem:[#allocation3 + $0xf0] sm:$0xff] %vm936, %v4001
      %4067 = vst.msk [vmem:[#allocation3 + $0xf8] sm:$0xff] %vm936, %v4003
      %v4068 = vld [vmem:[%s407] sm:$0xff]
      %v4069 = vld [vmem:[%s407 + $0x8] sm:$0xff]
      %v4070 = vld [vmem:[%s407 + $0x18] sm:$0xff]
      %v4071 = vld [vmem:[%s407 + $0x20] sm:$0xff]
      %v4072 = vld [vmem:[%s407 + $0x30] sm:$0xff]
      %v4073 = vld [vmem:[%s407 + $0x38] sm:$0xff]
      %v4074 = vld [vmem:[%s407 + $0x48] sm:$0xff]
      %v4075 = vld [vmem:[%s407 + $0x50] sm:$0xff]
      %v4076 = vld [vmem:[%s407 + $0x60] sm:$0xff]
      %v4077 = vld [vmem:[%s407 + $0x68] sm:$0xff]
      %v4078 = vld [vmem:[%s407 + $0x78] sm:$0xff]
      %v4079 = vld [vmem:[%s407 + $0x80] sm:$0xff]
      %v4080 = vld [vmem:[%s407 + $0x90] sm:$0xff]
      %v4081 = vld [vmem:[%s407 + $0x98] sm:$0xff]
      %v4082 = vld [vmem:[%s407 + $0xa8] sm:$0xff]
      %v4083 = vld [vmem:[%s407 + $0xb0] sm:$0xff]
      %v4084 = vld [vmem:[%s407 + $0xc0] sm:$0xff]
      %v4085 = vld [vmem:[%s407 + $0xc8] sm:$0xff]
      %v4086 = vld [vmem:[%s407 + $0xd8] sm:$0xff]
      %v4087 = vld [vmem:[%s407 + $0xe0] sm:$0xff]
      %v4088 = vld [vmem:[%s407 + $0xf0] sm:$0xff]
      %v4089 = vld [vmem:[%s407 + $0xf8] sm:$0xff]
      %v4090 = vld [vmem:[%s407 + $0x108] sm:$0xff]
      %v4091 = vld [vmem:[%s407 + $0x110] sm:$0xff]
      %v4092 = vld [vmem:[%s407 + $0x120] sm:$0xff]
      %v4093 = vld [vmem:[%s407 + $0x128] sm:$0xff]
      %v4094 = vld [vmem:[%s407 + $0x138] sm:$0xff]
      %v4095 = vld [vmem:[%s407 + $0x140] sm:$0xff]
      %v4096 = vld [vmem:[%s407 + $0x150] sm:$0xff]
      %v4097 = vld [vmem:[%s407 + $0x158] sm:$0xff]
      %v4098 = vld [vmem:[%s407 + $0x168] sm:$0xff]
      %v4099 = vld [vmem:[%s407 + $0x170] sm:$0xff]
      %4132 = vrot.lane.b32.xlu0 %v4068, 12
      %v4133 = vpop.permute.xlu0 %4132
      %4134 = vrot.lane.b32.xlu0 %v4069, 12
      %v4135 = vpop.permute.xlu0 %4134
      %4136 = vrot.lane.b32.xlu0 %v4070, 12
      %v4137 = vpop.permute.xlu0 %4136
      %4138 = vrot.lane.b32.xlu0 %v4071, 12
      %v4139 = vpop.permute.xlu0 %4138
      %4140 = vrot.lane.b32.xlu0 %v4072, 12
      %v4141 = vpop.permute.xlu0 %4140
      %4142 = vrot.lane.b32.xlu0 %v4073, 12
      %v4143 = vpop.permute.xlu0 %4142
      %4144 = vrot.lane.b32.xlu0 %v4074, 12
      %v4145 = vpop.permute.xlu0 %4144
      %4146 = vrot.lane.b32.xlu0 %v4075, 12
      %v4147 = vpop.permute.xlu0 %4146
      %4148 = vrot.lane.b32.xlu0 %v4076, 12
      %v4149 = vpop.permute.xlu0 %4148
      %4150 = vrot.lane.b32.xlu0 %v4077, 12
      %v4151 = vpop.permute.xlu0 %4150
      %4152 = vrot.lane.b32.xlu0 %v4078, 12
      %v4153 = vpop.permute.xlu0 %4152
      %4154 = vrot.lane.b32.xlu0 %v4079, 12
      %v4155 = vpop.permute.xlu0 %4154
      %4156 = vrot.lane.b32.xlu0 %v4080, 12
      %v4157 = vpop.permute.xlu0 %4156
      %4158 = vrot.lane.b32.xlu0 %v4081, 12
      %v4159 = vpop.permute.xlu0 %4158
      %4160 = vrot.lane.b32.xlu0 %v4082, 12
      %v4161 = vpop.permute.xlu0 %4160
      %4162 = vrot.lane.b32.xlu0 %v4083, 12
      %v4163 = vpop.permute.xlu0 %4162
      %4164 = vrot.lane.b32.xlu0 %v4084, 12
      %v4165 = vpop.permute.xlu0 %4164
      %4166 = vrot.lane.b32.xlu0 %v4085, 12
      %v4167 = vpop.permute.xlu0 %4166
      %4168 = vrot.lane.b32.xlu0 %v4086, 12
      %v4169 = vpop.permute.xlu0 %4168
      %4170 = vrot.lane.b32.xlu0 %v4087, 12
      %v4171 = vpop.permute.xlu0 %4170
      %4172 = vrot.lane.b32.xlu0 %v4088, 12
      %v4173 = vpop.permute.xlu0 %4172
      %4174 = vrot.lane.b32.xlu0 %v4089, 12
      %v4175 = vpop.permute.xlu0 %4174
      %4176 = vrot.lane.b32.xlu0 %v4090, 12
      %v4177 = vpop.permute.xlu0 %4176
      %4178 = vrot.lane.b32.xlu0 %v4091, 12
      %v4179 = vpop.permute.xlu0 %4178
      %4180 = vrot.lane.b32.xlu0 %v4092, 12
      %v4181 = vpop.permute.xlu0 %4180
      %4182 = vrot.lane.b32.xlu0 %v4093, 12
      %v4183 = vpop.permute.xlu0 %4182
      %4184 = vrot.lane.b32.xlu0 %v4094, 12
      %v4185 = vpop.permute.xlu0 %4184
      %4186 = vrot.lane.b32.xlu0 %v4095, 12
      %v4187 = vpop.permute.xlu0 %4186
      %4188 = vrot.lane.b32.xlu0 %v4096, 12
      %v4189 = vpop.permute.xlu0 %4188
      %4190 = vrot.lane.b32.xlu0 %v4097, 12
      %v4191 = vpop.permute.xlu0 %4190
      %4192 = vrot.lane.b32.xlu0 %v4098, 12
      %v4193 = vpop.permute.xlu0 %4192
      %4194 = vrot.lane.b32.xlu0 %v4099, 12
      %v4195 = vpop.permute.xlu0 %4194
      %4228 = vst.msk [vmem:[#allocation3] sm:$0xff] %vm1129, %v4133
      %4229 = vst.msk [vmem:[#allocation3 + $0x8] sm:$0xff] %vm1129, %v4135
      %4230 = vst.msk [vmem:[#allocation3 + $0x10] sm:$0xff] %vm1129, %v4137
      %4231 = vst.msk [vmem:[#allocation3 + $0x18] sm:$0xff] %vm1129, %v4139
      %4232 = vst.msk [vmem:[#allocation3 + $0x20] sm:$0xff] %vm1129, %v4141
      %4233 = vst.msk [vmem:[#allocation3 + $0x28] sm:$0xff] %vm1129, %v4143
      %4234 = vst.msk [vmem:[#allocation3 + $0x30] sm:$0xff] %vm1129, %v4145
      %4235 = vst.msk [vmem:[#allocation3 + $0x38] sm:$0xff] %vm1129, %v4147
      %4236 = vst.msk [vmem:[#allocation3 + $0x40] sm:$0xff] %vm1129, %v4149
      %4237 = vst.msk [vmem:[#allocation3 + $0x48] sm:$0xff] %vm1129, %v4151
      %4238 = vst.msk [vmem:[#allocation3 + $0x50] sm:$0xff] %vm1129, %v4153
      %4239 = vst.msk [vmem:[#allocation3 + $0x58] sm:$0xff] %vm1129, %v4155
      %4240 = vst.msk [vmem:[#allocation3 + $0x60] sm:$0xff] %vm1129, %v4157
      %4241 = vst.msk [vmem:[#allocation3 + $0x68] sm:$0xff] %vm1129, %v4159
      %4242 = vst.msk [vmem:[#allocation3 + $0x70] sm:$0xff] %vm1129, %v4161
      %4243 = vst.msk [vmem:[#allocation3 + $0x78] sm:$0xff] %vm1129, %v4163
      %4244 = vst.msk [vmem:[#allocation3 + $0x80] sm:$0xff] %vm1129, %v4165
      %4245 = vst.msk [vmem:[#allocation3 + $0x88] sm:$0xff] %vm1129, %v4167
      %4246 = vst.msk [vmem:[#allocation3 + $0x90] sm:$0xff] %vm1129, %v4169
      %4247 = vst.msk [vmem:[#allocation3 + $0x98] sm:$0xff] %vm1129, %v4171
      %4248 = vst.msk [vmem:[#allocation3 + $0xa0] sm:$0xff] %vm1129, %v4173
      %4249 = vst.msk [vmem:[#allocation3 + $0xa8] sm:$0xff] %vm1129, %v4175
      %4250 = vst.msk [vmem:[#allocation3 + $0xb0] sm:$0xff] %vm1129, %v4177
      %4251 = vst.msk [vmem:[#allocation3 + $0xb8] sm:$0xff] %vm1129, %v4179
      %4252 = vst.msk [vmem:[#allocation3 + $0xc0] sm:$0xff] %vm1129, %v4181
      %4253 = vst.msk [vmem:[#allocation3 + $0xc8] sm:$0xff] %vm1129, %v4183
      %4254 = vst.msk [vmem:[#allocation3 + $0xd0] sm:$0xff] %vm1129, %v4185
      %4255 = vst.msk [vmem:[#allocation3 + $0xd8] sm:$0xff] %vm1129, %v4187
      %4256 = vst.msk [vmem:[#allocation3 + $0xe0] sm:$0xff] %vm1129, %v4189
      %4257 = vst.msk [vmem:[#allocation3 + $0xe8] sm:$0xff] %vm1129, %v4191
      %4258 = vst.msk [vmem:[#allocation3 + $0xf0] sm:$0xff] %vm1129, %v4193
      %4259 = vst.msk [vmem:[#allocation3 + $0xf8] sm:$0xff] %vm1129, %v4195
      %v4260 = vld [vmem:[%s407 + $0x1] sm:$0xff]
      %v4261 = vld [vmem:[%s407 + $0x9] sm:$0xff]
      %v4262 = vld [vmem:[%s407 + $0x19] sm:$0xff]
      %v4263 = vld [vmem:[%s407 + $0x21] sm:$0xff]
      %v4264 = vld [vmem:[%s407 + $0x31] sm:$0xff]
      %v4265 = vld [vmem:[%s407 + $0x39] sm:$0xff]
      %v4266 = vld [vmem:[%s407 + $0x49] sm:$0xff]
      %v4267 = vld [vmem:[%s407 + $0x51] sm:$0xff]
      %v4268 = vld [vmem:[%s407 + $0x61] sm:$0xff]
      %v4269 = vld [vmem:[%s407 + $0x69] sm:$0xff]
      %v4270 = vld [vmem:[%s407 + $0x79] sm:$0xff]
      %v4271 = vld [vmem:[%s407 + $0x81] sm:$0xff]
      %v4272 = vld [vmem:[%s407 + $0x91] sm:$0xff]
      %v4273 = vld [vmem:[%s407 + $0x99] sm:$0xff]
      %v4274 = vld [vmem:[%s407 + $0xa9] sm:$0xff]
      %v4275 = vld [vmem:[%s407 + $0xb1] sm:$0xff]
      %v4276 = vld [vmem:[%s407 + $0xc1] sm:$0xff]
      %v4277 = vld [vmem:[%s407 + $0xc9] sm:$0xff]
      %v4278 = vld [vmem:[%s407 + $0xd9] sm:$0xff]
      %v4279 = vld [vmem:[%s407 + $0xe1] sm:$0xff]
      %v4280 = vld [vmem:[%s407 + $0xf1] sm:$0xff]
      %v4281 = vld [vmem:[%s407 + $0xf9] sm:$0xff]
      %v4282 = vld [vmem:[%s407 + $0x109] sm:$0xff]
      %v4283 = vld [vmem:[%s407 + $0x111] sm:$0xff]
      %v4284 = vld [vmem:[%s407 + $0x121] sm:$0xff]
      %v4285 = vld [vmem:[%s407 + $0x129] sm:$0xff]
      %v4286 = vld [vmem:[%s407 + $0x139] sm:$0xff]
      %v4287 = vld [vmem:[%s407 + $0x141] sm:$0xff]
      %v4288 = vld [vmem:[%s407 + $0x151] sm:$0xff]
      %v4289 = vld [vmem:[%s407 + $0x159] sm:$0xff]
      %v4290 = vld [vmem:[%s407 + $0x169] sm:$0xff]
      %v4291 = vld [vmem:[%s407 + $0x171] sm:$0xff]
      %4324 = vrot.lane.b32.xlu0 %v4260, 16
      %v4325 = vpop.permute.xlu0 %4324
      %4326 = vrot.lane.b32.xlu0 %v4261, 16
      %v4327 = vpop.permute.xlu0 %4326
      %4328 = vrot.lane.b32.xlu0 %v4262, 16
      %v4329 = vpop.permute.xlu0 %4328
      %4330 = vrot.lane.b32.xlu0 %v4263, 16
      %v4331 = vpop.permute.xlu0 %4330
      %4332 = vrot.lane.b32.xlu0 %v4264, 16
      %v4333 = vpop.permute.xlu0 %4332
      %4334 = vrot.lane.b32.xlu0 %v4265, 16
      %v4335 = vpop.permute.xlu0 %4334
      %4336 = vrot.lane.b32.xlu0 %v4266, 16
      %v4337 = vpop.permute.xlu0 %4336
      %4338 = vrot.lane.b32.xlu0 %v4267, 16
      %v4339 = vpop.permute.xlu0 %4338
      %4340 = vrot.lane.b32.xlu0 %v4268, 16
      %v4341 = vpop.permute.xlu0 %4340
      %4342 = vrot.lane.b32.xlu0 %v4269, 16
      %v4343 = vpop.permute.xlu0 %4342
      %4344 = vrot.lane.b32.xlu0 %v4270, 16
      %v4345 = vpop.permute.xlu0 %4344
      %4346 = vrot.lane.b32.xlu0 %v4271, 16
      %v4347 = vpop.permute.xlu0 %4346
      %4348 = vrot.lane.b32.xlu0 %v4272, 16
      %v4349 = vpop.permute.xlu0 %4348
      %4350 = vrot.lane.b32.xlu0 %v4273, 16
      %v4351 = vpop.permute.xlu0 %4350
      %4352 = vrot.lane.b32.xlu0 %v4274, 16
      %v4353 = vpop.permute.xlu0 %4352
      %4354 = vrot.lane.b32.xlu0 %v4275, 16
      %v4355 = vpop.permute.xlu0 %4354
      %4356 = vrot.lane.b32.xlu0 %v4276, 16
      %v4357 = vpop.permute.xlu0 %4356
      %4358 = vrot.lane.b32.xlu0 %v4277, 16
      %v4359 = vpop.permute.xlu0 %4358
      %4360 = vrot.lane.b32.xlu0 %v4278, 16
      %v4361 = vpop.permute.xlu0 %4360
      %4362 = vrot.lane.b32.xlu0 %v4279, 16
      %v4363 = vpop.permute.xlu0 %4362
      %4364 = vrot.lane.b32.xlu0 %v4280, 16
      %v4365 = vpop.permute.xlu0 %4364
      %4366 = vrot.lane.b32.xlu0 %v4281, 16
      %v4367 = vpop.permute.xlu0 %4366
      %4368 = vrot.lane.b32.xlu0 %v4282, 16
      %v4369 = vpop.permute.xlu0 %4368
      %4370 = vrot.lane.b32.xlu0 %v4283, 16
      %v4371 = vpop.permute.xlu0 %4370
      %4372 = vrot.lane.b32.xlu0 %v4284, 16
      %v4373 = vpop.permute.xlu0 %4372
      %4374 = vrot.lane.b32.xlu0 %v4285, 16
      %v4375 = vpop.permute.xlu0 %4374
      %4376 = vrot.lane.b32.xlu0 %v4286, 16
      %v4377 = vpop.permute.xlu0 %4376
      %4378 = vrot.lane.b32.xlu0 %v4287, 16
      %v4379 = vpop.permute.xlu0 %4378
      %4380 = vrot.lane.b32.xlu0 %v4288, 16
      %v4381 = vpop.permute.xlu0 %4380
      %4382 = vrot.lane.b32.xlu0 %v4289, 16
      %v4383 = vpop.permute.xlu0 %4382
      %4384 = vrot.lane.b32.xlu0 %v4290, 16
      %v4385 = vpop.permute.xlu0 %4384
      %4386 = vrot.lane.b32.xlu0 %v4291, 16
      %v4387 = vpop.permute.xlu0 %4386
      %4420 = vst.msk [vmem:[#allocation3] sm:$0xff] %vm1322, %v4325
      %4421 = vst.msk [vmem:[#allocation3 + $0x8] sm:$0xff] %vm1322, %v4327
      %4422 = vst.msk [vmem:[#allocation3 + $0x10] sm:$0xff] %vm1322, %v4329
      %4423 = vst.msk [vmem:[#allocation3 + $0x18] sm:$0xff] %vm1322, %v4331
      %4424 = vst.msk [vmem:[#allocation3 + $0x20] sm:$0xff] %vm1322, %v4333
      %4425 = vst.msk [vmem:[#allocation3 + $0x28] sm:$0xff] %vm1322, %v4335
      %4426 = vst.msk [vmem:[#allocation3 + $0x30] sm:$0xff] %vm1322, %v4337
      %4427 = vst.msk [vmem:[#allocation3 + $0x38] sm:$0xff] %vm1322, %v4339
      %4428 = vst.msk [vmem:[#allocation3 + $0x40] sm:$0xff] %vm1322, %v4341
      %4429 = vst.msk [vmem:[#allocation3 + $0x48] sm:$0xff] %vm1322, %v4343
      %4430 = vst.msk [vmem:[#allocation3 + $0x50] sm:$0xff] %vm1322, %v4345
      %4431 = vst.msk [vmem:[#allocation3 + $0x58] sm:$0xff] %vm1322, %v4347
      %4432 = vst.msk [vmem:[#allocation3 + $0x60] sm:$0xff] %vm1322, %v4349
      %4433 = vst.msk [vmem:[#allocation3 + $0x68] sm:$0xff] %vm1322, %v4351
      %4434 = vst.msk [vmem:[#allocation3 + $0x70] sm:$0xff] %vm1322, %v4353
      %4435 = vst.msk [vmem:[#allocation3 + $0x78] sm:$0xff] %vm1322, %v4355
      %4436 = vst.msk [vmem:[#allocation3 + $0x80] sm:$0xff] %vm1322, %v4357
      %4437 = vst.msk [vmem:[#allocation3 + $0x88] sm:$0xff] %vm1322, %v4359
      %4438 = vst.msk [vmem:[#allocation3 + $0x90] sm:$0xff] %vm1322, %v4361
      %4439 = vst.msk [vmem:[#allocation3 + $0x98] sm:$0xff] %vm1322, %v4363
      %4440 = vst.msk [vmem:[#allocation3 + $0xa0] sm:$0xff] %vm1322, %v4365
      %4441 = vst.msk [vmem:[#allocation3 + $0xa8] sm:$0xff] %vm1322, %v4367
      %4442 = vst.msk [vmem:[#allocation3 + $0xb0] sm:$0xff] %vm1322, %v4369
      %4443 = vst.msk [vmem:[#allocation3 + $0xb8] sm:$0xff] %vm1322, %v4371
      %4444 = vst.msk [vmem:[#allocation3 + $0xc0] sm:$0xff] %vm1322, %v4373
      %4445 = vst.msk [vmem:[#allocation3 + $0xc8] sm:$0xff] %vm1322, %v4375
      %4446 = vst.msk [vmem:[#allocation3 + $0xd0] sm:$0xff] %vm1322, %v4377
      %4447 = vst.msk [vmem:[#allocation3 + $0xd8] sm:$0xff] %vm1322, %v4379
      %4448 = vst.msk [vmem:[#allocation3 + $0xe0] sm:$0xff] %vm1322, %v4381
      %4449 = vst.msk [vmem:[#allocation3 + $0xe8] sm:$0xff] %vm1322, %v4383
      %4450 = vst.msk [vmem:[#allocation3 + $0xf0] sm:$0xff] %vm1322, %v4385
      %4451 = vst.msk [vmem:[#allocation3 + $0xf8] sm:$0xff] %vm1322, %v4387
      %v4452 = vld [vmem:[%s407 + $0x2] sm:$0xff]
      %v4453 = vld [vmem:[%s407 + $0xa] sm:$0xff]
      %v4454 = vld [vmem:[%s407 + $0x1a] sm:$0xff]
      %v4455 = vld [vmem:[%s407 + $0x22] sm:$0xff]
      %v4456 = vld [vmem:[%s407 + $0x32] sm:$0xff]
      %v4457 = vld [vmem:[%s407 + $0x3a] sm:$0xff]
      %v4458 = vld [vmem:[%s407 + $0x4a] sm:$0xff]
      %v4459 = vld [vmem:[%s407 + $0x52] sm:$0xff]
      %v4460 = vld [vmem:[%s407 + $0x62] sm:$0xff]
      %v4461 = vld [vmem:[%s407 + $0x6a] sm:$0xff]
      %v4462 = vld [vmem:[%s407 + $0x7a] sm:$0xff]
      %v4463 = vld [vmem:[%s407 + $0x82] sm:$0xff]
      %v4464 = vld [vmem:[%s407 + $0x92] sm:$0xff]
      %v4465 = vld [vmem:[%s407 + $0x9a] sm:$0xff]
      %v4466 = vld [vmem:[%s407 + $0xaa] sm:$0xff]
      %v4467 = vld [vmem:[%s407 + $0xb2] sm:$0xff]
      %v4468 = vld [vmem:[%s407 + $0xc2] sm:$0xff]
      %v4469 = vld [vmem:[%s407 + $0xca] sm:$0xff]
      %v4470 = vld [vmem:[%s407 + $0xda] sm:$0xff]
      %v4471 = vld [vmem:[%s407 + $0xe2] sm:$0xff]
      %v4472 = vld [vmem:[%s407 + $0xf2] sm:$0xff]
      %v4473 = vld [vmem:[%s407 + $0xfa] sm:$0xff]
      %v4474 = vld [vmem:[%s407 + $0x10a] sm:$0xff]
      %v4475 = vld [vmem:[%s407 + $0x112] sm:$0xff]
      %v4476 = vld [vmem:[%s407 + $0x122] sm:$0xff]
      %v4477 = vld [vmem:[%s407 + $0x12a] sm:$0xff]
      %v4478 = vld [vmem:[%s407 + $0x13a] sm:$0xff]
      %v4479 = vld [vmem:[%s407 + $0x142] sm:$0xff]
      %v4480 = vld [vmem:[%s407 + $0x152] sm:$0xff]
      %v4481 = vld [vmem:[%s407 + $0x15a] sm:$0xff]
      %v4482 = vld [vmem:[%s407 + $0x16a] sm:$0xff]
      %v4483 = vld [vmem:[%s407 + $0x172] sm:$0xff]
      %4516 = vrot.lane.b32.xlu0 %v4452, 20
      %v4517 = vpop.permute.xlu0 %4516
      %4518 = vrot.lane.b32.xlu0 %v4453, 20
      %v4519 = vpop.permute.xlu0 %4518
      %4520 = vrot.lane.b32.xlu0 %v4454, 20
      %v4521 = vpop.permute.xlu0 %4520
      %4522 = vrot.lane.b32.xlu0 %v4455, 20
      %v4523 = vpop.permute.xlu0 %4522
      %4524 = vrot.lane.b32.xlu0 %v4456, 20
      %v4525 = vpop.permute.xlu0 %4524
      %4526 = vrot.lane.b32.xlu0 %v4457, 20
      %v4527 = vpop.permute.xlu0 %4526
      %4528 = vrot.lane.b32.xlu0 %v4458, 20
      %v4529 = vpop.permute.xlu0 %4528
      %4530 = vrot.lane.b32.xlu0 %v4459, 20
      %v4531 = vpop.permute.xlu0 %4530
      %4532 = vrot.lane.b32.xlu0 %v4460, 20
      %v4533 = vpop.permute.xlu0 %4532
      %4534 = vrot.lane.b32.xlu0 %v4461, 20
      %v4535 = vpop.permute.xlu0 %4534
      %4536 = vrot.lane.b32.xlu0 %v4462, 20
      %v4537 = vpop.permute.xlu0 %4536
      %4538 = vrot.lane.b32.xlu0 %v4463, 20
      %v4539 = vpop.permute.xlu0 %4538
      %4540 = vrot.lane.b32.xlu0 %v4464, 20
      %v4541 = vpop.permute.xlu0 %4540
      %4542 = vrot.lane.b32.xlu0 %v4465, 20
      %v4543 = vpop.permute.xlu0 %4542
      %4544 = vrot.lane.b32.xlu0 %v4466, 20
      %v4545 = vpop.permute.xlu0 %4544
      %4546 = vrot.lane.b32.xlu0 %v4467, 20
      %v4547 = vpop.permute.xlu0 %4546
      %4548 = vrot.lane.b32.xlu0 %v4468, 20
      %v4549 = vpop.permute.xlu0 %4548
      %4550 = vrot.lane.b32.xlu0 %v4469, 20
      %v4551 = vpop.permute.xlu0 %4550
      %4552 = vrot.lane.b32.xlu0 %v4470, 20
      %v4553 = vpop.permute.xlu0 %4552
      %4554 = vrot.lane.b32.xlu0 %v4471, 20
      %v4555 = vpop.permute.xlu0 %4554
      %4556 = vrot.lane.b32.xlu0 %v4472, 20
      %v4557 = vpop.permute.xlu0 %4556
      %4558 = vrot.lane.b32.xlu0 %v4473, 20
      %v4559 = vpop.permute.xlu0 %4558
      %4560 = vrot.lane.b32.xlu0 %v4474, 20
      %v4561 = vpop.permute.xlu0 %4560
      %4562 = vrot.lane.b32.xlu0 %v4475, 20
      %v4563 = vpop.permute.xlu0 %4562
      %4564 = vrot.lane.b32.xlu0 %v4476, 20
      %v4565 = vpop.permute.xlu0 %4564
      %4566 = vrot.lane.b32.xlu0 %v4477, 20
      %v4567 = vpop.permute.xlu0 %4566
      %4568 = vrot.lane.b32.xlu0 %v4478, 20
      %v4569 = vpop.permute.xlu0 %4568
      %4570 = vrot.lane.b32.xlu0 %v4479, 20
      %v4571 = vpop.permute.xlu0 %4570
      %4572 = vrot.lane.b32.xlu0 %v4480, 20
      %v4573 = vpop.permute.xlu0 %4572
      %4574 = vrot.lane.b32.xlu0 %v4481, 20
      %v4575 = vpop.permute.xlu0 %4574
      %4576 = vrot.lane.b32.xlu0 %v4482, 20
      %v4577 = vpop.permute.xlu0 %4576
      %4578 = vrot.lane.b32.xlu0 %v4483, 20
      %v4579 = vpop.permute.xlu0 %4578
      %4612 = vst.msk [vmem:[#allocation3] sm:$0xff] %vm1515, %v4517
      %4613 = vst.msk [vmem:[#allocation3 + $0x8] sm:$0xff] %vm1515, %v4519
      %4614 = vst.msk [vmem:[#allocation3 + $0x10] sm:$0xff] %vm1515, %v4521
      %4615 = vst.msk [vmem:[#allocation3 + $0x18] sm:$0xff] %vm1515, %v4523
      %4616 = vst.msk [vmem:[#allocation3 + $0x20] sm:$0xff] %vm1515, %v4525
      %4617 = vst.msk [vmem:[#allocation3 + $0x28] sm:$0xff] %vm1515, %v4527
      %4618 = vst.msk [vmem:[#allocation3 + $0x30] sm:$0xff] %vm1515, %v4529
      %4619 = vst.msk [vmem:[#allocation3 + $0x38] sm:$0xff] %vm1515, %v4531
      %4620 = vst.msk [vmem:[#allocation3 + $0x40] sm:$0xff] %vm1515, %v4533
      %4621 = vst.msk [vmem:[#allocation3 + $0x48] sm:$0xff] %vm1515, %v4535
      %4622 = vst.msk [vmem:[#allocation3 + $0x50] sm:$0xff] %vm1515, %v4537
      %4623 = vst.msk [vmem:[#allocation3 + $0x58] sm:$0xff] %vm1515, %v4539
      %4624 = vst.msk [vmem:[#allocation3 + $0x60] sm:$0xff] %vm1515, %v4541
      %4625 = vst.msk [vmem:[#allocation3 + $0x68] sm:$0xff] %vm1515, %v4543
      %4626 = vst.msk [vmem:[#allocation3 + $0x70] sm:$0xff] %vm1515, %v4545
      %4627 = vst.msk [vmem:[#allocation3 + $0x78] sm:$0xff] %vm1515, %v4547
      %4628 = vst.msk [vmem:[#allocation3 + $0x80] sm:$0xff] %vm1515, %v4549
      %4629 = vst.msk [vmem:[#allocation3 + $0x88] sm:$0xff] %vm1515, %v4551
      %4630 = vst.msk [vmem:[#allocation3 + $0x90] sm:$0xff] %vm1515, %v4553
      %4631 = vst.msk [vmem:[#allocation3 + $0x98] sm:$0xff] %vm1515, %v4555
      %4632 = vst.msk [vmem:[#allocation3 + $0xa0] sm:$0xff] %vm1515, %v4557
      %4633 = vst.msk [vmem:[#allocation3 + $0xa8] sm:$0xff] %vm1515, %v4559
      %4634 = vst.msk [vmem:[#allocation3 + $0xb0] sm:$0xff] %vm1515, %v4561
      %4635 = vst.msk [vmem:[#allocation3 + $0xb8] sm:$0xff] %vm1515, %v4563
      %4636 = vst.msk [vmem:[#allocation3 + $0xc0] sm:$0xff] %vm1515, %v4565
      %4637 = vst.msk [vmem:[#allocation3 + $0xc8] sm:$0xff] %vm1515, %v4567
      %4638 = vst.msk [vmem:[#allocation3 + $0xd0] sm:$0xff] %vm1515, %v4569
      %4639 = vst.msk [vmem:[#allocation3 + $0xd8] sm:$0xff] %vm1515, %v4571
      %4640 = vst.msk [vmem:[#allocation3 + $0xe0] sm:$0xff] %vm1515, %v4573
      %4641 = vst.msk [vmem:[#allocation3 + $0xe8] sm:$0xff] %vm1515, %v4575
      %4642 = vst.msk [vmem:[#allocation3 + $0xf0] sm:$0xff] %vm1515, %v4577
      %4643 = vst.msk [vmem:[#allocation3 + $0xf8] sm:$0xff] %vm1515, %v4579
      %v4644 = vld [vmem:[%s1548] sm:$0xff]
      %v4645 = vld [vmem:[%s1548 + $0x8] sm:$0xff]
      %v4646 = vld [vmem:[%s1548 + $0x18] sm:$0xff]
      %v4647 = vld [vmem:[%s1548 + $0x20] sm:$0xff]
      %v4648 = vld [vmem:[%s1548 + $0x30] sm:$0xff]
      %v4649 = vld [vmem:[%s1548 + $0x38] sm:$0xff]
      %v4650 = vld [vmem:[%s1548 + $0x48] sm:$0xff]
      %v4651 = vld [vmem:[%s1548 + $0x50] sm:$0xff]
      %v4652 = vld [vmem:[%s1548 + $0x60] sm:$0xff]
      %v4653 = vld [vmem:[%s1548 + $0x68] sm:$0xff]
      %v4654 = vld [vmem:[%s1548 + $0x78] sm:$0xff]
      %v4655 = vld [vmem:[%s1548 + $0x80] sm:$0xff]
      %v4656 = vld [vmem:[%s1548 + $0x90] sm:$0xff]
      %v4657 = vld [vmem:[%s1548 + $0x98] sm:$0xff]
      %v4658 = vld [vmem:[%s1548 + $0xa8] sm:$0xff]
      %v4659 = vld [vmem:[%s1548 + $0xb0] sm:$0xff]
      %v4660 = vld [vmem:[%s1548 + $0xc0] sm:$0xff]
      %v4661 = vld [vmem:[%s1548 + $0xc8] sm:$0xff]
      %v4662 = vld [vmem:[%s1548 + $0xd8] sm:$0xff]
      %v4663 = vld [vmem:[%s1548 + $0xe0] sm:$0xff]
      %v4664 = vld [vmem:[%s1548 + $0xf0] sm:$0xff]
      %v4665 = vld [vmem:[%s1548 + $0xf8] sm:$0xff]
      %v4666 = vld [vmem:[%s1548 + $0x108] sm:$0xff]
      %v4667 = vld [vmem:[%s1548 + $0x110] sm:$0xff]
      %v4668 = vld [vmem:[%s1548 + $0x120] sm:$0xff]
      %v4669 = vld [vmem:[%s1548 + $0x128] sm:$0xff]
      %v4670 = vld [vmem:[%s1548 + $0x138] sm:$0xff]
      %v4671 = vld [vmem:[%s1548 + $0x140] sm:$0xff]
      %v4672 = vld [vmem:[%s1548 + $0x150] sm:$0xff]
      %v4673 = vld [vmem:[%s1548 + $0x158] sm:$0xff]
      %v4674 = vld [vmem:[%s1548 + $0x168] sm:$0xff]
      %v4675 = vld [vmem:[%s1548 + $0x170] sm:$0xff]
      %4708 = vrot.lane.b32.xlu0 %v4644, 24
      %v4709 = vpop.permute.xlu0 %4708
      %4710 = vrot.lane.b32.xlu0 %v4645, 24
      %v4711 = vpop.permute.xlu0 %4710
      %4712 = vrot.lane.b32.xlu0 %v4646, 24
      %v4713 = vpop.permute.xlu0 %4712
      %4714 = vrot.lane.b32.xlu0 %v4647, 24
      %v4715 = vpop.permute.xlu0 %4714
      %4716 = vrot.lane.b32.xlu0 %v4648, 24
      %v4717 = vpop.permute.xlu0 %4716
      %4718 = vrot.lane.b32.xlu0 %v4649, 24
      %v4719 = vpop.permute.xlu0 %4718
      %4720 = vrot.lane.b32.xlu0 %v4650, 24
      %v4721 = vpop.permute.xlu0 %4720
      %4722 = vrot.lane.b32.xlu0 %v4651, 24
      %v4723 = vpop.permute.xlu0 %4722
      %4724 = vrot.lane.b32.xlu0 %v4652, 24
      %v4725 = vpop.permute.xlu0 %4724
      %4726 = vrot.lane.b32.xlu0 %v4653, 24
      %v4727 = vpop.permute.xlu0 %4726
      %4728 = vrot.lane.b32.xlu0 %v4654, 24
      %v4729 = vpop.permute.xlu0 %4728
      %4730 = vrot.lane.b32.xlu0 %v4655, 24
      %v4731 = vpop.permute.xlu0 %4730
      %4732 = vrot.lane.b32.xlu0 %v4656, 24
      %v4733 = vpop.permute.xlu0 %4732
      %4734 = vrot.lane.b32.xlu0 %v4657, 24
      %v4735 = vpop.permute.xlu0 %4734
      %4736 = vrot.lane.b32.xlu0 %v4658, 24
      %v4737 = vpop.permute.xlu0 %4736
      %4738 = vrot.lane.b32.xlu0 %v4659, 24
      %v4739 = vpop.permute.xlu0 %4738
      %4740 = vrot.lane.b32.xlu0 %v4660, 24
      %v4741 = vpop.permute.xlu0 %4740
      %4742 = vrot.lane.b32.xlu0 %v4661, 24
      %v4743 = vpop.permute.xlu0 %4742
      %4744 = vrot.lane.b32.xlu0 %v4662, 24
      %v4745 = vpop.permute.xlu0 %4744
      %4746 = vrot.lane.b32.xlu0 %v4663, 24
      %v4747 = vpop.permute.xlu0 %4746
      %4748 = vrot.lane.b32.xlu0 %v4664, 24
      %v4749 = vpop.permute.xlu0 %4748
      %4750 = vrot.lane.b32.xlu0 %v4665, 24
      %v4751 = vpop.permute.xlu0 %4750
      %4752 = vrot.lane.b32.xlu0 %v4666, 24
      %v4753 = vpop.permute.xlu0 %4752
      %4754 = vrot.lane.b32.xlu0 %v4667, 24
      %v4755 = vpop.permute.xlu0 %4754
      %4756 = vrot.lane.b32.xlu0 %v4668, 24
      %v4757 = vpop.permute.xlu0 %4756
      %4758 = vrot.lane.b32.xlu0 %v4669, 24
      %v4759 = vpop.permute.xlu0 %4758
      %4760 = vrot.lane.b32.xlu0 %v4670, 24
      %v4761 = vpop.permute.xlu0 %4760
      %4762 = vrot.lane.b32.xlu0 %v4671, 24
      %v4763 = vpop.permute.xlu0 %4762
      %4764 = vrot.lane.b32.xlu0 %v4672, 24
      %v4765 = vpop.permute.xlu0 %4764
      %4766 = vrot.lane.b32.xlu0 %v4673, 24
      %v4767 = vpop.permute.xlu0 %4766
      %4768 = vrot.lane.b32.xlu0 %v4674, 24
      %v4769 = vpop.permute.xlu0 %4768
      %4770 = vrot.lane.b32.xlu0 %v4675, 24
      %v4771 = vpop.permute.xlu0 %4770
      %4804 = vst.msk [vmem:[#allocation3] sm:$0xff] %vm1709, %v4709
      %4805 = vst.msk [vmem:[#allocation3 + $0x8] sm:$0xff] %vm1709, %v4711
      %4806 = vst.msk [vmem:[#allocation3 + $0x10] sm:$0xff] %vm1709, %v4713
      %4807 = vst.msk [vmem:[#allocation3 + $0x18] sm:$0xff] %vm1709, %v4715
      %4808 = vst.msk [vmem:[#allocation3 + $0x20] sm:$0xff] %vm1709, %v4717
      %4809 = vst.msk [vmem:[#allocation3 + $0x28] sm:$0xff] %vm1709, %v4719
      %4810 = vst.msk [vmem:[#allocation3 + $0x30] sm:$0xff] %vm1709, %v4721
      %4811 = vst.msk [vmem:[#allocation3 + $0x38] sm:$0xff] %vm1709, %v4723
      %4812 = vst.msk [vmem:[#allocation3 + $0x40] sm:$0xff] %vm1709, %v4725
      %4813 = vst.msk [vmem:[#allocation3 + $0x48] sm:$0xff] %vm1709, %v4727
      %4814 = vst.msk [vmem:[#allocation3 + $0x50] sm:$0xff] %vm1709, %v4729
      %4815 = vst.msk [vmem:[#allocation3 + $0x58] sm:$0xff] %vm1709, %v4731
      %4816 = vst.msk [vmem:[#allocation3 + $0x60] sm:$0xff] %vm1709, %v4733
      %4817 = vst.msk [vmem:[#allocation3 + $0x68] sm:$0xff] %vm1709, %v4735
      %4818 = vst.msk [vmem:[#allocation3 + $0x70] sm:$0xff] %vm1709, %v4737
      %4819 = vst.msk [vmem:[#allocation3 + $0x78] sm:$0xff] %vm1709, %v4739
      %4820 = vst.msk [vmem:[#allocation3 + $0x80] sm:$0xff] %vm1709, %v4741
      %4821 = vst.msk [vmem:[#allocation3 + $0x88] sm:$0xff] %vm1709, %v4743
      %4822 = vst.msk [vmem:[#allocation3 + $0x90] sm:$0xff] %vm1709, %v4745
      %4823 = vst.msk [vmem:[#allocation3 + $0x98] sm:$0xff] %vm1709, %v4747
      %4824 = vst.msk [vmem:[#allocation3 + $0xa0] sm:$0xff] %vm1709, %v4749
      %4825 = vst.msk [vmem:[#allocation3 + $0xa8] sm:$0xff] %vm1709, %v4751
      %4826 = vst.msk [vmem:[#allocation3 + $0xb0] sm:$0xff] %vm1709, %v4753
      %4827 = vst.msk [vmem:[#allocation3 + $0xb8] sm:$0xff] %vm1709, %v4755
      %4828 = vst.msk [vmem:[#allocation3 + $0xc0] sm:$0xff] %vm1709, %v4757
      %4829 = vst.msk [vmem:[#allocation3 + $0xc8] sm:$0xff] %vm1709, %v4759
      %4830 = vst.msk [vmem:[#allocation3 + $0xd0] sm:$0xff] %vm1709, %v4761
      %4831 = vst.msk [vmem:[#allocation3 + $0xd8] sm:$0xff] %vm1709, %v4763
      %4832 = vst.msk [vmem:[#allocation3 + $0xe0] sm:$0xff] %vm1709, %v4765
      %4833 = vst.msk [vmem:[#allocation3 + $0xe8] sm:$0xff] %vm1709, %v4767
      %4834 = vst.msk [vmem:[#allocation3 + $0xf0] sm:$0xff] %vm1709, %v4769
      %4835 = vst.msk [vmem:[#allocation3 + $0xf8] sm:$0xff] %vm1709, %v4771
      %v4836 = vld [vmem:[%s1548 + $0x1] sm:$0xff]
      %v4837 = vld [vmem:[%s1548 + $0x9] sm:$0xff]
      %v4838 = vld [vmem:[%s1548 + $0x19] sm:$0xff]
      %v4839 = vld [vmem:[%s1548 + $0x21] sm:$0xff]
      %v4840 = vld [vmem:[%s1548 + $0x31] sm:$0xff]
      %v4841 = vld [vmem:[%s1548 + $0x39] sm:$0xff]
      %v4842 = vld [vmem:[%s1548 + $0x49] sm:$0xff]
      %v4843 = vld [vmem:[%s1548 + $0x51] sm:$0xff]
      %v4844 = vld [vmem:[%s1548 + $0x61] sm:$0xff]
      %v4845 = vld [vmem:[%s1548 + $0x69] sm:$0xff]
      %v4846 = vld [vmem:[%s1548 + $0x79] sm:$0xff]
      %v4847 = vld [vmem:[%s1548 + $0x81] sm:$0xff]
      %v4848 = vld [vmem:[%s1548 + $0x91] sm:$0xff]
      %v4849 = vld [vmem:[%s1548 + $0x99] sm:$0xff]
      %v4850 = vld [vmem:[%s1548 + $0xa9] sm:$0xff]
      %v4851 = vld [vmem:[%s1548 + $0xb1] sm:$0xff]
      %v4852 = vld [vmem:[%s1548 + $0xc1] sm:$0xff]
      %v4853 = vld [vmem:[%s1548 + $0xc9] sm:$0xff]
      %v4854 = vld [vmem:[%s1548 + $0xd9] sm:$0xff]
      %v4855 = vld [vmem:[%s1548 + $0xe1] sm:$0xff]
      %v4856 = vld [vmem:[%s1548 + $0xf1] sm:$0xff]
      %v4857 = vld [vmem:[%s1548 + $0xf9] sm:$0xff]
      %v4858 = vld [vmem:[%s1548 + $0x109] sm:$0xff]
      %v4859 = vld [vmem:[%s1548 + $0x111] sm:$0xff]
      %v4860 = vld [vmem:[%s1548 + $0x121] sm:$0xff]
      %v4861 = vld [vmem:[%s1548 + $0x129] sm:$0xff]
      %v4862 = vld [vmem:[%s1548 + $0x139] sm:$0xff]
      %v4863 = vld [vmem:[%s1548 + $0x141] sm:$0xff]
      %v4864 = vld [vmem:[%s1548 + $0x151] sm:$0xff]
      %v4865 = vld [vmem:[%s1548 + $0x159] sm:$0xff]
      %v4866 = vld [vmem:[%s1548 + $0x169] sm:$0xff]
      %v4867 = vld [vmem:[%s1548 + $0x171] sm:$0xff]
      %4900 = vrot.lane.b32.xlu0 %v4836, 28
      %v4901 = vpop.permute.xlu0 %4900
      %4902 = vrot.lane.b32.xlu0 %v4837, 28
      %v4903 = vpop.permute.xlu0 %4902
      %4904 = vrot.lane.b32.xlu0 %v4838, 28
      %v4905 = vpop.permute.xlu0 %4904
      %4906 = vrot.lane.b32.xlu0 %v4839, 28
      %v4907 = vpop.permute.xlu0 %4906
      %4908 = vrot.lane.b32.xlu0 %v4840, 28
      %v4909 = vpop.permute.xlu0 %4908
      %4910 = vrot.lane.b32.xlu0 %v4841, 28
      %v4911 = vpop.permute.xlu0 %4910
      %4912 = vrot.lane.b32.xlu0 %v4842, 28
      %v4913 = vpop.permute.xlu0 %4912
      %4914 = vrot.lane.b32.xlu0 %v4843, 28
      %v4915 = vpop.permute.xlu0 %4914
      %4916 = vrot.lane.b32.xlu0 %v4844, 28
      %v4917 = vpop.permute.xlu0 %4916
      %4918 = vrot.lane.b32.xlu0 %v4845, 28
      %v4919 = vpop.permute.xlu0 %4918
      %4920 = vrot.lane.b32.xlu0 %v4846, 28
      %v4921 = vpop.permute.xlu0 %4920
      %4922 = vrot.lane.b32.xlu0 %v4847, 28
      %v4923 = vpop.permute.xlu0 %4922
      %4924 = vrot.lane.b32.xlu0 %v4848, 28
      %v4925 = vpop.permute.xlu0 %4924
      %4926 = vrot.lane.b32.xlu0 %v4849, 28
      %v4927 = vpop.permute.xlu0 %4926
      %4928 = vrot.lane.b32.xlu0 %v4850, 28
      %v4929 = vpop.permute.xlu0 %4928
      %4930 = vrot.lane.b32.xlu0 %v4851, 28
      %v4931 = vpop.permute.xlu0 %4930
      %4932 = vrot.lane.b32.xlu0 %v4852, 28
      %v4933 = vpop.permute.xlu0 %4932
      %4934 = vrot.lane.b32.xlu0 %v4853, 28
      %v4935 = vpop.permute.xlu0 %4934
      %4936 = vrot.lane.b32.xlu0 %v4854, 28
      %v4937 = vpop.permute.xlu0 %4936
      %4938 = vrot.lane.b32.xlu0 %v4855, 28
      %v4939 = vpop.permute.xlu0 %4938
      %4940 = vrot.lane.b32.xlu0 %v4856, 28
      %v4941 = vpop.permute.xlu0 %4940
      %4942 = vrot.lane.b32.xlu0 %v4857, 28
      %v4943 = vpop.permute.xlu0 %4942
      %4944 = vrot.lane.b32.xlu0 %v4858, 28
      %v4945 = vpop.permute.xlu0 %4944
      %4946 = vrot.lane.b32.xlu0 %v4859, 28
      %v4947 = vpop.permute.xlu0 %4946
      %4948 = vrot.lane.b32.xlu0 %v4860, 28
      %v4949 = vpop.permute.xlu0 %4948
      %4950 = vrot.lane.b32.xlu0 %v4861, 28
      %v4951 = vpop.permute.xlu0 %4950
      %4952 = vrot.lane.b32.xlu0 %v4862, 28
      %v4953 = vpop.permute.xlu0 %4952
      %4954 = vrot.lane.b32.xlu0 %v4863, 28
      %v4955 = vpop.permute.xlu0 %4954
      %4956 = vrot.lane.b32.xlu0 %v4864, 28
      %v4957 = vpop.permute.xlu0 %4956
      %4958 = vrot.lane.b32.xlu0 %v4865, 28
      %v4959 = vpop.permute.xlu0 %4958
      %4960 = vrot.lane.b32.xlu0 %v4866, 28
      %v4961 = vpop.permute.xlu0 %4960
      %4962 = vrot.lane.b32.xlu0 %v4867, 28
      %v4963 = vpop.permute.xlu0 %4962
      %4996 = vst.msk [vmem:[#allocation3] sm:$0xff] %vm1902, %v4901
      %4997 = vst.msk [vmem:[#allocation3 + $0x8] sm:$0xff] %vm1902, %v4903
      %4998 = vst.msk [vmem:[#allocation3 + $0x10] sm:$0xff] %vm1902, %v4905
      %4999 = vst.msk [vmem:[#allocation3 + $0x18] sm:$0xff] %vm1902, %v4907
      %5000 = vst.msk [vmem:[#allocation3 + $0x20] sm:$0xff] %vm1902, %v4909
      %5001 = vst.msk [vmem:[#allocation3 + $0x28] sm:$0xff] %vm1902, %v4911
      %5002 = vst.msk [vmem:[#allocation3 + $0x30] sm:$0xff] %vm1902, %v4913
      %5003 = vst.msk [vmem:[#allocation3 + $0x38] sm:$0xff] %vm1902, %v4915
      %5004 = vst.msk [vmem:[#allocation3 + $0x40] sm:$0xff] %vm1902, %v4917
      %5005 = vst.msk [vmem:[#allocation3 + $0x48] sm:$0xff] %vm1902, %v4919
      %5006 = vst.msk [vmem:[#allocation3 + $0x50] sm:$0xff] %vm1902, %v4921
      %5007 = vst.msk [vmem:[#allocation3 + $0x58] sm:$0xff] %vm1902, %v4923
      %5008 = vst.msk [vmem:[#allocation3 + $0x60] sm:$0xff] %vm1902, %v4925
      %5009 = vst.msk [vmem:[#allocation3 + $0x68] sm:$0xff] %vm1902, %v4927
      %5010 = vst.msk [vmem:[#allocation3 + $0x70] sm:$0xff] %vm1902, %v4929
      %5011 = vst.msk [vmem:[#allocation3 + $0x78] sm:$0xff] %vm1902, %v4931
      %5012 = vst.msk [vmem:[#allocation3 + $0x80] sm:$0xff] %vm1902, %v4933
      %5013 = vst.msk [vmem:[#allocation3 + $0x88] sm:$0xff] %vm1902, %v4935
      %5014 = vst.msk [vmem:[#allocation3 + $0x90] sm:$0xff] %vm1902, %v4937
      %5015 = vst.msk [vmem:[#allocation3 + $0x98] sm:$0xff] %vm1902, %v4939
      %5016 = vst.msk [vmem:[#allocation3 + $0xa0] sm:$0xff] %vm1902, %v4941
      %5017 = vst.msk [vmem:[#allocation3 + $0xa8] sm:$0xff] %vm1902, %v4943
      %5018 = vst.msk [vmem:[#allocation3 + $0xb0] sm:$0xff] %vm1902, %v4945
      %5019 = vst.msk [vmem:[#allocation3 + $0xb8] sm:$0xff] %vm1902, %v4947
      %5020 = vst.msk [vmem:[#allocation3 + $0xc0] sm:$0xff] %vm1902, %v4949
      %5021 = vst.msk [vmem:[#allocation3 + $0xc8] sm:$0xff] %vm1902, %v4951
      %5022 = vst.msk [vmem:[#allocation3 + $0xd0] sm:$0xff] %vm1902, %v4953
      %5023 = vst.msk [vmem:[#allocation3 + $0xd8] sm:$0xff] %vm1902, %v4955
      %5024 = vst.msk [vmem:[#allocation3 + $0xe0] sm:$0xff] %vm1902, %v4957
      %5025 = vst.msk [vmem:[#allocation3 + $0xe8] sm:$0xff] %vm1902, %v4959
      %5026 = vst.msk [vmem:[#allocation3 + $0xf0] sm:$0xff] %vm1902, %v4961
      %5027 = vst.msk [vmem:[#allocation3 + $0xf8] sm:$0xff] %vm1902, %v4963
      %v5028 = vld [vmem:[%s1548 + $0x2] sm:$0xff]
      %v5029 = vld [vmem:[%s1548 + $0xa] sm:$0xff]
      %v5030 = vld [vmem:[%s1548 + $0x1a] sm:$0xff]
      %v5031 = vld [vmem:[%s1548 + $0x22] sm:$0xff]
      %v5032 = vld [vmem:[%s1548 + $0x32] sm:$0xff]
      %v5033 = vld [vmem:[%s1548 + $0x3a] sm:$0xff]
      %v5034 = vld [vmem:[%s1548 + $0x4a] sm:$0xff]
      %v5035 = vld [vmem:[%s1548 + $0x52] sm:$0xff]
      %v5036 = vld [vmem:[%s1548 + $0x62] sm:$0xff]
      %v5037 = vld [vmem:[%s1548 + $0x6a] sm:$0xff]
      %v5038 = vld [vmem:[%s1548 + $0x7a] sm:$0xff]
      %v5039 = vld [vmem:[%s1548 + $0x82] sm:$0xff]
      %v5040 = vld [vmem:[%s1548 + $0x92] sm:$0xff]
      %v5041 = vld [vmem:[%s1548 + $0x9a] sm:$0xff]
      %v5042 = vld [vmem:[%s1548 + $0xaa] sm:$0xff]
      %v5043 = vld [vmem:[%s1548 + $0xb2] sm:$0xff]
      %v5044 = vld [vmem:[%s1548 + $0xc2] sm:$0xff]
      %v5045 = vld [vmem:[%s1548 + $0xca] sm:$0xff]
      %v5046 = vld [vmem:[%s1548 + $0xda] sm:$0xff]
      %v5047 = vld [vmem:[%s1548 + $0xe2] sm:$0xff]
      %v5048 = vld [vmem:[%s1548 + $0xf2] sm:$0xff]
      %v5049 = vld [vmem:[%s1548 + $0xfa] sm:$0xff]
      %v5050 = vld [vmem:[%s1548 + $0x10a] sm:$0xff]
      %v5051 = vld [vmem:[%s1548 + $0x112] sm:$0xff]
      %v5052 = vld [vmem:[%s1548 + $0x122] sm:$0xff]
      %v5053 = vld [vmem:[%s1548 + $0x12a] sm:$0xff]
      %v5054 = vld [vmem:[%s1548 + $0x13a] sm:$0xff]
      %v5055 = vld [vmem:[%s1548 + $0x142] sm:$0xff]
      %v5056 = vld [vmem:[%s1548 + $0x152] sm:$0xff]
      %v5057 = vld [vmem:[%s1548 + $0x15a] sm:$0xff]
      %v5058 = vld [vmem:[%s1548 + $0x16a] sm:$0xff]
      %v5059 = vld [vmem:[%s1548 + $0x172] sm:$0xff]
      %5092 = vrot.lane.b32.xlu0 %v5028, 32
      %v5093 = vpop.permute.xlu0 %5092
      %5094 = vrot.lane.b32.xlu0 %v5029, 32
      %v5095 = vpop.permute.xlu0 %5094
      %5096 = vrot.lane.b32.xlu0 %v5030, 32
      %v5097 = vpop.permute.xlu0 %5096
      %5098 = vrot.lane.b32.xlu0 %v5031, 32
      %v5099 = vpop.permute.xlu0 %5098
      %5100 = vrot.lane.b32.xlu0 %v5032, 32
      %v5101 = vpop.permute.xlu0 %5100
      %5102 = vrot.lane.b32.xlu0 %v5033, 32
      %v5103 = vpop.permute.xlu0 %5102
      %5104 = vrot.lane.b32.xlu0 %v5034, 32
      %v5105 = vpop.permute.xlu0 %5104
      %5106 = vrot.lane.b32.xlu0 %v5035, 32
      %v5107 = vpop.permute.xlu0 %5106
      %5108 = vrot.lane.b32.xlu0 %v5036, 32
      %v5109 = vpop.permute.xlu0 %5108
      %5110 = vrot.lane.b32.xlu0 %v5037, 32
      %v5111 = vpop.permute.xlu0 %5110
      %5112 = vrot.lane.b32.xlu0 %v5038, 32
      %v5113 = vpop.permute.xlu0 %5112
      %5114 = vrot.lane.b32.xlu0 %v5039, 32
      %v5115 = vpop.permute.xlu0 %5114
      %5116 = vrot.lane.b32.xlu0 %v5040, 32
      %v5117 = vpop.permute.xlu0 %5116
      %5118 = vrot.lane.b32.xlu0 %v5041, 32
      %v5119 = vpop.permute.xlu0 %5118
      %5120 = vrot.lane.b32.xlu0 %v5042, 32
      %v5121 = vpop.permute.xlu0 %5120
      %5122 = vrot.lane.b32.xlu0 %v5043, 32
      %v5123 = vpop.permute.xlu0 %5122
      %5124 = vrot.lane.b32.xlu0 %v5044, 32
      %v5125 = vpop.permute.xlu0 %5124
      %5126 = vrot.lane.b32.xlu0 %v5045, 32
      %v5127 = vpop.permute.xlu0 %5126
      %5128 = vrot.lane.b32.xlu0 %v5046, 32
      %v5129 = vpop.permute.xlu0 %5128
      %5130 = vrot.lane.b32.xlu0 %v5047, 32
      %v5131 = vpop.permute.xlu0 %5130
      %5132 = vrot.lane.b32.xlu0 %v5048, 32
      %v5133 = vpop.permute.xlu0 %5132
      %5134 = vrot.lane.b32.xlu0 %v5049, 32
      %v5135 = vpop.permute.xlu0 %5134
      %5136 = vrot.lane.b32.xlu0 %v5050, 32
      %v5137 = vpop.permute.xlu0 %5136
      %5138 = vrot.lane.b32.xlu0 %v5051, 32
      %v5139 = vpop.permute.xlu0 %5138
      %5140 = vrot.lane.b32.xlu0 %v5052, 32
      %v5141 = vpop.permute.xlu0 %5140
      %5142 = vrot.lane.b32.xlu0 %v5053, 32
      %v5143 = vpop.permute.xlu0 %5142
      %5144 = vrot.lane.b32.xlu0 %v5054, 32
      %v5145 = vpop.permute.xlu0 %5144
      %5146 = vrot.lane.b32.xlu0 %v5055, 32
      %v5147 = vpop.permute.xlu0 %5146
      %5148 = vrot.lane.b32.xlu0 %v5056, 32
      %v5149 = vpop.permute.xlu0 %5148
      %5150 = vrot.lane.b32.xlu0 %v5057, 32
      %v5151 = vpop.permute.xlu0 %5150
      %5152 = vrot.lane.b32.xlu0 %v5058, 32
      %v5153 = vpop.permute.xlu0 %5152
      %5154 = vrot.lane.b32.xlu0 %v5059, 32
      %v5155 = vpop.permute.xlu0 %5154
      %5188 = vst.msk [vmem:[#allocation3] sm:$0xff] %vm2095, %v5093
      %5189 = vst.msk [vmem:[#allocation3 + $0x8] sm:$0xff] %vm2095, %v5095
      %5190 = vst.msk [vmem:[#allocation3 + $0x10] sm:$0xff] %vm2095, %v5097
      %5191 = vst.msk [vmem:[#allocation3 + $0x18] sm:$0xff] %vm2095, %v5099
      %5192 = vst.msk [vmem:[#allocation3 + $0x20] sm:$0xff] %vm2095, %v5101
      %5193 = vst.msk [vmem:[#allocation3 + $0x28] sm:$0xff] %vm2095, %v5103
      %5194 = vst.msk [vmem:[#allocation3 + $0x30] sm:$0xff] %vm2095, %v5105
      %5195 = vst.msk [vmem:[#allocation3 + $0x38] sm:$0xff] %vm2095, %v5107
      %5196 = vst.msk [vmem:[#allocation3 + $0x40] sm:$0xff] %vm2095, %v5109
      %5197 = vst.msk [vmem:[#allocation3 + $0x48] sm:$0xff] %vm2095, %v5111
      %5198 = vst.msk [vmem:[#allocation3 + $0x50] sm:$0xff] %vm2095, %v5113
      %5199 = vst.msk [vmem:[#allocation3 + $0x58] sm:$0xff] %vm2095, %v5115
      %5200 = vst.msk [vmem:[#allocation3 + $0x60] sm:$0xff] %vm2095, %v5117
      %5201 = vst.msk [vmem:[#allocation3 + $0x68] sm:$0xff] %vm2095, %v5119
      %5202 = vst.msk [vmem:[#allocation3 + $0x70] sm:$0xff] %vm2095, %v5121
      %5203 = vst.msk [vmem:[#allocation3 + $0x78] sm:$0xff] %vm2095, %v5123
      %5204 = vst.msk [vmem:[#allocation3 + $0x80] sm:$0xff] %vm2095, %v5125
      %5205 = vst.msk [vmem:[#allocation3 + $0x88] sm:$0xff] %vm2095, %v5127
      %5206 = vst.msk [vmem:[#allocation3 + $0x90] sm:$0xff] %vm2095, %v5129
      %5207 = vst.msk [vmem:[#allocation3 + $0x98] sm:$0xff] %vm2095, %v5131
      %5208 = vst.msk [vmem:[#allocation3 + $0xa0] sm:$0xff] %vm2095, %v5133
      %5209 = vst.msk [vmem:[#allocation3 + $0xa8] sm:$0xff] %vm2095, %v5135
      %5210 = vst.msk [vmem:[#allocation3 + $0xb0] sm:$0xff] %vm2095, %v5137
      %5211 = vst.msk [vmem:[#allocation3 + $0xb8] sm:$0xff] %vm2095, %v5139
      %5212 = vst.msk [vmem:[#allocation3 + $0xc0] sm:$0xff] %vm2095, %v5141
      %5213 = vst.msk [vmem:[#allocation3 + $0xc8] sm:$0xff] %vm2095, %v5143
      %5214 = vst.msk [vmem:[#allocation3 + $0xd0] sm:$0xff] %vm2095, %v5145
      %5215 = vst.msk [vmem:[#allocation3 + $0xd8] sm:$0xff] %vm2095, %v5147
      %5216 = vst.msk [vmem:[#allocation3 + $0xe0] sm:$0xff] %vm2095, %v5149
      %5217 = vst.msk [vmem:[#allocation3 + $0xe8] sm:$0xff] %vm2095, %v5151
      %5218 = vst.msk [vmem:[#allocation3 + $0xf0] sm:$0xff] %vm2095, %v5153
      %5219 = vst.msk [vmem:[#allocation3 + $0xf8] sm:$0xff] %vm2095, %v5155
      %v5220 = vld [vmem:[#allocation3] sm:$0xff]
      %v5221 = vld [vmem:[#allocation3 + $0x8] sm:$0xff]
      %v5222 = vld [vmem:[#allocation3 + $0x10] sm:$0xff]
      %v5223 = vld [vmem:[#allocation3 + $0x18] sm:$0xff]
      %v5224 = vld [vmem:[#allocation3 + $0x20] sm:$0xff]
      %v5225 = vld [vmem:[#allocation3 + $0x28] sm:$0xff]
      %v5226 = vld [vmem:[#allocation3 + $0x30] sm:$0xff]
      %v5227 = vld [vmem:[#allocation3 + $0x38] sm:$0xff]
      %v5228 = vld [vmem:[#allocation3 + $0x40] sm:$0xff]
      %v5229 = vld [vmem:[#allocation3 + $0x48] sm:$0xff]
      %v5230 = vld [vmem:[#allocation3 + $0x50] sm:$0xff]
      %v5231 = vld [vmem:[#allocation3 + $0x58] sm:$0xff]
      %v5232 = vld [vmem:[#allocation3 + $0x60] sm:$0xff]
      %v5233 = vld [vmem:[#allocation3 + $0x68] sm:$0xff]
      %v5234 = vld [vmem:[#allocation3 + $0x70] sm:$0xff]
      %v5235 = vld [vmem:[#allocation3 + $0x78] sm:$0xff]
      %v5236 = vld [vmem:[#allocation3 + $0x80] sm:$0xff]
      %v5237 = vld [vmem:[#allocation3 + $0x88] sm:$0xff]
      %v5238 = vld [vmem:[#allocation3 + $0x90] sm:$0xff]
      %v5239 = vld [vmem:[#allocation3 + $0x98] sm:$0xff]
      %v5240 = vld [vmem:[#allocation3 + $0xa0] sm:$0xff]
      %v5241 = vld [vmem:[#allocation3 + $0xa8] sm:$0xff]
      %v5242 = vld [vmem:[#allocation3 + $0xb0] sm:$0xff]
      %v5243 = vld [vmem:[#allocation3 + $0xb8] sm:$0xff]
      %v5244 = vld [vmem:[#allocation3 + $0xc0] sm:$0xff]
      %v5245 = vld [vmem:[#allocation3 + $0xc8] sm:$0xff]
      %v5246 = vld [vmem:[#allocation3 + $0xd0] sm:$0xff]
      %v5247 = vld [vmem:[#allocation3 + $0xd8] sm:$0xff]
      %v5248 = vld [vmem:[#allocation3 + $0xe0] sm:$0xff]
      %v5249 = vld [vmem:[#allocation3 + $0xe8] sm:$0xff]
      %v5250 = vld [vmem:[#allocation3 + $0xf0] sm:$0xff]
      %v5251 = vld [vmem:[#allocation3 + $0xf8] sm:$0xff]
      %v5252 = vld [vmem:[%s4] sm:$0xff]
      %v5253 = vld [vmem:[%s4 + $0x8] sm:$0xff]
      %v5254 = vld [vmem:[%s4 + $0x10] sm:$0xff]
      %v5255 = vld [vmem:[%s4 + $0x18] sm:$0xff]
      %v5256 = vld [vmem:[%s4 + $0x20] sm:$0xf]
      %v5257 = vld [vmem:[%s5] sm:$0x1]
      %v5259 = vlaneseq
      %v5260 = vshrl.u32 %v5259, 7
      %v5261 = vsub.s32 0, %v5260
      %v5262 = vrot.slane %v5257, %v5261
      %v5265 = vsel %vm2172, %v5220, 0
      %v5268 = vsel %vm2172, %v5221, 0
      %v5271 = vsel %vm2172, %v5222, 0
      %v5274 = vsel %vm2172, %v5223, 0
      %v5277 = vsel %vm2172, %v5224, 0
      %v5280 = vsel %vm2172, %v5225, 0
      %v5283 = vsel %vm2172, %v5226, 0
      %v5286 = vsel %vm2172, %v5227, 0
      %v5289 = vsel %vm2172, %v5228, 0
      %v5292 = vsel %vm2172, %v5229, 0
      %v5295 = vsel %vm2172, %v5230, 0
      %v5298 = vsel %vm2172, %v5231, 0
      %v5301 = vsel %vm2172, %v5232, 0
      %v5304 = vsel %vm2172, %v5233, 0
      %v5307 = vsel %vm2172, %v5234, 0
      %v5310 = vsel %vm2172, %v5235, 0
      %v5313 = vsel %vm2172, %v5236, 0
      %v5316 = vsel %vm2172, %v5237, 0
      %v5319 = vsel %vm2172, %v5238, 0
      %v5322 = vsel %vm2172, %v5239, 0
      %v5325 = vsel %vm2172, %v5240, 0
      %v5328 = vsel %vm2172, %v5241, 0
      %v5331 = vsel %vm2172, %v5242, 0
      %v5334 = vsel %vm2172, %v5243, 0
      %v5337 = vsel %vm2172, %v5244, 0
      %v5340 = vsel %vm2172, %v5245, 0
      %v5343 = vsel %vm2172, %v5246, 0
      %v5346 = vsel %vm2172, %v5247, 0
      %v5349 = vsel %vm2172, %v5248, 0
      %v5352 = vsel %vm2172, %v5249, 0
      %v5355 = vsel %vm2172, %v5250, 0
      %v5358 = vsel %vm2172, %v5251, 0
      %v5361 = vsel %vm2269, %v5256, 0
      %5363 = vmatprep.subr.mxu0 0.0
      %5364 = vmatpush1.msra.mxu0 %v5252
      %5365 = vmatprep.subr.mxu0 0.0
      %5366 = vmatpush1.msra.mxu0 %v5253
      %5367 = vmatprep.subr.mxu0 0.0
      %5368 = vmatpush1.msra.mxu0 %v5254
      %5369 = vmatprep.subr.mxu0 0.0
      %5370 = vmatpush1.msra.mxu0 %v5255
      %5371 = vmatprep.subr.mxu0 0.0
      %5372 = vmatpush1.msra.mxu0 %v5361
      %5373 = vmatprep.subr.mxu0 0.0
      %5374 = vmatpush1.msra.mxu0 0.0
      %5375 = vmatprep.subr.mxu0 0.0
      %5376 = vmatpush1.msra.mxu0 0.0
      %5377 = vmatprep.subr.mxu0 0.0
      %5378 = vmatpush1.msra.mxu0 0.0
      %5379 = vmatprep.subr.mxu0 0.0
      %5380 = vmatpush1.msra.mxu0 0.0
      %5381 = vmatprep.subr.mxu0 0.0
      %5382 = vmatpush1.msra.mxu0 0.0
      %5383 = vmatprep.subr.mxu0 0.0
      %5384 = vmatpush1.msra.mxu0 0.0
      %5385 = vmatprep.subr.mxu0 0.0
      %5386 = vmatpush1.msra.mxu0 0.0
      %5387 = vmatprep.subr.mxu0 0.0
      %5388 = vmatpush1.msra.mxu0 0.0
      %5389 = vmatprep.subr.mxu0 0.0
      %5390 = vmatpush1.msra.mxu0 0.0
      %5391 = vmatprep.subr.mxu0 0.0
      %5392 = vmatpush1.msra.mxu0 0.0
      %5393 = vmatprep.subr.mxu0 0.0
      %5394 = vmatpush1.msra.mxu0 0.0
      %5395 = vmatprep.subr.mxu0 0.0
      %5396 = vmatpush1.msra.mxu0 0.0
      %5397 = vmatprep.subr.mxu0 0.0
      %5398 = vmatpush1.msra.mxu0 0.0
      %5399 = vmatprep.subr.mxu0 0.0
      %5400 = vmatpush1.msra.mxu0 0.0
      %5401 = vmatprep.subr.mxu0 0.0
      %5402 = vmatpush1.msra.mxu0 0.0
      %5403 = vmatprep.subr.mxu0 0.0
      %5404 = vmatpush1.msra.mxu0 0.0
      %5405 = vmatprep.subr.mxu0 0.0
      %5406 = vmatpush1.msra.mxu0 0.0
      %5407 = vmatprep.subr.mxu0 0.0
      %5408 = vmatpush1.msra.mxu0 0.0
      %5409 = vmatprep.subr.mxu0 0.0
      %5410 = vmatpush1.msra.mxu0 0.0
      %5411 = vmatprep.subr.mxu0 0.0
      %5412 = vmatpush1.msra.mxu0 0.0
      %5413 = vmatprep.subr.mxu0 0.0
      %5414 = vmatpush1.msra.mxu0 0.0
      %5415 = vmatprep.subr.mxu0 0.0
      %5416 = vmatpush1.msra.mxu0 0.0
      %5417 = vmatprep.subr.mxu0 0.0
      %5418 = vmatpush1.msra.mxu0 0.0
      %5419 = vmatprep.subr.mxu0 0.0
      %5420 = vmatpush1.msra.mxu0 0.0
      %5421 = vmatprep.subr.mxu0 0.0
      %5422 = vmatpush1.msra.mxu0 0.0
      %5423 = vmatprep.subr.mxu0 0.0
      %5424 = vmatpush1.msra.mxu0 0.0
      %5425 = vmatprep.subr.mxu0 0.0
      %5426 = vmatpush1.msra.mxu0 0.0
      %5427 = vmatprep.mubr.f32.mxu0 0.0
      %5428 = vmatmul.mubr.f32.gmra.mrb[0].mxu0 %v5265
      %v5429 = vpop.f32.mrb[0].mxu0
      %v5430 = vadd.f32 %v5262, %v5429
      %v5431 = vpop.f32.mrb[0].mxu0
      %5432 = vmatprep.mubr.f32.mxu0 0.0
      %5433 = vmatmul.mubr.f32.gmra.mrb[0].mxu0 %v5268
      %v5434 = vpop.f32.mrb[0].mxu0
      %v5435 = vadd.f32 %v5262, %v5434
      %v5436 = vpop.f32.mrb[0].mxu0
      %5437 = vmatprep.mubr.f32.mxu0 0.0
      %5438 = vmatmul.mubr.f32.gmra.mrb[0].mxu0 %v5271
      %v5439 = vpop.f32.mrb[0].mxu0
      %v5440 = vadd.f32 %v5262, %v5439
      %v5441 = vpop.f32.mrb[0].mxu0
      %5442 = vmatprep.mubr.f32.mxu0 0.0
      %5443 = vmatmul.mubr.f32.gmra.mrb[0].mxu0 %v5274
      %v5444 = vpop.f32.mrb[0].mxu0
      %v5445 = vadd.f32 %v5262, %v5444
      %v5446 = vpop.f32.mrb[0].mxu0
      %5447 = vmatprep.mubr.f32.mxu0 0.0
      %5448 = vmatmul.mubr.f32.gmra.mrb[0].mxu0 %v5277
      %v5449 = vpop.f32.mrb[0].mxu0
      %v5450 = vadd.f32 %v5262, %v5449
      %v5451 = vpop.f32.mrb[0].mxu0
      %5452 = vmatprep.mubr.f32.mxu0 0.0
      %5453 = vmatmul.mubr.f32.gmra.mrb[0].mxu0 %v5280
      %v5454 = vpop.f32.mrb[0].mxu0
      %v5455 = vadd.f32 %v5262, %v5454
      %v5456 = vpop.f32.mrb[0].mxu0
      %5457 = vmatprep.mubr.f32.mxu0 0.0
      %5458 = vmatmul.mubr.f32.gmra.mrb[0].mxu0 %v5283
      %v5459 = vpop.f32.mrb[0].mxu0
      %v5460 = vadd.f32 %v5262, %v5459
      %v5461 = vpop.f32.mrb[0].mxu0
      %5462 = vmatprep.mubr.f32.mxu0 0.0
      %5463 = vmatmul.mubr.f32.gmra.mrb[0].mxu0 %v5286
      %v5464 = vpop.f32.mrb[0].mxu0
      %v5465 = vadd.f32 %v5262, %v5464
      %v5466 = vpop.f32.mrb[0].mxu0
      %5467 = vmatprep.mubr.f32.mxu0 0.0
      %5468 = vmatmul.mubr.f32.gmra.mrb[0].mxu0 %v5289
      %v5469 = vpop.f32.mrb[0].mxu0
      %v5470 = vadd.f32 %v5262, %v5469
      %v5471 = vpop.f32.mrb[0].mxu0
      %5472 = vmatprep.mubr.f32.mxu0 0.0
      %5473 = vmatmul.mubr.f32.gmra.mrb[0].mxu0 %v5292
      %v5474 = vpop.f32.mrb[0].mxu0
      %v5475 = vadd.f32 %v5262, %v5474
      %v5476 = vpop.f32.mrb[0].mxu0
      %5477 = vmatprep.mubr.f32.mxu0 0.0
      %5478 = vmatmul.mubr.f32.gmra.mrb[0].mxu0 %v5295
      %v5479 = vpop.f32.mrb[0].mxu0
      %v5480 = vadd.f32 %v5262, %v5479
      %v5481 = vpop.f32.mrb[0].mxu0
      %5482 = vmatprep.mubr.f32.mxu0 0.0
      %5483 = vmatmul.mubr.f32.gmra.mrb[0].mxu0 %v5298
      %v5484 = vpop.f32.mrb[0].mxu0
      %v5485 = vadd.f32 %v5262, %v5484
      %v5486 = vpop.f32.mrb[0].mxu0
      %5487 = vmatprep.mubr.f32.mxu0 0.0
      %5488 = vmatmul.mubr.f32.gmra.mrb[0].mxu0 %v5301
      %v5489 = vpop.f32.mrb[0].mxu0
      %v5490 = vadd.f32 %v5262, %v5489
      %v5491 = vpop.f32.mrb[0].mxu0
      %5492 = vmatprep.mubr.f32.mxu0 0.0
      %5493 = vmatmul.mubr.f32.gmra.mrb[0].mxu0 %v5304
      %v5494 = vpop.f32.mrb[0].mxu0
      %v5495 = vadd.f32 %v5262, %v5494
      %v5496 = vpop.f32.mrb[0].mxu0
      %5497 = vmatprep.mubr.f32.mxu0 0.0
      %5498 = vmatmul.mubr.f32.gmra.mrb[0].mxu0 %v5307
      %v5499 = vpop.f32.mrb[0].mxu0
      %v5500 = vadd.f32 %v5262, %v5499
      %v5501 = vpop.f32.mrb[0].mxu0
      %5502 = vmatprep.mubr.f32.mxu0 0.0
      %5503 = vmatmul.mubr.f32.gmra.mrb[0].mxu0 %v5310
      %v5504 = vpop.f32.mrb[0].mxu0
      %v5505 = vadd.f32 %v5262, %v5504
      %v5506 = vpop.f32.mrb[0].mxu0
      %5507 = vmatprep.mubr.f32.mxu0 0.0
      %5508 = vmatmul.mubr.f32.gmra.mrb[0].mxu0 %v5313
      %v5509 = vpop.f32.mrb[0].mxu0
      %v5510 = vadd.f32 %v5262, %v5509
      %v5511 = vpop.f32.mrb[0].mxu0
      %5512 = vmatprep.mubr.f32.mxu0 0.0
      %5513 = vmatmul.mubr.f32.gmra.mrb[0].mxu0 %v5316
      %v5514 = vpop.f32.mrb[0].mxu0
      %v5515 = vadd.f32 %v5262, %v5514
      %v5516 = vpop.f32.mrb[0].mxu0
      %5517 = vmatprep.mubr.f32.mxu0 0.0
      %5518 = vmatmul.mubr.f32.gmra.mrb[0].mxu0 %v5319
      %v5519 = vpop.f32.mrb[0].mxu0
      %v5520 = vadd.f32 %v5262, %v5519
      %v5521 = vpop.f32.mrb[0].mxu0
      %5522 = vmatprep.mubr.f32.mxu0 0.0
      %5523 = vmatmul.mubr.f32.gmra.mrb[0].mxu0 %v5322
      %v5524 = vpop.f32.mrb[0].mxu0
      %v5525 = vadd.f32 %v5262, %v5524
      %v5526 = vpop.f32.mrb[0].mxu0
      %5527 = vmatprep.mubr.f32.mxu0 0.0
      %5528 = vmatmul.mubr.f32.gmra.mrb[0].mxu0 %v5325
      %v5529 = vpop.f32.mrb[0].mxu0
      %v5530 = vadd.f32 %v5262, %v5529
      %v5531 = vpop.f32.mrb[0].mxu0
      %5532 = vmatprep.mubr.f32.mxu0 0.0
      %5533 = vmatmul.mubr.f32.gmra.mrb[0].mxu0 %v5328
      %v5534 = vpop.f32.mrb[0].mxu0
      %v5535 = vadd.f32 %v5262, %v5534
      %v5536 = vpop.f32.mrb[0].mxu0
      %5537 = vmatprep.mubr.f32.mxu0 0.0
      %5538 = vmatmul.mubr.f32.gmra.mrb[0].mxu0 %v5331
      %v5539 = vpop.f32.mrb[0].mxu0
      %v5540 = vadd.f32 %v5262, %v5539
      %v5541 = vpop.f32.mrb[0].mxu0
      %5542 = vmatprep.mubr.f32.mxu0 0.0
      %5543 = vmatmul.mubr.f32.gmra.mrb[0].mxu0 %v5334
      %v5544 = vpop.f32.mrb[0].mxu0
      %v5545 = vadd.f32 %v5262, %v5544
      %v5546 = vpop.f32.mrb[0].mxu0
      %5547 = vmatprep.mubr.f32.mxu0 0.0
      %5548 = vmatmul.mubr.f32.gmra.mrb[0].mxu0 %v5337
      %v5549 = vpop.f32.mrb[0].mxu0
      %v5550 = vadd.f32 %v5262, %v5549
      %v5551 = vpop.f32.mrb[0].mxu0
      %5552 = vmatprep.mubr.f32.mxu0 0.0
      %5553 = vmatmul.mubr.f32.gmra.mrb[0].mxu0 %v5340
      %v5554 = vpop.f32.mrb[0].mxu0
      %v5555 = vadd.f32 %v5262, %v5554
      %v5556 = vpop.f32.mrb[0].mxu0
      %5557 = vmatprep.mubr.f32.mxu0 0.0
      %5558 = vmatmul.mubr.f32.gmra.mrb[0].mxu0 %v5343
      %v5559 = vpop.f32.mrb[0].mxu0
      %v5560 = vadd.f32 %v5262, %v5559
      %v5561 = vpop.f32.mrb[0].mxu0
      %5562 = vmatprep.mubr.f32.mxu0 0.0
      %5563 = vmatmul.mubr.f32.gmra.mrb[0].mxu0 %v5346
      %v5564 = vpop.f32.mrb[0].mxu0
      %v5565 = vadd.f32 %v5262, %v5564
      %v5566 = vpop.f32.mrb[0].mxu0
      %5567 = vmatprep.mubr.f32.mxu0 0.0
      %5568 = vmatmul.mubr.f32.gmra.mrb[0].mxu0 %v5349
      %v5569 = vpop.f32.mrb[0].mxu0
      %v5570 = vadd.f32 %v5262, %v5569
      %v5571 = vpop.f32.mrb[0].mxu0
      %5572 = vmatprep.mubr.f32.mxu0 0.0
      %5573 = vmatmul.mubr.f32.gmra.mrb[0].mxu0 %v5352
      %v5574 = vpop.f32.mrb[0].mxu0
      %v5575 = vadd.f32 %v5262, %v5574
      %v5576 = vpop.f32.mrb[0].mxu0
      %5577 = vmatprep.mubr.f32.mxu0 0.0
      %5578 = vmatmul.mubr.f32.gmra.mrb[0].mxu0 %v5355
      %v5579 = vpop.f32.mrb[0].mxu0
      %v5580 = vadd.f32 %v5262, %v5579
      %v5581 = vpop.f32.mrb[0].mxu0
      %5582 = vmatprep.mubr.f32.mxu0 0.0
      %5583 = vmatmul.mubr.f32.gmra.mrb[0].mxu0 %v5358
      %v5584 = vpop.f32.mrb[0].mxu0
      %v5585 = vadd.f32 %v5262, %v5584
      %v5586 = vpop.f32.mrb[0].mxu0
      %5587 = vdwg.mxu0
      %v5588 = vmin.f32 %v5430, 20.0
      %v5589 = vmin.f32 %v5435, 20.0
      %v5590 = vmin.f32 %v5440, 20.0
      %v5591 = vmin.f32 %v5445, 20.0
      %v5592 = vmin.f32 %v5450, 20.0
      %v5593 = vmin.f32 %v5455, 20.0
      %v5594 = vmin.f32 %v5460, 20.0
      %v5595 = vmin.f32 %v5465, 20.0
      %v5596 = vmin.f32 %v5470, 20.0
      %v5597 = vmin.f32 %v5475, 20.0
      %v5598 = vmin.f32 %v5480, 20.0
      %v5599 = vmin.f32 %v5485, 20.0
      %v5600 = vmin.f32 %v5490, 20.0
      %v5601 = vmin.f32 %v5495, 20.0
      %v5602 = vmin.f32 %v5500, 20.0
      %v5603 = vmin.f32 %v5505, 20.0
      %v5604 = vmin.f32 %v5510, 20.0
      %v5605 = vmin.f32 %v5515, 20.0
      %v5606 = vmin.f32 %v5520, 20.0
      %v5607 = vmin.f32 %v5525, 20.0
      %v5608 = vmin.f32 %v5530, 20.0
      %v5609 = vmin.f32 %v5535, 20.0
      %v5610 = vmin.f32 %v5540, 20.0
      %v5611 = vmin.f32 %v5545, 20.0
      %v5612 = vmin.f32 %v5550, 20.0
      %v5613 = vmin.f32 %v5555, 20.0
      %v5614 = vmin.f32 %v5560, 20.0
      %v5615 = vmin.f32 %v5565, 20.0
      %v5616 = vmin.f32 %v5570, 20.0
      %v5617 = vmin.f32 %v5575, 20.0
      %v5618 = vmin.f32 %v5580, 20.0
      %v5619 = vmin.f32 %v5585, 20.0
      %v5620 = vmul.f32 %v5588, 1.442695
      %v5621 = vpow.pop %v5620
      %v5622 = vmul.f32 %v5589, 1.442695
      %v5623 = vpow.pop %v5622
      %v5624 = vmul.f32 %v5590, 1.442695
      %v5625 = vpow.pop %v5624
      %v5626 = vmul.f32 %v5591, 1.442695
      %v5627 = vpow.pop %v5626
      %v5628 = vmul.f32 %v5592, 1.442695
      %v5629 = vpow.pop %v5628
      %v5630 = vmul.f32 %v5593, 1.442695
      %v5631 = vpow.pop %v5630
      %v5632 = vmul.f32 %v5594, 1.442695
      %v5633 = vpow.pop %v5632
      %v5634 = vmul.f32 %v5595, 1.442695
      %v5635 = vpow.pop %v5634
      %v5636 = vmul.f32 %v5596, 1.442695
      %v5637 = vpow.pop %v5636
      %v5638 = vmul.f32 %v5597, 1.442695
      %v5639 = vpow.pop %v5638
      %v5640 = vmul.f32 %v5598, 1.442695
      %v5641 = vpow.pop %v5640
      %v5642 = vmul.f32 %v5599, 1.442695
      %v5643 = vpow.pop %v5642
      %v5644 = vmul.f32 %v5600, 1.442695
      %v5645 = vpow.pop %v5644
      %v5646 = vmul.f32 %v5601, 1.442695
      %v5647 = vpow.pop %v5646
      %v5648 = vmul.f32 %v5602, 1.442695
      %v5649 = vpow.pop %v5648
      %v5650 = vmul.f32 %v5603, 1.442695
      %v5651 = vpow.pop %v5650
      %v5652 = vmul.f32 %v5604, 1.442695
      %v5653 = vpow.pop %v5652
      %v5654 = vmul.f32 %v5605, 1.442695
      %v5655 = vpow.pop %v5654
      %v5656 = vmul.f32 %v5606, 1.442695
      %v5657 = vpow.pop %v5656
      %v5658 = vmul.f32 %v5607, 1.442695
      %v5659 = vpow.pop %v5658
      %v5660 = vmul.f32 %v5608, 1.442695
      %v5661 = vpow.pop %v5660
      %v5662 = vmul.f32 %v5609, 1.442695
      %v5663 = vpow.pop %v5662
      %v5664 = vmul.f32 %v5610, 1.442695
      %v5665 = vpow.pop %v5664
      %v5666 = vmul.f32 %v5611, 1.442695
      %v5667 = vpow.pop %v5666
      %v5668 = vmul.f32 %v5612, 1.442695
      %v5669 = vpow.pop %v5668
      %v5670 = vmul.f32 %v5613, 1.442695
      %v5671 = vpow.pop %v5670
      %v5672 = vmul.f32 %v5614, 1.442695
      %v5673 = vpow.pop %v5672
      %v5674 = vmul.f32 %v5615, 1.442695
      %v5675 = vpow.pop %v5674
      %v5676 = vmul.f32 %v5616, 1.442695
      %v5677 = vpow.pop %v5676
      %v5678 = vmul.f32 %v5617, 1.442695
      %v5679 = vpow.pop %v5678
      %v5680 = vmul.f32 %v5618, 1.442695
      %v5681 = vpow.pop %v5680
      %v5682 = vmul.f32 %v5619, 1.442695
      %v5683 = vpow.pop %v5682
      %v5684 = vadd.f32 %v5621, 2.0
      %v5685 = vadd.f32 %v5623, 2.0
      %v5686 = vadd.f32 %v5625, 2.0
      %v5687 = vadd.f32 %v5627, 2.0
      %v5688 = vadd.f32 %v5629, 2.0
      %v5689 = vadd.f32 %v5631, 2.0
      %v5690 = vadd.f32 %v5633, 2.0
      %v5691 = vadd.f32 %v5635, 2.0
      %v5692 = vadd.f32 %v5637, 2.0
      %v5693 = vadd.f32 %v5639, 2.0
      %v5694 = vadd.f32 %v5641, 2.0
      %v5695 = vadd.f32 %v5643, 2.0
      %v5696 = vadd.f32 %v5645, 2.0
      %v5697 = vadd.f32 %v5647, 2.0
      %v5698 = vadd.f32 %v5649, 2.0
      %v5699 = vadd.f32 %v5651, 2.0
      %v5700 = vadd.f32 %v5653, 2.0
      %v5701 = vadd.f32 %v5655, 2.0
      %v5702 = vadd.f32 %v5657, 2.0
      %v5703 = vadd.f32 %v5659, 2.0
      %v5704 = vadd.f32 %v5661, 2.0
      %v5705 = vadd.f32 %v5663, 2.0
      %v5706 = vadd.f32 %v5665, 2.0
      %v5707 = vadd.f32 %v5667, 2.0
      %v5708 = vadd.f32 %v5669, 2.0
      %v5709 = vadd.f32 %v5671, 2.0
      %v5710 = vadd.f32 %v5673, 2.0
      %v5711 = vadd.f32 %v5675, 2.0
      %v5712 = vadd.f32 %v5677, 2.0
      %v5713 = vadd.f32 %v5679, 2.0
      %v5714 = vadd.f32 %v5681, 2.0
      %v5715 = vadd.f32 %v5683, 2.0
      %v5716 = vmul.f32 %v5621, %v5684
      %v5717 = vmul.f32 %v5623, %v5685
      %v5718 = vmul.f32 %v5625, %v5686
      %v5719 = vmul.f32 %v5627, %v5687
      %v5720 = vmul.f32 %v5629, %v5688
      %v5721 = vmul.f32 %v5631, %v5689
      %v5722 = vmul.f32 %v5633, %v5690
      %v5723 = vmul.f32 %v5635, %v5691
      %v5724 = vmul.f32 %v5637, %v5692
      %v5725 = vmul.f32 %v5639, %v5693
      %v5726 = vmul.f32 %v5641, %v5694
      %v5727 = vmul.f32 %v5643, %v5695
      %v5728 = vmul.f32 %v5645, %v5696
      %v5729 = vmul.f32 %v5647, %v5697
      %v5730 = vmul.f32 %v5649, %v5698
      %v5731 = vmul.f32 %v5651, %v5699
      %v5732 = vmul.f32 %v5653, %v5700
      %v5733 = vmul.f32 %v5655, %v5701
      %v5734 = vmul.f32 %v5657, %v5702
      %v5735 = vmul.f32 %v5659, %v5703
      %v5736 = vmul.f32 %v5661, %v5704
      %v5737 = vmul.f32 %v5663, %v5705
      %v5738 = vmul.f32 %v5665, %v5706
      %v5739 = vmul.f32 %v5667, %v5707
      %v5740 = vmul.f32 %v5669, %v5708
      %v5741 = vmul.f32 %v5671, %v5709
      %v5742 = vmul.f32 %v5673, %v5710
      %v5743 = vmul.f32 %v5675, %v5711
      %v5744 = vmul.f32 %v5677, %v5712
      %v5745 = vmul.f32 %v5679, %v5713
      %v5746 = vmul.f32 %v5681, %v5714
      %v5747 = vmul.f32 %v5683, %v5715
      %vm5748 = vcmp.gt.f32.partialorder %v5430, 20.0
      %vm5749 = vcmp.gt.f32.partialorder %v5435, 20.0
      %vm5750 = vcmp.gt.f32.partialorder %v5440, 20.0
      %vm5751 = vcmp.gt.f32.partialorder %v5445, 20.0
      %vm5752 = vcmp.gt.f32.partialorder %v5450, 20.0
      %vm5753 = vcmp.gt.f32.partialorder %v5455, 20.0
      %vm5754 = vcmp.gt.f32.partialorder %v5460, 20.0
      %vm5755 = vcmp.gt.f32.partialorder %v5465, 20.0
      %vm5756 = vcmp.gt.f32.partialorder %v5470, 20.0
      %vm5757 = vcmp.gt.f32.partialorder %v5475, 20.0
      %vm5758 = vcmp.gt.f32.partialorder %v5480, 20.0
      %vm5759 = vcmp.gt.f32.partialorder %v5485, 20.0
      %vm5760 = vcmp.gt.f32.partialorder %v5490, 20.0
      %vm5761 = vcmp.gt.f32.partialorder %v5495, 20.0
      %vm5762 = vcmp.gt.f32.partialorder %v5500, 20.0
      %vm5763 = vcmp.gt.f32.partialorder %v5505, 20.0
      %vm5764 = vcmp.gt.f32.partialorder %v5510, 20.0
      %vm5765 = vcmp.gt.f32.partialorder %v5515, 20.0
      %vm5766 = vcmp.gt.f32.partialorder %v5520, 20.0
      %vm5767 = vcmp.gt.f32.partialorder %v5525, 20.0
      %vm5768 = vcmp.gt.f32.partialorder %v5530, 20.0
      %vm5769 = vcmp.gt.f32.partialorder %v5535, 20.0
      %vm5770 = vcmp.gt.f32.partialorder %v5540, 20.0
      %vm5771 = vcmp.gt.f32.partialorder %v5545, 20.0
      %vm5772 = vcmp.gt.f32.partialorder %v5550, 20.0
      %vm5773 = vcmp.gt.f32.partialorder %v5555, 20.0
      %vm5774 = vcmp.gt.f32.partialorder %v5560, 20.0
      %vm5775 = vcmp.gt.f32.partialorder %v5565, 20.0
      %vm5776 = vcmp.gt.f32.partialorder %v5570, 20.0
      %vm5777 = vcmp.gt.f32.partialorder %v5575, 20.0
      %vm5778 = vcmp.gt.f32.partialorder %v5580, 20.0
      %vm5779 = vcmp.gt.f32.partialorder %v5585, 20.0
      %v5780 = vmul.f32 %v5430, %v5716
      %v5781 = vmul.f32 %v5435, %v5717
      %v5782 = vmul.f32 %v5440, %v5718
      %v5783 = vmul.f32 %v5445, %v5719
      %v5784 = vmul.f32 %v5450, %v5720
      %v5785 = vmul.f32 %v5455, %v5721
      %v5786 = vmul.f32 %v5460, %v5722
      %v5787 = vmul.f32 %v5465, %v5723
      %v5788 = vmul.f32 %v5470, %v5724
      %v5789 = vmul.f32 %v5475, %v5725
      %v5790 = vmul.f32 %v5480, %v5726
      %v5791 = vmul.f32 %v5485, %v5727
      %v5792 = vmul.f32 %v5490, %v5728
      %v5793 = vmul.f32 %v5495, %v5729
      %v5794 = vmul.f32 %v5500, %v5730
      %v5795 = vmul.f32 %v5505, %v5731
      %v5796 = vmul.f32 %v5510, %v5732
      %v5797 = vmul.f32 %v5515, %v5733
      %v5798 = vmul.f32 %v5520, %v5734
      %v5799 = vmul.f32 %v5525, %v5735
      %v5800 = vmul.f32 %v5530, %v5736
      %v5801 = vmul.f32 %v5535, %v5737
      %v5802 = vmul.f32 %v5540, %v5738
      %v5803 = vmul.f32 %v5545, %v5739
      %v5804 = vmul.f32 %v5550, %v5740
      %v5805 = vmul.f32 %v5555, %v5741
      %v5806 = vmul.f32 %v5560, %v5742
      %v5807 = vmul.f32 %v5565, %v5743
      %v5808 = vmul.f32 %v5570, %v5744
      %v5809 = vmul.f32 %v5575, %v5745
      %v5810 = vmul.f32 %v5580, %v5746
      %v5811 = vmul.f32 %v5585, %v5747
      %v5812 = vadd.f32 %v5716, 2.0
      %v5813 = vadd.f32 %v5717, 2.0
      %v5814 = vadd.f32 %v5718, 2.0
      %v5815 = vadd.f32 %v5719, 2.0
      %v5816 = vadd.f32 %v5720, 2.0
      %v5817 = vadd.f32 %v5721, 2.0
      %v5818 = vadd.f32 %v5722, 2.0
      %v5819 = vadd.f32 %v5723, 2.0
      %v5820 = vadd.f32 %v5724, 2.0
      %v5821 = vadd.f32 %v5725, 2.0
      %v5822 = vadd.f32 %v5726, 2.0
      %v5823 = vadd.f32 %v5727, 2.0
      %v5824 = vadd.f32 %v5728, 2.0
      %v5825 = vadd.f32 %v5729, 2.0
      %v5826 = vadd.f32 %v5730, 2.0
      %v5827 = vadd.f32 %v5731, 2.0
      %v5828 = vadd.f32 %v5732, 2.0
      %v5829 = vadd.f32 %v5733, 2.0
      %v5830 = vadd.f32 %v5734, 2.0
      %v5831 = vadd.f32 %v5735, 2.0
      %v5832 = vadd.f32 %v5736, 2.0
      %v5833 = vadd.f32 %v5737, 2.0
      %v5834 = vadd.f32 %v5738, 2.0
      %v5835 = vadd.f32 %v5739, 2.0
      %v5836 = vadd.f32 %v5740, 2.0
      %v5837 = vadd.f32 %v5741, 2.0
      %v5838 = vadd.f32 %v5742, 2.0
      %v5839 = vadd.f32 %v5743, 2.0
      %v5840 = vadd.f32 %v5744, 2.0
      %v5841 = vadd.f32 %v5745, 2.0
      %v5842 = vadd.f32 %v5746, 2.0
      %v5843 = vadd.f32 %v5747, 2.0
      %v5844 = vrcp.pop %v5812
      %v5845 = vmul.f32 %v5780, %v5844
      %v5846 = vrcp.pop %v5813
      %v5847 = vmul.f32 %v5781, %v5846
      %v5848 = vrcp.pop %v5814
      %v5849 = vmul.f32 %v5782, %v5848
      %v5850 = vrcp.pop %v5815
      %v5851 = vmul.f32 %v5783, %v5850
      %v5852 = vrcp.pop %v5816
      %v5853 = vmul.f32 %v5784, %v5852
      %v5854 = vrcp.pop %v5817
      %v5855 = vmul.f32 %v5785, %v5854
      %v5856 = vrcp.pop %v5818
      %v5857 = vmul.f32 %v5786, %v5856
      %v5858 = vrcp.pop %v5819
      %v5859 = vmul.f32 %v5787, %v5858
      %v5860 = vrcp.pop %v5820
      %v5861 = vmul.f32 %v5788, %v5860
      %v5862 = vrcp.pop %v5821
      %v5863 = vmul.f32 %v5789, %v5862
      %v5864 = vrcp.pop %v5822
      %v5865 = vmul.f32 %v5790, %v5864
      %v5866 = vrcp.pop %v5823
      %v5867 = vmul.f32 %v5791, %v5866
      %v5868 = vrcp.pop %v5824
      %v5869 = vmul.f32 %v5792, %v5868
      %v5870 = vrcp.pop %v5825
      %v5871 = vmul.f32 %v5793, %v5870
      %v5872 = vrcp.pop %v5826
      %v5873 = vmul.f32 %v5794, %v5872
      %v5874 = vrcp.pop %v5827
      %v5875 = vmul.f32 %v5795, %v5874
      %v5876 = vrcp.pop %v5828
      %v5877 = vmul.f32 %v5796, %v5876
      %v5878 = vrcp.pop %v5829
      %v5879 = vmul.f32 %v5797, %v5878
      %v5880 = vrcp.pop %v5830
      %v5881 = vmul.f32 %v5798, %v5880
      %v5882 = vrcp.pop %v5831
      %v5883 = vmul.f32 %v5799, %v5882
      %v5884 = vrcp.pop %v5832
      %v5885 = vmul.f32 %v5800, %v5884
      %v5886 = vrcp.pop %v5833
      %v5887 = vmul.f32 %v5801, %v5886
      %v5888 = vrcp.pop %v5834
      %v5889 = vmul.f32 %v5802, %v5888
      %v5890 = vrcp.pop %v5835
      %v5891 = vmul.f32 %v5803, %v5890
      %v5892 = vrcp.pop %v5836
      %v5893 = vmul.f32 %v5804, %v5892
      %v5894 = vrcp.pop %v5837
      %v5895 = vmul.f32 %v5805, %v5894
      %v5896 = vrcp.pop %v5838
      %v5897 = vmul.f32 %v5806, %v5896
      %v5898 = vrcp.pop %v5839
      %v5899 = vmul.f32 %v5807, %v5898
      %v5900 = vrcp.pop %v5840
      %v5901 = vmul.f32 %v5808, %v5900
      %v5902 = vrcp.pop %v5841
      %v5903 = vmul.f32 %v5809, %v5902
      %v5904 = vrcp.pop %v5842
      %v5905 = vmul.f32 %v5810, %v5904
      %v5906 = vrcp.pop %v5843
      %v5907 = vmul.f32 %v5811, %v5906
      %v5908 = vsel %vm5748, %v5430, %v5845
      %v5909 = vsel %vm5749, %v5435, %v5847
      %v5910 = vsel %vm5750, %v5440, %v5849
      %v5911 = vsel %vm5751, %v5445, %v5851
      %v5912 = vsel %vm5752, %v5450, %v5853
      %v5913 = vsel %vm5753, %v5455, %v5855
      %v5914 = vsel %vm5754, %v5460, %v5857
      %v5915 = vsel %vm5755, %v5465, %v5859
      %v5916 = vsel %vm5756, %v5470, %v5861
      %v5917 = vsel %vm5757, %v5475, %v5863
      %v5918 = vsel %vm5758, %v5480, %v5865
      %v5919 = vsel %vm5759, %v5485, %v5867
      %v5920 = vsel %vm5760, %v5490, %v5869
      %v5921 = vsel %vm5761, %v5495, %v5871
      %v5922 = vsel %vm5762, %v5500, %v5873
      %v5923 = vsel %vm5763, %v5505, %v5875
      %v5924 = vsel %vm5764, %v5510, %v5877
      %v5925 = vsel %vm5765, %v5515, %v5879
      %v5926 = vsel %vm5766, %v5520, %v5881
      %v5927 = vsel %vm5767, %v5525, %v5883
      %v5928 = vsel %vm5768, %v5530, %v5885
      %v5929 = vsel %vm5769, %v5535, %v5887
      %v5930 = vsel %vm5770, %v5540, %v5889
      %v5931 = vsel %vm5771, %v5545, %v5891
      %v5932 = vsel %vm5772, %v5550, %v5893
      %v5933 = vsel %vm5773, %v5555, %v5895
      %v5934 = vsel %vm5774, %v5560, %v5897
      %v5935 = vsel %vm5775, %v5565, %v5899
      %v5936 = vsel %vm5776, %v5570, %v5901
      %v5937 = vsel %vm5777, %v5575, %v5903
      %v5938 = vsel %vm5778, %v5580, %v5905
      %v5939 = vsel %vm5779, %v5585, %v5907
      %v5940 = vadd.f32 %v5908, %v374
      %v5941 = vadd.f32 %v5909, %v375
      %v5942 = vadd.f32 %v5910, %v376
      %v5943 = vadd.f32 %v5911, %v377
      %v5944 = vadd.f32 %v5912, %v378
      %v5945 = vadd.f32 %v5913, %v379
      %v5946 = vadd.f32 %v5914, %v380
      %v5947 = vadd.f32 %v5915, %v381
      %v5948 = vadd.f32 %v5916, %v382
      %v5949 = vadd.f32 %v5917, %v383
      %v5950 = vadd.f32 %v5918, %v384
      %v5951 = vadd.f32 %v5919, %v385
      %v5952 = vadd.f32 %v5920, %v386
      %v5953 = vadd.f32 %v5921, %v387
      %v5954 = vadd.f32 %v5922, %v388
      %v5955 = vadd.f32 %v5923, %v389
      %v5956 = vadd.f32 %v5924, %v390
      %v5957 = vadd.f32 %v5925, %v391
      %v5958 = vadd.f32 %v5926, %v392
      %v5959 = vadd.f32 %v5927, %v393
      %v5960 = vadd.f32 %v5928, %v394
      %v5961 = vadd.f32 %v5929, %v395
      %v5962 = vadd.f32 %v5930, %v396
      %v5963 = vadd.f32 %v5931, %v397
      %v5964 = vadd.f32 %v5932, %v398
      %v5965 = vadd.f32 %v5933, %v399
      %v5966 = vadd.f32 %v5934, %v400
      %v5967 = vadd.f32 %v5935, %v401
      %v5968 = vadd.f32 %v5936, %v402
      %v5969 = vadd.f32 %v5937, %v403
      %v5970 = vadd.f32 %v5938, %v404
      %v5971 = vadd.f32 %v5939, %v405
      %5972 = vst.msk [vmem:[%s407 + $0x1] sm:$0xff] %vm408, %v3480
      %5973 = vst.msk [vmem:[%s407 + $0x9] sm:$0xff] %vm408, %v3481
      %5974 = vst.msk [vmem:[%s407 + $0x19] sm:$0xff] %vm408, %v3482
      %5975 = vst.msk [vmem:[%s407 + $0x21] sm:$0xff] %vm408, %v3483
      %5976 = vst.msk [vmem:[%s407 + $0x31] sm:$0xff] %vm408, %v3484
      %5977 = vst.msk [vmem:[%s407 + $0x39] sm:$0xff] %vm408, %v3485
      %5978 = vst.msk [vmem:[%s407 + $0x49] sm:$0xff] %vm408, %v3486
      %5979 = vst.msk [vmem:[%s407 + $0x51] sm:$0xff] %vm408, %v3487
      %5980 = vst.msk [vmem:[%s407 + $0x61] sm:$0xff] %vm408, %v3488
      %5981 = vst.msk [vmem:[%s407 + $0x69] sm:$0xff] %vm408, %v3489
      %5982 = vst.msk [vmem:[%s407 + $0x79] sm:$0xff] %vm408, %v3490
      %5983 = vst.msk [vmem:[%s407 + $0x81] sm:$0xff] %vm408, %v3491
      %5984 = vst.msk [vmem:[%s407 + $0x91] sm:$0xff] %vm408, %v3492
      %5985 = vst.msk [vmem:[%s407 + $0x99] sm:$0xff] %vm408, %v3493
      %5986 = vst.msk [vmem:[%s407 + $0xa9] sm:$0xff] %vm408, %v3494
      %5987 = vst.msk [vmem:[%s407 + $0xb1] sm:$0xff] %vm408, %v3495
      %5988 = vst.msk [vmem:[%s407 + $0xc1] sm:$0xff] %vm408, %v3496
      %5989 = vst.msk [vmem:[%s407 + $0xc9] sm:$0xff] %vm408, %v3497
      %5990 = vst.msk [vmem:[%s407 + $0xd9] sm:$0xff] %vm408, %v3498
      %5991 = vst.msk [vmem:[%s407 + $0xe1] sm:$0xff] %vm408, %v3499
      %5992 = vst.msk [vmem:[%s407 + $0xf1] sm:$0xff] %vm408, %v3500
      %5993 = vst.msk [vmem:[%s407 + $0xf9] sm:$0xff] %vm408, %v3501
      %5994 = vst.msk [vmem:[%s407 + $0x109] sm:$0xff] %vm408, %v3502
      %5995 = vst.msk [vmem:[%s407 + $0x111] sm:$0xff] %vm408, %v3503
      %5996 = vst.msk [vmem:[%s407 + $0x121] sm:$0xff] %vm408, %v3504
      %5997 = vst.msk [vmem:[%s407 + $0x129] sm:$0xff] %vm408, %v3505
      %5998 = vst.msk [vmem:[%s407 + $0x139] sm:$0xff] %vm408, %v3506
      %5999 = vst.msk [vmem:[%s407 + $0x141] sm:$0xff] %vm408, %v3507
      %6000 = vst.msk [vmem:[%s407 + $0x151] sm:$0xff] %vm408, %v3508
      %6001 = vst.msk [vmem:[%s407 + $0x159] sm:$0xff] %vm408, %v3509
      %6002 = vst.msk [vmem:[%s407 + $0x169] sm:$0xff] %vm408, %v3510
      %6003 = vst.msk [vmem:[%s407 + $0x171] sm:$0xff] %vm408, %v3511
      %6004 = vst.msk [vmem:[#allocation2 + $0x1] sm:$0xff] %vm408, %v3480
      %6005 = vst.msk [vmem:[#allocation2 + $0x9] sm:$0xff] %vm408, %v3481
      %6006 = vst.msk [vmem:[%s443 + $0x1] sm:$0xff] %vm408, %v3510
      %6007 = vst.msk [vmem:[%s443 + $0x9] sm:$0xff] %vm408, %v3511
      %v6008 = vld [vmem:[#allocation2 + $0x1] sm:$0x1]
      %v6009 = vld [vmem:[#allocation2 + $0x19] sm:$0x1]
      %v6010 = vld [vmem:[#allocation2 + $0x31] sm:$0x1]
      %v6011 = vld [vmem:[#allocation2 + $0x49] sm:$0x1]
      %v6012 = vld [vmem:[#allocation2 + $0x61] sm:$0x1]
      %v6013 = vld [vmem:[#allocation2 + $0x79] sm:$0x1]
      %v6014 = vld [vmem:[#allocation2 + $0x91] sm:$0x1]
      %v6015 = vld [vmem:[#allocation2 + $0xa9] sm:$0x1]
      %v6016 = vld [vmem:[#allocation2 + $0xc1] sm:$0x1]
      %v6017 = vld [vmem:[#allocation2 + $0xd9] sm:$0x1]
      %v6018 = vld [vmem:[#allocation2 + $0xf1] sm:$0x1]
      %v6019 = vld [vmem:[#allocation2 + $0x109] sm:$0x1]
      %v6020 = vld [vmem:[#allocation2 + $0x121] sm:$0x1]
      %v6021 = vld [vmem:[#allocation2 + $0x139] sm:$0x1]
      %v6022 = vld [vmem:[#allocation2 + $0x151] sm:$0x1]
      %v6023 = vld [vmem:[#allocation2 + $0x169] sm:$0x1]
      %v6024 = vld [vmem:[#allocation2 + $0x181] sm:$0x1]
      %v6025 = vld [vmem:[#allocation2 + $0x199] sm:$0x1]
      %6026 = vst.msk [vmem:[#allocation2] sm:$0x1] %vm464, %v6008
      %6027 = vst.msk [vmem:[#allocation2 + $0x18] sm:$0x1] %vm464, %v6009
      %6028 = vst.msk [vmem:[#allocation2 + $0x30] sm:$0x1] %vm464, %v6010
      %6029 = vst.msk [vmem:[#allocation2 + $0x48] sm:$0x1] %vm464, %v6011
      %6030 = vst.msk [vmem:[#allocation2 + $0x60] sm:$0x1] %vm464, %v6012
      %6031 = vst.msk [vmem:[#allocation2 + $0x78] sm:$0x1] %vm464, %v6013
      %6032 = vst.msk [vmem:[#allocation2 + $0x90] sm:$0x1] %vm464, %v6014
      %6033 = vst.msk [vmem:[#allocation2 + $0xa8] sm:$0x1] %vm464, %v6015
      %6034 = vst.msk [vmem:[#allocation2 + $0xc0] sm:$0x1] %vm464, %v6016
      %6035 = vst.msk [vmem:[#allocation2 + $0xd8] sm:$0x1] %vm464, %v6017
      %6036 = vst.msk [vmem:[#allocation2 + $0xf0] sm:$0x1] %vm464, %v6018
      %6037 = vst.msk [vmem:[#allocation2 + $0x108] sm:$0x1] %vm464, %v6019
      %6038 = vst.msk [vmem:[#allocation2 + $0x120] sm:$0x1] %vm464, %v6020
      %6039 = vst.msk [vmem:[#allocation2 + $0x138] sm:$0x1] %vm464, %v6021
      %6040 = vst.msk [vmem:[#allocation2 + $0x150] sm:$0x1] %vm464, %v6022
      %6041 = vst.msk [vmem:[#allocation2 + $0x168] sm:$0x1] %vm464, %v6023
      %6042 = vst.msk [vmem:[#allocation2 + $0x180] sm:$0x1] %vm464, %v6024
      %6043 = vst.msk [vmem:[#allocation2 + $0x198] sm:$0x1] %vm464, %v6025
      %v6044 = vld [vmem:[#allocation2 + $0x10] sm:$0x1]
      %v6045 = vld [vmem:[#allocation2 + $0x28] sm:$0x1]
      %v6046 = vld [vmem:[#allocation2 + $0x40] sm:$0x1]
      %v6047 = vld [vmem:[#allocation2 + $0x58] sm:$0x1]
      %v6048 = vld [vmem:[#allocation2 + $0x70] sm:$0x1]
      %v6049 = vld [vmem:[#allocation2 + $0x88] sm:$0x1]
      %v6050 = vld [vmem:[#allocation2 + $0xa0] sm:$0x1]
      %v6051 = vld [vmem:[#allocation2 + $0xb8] sm:$0x1]
      %v6052 = vld [vmem:[#allocation2 + $0xd0] sm:$0x1]
      %v6053 = vld [vmem:[#allocation2 + $0xe8] sm:$0x1]
      %v6054 = vld [vmem:[#allocation2 + $0x100] sm:$0x1]
      %v6055 = vld [vmem:[#allocation2 + $0x118] sm:$0x1]
      %v6056 = vld [vmem:[#allocation2 + $0x130] sm:$0x1]
      %v6057 = vld [vmem:[#allocation2 + $0x148] sm:$0x1]
      %v6058 = vld [vmem:[#allocation2 + $0x160] sm:$0x1]
      %v6059 = vld [vmem:[#allocation2 + $0x178] sm:$0x1]
      %v6060 = vld [vmem:[#allocation2 + $0x190] sm:$0x1]
      %v6061 = vld [vmem:[#allocation2 + $0x1a8] sm:$0x1]
      %6062 = vst.msk [vmem:[#allocation2 + $0x11] sm:$0x1] %vm464, %v6044
      %6063 = vst.msk [vmem:[#allocation2 + $0x29] sm:$0x1] %vm464, %v6045
      %6064 = vst.msk [vmem:[#allocation2 + $0x41] sm:$0x1] %vm464, %v6046
      %6065 = vst.msk [vmem:[#allocation2 + $0x59] sm:$0x1] %vm464, %v6047
      %6066 = vst.msk [vmem:[#allocation2 + $0x71] sm:$0x1] %vm464, %v6048
      %6067 = vst.msk [vmem:[#allocation2 + $0x89] sm:$0x1] %vm464, %v6049
      %6068 = vst.msk [vmem:[#allocation2 + $0xa1] sm:$0x1] %vm464, %v6050
      %6069 = vst.msk [vmem:[#allocation2 + $0xb9] sm:$0x1] %vm464, %v6051
      %6070 = vst.msk [vmem:[#allocation2 + $0xd1] sm:$0x1] %vm464, %v6052
      %6071 = vst.msk [vmem:[#allocation2 + $0xe9] sm:$0x1] %vm464, %v6053
      %6072 = vst.msk [vmem:[#allocation2 + $0x101] sm:$0x1] %vm464, %v6054
      %6073 = vst.msk [vmem:[#allocation2 + $0x119] sm:$0x1] %vm464, %v6055
      %6074 = vst.msk [vmem:[#allocation2 + $0x131] sm:$0x1] %vm464, %v6056
      %6075 = vst.msk [vmem:[#allocation2 + $0x149] sm:$0x1] %vm464, %v6057
      %6076 = vst.msk [vmem:[#allocation2 + $0x161] sm:$0x1] %vm464, %v6058
      %6077 = vst.msk [vmem:[#allocation2 + $0x179] sm:$0x1] %vm464, %v6059
      %6078 = vst.msk [vmem:[#allocation2 + $0x191] sm:$0x1] %vm464, %v6060
      %6079 = vst.msk [vmem:[#allocation2 + $0x1a9] sm:$0x1] %vm464, %v6061
      %v6080 = vld [vmem:[#allocation2] sm:$0xff]
      %v6081 = vld [vmem:[#allocation2 + $0x8] sm:$0xff]
      %v6082 = vld [vmem:[#allocation2 + $0x18] sm:$0xff]
      %v6083 = vld [vmem:[#allocation2 + $0x20] sm:$0xff]
      %v6084 = vld [vmem:[#allocation2 + $0x30] sm:$0xff]
      %v6085 = vld [vmem:[#allocation2 + $0x38] sm:$0xff]
      %v6086 = vld [vmem:[#allocation2 + $0x48] sm:$0xff]
      %v6087 = vld [vmem:[#allocation2 + $0x50] sm:$0xff]
      %v6088 = vld [vmem:[#allocation2 + $0x60] sm:$0xff]
      %v6089 = vld [vmem:[#allocation2 + $0x68] sm:$0xff]
      %v6090 = vld [vmem:[#allocation2 + $0x78] sm:$0xff]
      %v6091 = vld [vmem:[#allocation2 + $0x80] sm:$0xff]
      %v6092 = vld [vmem:[#allocation2 + $0x90] sm:$0xff]
      %v6093 = vld [vmem:[#allocation2 + $0x98] sm:$0xff]
      %v6094 = vld [vmem:[#allocation2 + $0xa8] sm:$0xff]
      %v6095 = vld [vmem:[#allocation2 + $0xb0] sm:$0xff]
      %v6096 = vld [vmem:[#allocation2 + $0xc0] sm:$0xff]
      %v6097 = vld [vmem:[#allocation2 + $0xc8] sm:$0xff]
      %v6098 = vld [vmem:[#allocation2 + $0xd8] sm:$0xff]
      %v6099 = vld [vmem:[#allocation2 + $0xe0] sm:$0xff]
      %v6100 = vld [vmem:[#allocation2 + $0xf0] sm:$0xff]
      %v6101 = vld [vmem:[#allocation2 + $0xf8] sm:$0xff]
      %v6102 = vld [vmem:[#allocation2 + $0x108] sm:$0xff]
      %v6103 = vld [vmem:[#allocation2 + $0x110] sm:$0xff]
      %v6104 = vld [vmem:[#allocation2 + $0x120] sm:$0xff]
      %v6105 = vld [vmem:[#allocation2 + $0x128] sm:$0xff]
      %v6106 = vld [vmem:[#allocation2 + $0x138] sm:$0xff]
      %v6107 = vld [vmem:[#allocation2 + $0x140] sm:$0xff]
      %v6108 = vld [vmem:[#allocation2 + $0x150] sm:$0xff]
      %v6109 = vld [vmem:[#allocation2 + $0x158] sm:$0xff]
      %v6110 = vld [vmem:[#allocation2 + $0x168] sm:$0xff]
      %v6111 = vld [vmem:[#allocation2 + $0x170] sm:$0xff]
      %6112 = vst.msk [vmem:[#allocation3] sm:$0xff] %vm408, %v6080
      %6113 = vst.msk [vmem:[#allocation3 + $0x8] sm:$0xff] %vm408, %v6081
      %6114 = vst.msk [vmem:[#allocation3 + $0x10] sm:$0xff] %vm408, %v6082
      %6115 = vst.msk [vmem:[#allocation3 + $0x18] sm:$0xff] %vm408, %v6083
      %6116 = vst.msk [vmem:[#allocation3 + $0x20] sm:$0xff] %vm408, %v6084
      %6117 = vst.msk [vmem:[#allocation3 + $0x28] sm:$0xff] %vm408, %v6085
      %6118 = vst.msk [vmem:[#allocation3 + $0x30] sm:$0xff] %vm408, %v6086
      %6119 = vst.msk [vmem:[#allocation3 + $0x38] sm:$0xff] %vm408, %v6087
      %6120 = vst.msk [vmem:[#allocation3 + $0x40] sm:$0xff] %vm408, %v6088
      %6121 = vst.msk [vmem:[#allocation3 + $0x48] sm:$0xff] %vm408, %v6089
      %6122 = vst.msk [vmem:[#allocation3 + $0x50] sm:$0xff] %vm408, %v6090
      %6123 = vst.msk [vmem:[#allocation3 + $0x58] sm:$0xff] %vm408, %v6091
      %6124 = vst.msk [vmem:[#allocation3 + $0x60] sm:$0xff] %vm408, %v6092
      %6125 = vst.msk [vmem:[#allocation3 + $0x68] sm:$0xff] %vm408, %v6093
      %6126 = vst.msk [vmem:[#allocation3 + $0x70] sm:$0xff] %vm408, %v6094
      %6127 = vst.msk [vmem:[#allocation3 + $0x78] sm:$0xff] %vm408, %v6095
      %6128 = vst.msk [vmem:[#allocation3 + $0x80] sm:$0xff] %vm408, %v6096
      %6129 = vst.msk [vmem:[#allocation3 + $0x88] sm:$0xff] %vm408, %v6097
      %6130 = vst.msk [vmem:[#allocation3 + $0x90] sm:$0xff] %vm408, %v6098
      %6131 = vst.msk [vmem:[#allocation3 + $0x98] sm:$0xff] %vm408, %v6099
      %6132 = vst.msk [vmem:[#allocation3 + $0xa0] sm:$0xff] %vm408, %v6100
      %6133 = vst.msk [vmem:[#allocation3 + $0xa8] sm:$0xff] %vm408, %v6101
      %6134 = vst.msk [vmem:[#allocation3 + $0xb0] sm:$0xff] %vm408, %v6102
      %6135 = vst.msk [vmem:[#allocation3 + $0xb8] sm:$0xff] %vm408, %v6103
      %6136 = vst.msk [vmem:[#allocation3 + $0xc0] sm:$0xff] %vm408, %v6104
      %6137 = vst.msk [vmem:[#allocation3 + $0xc8] sm:$0xff] %vm408, %v6105
      %6138 = vst.msk [vmem:[#allocation3 + $0xd0] sm:$0xff] %vm408, %v6106
      %6139 = vst.msk [vmem:[#allocation3 + $0xd8] sm:$0xff] %vm408, %v6107
      %6140 = vst.msk [vmem:[#allocation3 + $0xe0] sm:$0xff] %vm408, %v6108
      %6141 = vst.msk [vmem:[#allocation3 + $0xe8] sm:$0xff] %vm408, %v6109
      %6142 = vst.msk [vmem:[#allocation3 + $0xf0] sm:$0xff] %vm408, %v6110
      %6143 = vst.msk [vmem:[#allocation3 + $0xf8] sm:$0xff] %vm408, %v6111
      %v6144 = vld [vmem:[#allocation2 + $0x1] sm:$0xff]
      %v6145 = vld [vmem:[#allocation2 + $0x9] sm:$0xff]
      %v6146 = vld [vmem:[#allocation2 + $0x19] sm:$0xff]
      %v6147 = vld [vmem:[#allocation2 + $0x21] sm:$0xff]
      %v6148 = vld [vmem:[#allocation2 + $0x31] sm:$0xff]
      %v6149 = vld [vmem:[#allocation2 + $0x39] sm:$0xff]
      %v6150 = vld [vmem:[#allocation2 + $0x49] sm:$0xff]
      %v6151 = vld [vmem:[#allocation2 + $0x51] sm:$0xff]
      %v6152 = vld [vmem:[#allocation2 + $0x61] sm:$0xff]
      %v6153 = vld [vmem:[#allocation2 + $0x69] sm:$0xff]
      %v6154 = vld [vmem:[#allocation2 + $0x79] sm:$0xff]
      %v6155 = vld [vmem:[#allocation2 + $0x81] sm:$0xff]
      %v6156 = vld [vmem:[#allocation2 + $0x91] sm:$0xff]
      %v6157 = vld [vmem:[#allocation2 + $0x99] sm:$0xff]
      %v6158 = vld [vmem:[#allocation2 + $0xa9] sm:$0xff]
      %v6159 = vld [vmem:[#allocation2 + $0xb1] sm:$0xff]
      %v6160 = vld [vmem:[#allocation2 + $0xc1] sm:$0xff]
      %v6161 = vld [vmem:[#allocation2 + $0xc9] sm:$0xff]
      %v6162 = vld [vmem:[#allocation2 + $0xd9] sm:$0xff]
      %v6163 = vld [vmem:[#allocation2 + $0xe1] sm:$0xff]
      %v6164 = vld [vmem:[#allocation2 + $0xf1] sm:$0xff]
      %v6165 = vld [vmem:[#allocation2 + $0xf9] sm:$0xff]
      %v6166 = vld [vmem:[#allocation2 + $0x109] sm:$0xff]
      %v6167 = vld [vmem:[#allocation2 + $0x111] sm:$0xff]
      %v6168 = vld [vmem:[#allocation2 + $0x121] sm:$0xff]
      %v6169 = vld [vmem:[#allocation2 + $0x129] sm:$0xff]
      %v6170 = vld [vmem:[#allocation2 + $0x139] sm:$0xff]
      %v6171 = vld [vmem:[#allocation2 + $0x141] sm:$0xff]
      %v6172 = vld [vmem:[#allocation2 + $0x151] sm:$0xff]
      %v6173 = vld [vmem:[#allocation2 + $0x159] sm:$0xff]
      %v6174 = vld [vmem:[#allocation2 + $0x169] sm:$0xff]
      %v6175 = vld [vmem:[#allocation2 + $0x171] sm:$0xff]
      %6208 = vrot.lane.b32.xlu0 %v6144, 4
      %v6209 = vpop.permute.xlu0 %6208
      %6210 = vrot.lane.b32.xlu0 %v6145, 4
      %v6211 = vpop.permute.xlu0 %6210
      %6212 = vrot.lane.b32.xlu0 %v6146, 4
      %v6213 = vpop.permute.xlu0 %6212
      %6214 = vrot.lane.b32.xlu0 %v6147, 4
      %v6215 = vpop.permute.xlu0 %6214
      %6216 = vrot.lane.b32.xlu0 %v6148, 4
      %v6217 = vpop.permute.xlu0 %6216
      %6218 = vrot.lane.b32.xlu0 %v6149, 4
      %v6219 = vpop.permute.xlu0 %6218
      %6220 = vrot.lane.b32.xlu0 %v6150, 4
      %v6221 = vpop.permute.xlu0 %6220
      %6222 = vrot.lane.b32.xlu0 %v6151, 4
      %v6223 = vpop.permute.xlu0 %6222
      %6224 = vrot.lane.b32.xlu0 %v6152, 4
      %v6225 = vpop.permute.xlu0 %6224
      %6226 = vrot.lane.b32.xlu0 %v6153, 4
      %v6227 = vpop.permute.xlu0 %6226
      %6228 = vrot.lane.b32.xlu0 %v6154, 4
      %v6229 = vpop.permute.xlu0 %6228
      %6230 = vrot.lane.b32.xlu0 %v6155, 4
      %v6231 = vpop.permute.xlu0 %6230
      %6232 = vrot.lane.b32.xlu0 %v6156, 4
      %v6233 = vpop.permute.xlu0 %6232
      %6234 = vrot.lane.b32.xlu0 %v6157, 4
      %v6235 = vpop.permute.xlu0 %6234
      %6236 = vrot.lane.b32.xlu0 %v6158, 4
      %v6237 = vpop.permute.xlu0 %6236
      %6238 = vrot.lane.b32.xlu0 %v6159, 4
      %v6239 = vpop.permute.xlu0 %6238
      %6240 = vrot.lane.b32.xlu0 %v6160, 4
      %v6241 = vpop.permute.xlu0 %6240
      %6242 = vrot.lane.b32.xlu0 %v6161, 4
      %v6243 = vpop.permute.xlu0 %6242
      %6244 = vrot.lane.b32.xlu0 %v6162, 4
      %v6245 = vpop.permute.xlu0 %6244
      %6246 = vrot.lane.b32.xlu0 %v6163, 4
      %v6247 = vpop.permute.xlu0 %6246
      %6248 = vrot.lane.b32.xlu0 %v6164, 4
      %v6249 = vpop.permute.xlu0 %6248
      %6250 = vrot.lane.b32.xlu0 %v6165, 4
      %v6251 = vpop.permute.xlu0 %6250
      %6252 = vrot.lane.b32.xlu0 %v6166, 4
      %v6253 = vpop.permute.xlu0 %6252
      %6254 = vrot.lane.b32.xlu0 %v6167, 4
      %v6255 = vpop.permute.xlu0 %6254
      %6256 = vrot.lane.b32.xlu0 %v6168, 4
      %v6257 = vpop.permute.xlu0 %6256
      %6258 = vrot.lane.b32.xlu0 %v6169, 4
      %v6259 = vpop.permute.xlu0 %6258
      %6260 = vrot.lane.b32.xlu0 %v6170, 4
      %v6261 = vpop.permute.xlu0 %6260
      %6262 = vrot.lane.b32.xlu0 %v6171, 4
      %v6263 = vpop.permute.xlu0 %6262
      %6264 = vrot.lane.b32.xlu0 %v6172, 4
      %v6265 = vpop.permute.xlu0 %6264
      %6266 = vrot.lane.b32.xlu0 %v6173, 4
      %v6267 = vpop.permute.xlu0 %6266
      %6268 = vrot.lane.b32.xlu0 %v6174, 4
      %v6269 = vpop.permute.xlu0 %6268
      %6270 = vrot.lane.b32.xlu0 %v6175, 4
      %v6271 = vpop.permute.xlu0 %6270
      %6304 = vst.msk [vmem:[#allocation3] sm:$0xff] %vm743, %v6209
      %6305 = vst.msk [vmem:[#allocation3 + $0x8] sm:$0xff] %vm743, %v6211
      %6306 = vst.msk [vmem:[#allocation3 + $0x10] sm:$0xff] %vm743, %v6213
      %6307 = vst.msk [vmem:[#allocation3 + $0x18] sm:$0xff] %vm743, %v6215
      %6308 = vst.msk [vmem:[#allocation3 + $0x20] sm:$0xff] %vm743, %v6217
      %6309 = vst.msk [vmem:[#allocation3 + $0x28] sm:$0xff] %vm743, %v6219
      %6310 = vst.msk [vmem:[#allocation3 + $0x30] sm:$0xff] %vm743, %v6221
      %6311 = vst.msk [vmem:[#allocation3 + $0x38] sm:$0xff] %vm743, %v6223
      %6312 = vst.msk [vmem:[#allocation3 + $0x40] sm:$0xff] %vm743, %v6225
      %6313 = vst.msk [vmem:[#allocation3 + $0x48] sm:$0xff] %vm743, %v6227
      %6314 = vst.msk [vmem:[#allocation3 + $0x50] sm:$0xff] %vm743, %v6229
      %6315 = vst.msk [vmem:[#allocation3 + $0x58] sm:$0xff] %vm743, %v6231
      %6316 = vst.msk [vmem:[#allocation3 + $0x60] sm:$0xff] %vm743, %v6233
      %6317 = vst.msk [vmem:[#allocation3 + $0x68] sm:$0xff] %vm743, %v6235
      %6318 = vst.msk [vmem:[#allocation3 + $0x70] sm:$0xff] %vm743, %v6237
      %6319 = vst.msk [vmem:[#allocation3 + $0x78] sm:$0xff] %vm743, %v6239
      %6320 = vst.msk [vmem:[#allocation3 + $0x80] sm:$0xff] %vm743, %v6241
      %6321 = vst.msk [vmem:[#allocation3 + $0x88] sm:$0xff] %vm743, %v6243
      %6322 = vst.msk [vmem:[#allocation3 + $0x90] sm:$0xff] %vm743, %v6245
      %6323 = vst.msk [vmem:[#allocation3 + $0x98] sm:$0xff] %vm743, %v6247
      %6324 = vst.msk [vmem:[#allocation3 + $0xa0] sm:$0xff] %vm743, %v6249
      %6325 = vst.msk [vmem:[#allocation3 + $0xa8] sm:$0xff] %vm743, %v6251
      %6326 = vst.msk [vmem:[#allocation3 + $0xb0] sm:$0xff] %vm743, %v6253
      %6327 = vst.msk [vmem:[#allocation3 + $0xb8] sm:$0xff] %vm743, %v6255
      %6328 = vst.msk [vmem:[#allocation3 + $0xc0] sm:$0xff] %vm743, %v6257
      %6329 = vst.msk [vmem:[#allocation3 + $0xc8] sm:$0xff] %vm743, %v6259
      %6330 = vst.msk [vmem:[#allocation3 + $0xd0] sm:$0xff] %vm743, %v6261
      %6331 = vst.msk [vmem:[#allocation3 + $0xd8] sm:$0xff] %vm743, %v6263
      %6332 = vst.msk [vmem:[#allocation3 + $0xe0] sm:$0xff] %vm743, %v6265
      %6333 = vst.msk [vmem:[#allocation3 + $0xe8] sm:$0xff] %vm743, %v6267
      %6334 = vst.msk [vmem:[#allocation3 + $0xf0] sm:$0xff] %vm743, %v6269
      %6335 = vst.msk [vmem:[#allocation3 + $0xf8] sm:$0xff] %vm743, %v6271
      %v6336 = vld [vmem:[#allocation2 + $0x2] sm:$0xff]
      %v6337 = vld [vmem:[#allocation2 + $0xa] sm:$0xff]
      %v6338 = vld [vmem:[#allocation2 + $0x1a] sm:$0xff]
      %v6339 = vld [vmem:[#allocation2 + $0x22] sm:$0xff]
      %v6340 = vld [vmem:[#allocation2 + $0x32] sm:$0xff]
      %v6341 = vld [vmem:[#allocation2 + $0x3a] sm:$0xff]
      %v6342 = vld [vmem:[#allocation2 + $0x4a] sm:$0xff]
      %v6343 = vld [vmem:[#allocation2 + $0x52] sm:$0xff]
      %v6344 = vld [vmem:[#allocation2 + $0x62] sm:$0xff]
      %v6345 = vld [vmem:[#allocation2 + $0x6a] sm:$0xff]
      %v6346 = vld [vmem:[#allocation2 + $0x7a] sm:$0xff]
      %v6347 = vld [vmem:[#allocation2 + $0x82] sm:$0xff]
      %v6348 = vld [vmem:[#allocation2 + $0x92] sm:$0xff]
      %v6349 = vld [vmem:[#allocation2 + $0x9a] sm:$0xff]
      %v6350 = vld [vmem:[#allocation2 + $0xaa] sm:$0xff]
      %v6351 = vld [vmem:[#allocation2 + $0xb2] sm:$0xff]
      %v6352 = vld [vmem:[#allocation2 + $0xc2] sm:$0xff]
      %v6353 = vld [vmem:[#allocation2 + $0xca] sm:$0xff]
      %v6354 = vld [vmem:[#allocation2 + $0xda] sm:$0xff]
      %v6355 = vld [vmem:[#allocation2 + $0xe2] sm:$0xff]
      %v6356 = vld [vmem:[#allocation2 + $0xf2] sm:$0xff]
      %v6357 = vld [vmem:[#allocation2 + $0xfa] sm:$0xff]
      %v6358 = vld [vmem:[#allocation2 + $0x10a] sm:$0xff]
      %v6359 = vld [vmem:[#allocation2 + $0x112] sm:$0xff]
      %v6360 = vld [vmem:[#allocation2 + $0x122] sm:$0xff]
      %v6361 = vld [vmem:[#allocation2 + $0x12a] sm:$0xff]
      %v6362 = vld [vmem:[#allocation2 + $0x13a] sm:$0xff]
      %v6363 = vld [vmem:[#allocation2 + $0x142] sm:$0xff]
      %v6364 = vld [vmem:[#allocation2 + $0x152] sm:$0xff]
      %v6365 = vld [vmem:[#allocation2 + $0x15a] sm:$0xff]
      %v6366 = vld [vmem:[#allocation2 + $0x16a] sm:$0xff]
      %v6367 = vld [vmem:[#allocation2 + $0x172] sm:$0xff]
      %6400 = vrot.lane.b32.xlu0 %v6336, 8
      %v6401 = vpop.permute.xlu0 %6400
      %6402 = vrot.lane.b32.xlu0 %v6337, 8
      %v6403 = vpop.permute.xlu0 %6402
      %6404 = vrot.lane.b32.xlu0 %v6338, 8
      %v6405 = vpop.permute.xlu0 %6404
      %6406 = vrot.lane.b32.xlu0 %v6339, 8
      %v6407 = vpop.permute.xlu0 %6406
      %6408 = vrot.lane.b32.xlu0 %v6340, 8
      %v6409 = vpop.permute.xlu0 %6408
      %6410 = vrot.lane.b32.xlu0 %v6341, 8
      %v6411 = vpop.permute.xlu0 %6410
      %6412 = vrot.lane.b32.xlu0 %v6342, 8
      %v6413 = vpop.permute.xlu0 %6412
      %6414 = vrot.lane.b32.xlu0 %v6343, 8
      %v6415 = vpop.permute.xlu0 %6414
      %6416 = vrot.lane.b32.xlu0 %v6344, 8
      %v6417 = vpop.permute.xlu0 %6416
      %6418 = vrot.lane.b32.xlu0 %v6345, 8
      %v6419 = vpop.permute.xlu0 %6418
      %6420 = vrot.lane.b32.xlu0 %v6346, 8
      %v6421 = vpop.permute.xlu0 %6420
      %6422 = vrot.lane.b32.xlu0 %v6347, 8
      %v6423 = vpop.permute.xlu0 %6422
      %6424 = vrot.lane.b32.xlu0 %v6348, 8
      %v6425 = vpop.permute.xlu0 %6424
      %6426 = vrot.lane.b32.xlu0 %v6349, 8
      %v6427 = vpop.permute.xlu0 %6426
      %6428 = vrot.lane.b32.xlu0 %v6350, 8
      %v6429 = vpop.permute.xlu0 %6428
      %6430 = vrot.lane.b32.xlu0 %v6351, 8
      %v6431 = vpop.permute.xlu0 %6430
      %6432 = vrot.lane.b32.xlu0 %v6352, 8
      %v6433 = vpop.permute.xlu0 %6432
      %6434 = vrot.lane.b32.xlu0 %v6353, 8
      %v6435 = vpop.permute.xlu0 %6434
      %6436 = vrot.lane.b32.xlu0 %v6354, 8
      %v6437 = vpop.permute.xlu0 %6436
      %6438 = vrot.lane.b32.xlu0 %v6355, 8
      %v6439 = vpop.permute.xlu0 %6438
      %6440 = vrot.lane.b32.xlu0 %v6356, 8
      %v6441 = vpop.permute.xlu0 %6440
      %6442 = vrot.lane.b32.xlu0 %v6357, 8
      %v6443 = vpop.permute.xlu0 %6442
      %6444 = vrot.lane.b32.xlu0 %v6358, 8
      %v6445 = vpop.permute.xlu0 %6444
      %6446 = vrot.lane.b32.xlu0 %v6359, 8
      %v6447 = vpop.permute.xlu0 %6446
      %6448 = vrot.lane.b32.xlu0 %v6360, 8
      %v6449 = vpop.permute.xlu0 %6448
      %6450 = vrot.lane.b32.xlu0 %v6361, 8
      %v6451 = vpop.permute.xlu0 %6450
      %6452 = vrot.lane.b32.xlu0 %v6362, 8
      %v6453 = vpop.permute.xlu0 %6452
      %6454 = vrot.lane.b32.xlu0 %v6363, 8
      %v6455 = vpop.permute.xlu0 %6454
      %6456 = vrot.lane.b32.xlu0 %v6364, 8
      %v6457 = vpop.permute.xlu0 %6456
      %6458 = vrot.lane.b32.xlu0 %v6365, 8
      %v6459 = vpop.permute.xlu0 %6458
      %6460 = vrot.lane.b32.xlu0 %v6366, 8
      %v6461 = vpop.permute.xlu0 %6460
      %6462 = vrot.lane.b32.xlu0 %v6367, 8
      %v6463 = vpop.permute.xlu0 %6462
      %6496 = vst.msk [vmem:[#allocation3] sm:$0xff] %vm936, %v6401
      %6497 = vst.msk [vmem:[#allocation3 + $0x8] sm:$0xff] %vm936, %v6403
      %6498 = vst.msk [vmem:[#allocation3 + $0x10] sm:$0xff] %vm936, %v6405
      %6499 = vst.msk [vmem:[#allocation3 + $0x18] sm:$0xff] %vm936, %v6407
      %6500 = vst.msk [vmem:[#allocation3 + $0x20] sm:$0xff] %vm936, %v6409
      %6501 = vst.msk [vmem:[#allocation3 + $0x28] sm:$0xff] %vm936, %v6411
      %6502 = vst.msk [vmem:[#allocation3 + $0x30] sm:$0xff] %vm936, %v6413
      %6503 = vst.msk [vmem:[#allocation3 + $0x38] sm:$0xff] %vm936, %v6415
      %6504 = vst.msk [vmem:[#allocation3 + $0x40] sm:$0xff] %vm936, %v6417
      %6505 = vst.msk [vmem:[#allocation3 + $0x48] sm:$0xff] %vm936, %v6419
      %6506 = vst.msk [vmem:[#allocation3 + $0x50] sm:$0xff] %vm936, %v6421
      %6507 = vst.msk [vmem:[#allocation3 + $0x58] sm:$0xff] %vm936, %v6423
      %6508 = vst.msk [vmem:[#allocation3 + $0x60] sm:$0xff] %vm936, %v6425
      %6509 = vst.msk [vmem:[#allocation3 + $0x68] sm:$0xff] %vm936, %v6427
      %6510 = vst.msk [vmem:[#allocation3 + $0x70] sm:$0xff] %vm936, %v6429
      %6511 = vst.msk [vmem:[#allocation3 + $0x78] sm:$0xff] %vm936, %v6431
      %6512 = vst.msk [vmem:[#allocation3 + $0x80] sm:$0xff] %vm936, %v6433
      %6513 = vst.msk [vmem:[#allocation3 + $0x88] sm:$0xff] %vm936, %v6435
      %6514 = vst.msk [vmem:[#allocation3 + $0x90] sm:$0xff] %vm936, %v6437
      %6515 = vst.msk [vmem:[#allocation3 + $0x98] sm:$0xff] %vm936, %v6439
      %6516 = vst.msk [vmem:[#allocation3 + $0xa0] sm:$0xff] %vm936, %v6441
      %6517 = vst.msk [vmem:[#allocation3 + $0xa8] sm:$0xff] %vm936, %v6443
      %6518 = vst.msk [vmem:[#allocation3 + $0xb0] sm:$0xff] %vm936, %v6445
      %6519 = vst.msk [vmem:[#allocation3 + $0xb8] sm:$0xff] %vm936, %v6447
      %6520 = vst.msk [vmem:[#allocation3 + $0xc0] sm:$0xff] %vm936, %v6449
      %6521 = vst.msk [vmem:[#allocation3 + $0xc8] sm:$0xff] %vm936, %v6451
      %6522 = vst.msk [vmem:[#allocation3 + $0xd0] sm:$0xff] %vm936, %v6453
      %6523 = vst.msk [vmem:[#allocation3 + $0xd8] sm:$0xff] %vm936, %v6455
      %6524 = vst.msk [vmem:[#allocation3 + $0xe0] sm:$0xff] %vm936, %v6457
      %6525 = vst.msk [vmem:[#allocation3 + $0xe8] sm:$0xff] %vm936, %v6459
      %6526 = vst.msk [vmem:[#allocation3 + $0xf0] sm:$0xff] %vm936, %v6461
      %6527 = vst.msk [vmem:[#allocation3 + $0xf8] sm:$0xff] %vm936, %v6463
      %v6528 = vld [vmem:[%s407] sm:$0xff]
      %v6529 = vld [vmem:[%s407 + $0x8] sm:$0xff]
      %v6530 = vld [vmem:[%s407 + $0x18] sm:$0xff]
      %v6531 = vld [vmem:[%s407 + $0x20] sm:$0xff]
      %v6532 = vld [vmem:[%s407 + $0x30] sm:$0xff]
      %v6533 = vld [vmem:[%s407 + $0x38] sm:$0xff]
      %v6534 = vld [vmem:[%s407 + $0x48] sm:$0xff]
      %v6535 = vld [vmem:[%s407 + $0x50] sm:$0xff]
      %v6536 = vld [vmem:[%s407 + $0x60] sm:$0xff]
      %v6537 = vld [vmem:[%s407 + $0x68] sm:$0xff]
      %v6538 = vld [vmem:[%s407 + $0x78] sm:$0xff]
      %v6539 = vld [vmem:[%s407 + $0x80] sm:$0xff]
      %v6540 = vld [vmem:[%s407 + $0x90] sm:$0xff]
      %v6541 = vld [vmem:[%s407 + $0x98] sm:$0xff]
      %v6542 = vld [vmem:[%s407 + $0xa8] sm:$0xff]
      %v6543 = vld [vmem:[%s407 + $0xb0] sm:$0xff]
      %v6544 = vld [vmem:[%s407 + $0xc0] sm:$0xff]
      %v6545 = vld [vmem:[%s407 + $0xc8] sm:$0xff]
      %v6546 = vld [vmem:[%s407 + $0xd8] sm:$0xff]
      %v6547 = vld [vmem:[%s407 + $0xe0] sm:$0xff]
      %v6548 = vld [vmem:[%s407 + $0xf0] sm:$0xff]
      %v6549 = vld [vmem:[%s407 + $0xf8] sm:$0xff]
      %v6550 = vld [vmem:[%s407 + $0x108] sm:$0xff]
      %v6551 = vld [vmem:[%s407 + $0x110] sm:$0xff]
      %v6552 = vld [vmem:[%s407 + $0x120] sm:$0xff]
      %v6553 = vld [vmem:[%s407 + $0x128] sm:$0xff]
      %v6554 = vld [vmem:[%s407 + $0x138] sm:$0xff]
      %v6555 = vld [vmem:[%s407 + $0x140] sm:$0xff]
      %v6556 = vld [vmem:[%s407 + $0x150] sm:$0xff]
      %v6557 = vld [vmem:[%s407 + $0x158] sm:$0xff]
      %v6558 = vld [vmem:[%s407 + $0x168] sm:$0xff]
      %v6559 = vld [vmem:[%s407 + $0x170] sm:$0xff]
      %6592 = vrot.lane.b32.xlu0 %v6528, 12
      %v6593 = vpop.permute.xlu0 %6592
      %6594 = vrot.lane.b32.xlu0 %v6529, 12
      %v6595 = vpop.permute.xlu0 %6594
      %6596 = vrot.lane.b32.xlu0 %v6530, 12
      %v6597 = vpop.permute.xlu0 %6596
      %6598 = vrot.lane.b32.xlu0 %v6531, 12
      %v6599 = vpop.permute.xlu0 %6598
      %6600 = vrot.lane.b32.xlu0 %v6532, 12
      %v6601 = vpop.permute.xlu0 %6600
      %6602 = vrot.lane.b32.xlu0 %v6533, 12
      %v6603 = vpop.permute.xlu0 %6602
      %6604 = vrot.lane.b32.xlu0 %v6534, 12
      %v6605 = vpop.permute.xlu0 %6604
      %6606 = vrot.lane.b32.xlu0 %v6535, 12
      %v6607 = vpop.permute.xlu0 %6606
      %6608 = vrot.lane.b32.xlu0 %v6536, 12
      %v6609 = vpop.permute.xlu0 %6608
      %6610 = vrot.lane.b32.xlu0 %v6537, 12
      %v6611 = vpop.permute.xlu0 %6610
      %6612 = vrot.lane.b32.xlu0 %v6538, 12
      %v6613 = vpop.permute.xlu0 %6612
      %6614 = vrot.lane.b32.xlu0 %v6539, 12
      %v6615 = vpop.permute.xlu0 %6614
      %6616 = vrot.lane.b32.xlu0 %v6540, 12
      %v6617 = vpop.permute.xlu0 %6616
      %6618 = vrot.lane.b32.xlu0 %v6541, 12
      %v6619 = vpop.permute.xlu0 %6618
      %6620 = vrot.lane.b32.xlu0 %v6542, 12
      %v6621 = vpop.permute.xlu0 %6620
      %6622 = vrot.lane.b32.xlu0 %v6543, 12
      %v6623 = vpop.permute.xlu0 %6622
      %6624 = vrot.lane.b32.xlu0 %v6544, 12
      %v6625 = vpop.permute.xlu0 %6624
      %6626 = vrot.lane.b32.xlu0 %v6545, 12
      %v6627 = vpop.permute.xlu0 %6626
      %6628 = vrot.lane.b32.xlu0 %v6546, 12
      %v6629 = vpop.permute.xlu0 %6628
      %6630 = vrot.lane.b32.xlu0 %v6547, 12
      %v6631 = vpop.permute.xlu0 %6630
      %6632 = vrot.lane.b32.xlu0 %v6548, 12
      %v6633 = vpop.permute.xlu0 %6632
      %6634 = vrot.lane.b32.xlu0 %v6549, 12
      %v6635 = vpop.permute.xlu0 %6634
      %6636 = vrot.lane.b32.xlu0 %v6550, 12
      %v6637 = vpop.permute.xlu0 %6636
      %6638 = vrot.lane.b32.xlu0 %v6551, 12
      %v6639 = vpop.permute.xlu0 %6638
      %6640 = vrot.lane.b32.xlu0 %v6552, 12
      %v6641 = vpop.permute.xlu0 %6640
      %6642 = vrot.lane.b32.xlu0 %v6553, 12
      %v6643 = vpop.permute.xlu0 %6642
      %6644 = vrot.lane.b32.xlu0 %v6554, 12
      %v6645 = vpop.permute.xlu0 %6644
      %6646 = vrot.lane.b32.xlu0 %v6555, 12
      %v6647 = vpop.permute.xlu0 %6646
      %6648 = vrot.lane.b32.xlu0 %v6556, 12
      %v6649 = vpop.permute.xlu0 %6648
      %6650 = vrot.lane.b32.xlu0 %v6557, 12
      %v6651 = vpop.permute.xlu0 %6650
      %6652 = vrot.lane.b32.xlu0 %v6558, 12
      %v6653 = vpop.permute.xlu0 %6652
      %6654 = vrot.lane.b32.xlu0 %v6559, 12
      %v6655 = vpop.permute.xlu0 %6654
      %6688 = vst.msk [vmem:[#allocation3] sm:$0xff] %vm1129, %v6593
      %6689 = vst.msk [vmem:[#allocation3 + $0x8] sm:$0xff] %vm1129, %v6595
      %6690 = vst.msk [vmem:[#allocation3 + $0x10] sm:$0xff] %vm1129, %v6597
      %6691 = vst.msk [vmem:[#allocation3 + $0x18] sm:$0xff] %vm1129, %v6599
      %6692 = vst.msk [vmem:[#allocation3 + $0x20] sm:$0xff] %vm1129, %v6601
      %6693 = vst.msk [vmem:[#allocation3 + $0x28] sm:$0xff] %vm1129, %v6603
      %6694 = vst.msk [vmem:[#allocation3 + $0x30] sm:$0xff] %vm1129, %v6605
      %6695 = vst.msk [vmem:[#allocation3 + $0x38] sm:$0xff] %vm1129, %v6607
      %6696 = vst.msk [vmem:[#allocation3 + $0x40] sm:$0xff] %vm1129, %v6609
      %6697 = vst.msk [vmem:[#allocation3 + $0x48] sm:$0xff] %vm1129, %v6611
      %6698 = vst.msk [vmem:[#allocation3 + $0x50] sm:$0xff] %vm1129, %v6613
      %6699 = vst.msk [vmem:[#allocation3 + $0x58] sm:$0xff] %vm1129, %v6615
      %6700 = vst.msk [vmem:[#allocation3 + $0x60] sm:$0xff] %vm1129, %v6617
      %6701 = vst.msk [vmem:[#allocation3 + $0x68] sm:$0xff] %vm1129, %v6619
      %6702 = vst.msk [vmem:[#allocation3 + $0x70] sm:$0xff] %vm1129, %v6621
      %6703 = vst.msk [vmem:[#allocation3 + $0x78] sm:$0xff] %vm1129, %v6623
      %6704 = vst.msk [vmem:[#allocation3 + $0x80] sm:$0xff] %vm1129, %v6625
      %6705 = vst.msk [vmem:[#allocation3 + $0x88] sm:$0xff] %vm1129, %v6627
      %6706 = vst.msk [vmem:[#allocation3 + $0x90] sm:$0xff] %vm1129, %v6629
      %6707 = vst.msk [vmem:[#allocation3 + $0x98] sm:$0xff] %vm1129, %v6631
      %6708 = vst.msk [vmem:[#allocation3 + $0xa0] sm:$0xff] %vm1129, %v6633
      %6709 = vst.msk [vmem:[#allocation3 + $0xa8] sm:$0xff] %vm1129, %v6635
      %6710 = vst.msk [vmem:[#allocation3 + $0xb0] sm:$0xff] %vm1129, %v6637
      %6711 = vst.msk [vmem:[#allocation3 + $0xb8] sm:$0xff] %vm1129, %v6639
      %6712 = vst.msk [vmem:[#allocation3 + $0xc0] sm:$0xff] %vm1129, %v6641
      %6713 = vst.msk [vmem:[#allocation3 + $0xc8] sm:$0xff] %vm1129, %v6643
      %6714 = vst.msk [vmem:[#allocation3 + $0xd0] sm:$0xff] %vm1129, %v6645
      %6715 = vst.msk [vmem:[#allocation3 + $0xd8] sm:$0xff] %vm1129, %v6647
      %6716 = vst.msk [vmem:[#allocation3 + $0xe0] sm:$0xff] %vm1129, %v6649
      %6717 = vst.msk [vmem:[#allocation3 + $0xe8] sm:$0xff] %vm1129, %v6651
      %6718 = vst.msk [vmem:[#allocation3 + $0xf0] sm:$0xff] %vm1129, %v6653
      %6719 = vst.msk [vmem:[#allocation3 + $0xf8] sm:$0xff] %vm1129, %v6655
      %v6720 = vld [vmem:[%s407 + $0x1] sm:$0xff]
      %v6721 = vld [vmem:[%s407 + $0x9] sm:$0xff]
      %v6722 = vld [vmem:[%s407 + $0x19] sm:$0xff]
      %v6723 = vld [vmem:[%s407 + $0x21] sm:$0xff]
      %v6724 = vld [vmem:[%s407 + $0x31] sm:$0xff]
      %v6725 = vld [vmem:[%s407 + $0x39] sm:$0xff]
      %v6726 = vld [vmem:[%s407 + $0x49] sm:$0xff]
      %v6727 = vld [vmem:[%s407 + $0x51] sm:$0xff]
      %v6728 = vld [vmem:[%s407 + $0x61] sm:$0xff]
      %v6729 = vld [vmem:[%s407 + $0x69] sm:$0xff]
      %v6730 = vld [vmem:[%s407 + $0x79] sm:$0xff]
      %v6731 = vld [vmem:[%s407 + $0x81] sm:$0xff]
      %v6732 = vld [vmem:[%s407 + $0x91] sm:$0xff]
      %v6733 = vld [vmem:[%s407 + $0x99] sm:$0xff]
      %v6734 = vld [vmem:[%s407 + $0xa9] sm:$0xff]
      %v6735 = vld [vmem:[%s407 + $0xb1] sm:$0xff]
      %v6736 = vld [vmem:[%s407 + $0xc1] sm:$0xff]
      %v6737 = vld [vmem:[%s407 + $0xc9] sm:$0xff]
      %v6738 = vld [vmem:[%s407 + $0xd9] sm:$0xff]
      %v6739 = vld [vmem:[%s407 + $0xe1] sm:$0xff]
      %v6740 = vld [vmem:[%s407 + $0xf1] sm:$0xff]
      %v6741 = vld [vmem:[%s407 + $0xf9] sm:$0xff]
      %v6742 = vld [vmem:[%s407 + $0x109] sm:$0xff]
      %v6743 = vld [vmem:[%s407 + $0x111] sm:$0xff]
      %v6744 = vld [vmem:[%s407 + $0x121] sm:$0xff]
      %v6745 = vld [vmem:[%s407 + $0x129] sm:$0xff]
      %v6746 = vld [vmem:[%s407 + $0x139] sm:$0xff]
      %v6747 = vld [vmem:[%s407 + $0x141] sm:$0xff]
      %v6748 = vld [vmem:[%s407 + $0x151] sm:$0xff]
      %v6749 = vld [vmem:[%s407 + $0x159] sm:$0xff]
      %v6750 = vld [vmem:[%s407 + $0x169] sm:$0xff]
      %v6751 = vld [vmem:[%s407 + $0x171] sm:$0xff]
      %6784 = vrot.lane.b32.xlu0 %v6720, 16
      %v6785 = vpop.permute.xlu0 %6784
      %6786 = vrot.lane.b32.xlu0 %v6721, 16
      %v6787 = vpop.permute.xlu0 %6786
      %6788 = vrot.lane.b32.xlu0 %v6722, 16
      %v6789 = vpop.permute.xlu0 %6788
      %6790 = vrot.lane.b32.xlu0 %v6723, 16
      %v6791 = vpop.permute.xlu0 %6790
      %6792 = vrot.lane.b32.xlu0 %v6724, 16
      %v6793 = vpop.permute.xlu0 %6792
      %6794 = vrot.lane.b32.xlu0 %v6725, 16
      %v6795 = vpop.permute.xlu0 %6794
      %6796 = vrot.lane.b32.xlu0 %v6726, 16
      %v6797 = vpop.permute.xlu0 %6796
      %6798 = vrot.lane.b32.xlu0 %v6727, 16
      %v6799 = vpop.permute.xlu0 %6798
      %6800 = vrot.lane.b32.xlu0 %v6728, 16
      %v6801 = vpop.permute.xlu0 %6800
      %6802 = vrot.lane.b32.xlu0 %v6729, 16
      %v6803 = vpop.permute.xlu0 %6802
      %6804 = vrot.lane.b32.xlu0 %v6730, 16
      %v6805 = vpop.permute.xlu0 %6804
      %6806 = vrot.lane.b32.xlu0 %v6731, 16
      %v6807 = vpop.permute.xlu0 %6806
      %6808 = vrot.lane.b32.xlu0 %v6732, 16
      %v6809 = vpop.permute.xlu0 %6808
      %6810 = vrot.lane.b32.xlu0 %v6733, 16
      %v6811 = vpop.permute.xlu0 %6810
      %6812 = vrot.lane.b32.xlu0 %v6734, 16
      %v6813 = vpop.permute.xlu0 %6812
      %6814 = vrot.lane.b32.xlu0 %v6735, 16
      %v6815 = vpop.permute.xlu0 %6814
      %6816 = vrot.lane.b32.xlu0 %v6736, 16
      %v6817 = vpop.permute.xlu0 %6816
      %6818 = vrot.lane.b32.xlu0 %v6737, 16
      %v6819 = vpop.permute.xlu0 %6818
      %6820 = vrot.lane.b32.xlu0 %v6738, 16
      %v6821 = vpop.permute.xlu0 %6820
      %6822 = vrot.lane.b32.xlu0 %v6739, 16
      %v6823 = vpop.permute.xlu0 %6822
      %6824 = vrot.lane.b32.xlu0 %v6740, 16
      %v6825 = vpop.permute.xlu0 %6824
      %6826 = vrot.lane.b32.xlu0 %v6741, 16
      %v6827 = vpop.permute.xlu0 %6826
      %6828 = vrot.lane.b32.xlu0 %v6742, 16
      %v6829 = vpop.permute.xlu0 %6828
      %6830 = vrot.lane.b32.xlu0 %v6743, 16
      %v6831 = vpop.permute.xlu0 %6830
      %6832 = vrot.lane.b32.xlu0 %v6744, 16
      %v6833 = vpop.permute.xlu0 %6832
      %6834 = vrot.lane.b32.xlu0 %v6745, 16
      %v6835 = vpop.permute.xlu0 %6834
      %6836 = vrot.lane.b32.xlu0 %v6746, 16
      %v6837 = vpop.permute.xlu0 %6836
      %6838 = vrot.lane.b32.xlu0 %v6747, 16
      %v6839 = vpop.permute.xlu0 %6838
      %6840 = vrot.lane.b32.xlu0 %v6748, 16
      %v6841 = vpop.permute.xlu0 %6840
      %6842 = vrot.lane.b32.xlu0 %v6749, 16
      %v6843 = vpop.permute.xlu0 %6842
      %6844 = vrot.lane.b32.xlu0 %v6750, 16
      %v6845 = vpop.permute.xlu0 %6844
      %6846 = vrot.lane.b32.xlu0 %v6751, 16
      %v6847 = vpop.permute.xlu0 %6846
      %6880 = vst.msk [vmem:[#allocation3] sm:$0xff] %vm1322, %v6785
      %6881 = vst.msk [vmem:[#allocation3 + $0x8] sm:$0xff] %vm1322, %v6787
      %6882 = vst.msk [vmem:[#allocation3 + $0x10] sm:$0xff] %vm1322, %v6789
      %6883 = vst.msk [vmem:[#allocation3 + $0x18] sm:$0xff] %vm1322, %v6791
      %6884 = vst.msk [vmem:[#allocation3 + $0x20] sm:$0xff] %vm1322, %v6793
      %6885 = vst.msk [vmem:[#allocation3 + $0x28] sm:$0xff] %vm1322, %v6795
      %6886 = vst.msk [vmem:[#allocation3 + $0x30] sm:$0xff] %vm1322, %v6797
      %6887 = vst.msk [vmem:[#allocation3 + $0x38] sm:$0xff] %vm1322, %v6799
      %6888 = vst.msk [vmem:[#allocation3 + $0x40] sm:$0xff] %vm1322, %v6801
      %6889 = vst.msk [vmem:[#allocation3 + $0x48] sm:$0xff] %vm1322, %v6803
      %6890 = vst.msk [vmem:[#allocation3 + $0x50] sm:$0xff] %vm1322, %v6805
      %6891 = vst.msk [vmem:[#allocation3 + $0x58] sm:$0xff] %vm1322, %v6807
      %6892 = vst.msk [vmem:[#allocation3 + $0x60] sm:$0xff] %vm1322, %v6809
      %6893 = vst.msk [vmem:[#allocation3 + $0x68] sm:$0xff] %vm1322, %v6811
      %6894 = vst.msk [vmem:[#allocation3 + $0x70] sm:$0xff] %vm1322, %v6813
      %6895 = vst.msk [vmem:[#allocation3 + $0x78] sm:$0xff] %vm1322, %v6815
      %6896 = vst.msk [vmem:[#allocation3 + $0x80] sm:$0xff] %vm1322, %v6817
      %6897 = vst.msk [vmem:[#allocation3 + $0x88] sm:$0xff] %vm1322, %v6819
      %6898 = vst.msk [vmem:[#allocation3 + $0x90] sm:$0xff] %vm1322, %v6821
      %6899 = vst.msk [vmem:[#allocation3 + $0x98] sm:$0xff] %vm1322, %v6823
      %6900 = vst.msk [vmem:[#allocation3 + $0xa0] sm:$0xff] %vm1322, %v6825
      %6901 = vst.msk [vmem:[#allocation3 + $0xa8] sm:$0xff] %vm1322, %v6827
      %6902 = vst.msk [vmem:[#allocation3 + $0xb0] sm:$0xff] %vm1322, %v6829
      %6903 = vst.msk [vmem:[#allocation3 + $0xb8] sm:$0xff] %vm1322, %v6831
      %6904 = vst.msk [vmem:[#allocation3 + $0xc0] sm:$0xff] %vm1322, %v6833
      %6905 = vst.msk [vmem:[#allocation3 + $0xc8] sm:$0xff] %vm1322, %v6835
      %6906 = vst.msk [vmem:[#allocation3 + $0xd0] sm:$0xff] %vm1322, %v6837
      %6907 = vst.msk [vmem:[#allocation3 + $0xd8] sm:$0xff] %vm1322, %v6839
      %6908 = vst.msk [vmem:[#allocation3 + $0xe0] sm:$0xff] %vm1322, %v6841
      %6909 = vst.msk [vmem:[#allocation3 + $0xe8] sm:$0xff] %vm1322, %v6843
      %6910 = vst.msk [vmem:[#allocation3 + $0xf0] sm:$0xff] %vm1322, %v6845
      %6911 = vst.msk [vmem:[#allocation3 + $0xf8] sm:$0xff] %vm1322, %v6847
      %v6912 = vld [vmem:[%s407 + $0x2] sm:$0xff]
      %v6913 = vld [vmem:[%s407 + $0xa] sm:$0xff]
      %v6914 = vld [vmem:[%s407 + $0x1a] sm:$0xff]
      %v6915 = vld [vmem:[%s407 + $0x22] sm:$0xff]
      %v6916 = vld [vmem:[%s407 + $0x32] sm:$0xff]
      %v6917 = vld [vmem:[%s407 + $0x3a] sm:$0xff]
      %v6918 = vld [vmem:[%s407 + $0x4a] sm:$0xff]
      %v6919 = vld [vmem:[%s407 + $0x52] sm:$0xff]
      %v6920 = vld [vmem:[%s407 + $0x62] sm:$0xff]
      %v6921 = vld [vmem:[%s407 + $0x6a] sm:$0xff]
      %v6922 = vld [vmem:[%s407 + $0x7a] sm:$0xff]
      %v6923 = vld [vmem:[%s407 + $0x82] sm:$0xff]
      %v6924 = vld [vmem:[%s407 + $0x92] sm:$0xff]
      %v6925 = vld [vmem:[%s407 + $0x9a] sm:$0xff]
      %v6926 = vld [vmem:[%s407 + $0xaa] sm:$0xff]
      %v6927 = vld [vmem:[%s407 + $0xb2] sm:$0xff]
      %v6928 = vld [vmem:[%s407 + $0xc2] sm:$0xff]
      %v6929 = vld [vmem:[%s407 + $0xca] sm:$0xff]
      %v6930 = vld [vmem:[%s407 + $0xda] sm:$0xff]
      %v6931 = vld [vmem:[%s407 + $0xe2] sm:$0xff]
      %v6932 = vld [vmem:[%s407 + $0xf2] sm:$0xff]
      %v6933 = vld [vmem:[%s407 + $0xfa] sm:$0xff]
      %v6934 = vld [vmem:[%s407 + $0x10a] sm:$0xff]
      %v6935 = vld [vmem:[%s407 + $0x112] sm:$0xff]
      %v6936 = vld [vmem:[%s407 + $0x122] sm:$0xff]
      %v6937 = vld [vmem:[%s407 + $0x12a] sm:$0xff]
      %v6938 = vld [vmem:[%s407 + $0x13a] sm:$0xff]
      %v6939 = vld [vmem:[%s407 + $0x142] sm:$0xff]
      %v6940 = vld [vmem:[%s407 + $0x152] sm:$0xff]
      %v6941 = vld [vmem:[%s407 + $0x15a] sm:$0xff]
      %v6942 = vld [vmem:[%s407 + $0x16a] sm:$0xff]
      %v6943 = vld [vmem:[%s407 + $0x172] sm:$0xff]
      %6976 = vrot.lane.b32.xlu0 %v6912, 20
      %v6977 = vpop.permute.xlu0 %6976
      %6978 = vrot.lane.b32.xlu0 %v6913, 20
      %v6979 = vpop.permute.xlu0 %6978
      %6980 = vrot.lane.b32.xlu0 %v6914, 20
      %v6981 = vpop.permute.xlu0 %6980
      %6982 = vrot.lane.b32.xlu0 %v6915, 20
      %v6983 = vpop.permute.xlu0 %6982
      %6984 = vrot.lane.b32.xlu0 %v6916, 20
      %v6985 = vpop.permute.xlu0 %6984
      %6986 = vrot.lane.b32.xlu0 %v6917, 20
      %v6987 = vpop.permute.xlu0 %6986
      %6988 = vrot.lane.b32.xlu0 %v6918, 20
      %v6989 = vpop.permute.xlu0 %6988
      %6990 = vrot.lane.b32.xlu0 %v6919, 20
      %v6991 = vpop.permute.xlu0 %6990
      %6992 = vrot.lane.b32.xlu0 %v6920, 20
      %v6993 = vpop.permute.xlu0 %6992
      %6994 = vrot.lane.b32.xlu0 %v6921, 20
      %v6995 = vpop.permute.xlu0 %6994
      %6996 = vrot.lane.b32.xlu0 %v6922, 20
      %v6997 = vpop.permute.xlu0 %6996
      %6998 = vrot.lane.b32.xlu0 %v6923, 20
      %v6999 = vpop.permute.xlu0 %6998
      %7000 = vrot.lane.b32.xlu0 %v6924, 20
      %v7001 = vpop.permute.xlu0 %7000
      %7002 = vrot.lane.b32.xlu0 %v6925, 20
      %v7003 = vpop.permute.xlu0 %7002
      %7004 = vrot.lane.b32.xlu0 %v6926, 20
      %v7005 = vpop.permute.xlu0 %7004
      %7006 = vrot.lane.b32.xlu0 %v6927, 20
      %v7007 = vpop.permute.xlu0 %7006
      %7008 = vrot.lane.b32.xlu0 %v6928, 20
      %v7009 = vpop.permute.xlu0 %7008
      %7010 = vrot.lane.b32.xlu0 %v6929, 20
      %v7011 = vpop.permute.xlu0 %7010
      %7012 = vrot.lane.b32.xlu0 %v6930, 20
      %v7013 = vpop.permute.xlu0 %7012
      %7014 = vrot.lane.b32.xlu0 %v6931, 20
      %v7015 = vpop.permute.xlu0 %7014
      %7016 = vrot.lane.b32.xlu0 %v6932, 20
      %v7017 = vpop.permute.xlu0 %7016
      %7018 = vrot.lane.b32.xlu0 %v6933, 20
      %v7019 = vpop.permute.xlu0 %7018
      %7020 = vrot.lane.b32.xlu0 %v6934, 20
      %v7021 = vpop.permute.xlu0 %7020
      %7022 = vrot.lane.b32.xlu0 %v6935, 20
      %v7023 = vpop.permute.xlu0 %7022
      %7024 = vrot.lane.b32.xlu0 %v6936, 20
      %v7025 = vpop.permute.xlu0 %7024
      %7026 = vrot.lane.b32.xlu0 %v6937, 20
      %v7027 = vpop.permute.xlu0 %7026
      %7028 = vrot.lane.b32.xlu0 %v6938, 20
      %v7029 = vpop.permute.xlu0 %7028
      %7030 = vrot.lane.b32.xlu0 %v6939, 20
      %v7031 = vpop.permute.xlu0 %7030
      %7032 = vrot.lane.b32.xlu0 %v6940, 20
      %v7033 = vpop.permute.xlu0 %7032
      %7034 = vrot.lane.b32.xlu0 %v6941, 20
      %v7035 = vpop.permute.xlu0 %7034
      %7036 = vrot.lane.b32.xlu0 %v6942, 20
      %v7037 = vpop.permute.xlu0 %7036
      %7038 = vrot.lane.b32.xlu0 %v6943, 20
      %v7039 = vpop.permute.xlu0 %7038
      %7072 = vst.msk [vmem:[#allocation3] sm:$0xff] %vm1515, %v6977
      %7073 = vst.msk [vmem:[#allocation3 + $0x8] sm:$0xff] %vm1515, %v6979
      %7074 = vst.msk [vmem:[#allocation3 + $0x10] sm:$0xff] %vm1515, %v6981
      %7075 = vst.msk [vmem:[#allocation3 + $0x18] sm:$0xff] %vm1515, %v6983
      %7076 = vst.msk [vmem:[#allocation3 + $0x20] sm:$0xff] %vm1515, %v6985
      %7077 = vst.msk [vmem:[#allocation3 + $0x28] sm:$0xff] %vm1515, %v6987
      %7078 = vst.msk [vmem:[#allocation3 + $0x30] sm:$0xff] %vm1515, %v6989
      %7079 = vst.msk [vmem:[#allocation3 + $0x38] sm:$0xff] %vm1515, %v6991
      %7080 = vst.msk [vmem:[#allocation3 + $0x40] sm:$0xff] %vm1515, %v6993
      %7081 = vst.msk [vmem:[#allocation3 + $0x48] sm:$0xff] %vm1515, %v6995
      %7082 = vst.msk [vmem:[#allocation3 + $0x50] sm:$0xff] %vm1515, %v6997
      %7083 = vst.msk [vmem:[#allocation3 + $0x58] sm:$0xff] %vm1515, %v6999
      %7084 = vst.msk [vmem:[#allocation3 + $0x60] sm:$0xff] %vm1515, %v7001
      %7085 = vst.msk [vmem:[#allocation3 + $0x68] sm:$0xff] %vm1515, %v7003
      %7086 = vst.msk [vmem:[#allocation3 + $0x70] sm:$0xff] %vm1515, %v7005
      %7087 = vst.msk [vmem:[#allocation3 + $0x78] sm:$0xff] %vm1515, %v7007
      %7088 = vst.msk [vmem:[#allocation3 + $0x80] sm:$0xff] %vm1515, %v7009
      %7089 = vst.msk [vmem:[#allocation3 + $0x88] sm:$0xff] %vm1515, %v7011
      %7090 = vst.msk [vmem:[#allocation3 + $0x90] sm:$0xff] %vm1515, %v7013
      %7091 = vst.msk [vmem:[#allocation3 + $0x98] sm:$0xff] %vm1515, %v7015
      %7092 = vst.msk [vmem:[#allocation3 + $0xa0] sm:$0xff] %vm1515, %v7017
      %7093 = vst.msk [vmem:[#allocation3 + $0xa8] sm:$0xff] %vm1515, %v7019
      %7094 = vst.msk [vmem:[#allocation3 + $0xb0] sm:$0xff] %vm1515, %v7021
      %7095 = vst.msk [vmem:[#allocation3 + $0xb8] sm:$0xff] %vm1515, %v7023
      %7096 = vst.msk [vmem:[#allocation3 + $0xc0] sm:$0xff] %vm1515, %v7025
      %7097 = vst.msk [vmem:[#allocation3 + $0xc8] sm:$0xff] %vm1515, %v7027
      %7098 = vst.msk [vmem:[#allocation3 + $0xd0] sm:$0xff] %vm1515, %v7029
      %7099 = vst.msk [vmem:[#allocation3 + $0xd8] sm:$0xff] %vm1515, %v7031
      %7100 = vst.msk [vmem:[#allocation3 + $0xe0] sm:$0xff] %vm1515, %v7033
      %7101 = vst.msk [vmem:[#allocation3 + $0xe8] sm:$0xff] %vm1515, %v7035
      %7102 = vst.msk [vmem:[#allocation3 + $0xf0] sm:$0xff] %vm1515, %v7037
      %7103 = vst.msk [vmem:[#allocation3 + $0xf8] sm:$0xff] %vm1515, %v7039
      %v7104 = vld [vmem:[%s1548] sm:$0xff]
      %v7105 = vld [vmem:[%s1548 + $0x8] sm:$0xff]
      %v7106 = vld [vmem:[%s1548 + $0x18] sm:$0xff]
      %v7107 = vld [vmem:[%s1548 + $0x20] sm:$0xff]
      %v7108 = vld [vmem:[%s1548 + $0x30] sm:$0xff]
      %v7109 = vld [vmem:[%s1548 + $0x38] sm:$0xff]
      %v7110 = vld [vmem:[%s1548 + $0x48] sm:$0xff]
      %v7111 = vld [vmem:[%s1548 + $0x50] sm:$0xff]
      %v7112 = vld [vmem:[%s1548 + $0x60] sm:$0xff]
      %v7113 = vld [vmem:[%s1548 + $0x68] sm:$0xff]
      %v7114 = vld [vmem:[%s1548 + $0x78] sm:$0xff]
      %v7115 = vld [vmem:[%s1548 + $0x80] sm:$0xff]
      %v7116 = vld [vmem:[%s1548 + $0x90] sm:$0xff]
      %v7117 = vld [vmem:[%s1548 + $0x98] sm:$0xff]
      %v7118 = vld [vmem:[%s1548 + $0xa8] sm:$0xff]
      %v7119 = vld [vmem:[%s1548 + $0xb0] sm:$0xff]
      %v7120 = vld [vmem:[%s1548 + $0xc0] sm:$0xff]
      %v7121 = vld [vmem:[%s1548 + $0xc8] sm:$0xff]
      %v7122 = vld [vmem:[%s1548 + $0xd8] sm:$0xff]
      %v7123 = vld [vmem:[%s1548 + $0xe0] sm:$0xff]
      %v7124 = vld [vmem:[%s1548 + $0xf0] sm:$0xff]
      %v7125 = vld [vmem:[%s1548 + $0xf8] sm:$0xff]
      %v7126 = vld [vmem:[%s1548 + $0x108] sm:$0xff]
      %v7127 = vld [vmem:[%s1548 + $0x110] sm:$0xff]
      %v7128 = vld [vmem:[%s1548 + $0x120] sm:$0xff]
      %v7129 = vld [vmem:[%s1548 + $0x128] sm:$0xff]
      %v7130 = vld [vmem:[%s1548 + $0x138] sm:$0xff]
      %v7131 = vld [vmem:[%s1548 + $0x140] sm:$0xff]
      %v7132 = vld [vmem:[%s1548 + $0x150] sm:$0xff]
      %v7133 = vld [vmem:[%s1548 + $0x158] sm:$0xff]
      %v7134 = vld [vmem:[%s1548 + $0x168] sm:$0xff]
      %v7135 = vld [vmem:[%s1548 + $0x170] sm:$0xff]
      %7168 = vrot.lane.b32.xlu0 %v7104, 24
      %v7169 = vpop.permute.xlu0 %7168
      %7170 = vrot.lane.b32.xlu0 %v7105, 24
      %v7171 = vpop.permute.xlu0 %7170
      %7172 = vrot.lane.b32.xlu0 %v7106, 24
      %v7173 = vpop.permute.xlu0 %7172
      %7174 = vrot.lane.b32.xlu0 %v7107, 24
      %v7175 = vpop.permute.xlu0 %7174
      %7176 = vrot.lane.b32.xlu0 %v7108, 24
      %v7177 = vpop.permute.xlu0 %7176
      %7178 = vrot.lane.b32.xlu0 %v7109, 24
      %v7179 = vpop.permute.xlu0 %7178
      %7180 = vrot.lane.b32.xlu0 %v7110, 24
      %v7181 = vpop.permute.xlu0 %7180
      %7182 = vrot.lane.b32.xlu0 %v7111, 24
      %v7183 = vpop.permute.xlu0 %7182
      %7184 = vrot.lane.b32.xlu0 %v7112, 24
      %v7185 = vpop.permute.xlu0 %7184
      %7186 = vrot.lane.b32.xlu0 %v7113, 24
      %v7187 = vpop.permute.xlu0 %7186
      %7188 = vrot.lane.b32.xlu0 %v7114, 24
      %v7189 = vpop.permute.xlu0 %7188
      %7190 = vrot.lane.b32.xlu0 %v7115, 24
      %v7191 = vpop.permute.xlu0 %7190
      %7192 = vrot.lane.b32.xlu0 %v7116, 24
      %v7193 = vpop.permute.xlu0 %7192
      %7194 = vrot.lane.b32.xlu0 %v7117, 24
      %v7195 = vpop.permute.xlu0 %7194
      %7196 = vrot.lane.b32.xlu0 %v7118, 24
      %v7197 = vpop.permute.xlu0 %7196
      %7198 = vrot.lane.b32.xlu0 %v7119, 24
      %v7199 = vpop.permute.xlu0 %7198
      %7200 = vrot.lane.b32.xlu0 %v7120, 24
      %v7201 = vpop.permute.xlu0 %7200
      %7202 = vrot.lane.b32.xlu0 %v7121, 24
      %v7203 = vpop.permute.xlu0 %7202
      %7204 = vrot.lane.b32.xlu0 %v7122, 24
      %v7205 = vpop.permute.xlu0 %7204
      %7206 = vrot.lane.b32.xlu0 %v7123, 24
      %v7207 = vpop.permute.xlu0 %7206
      %7208 = vrot.lane.b32.xlu0 %v7124, 24
      %v7209 = vpop.permute.xlu0 %7208
      %7210 = vrot.lane.b32.xlu0 %v7125, 24
      %v7211 = vpop.permute.xlu0 %7210
      %7212 = vrot.lane.b32.xlu0 %v7126, 24
      %v7213 = vpop.permute.xlu0 %7212
      %7214 = vrot.lane.b32.xlu0 %v7127, 24
      %v7215 = vpop.permute.xlu0 %7214
      %7216 = vrot.lane.b32.xlu0 %v7128, 24
      %v7217 = vpop.permute.xlu0 %7216
      %7218 = vrot.lane.b32.xlu0 %v7129, 24
      %v7219 = vpop.permute.xlu0 %7218
      %7220 = vrot.lane.b32.xlu0 %v7130, 24
      %v7221 = vpop.permute.xlu0 %7220
      %7222 = vrot.lane.b32.xlu0 %v7131, 24
      %v7223 = vpop.permute.xlu0 %7222
      %7224 = vrot.lane.b32.xlu0 %v7132, 24
      %v7225 = vpop.permute.xlu0 %7224
      %7226 = vrot.lane.b32.xlu0 %v7133, 24
      %v7227 = vpop.permute.xlu0 %7226
      %7228 = vrot.lane.b32.xlu0 %v7134, 24
      %v7229 = vpop.permute.xlu0 %7228
      %7230 = vrot.lane.b32.xlu0 %v7135, 24
      %v7231 = vpop.permute.xlu0 %7230
      %7264 = vst.msk [vmem:[#allocation3] sm:$0xff] %vm1709, %v7169
      %7265 = vst.msk [vmem:[#allocation3 + $0x8] sm:$0xff] %vm1709, %v7171
      %7266 = vst.msk [vmem:[#allocation3 + $0x10] sm:$0xff] %vm1709, %v7173
      %7267 = vst.msk [vmem:[#allocation3 + $0x18] sm:$0xff] %vm1709, %v7175
      %7268 = vst.msk [vmem:[#allocation3 + $0x20] sm:$0xff] %vm1709, %v7177
      %7269 = vst.msk [vmem:[#allocation3 + $0x28] sm:$0xff] %vm1709, %v7179
      %7270 = vst.msk [vmem:[#allocation3 + $0x30] sm:$0xff] %vm1709, %v7181
      %7271 = vst.msk [vmem:[#allocation3 + $0x38] sm:$0xff] %vm1709, %v7183
      %7272 = vst.msk [vmem:[#allocation3 + $0x40] sm:$0xff] %vm1709, %v7185
      %7273 = vst.msk [vmem:[#allocation3 + $0x48] sm:$0xff] %vm1709, %v7187
      %7274 = vst.msk [vmem:[#allocation3 + $0x50] sm:$0xff] %vm1709, %v7189
      %7275 = vst.msk [vmem:[#allocation3 + $0x58] sm:$0xff] %vm1709, %v7191
      %7276 = vst.msk [vmem:[#allocation3 + $0x60] sm:$0xff] %vm1709, %v7193
      %7277 = vst.msk [vmem:[#allocation3 + $0x68] sm:$0xff] %vm1709, %v7195
      %7278 = vst.msk [vmem:[#allocation3 + $0x70] sm:$0xff] %vm1709, %v7197
      %7279 = vst.msk [vmem:[#allocation3 + $0x78] sm:$0xff] %vm1709, %v7199
      %7280 = vst.msk [vmem:[#allocation3 + $0x80] sm:$0xff] %vm1709, %v7201
      %7281 = vst.msk [vmem:[#allocation3 + $0x88] sm:$0xff] %vm1709, %v7203
      %7282 = vst.msk [vmem:[#allocation3 + $0x90] sm:$0xff] %vm1709, %v7205
      %7283 = vst.msk [vmem:[#allocation3 + $0x98] sm:$0xff] %vm1709, %v7207
      %7284 = vst.msk [vmem:[#allocation3 + $0xa0] sm:$0xff] %vm1709, %v7209
      %7285 = vst.msk [vmem:[#allocation3 + $0xa8] sm:$0xff] %vm1709, %v7211
      %7286 = vst.msk [vmem:[#allocation3 + $0xb0] sm:$0xff] %vm1709, %v7213
      %7287 = vst.msk [vmem:[#allocation3 + $0xb8] sm:$0xff] %vm1709, %v7215
      %7288 = vst.msk [vmem:[#allocation3 + $0xc0] sm:$0xff] %vm1709, %v7217
      %7289 = vst.msk [vmem:[#allocation3 + $0xc8] sm:$0xff] %vm1709, %v7219
      %7290 = vst.msk [vmem:[#allocation3 + $0xd0] sm:$0xff] %vm1709, %v7221
      %7291 = vst.msk [vmem:[#allocation3 + $0xd8] sm:$0xff] %vm1709, %v7223
      %7292 = vst.msk [vmem:[#allocation3 + $0xe0] sm:$0xff] %vm1709, %v7225
      %7293 = vst.msk [vmem:[#allocation3 + $0xe8] sm:$0xff] %vm1709, %v7227
      %7294 = vst.msk [vmem:[#allocation3 + $0xf0] sm:$0xff] %vm1709, %v7229
      %7295 = vst.msk [vmem:[#allocation3 + $0xf8] sm:$0xff] %vm1709, %v7231
      %v7296 = vld [vmem:[%s1548 + $0x1] sm:$0xff]
      %v7297 = vld [vmem:[%s1548 + $0x9] sm:$0xff]
      %v7298 = vld [vmem:[%s1548 + $0x19] sm:$0xff]
      %v7299 = vld [vmem:[%s1548 + $0x21] sm:$0xff]
      %v7300 = vld [vmem:[%s1548 + $0x31] sm:$0xff]
      %v7301 = vld [vmem:[%s1548 + $0x39] sm:$0xff]
      %v7302 = vld [vmem:[%s1548 + $0x49] sm:$0xff]
      %v7303 = vld [vmem:[%s1548 + $0x51] sm:$0xff]
      %v7304 = vld [vmem:[%s1548 + $0x61] sm:$0xff]
      %v7305 = vld [vmem:[%s1548 + $0x69] sm:$0xff]
      %v7306 = vld [vmem:[%s1548 + $0x79] sm:$0xff]
      %v7307 = vld [vmem:[%s1548 + $0x81] sm:$0xff]
      %v7308 = vld [vmem:[%s1548 + $0x91] sm:$0xff]
      %v7309 = vld [vmem:[%s1548 + $0x99] sm:$0xff]
      %v7310 = vld [vmem:[%s1548 + $0xa9] sm:$0xff]
      %v7311 = vld [vmem:[%s1548 + $0xb1] sm:$0xff]
      %v7312 = vld [vmem:[%s1548 + $0xc1] sm:$0xff]
      %v7313 = vld [vmem:[%s1548 + $0xc9] sm:$0xff]
      %v7314 = vld [vmem:[%s1548 + $0xd9] sm:$0xff]
      %v7315 = vld [vmem:[%s1548 + $0xe1] sm:$0xff]
      %v7316 = vld [vmem:[%s1548 + $0xf1] sm:$0xff]
      %v7317 = vld [vmem:[%s1548 + $0xf9] sm:$0xff]
      %v7318 = vld [vmem:[%s1548 + $0x109] sm:$0xff]
      %v7319 = vld [vmem:[%s1548 + $0x111] sm:$0xff]
      %v7320 = vld [vmem:[%s1548 + $0x121] sm:$0xff]
      %v7321 = vld [vmem:[%s1548 + $0x129] sm:$0xff]
      %v7322 = vld [vmem:[%s1548 + $0x139] sm:$0xff]
      %v7323 = vld [vmem:[%s1548 + $0x141] sm:$0xff]
      %v7324 = vld [vmem:[%s1548 + $0x151] sm:$0xff]
      %v7325 = vld [vmem:[%s1548 + $0x159] sm:$0xff]
      %v7326 = vld [vmem:[%s1548 + $0x169] sm:$0xff]
      %v7327 = vld [vmem:[%s1548 + $0x171] sm:$0xff]
      %7360 = vrot.lane.b32.xlu0 %v7296, 28
      %v7361 = vpop.permute.xlu0 %7360
      %7362 = vrot.lane.b32.xlu0 %v7297, 28
      %v7363 = vpop.permute.xlu0 %7362
      %7364 = vrot.lane.b32.xlu0 %v7298, 28
      %v7365 = vpop.permute.xlu0 %7364
      %7366 = vrot.lane.b32.xlu0 %v7299, 28
      %v7367 = vpop.permute.xlu0 %7366
      %7368 = vrot.lane.b32.xlu0 %v7300, 28
      %v7369 = vpop.permute.xlu0 %7368
      %7370 = vrot.lane.b32.xlu0 %v7301, 28
      %v7371 = vpop.permute.xlu0 %7370
      %7372 = vrot.lane.b32.xlu0 %v7302, 28
      %v7373 = vpop.permute.xlu0 %7372
      %7374 = vrot.lane.b32.xlu0 %v7303, 28
      %v7375 = vpop.permute.xlu0 %7374
      %7376 = vrot.lane.b32.xlu0 %v7304, 28
      %v7377 = vpop.permute.xlu0 %7376
      %7378 = vrot.lane.b32.xlu0 %v7305, 28
      %v7379 = vpop.permute.xlu0 %7378
      %7380 = vrot.lane.b32.xlu0 %v7306, 28
      %v7381 = vpop.permute.xlu0 %7380
      %7382 = vrot.lane.b32.xlu0 %v7307, 28
      %v7383 = vpop.permute.xlu0 %7382
      %7384 = vrot.lane.b32.xlu0 %v7308, 28
      %v7385 = vpop.permute.xlu0 %7384
      %7386 = vrot.lane.b32.xlu0 %v7309, 28
      %v7387 = vpop.permute.xlu0 %7386
      %7388 = vrot.lane.b32.xlu0 %v7310, 28
      %v7389 = vpop.permute.xlu0 %7388
      %7390 = vrot.lane.b32.xlu0 %v7311, 28
      %v7391 = vpop.permute.xlu0 %7390
      %7392 = vrot.lane.b32.xlu0 %v7312, 28
      %v7393 = vpop.permute.xlu0 %7392
      %7394 = vrot.lane.b32.xlu0 %v7313, 28
      %v7395 = vpop.permute.xlu0 %7394
      %7396 = vrot.lane.b32.xlu0 %v7314, 28
      %v7397 = vpop.permute.xlu0 %7396
      %7398 = vrot.lane.b32.xlu0 %v7315, 28
      %v7399 = vpop.permute.xlu0 %7398
      %7400 = vrot.lane.b32.xlu0 %v7316, 28
      %v7401 = vpop.permute.xlu0 %7400
      %7402 = vrot.lane.b32.xlu0 %v7317, 28
      %v7403 = vpop.permute.xlu0 %7402
      %7404 = vrot.lane.b32.xlu0 %v7318, 28
      %v7405 = vpop.permute.xlu0 %7404
      %7406 = vrot.lane.b32.xlu0 %v7319, 28
      %v7407 = vpop.permute.xlu0 %7406
      %7408 = vrot.lane.b32.xlu0 %v7320, 28
      %v7409 = vpop.permute.xlu0 %7408
      %7410 = vrot.lane.b32.xlu0 %v7321, 28
      %v7411 = vpop.permute.xlu0 %7410
      %7412 = vrot.lane.b32.xlu0 %v7322, 28
      %v7413 = vpop.permute.xlu0 %7412
      %7414 = vrot.lane.b32.xlu0 %v7323, 28
      %v7415 = vpop.permute.xlu0 %7414
      %7416 = vrot.lane.b32.xlu0 %v7324, 28
      %v7417 = vpop.permute.xlu0 %7416
      %7418 = vrot.lane.b32.xlu0 %v7325, 28
      %v7419 = vpop.permute.xlu0 %7418
      %7420 = vrot.lane.b32.xlu0 %v7326, 28
      %v7421 = vpop.permute.xlu0 %7420
      %7422 = vrot.lane.b32.xlu0 %v7327, 28
      %v7423 = vpop.permute.xlu0 %7422
      %7456 = vst.msk [vmem:[#allocation3] sm:$0xff] %vm1902, %v7361
      %7457 = vst.msk [vmem:[#allocation3 + $0x8] sm:$0xff] %vm1902, %v7363
      %7458 = vst.msk [vmem:[#allocation3 + $0x10] sm:$0xff] %vm1902, %v7365
      %7459 = vst.msk [vmem:[#allocation3 + $0x18] sm:$0xff] %vm1902, %v7367
      %7460 = vst.msk [vmem:[#allocation3 + $0x20] sm:$0xff] %vm1902, %v7369
      %7461 = vst.msk [vmem:[#allocation3 + $0x28] sm:$0xff] %vm1902, %v7371
      %7462 = vst.msk [vmem:[#allocation3 + $0x30] sm:$0xff] %vm1902, %v7373
      %7463 = vst.msk [vmem:[#allocation3 + $0x38] sm:$0xff] %vm1902, %v7375
      %7464 = vst.msk [vmem:[#allocation3 + $0x40] sm:$0xff] %vm1902, %v7377
      %7465 = vst.msk [vmem:[#allocation3 + $0x48] sm:$0xff] %vm1902, %v7379
      %7466 = vst.msk [vmem:[#allocation3 + $0x50] sm:$0xff] %vm1902, %v7381
      %7467 = vst.msk [vmem:[#allocation3 + $0x58] sm:$0xff] %vm1902, %v7383
      %7468 = vst.msk [vmem:[#allocation3 + $0x60] sm:$0xff] %vm1902, %v7385
      %7469 = vst.msk [vmem:[#allocation3 + $0x68] sm:$0xff] %vm1902, %v7387
      %7470 = vst.msk [vmem:[#allocation3 + $0x70] sm:$0xff] %vm1902, %v7389
      %7471 = vst.msk [vmem:[#allocation3 + $0x78] sm:$0xff] %vm1902, %v7391
      %7472 = vst.msk [vmem:[#allocation3 + $0x80] sm:$0xff] %vm1902, %v7393
      %7473 = vst.msk [vmem:[#allocation3 + $0x88] sm:$0xff] %vm1902, %v7395
      %7474 = vst.msk [vmem:[#allocation3 + $0x90] sm:$0xff] %vm1902, %v7397
      %7475 = vst.msk [vmem:[#allocation3 + $0x98] sm:$0xff] %vm1902, %v7399
      %7476 = vst.msk [vmem:[#allocation3 + $0xa0] sm:$0xff] %vm1902, %v7401
      %7477 = vst.msk [vmem:[#allocation3 + $0xa8] sm:$0xff] %vm1902, %v7403
      %7478 = vst.msk [vmem:[#allocation3 + $0xb0] sm:$0xff] %vm1902, %v7405
      %7479 = vst.msk [vmem:[#allocation3 + $0xb8] sm:$0xff] %vm1902, %v7407
      %7480 = vst.msk [vmem:[#allocation3 + $0xc0] sm:$0xff] %vm1902, %v7409
      %7481 = vst.msk [vmem:[#allocation3 + $0xc8] sm:$0xff] %vm1902, %v7411
      %7482 = vst.msk [vmem:[#allocation3 + $0xd0] sm:$0xff] %vm1902, %v7413
      %7483 = vst.msk [vmem:[#allocation3 + $0xd8] sm:$0xff] %vm1902, %v7415
      %7484 = vst.msk [vmem:[#allocation3 + $0xe0] sm:$0xff] %vm1902, %v7417
      %7485 = vst.msk [vmem:[#allocation3 + $0xe8] sm:$0xff] %vm1902, %v7419
      %7486 = vst.msk [vmem:[#allocation3 + $0xf0] sm:$0xff] %vm1902, %v7421
      %7487 = vst.msk [vmem:[#allocation3 + $0xf8] sm:$0xff] %vm1902, %v7423
      %v7488 = vld [vmem:[%s1548 + $0x2] sm:$0xff]
      %v7489 = vld [vmem:[%s1548 + $0xa] sm:$0xff]
      %v7490 = vld [vmem:[%s1548 + $0x1a] sm:$0xff]
      %v7491 = vld [vmem:[%s1548 + $0x22] sm:$0xff]
      %v7492 = vld [vmem:[%s1548 + $0x32] sm:$0xff]
      %v7493 = vld [vmem:[%s1548 + $0x3a] sm:$0xff]
      %v7494 = vld [vmem:[%s1548 + $0x4a] sm:$0xff]
      %v7495 = vld [vmem:[%s1548 + $0x52] sm:$0xff]
      %v7496 = vld [vmem:[%s1548 + $0x62] sm:$0xff]
      %v7497 = vld [vmem:[%s1548 + $0x6a] sm:$0xff]
      %v7498 = vld [vmem:[%s1548 + $0x7a] sm:$0xff]
      %v7499 = vld [vmem:[%s1548 + $0x82] sm:$0xff]
      %v7500 = vld [vmem:[%s1548 + $0x92] sm:$0xff]
      %v7501 = vld [vmem:[%s1548 + $0x9a] sm:$0xff]
      %v7502 = vld [vmem:[%s1548 + $0xaa] sm:$0xff]
      %v7503 = vld [vmem:[%s1548 + $0xb2] sm:$0xff]
      %v7504 = vld [vmem:[%s1548 + $0xc2] sm:$0xff]
      %v7505 = vld [vmem:[%s1548 + $0xca] sm:$0xff]
      %v7506 = vld [vmem:[%s1548 + $0xda] sm:$0xff]
      %v7507 = vld [vmem:[%s1548 + $0xe2] sm:$0xff]
      %v7508 = vld [vmem:[%s1548 + $0xf2] sm:$0xff]
      %v7509 = vld [vmem:[%s1548 + $0xfa] sm:$0xff]
      %v7510 = vld [vmem:[%s1548 + $0x10a] sm:$0xff]
      %v7511 = vld [vmem:[%s1548 + $0x112] sm:$0xff]
      %v7512 = vld [vmem:[%s1548 + $0x122] sm:$0xff]
      %v7513 = vld [vmem:[%s1548 + $0x12a] sm:$0xff]
      %v7514 = vld [vmem:[%s1548 + $0x13a] sm:$0xff]
      %v7515 = vld [vmem:[%s1548 + $0x142] sm:$0xff]
      %v7516 = vld [vmem:[%s1548 + $0x152] sm:$0xff]
      %v7517 = vld [vmem:[%s1548 + $0x15a] sm:$0xff]
      %v7518 = vld [vmem:[%s1548 + $0x16a] sm:$0xff]
      %v7519 = vld [vmem:[%s1548 + $0x172] sm:$0xff]
      %7552 = vrot.lane.b32.xlu0 %v7488, 32
      %v7553 = vpop.permute.xlu0 %7552
      %7554 = vrot.lane.b32.xlu0 %v7489, 32
      %v7555 = vpop.permute.xlu0 %7554
      %7556 = vrot.lane.b32.xlu0 %v7490, 32
      %v7557 = vpop.permute.xlu0 %7556
      %7558 = vrot.lane.b32.xlu0 %v7491, 32
      %v7559 = vpop.permute.xlu0 %7558
      %7560 = vrot.lane.b32.xlu0 %v7492, 32
      %v7561 = vpop.permute.xlu0 %7560
      %7562 = vrot.lane.b32.xlu0 %v7493, 32
      %v7563 = vpop.permute.xlu0 %7562
      %7564 = vrot.lane.b32.xlu0 %v7494, 32
      %v7565 = vpop.permute.xlu0 %7564
      %7566 = vrot.lane.b32.xlu0 %v7495, 32
      %v7567 = vpop.permute.xlu0 %7566
      %7568 = vrot.lane.b32.xlu0 %v7496, 32
      %v7569 = vpop.permute.xlu0 %7568
      %7570 = vrot.lane.b32.xlu0 %v7497, 32
      %v7571 = vpop.permute.xlu0 %7570
      %7572 = vrot.lane.b32.xlu0 %v7498, 32
      %v7573 = vpop.permute.xlu0 %7572
      %7574 = vrot.lane.b32.xlu0 %v7499, 32
      %v7575 = vpop.permute.xlu0 %7574
      %7576 = vrot.lane.b32.xlu0 %v7500, 32
      %v7577 = vpop.permute.xlu0 %7576
      %7578 = vrot.lane.b32.xlu0 %v7501, 32
      %v7579 = vpop.permute.xlu0 %7578
      %7580 = vrot.lane.b32.xlu0 %v7502, 32
      %v7581 = vpop.permute.xlu0 %7580
      %7582 = vrot.lane.b32.xlu0 %v7503, 32
      %v7583 = vpop.permute.xlu0 %7582
      %7584 = vrot.lane.b32.xlu0 %v7504, 32
      %v7585 = vpop.permute.xlu0 %7584
      %7586 = vrot.lane.b32.xlu0 %v7505, 32
      %v7587 = vpop.permute.xlu0 %7586
      %7588 = vrot.lane.b32.xlu0 %v7506, 32
      %v7589 = vpop.permute.xlu0 %7588
      %7590 = vrot.lane.b32.xlu0 %v7507, 32
      %v7591 = vpop.permute.xlu0 %7590
      %7592 = vrot.lane.b32.xlu0 %v7508, 32
      %v7593 = vpop.permute.xlu0 %7592
      %7594 = vrot.lane.b32.xlu0 %v7509, 32
      %v7595 = vpop.permute.xlu0 %7594
      %7596 = vrot.lane.b32.xlu0 %v7510, 32
      %v7597 = vpop.permute.xlu0 %7596
      %7598 = vrot.lane.b32.xlu0 %v7511, 32
      %v7599 = vpop.permute.xlu0 %7598
      %7600 = vrot.lane.b32.xlu0 %v7512, 32
      %v7601 = vpop.permute.xlu0 %7600
      %7602 = vrot.lane.b32.xlu0 %v7513, 32
      %v7603 = vpop.permute.xlu0 %7602
      %7604 = vrot.lane.b32.xlu0 %v7514, 32
      %v7605 = vpop.permute.xlu0 %7604
      %7606 = vrot.lane.b32.xlu0 %v7515, 32
      %v7607 = vpop.permute.xlu0 %7606
      %7608 = vrot.lane.b32.xlu0 %v7516, 32
      %v7609 = vpop.permute.xlu0 %7608
      %7610 = vrot.lane.b32.xlu0 %v7517, 32
      %v7611 = vpop.permute.xlu0 %7610
      %7612 = vrot.lane.b32.xlu0 %v7518, 32
      %v7613 = vpop.permute.xlu0 %7612
      %7614 = vrot.lane.b32.xlu0 %v7519, 32
      %v7615 = vpop.permute.xlu0 %7614
      %7648 = vst.msk [vmem:[#allocation3] sm:$0xff] %vm2095, %v7553
      %7649 = vst.msk [vmem:[#allocation3 + $0x8] sm:$0xff] %vm2095, %v7555
      %7650 = vst.msk [vmem:[#allocation3 + $0x10] sm:$0xff] %vm2095, %v7557
      %7651 = vst.msk [vmem:[#allocation3 + $0x18] sm:$0xff] %vm2095, %v7559
      %7652 = vst.msk [vmem:[#allocation3 + $0x20] sm:$0xff] %vm2095, %v7561
      %7653 = vst.msk [vmem:[#allocation3 + $0x28] sm:$0xff] %vm2095, %v7563
      %7654 = vst.msk [vmem:[#allocation3 + $0x30] sm:$0xff] %vm2095, %v7565
      %7655 = vst.msk [vmem:[#allocation3 + $0x38] sm:$0xff] %vm2095, %v7567
      %7656 = vst.msk [vmem:[#allocation3 + $0x40] sm:$0xff] %vm2095, %v7569
      %7657 = vst.msk [vmem:[#allocation3 + $0x48] sm:$0xff] %vm2095, %v7571
      %7658 = vst.msk [vmem:[#allocation3 + $0x50] sm:$0xff] %vm2095, %v7573
      %7659 = vst.msk [vmem:[#allocation3 + $0x58] sm:$0xff] %vm2095, %v7575
      %7660 = vst.msk [vmem:[#allocation3 + $0x60] sm:$0xff] %vm2095, %v7577
      %7661 = vst.msk [vmem:[#allocation3 + $0x68] sm:$0xff] %vm2095, %v7579
      %7662 = vst.msk [vmem:[#allocation3 + $0x70] sm:$0xff] %vm2095, %v7581
      %7663 = vst.msk [vmem:[#allocation3 + $0x78] sm:$0xff] %vm2095, %v7583
      %7664 = vst.msk [vmem:[#allocation3 + $0x80] sm:$0xff] %vm2095, %v7585
      %7665 = vst.msk [vmem:[#allocation3 + $0x88] sm:$0xff] %vm2095, %v7587
      %7666 = vst.msk [vmem:[#allocation3 + $0x90] sm:$0xff] %vm2095, %v7589
      %7667 = vst.msk [vmem:[#allocation3 + $0x98] sm:$0xff] %vm2095, %v7591
      %7668 = vst.msk [vmem:[#allocation3 + $0xa0] sm:$0xff] %vm2095, %v7593
      %7669 = vst.msk [vmem:[#allocation3 + $0xa8] sm:$0xff] %vm2095, %v7595
      %7670 = vst.msk [vmem:[#allocation3 + $0xb0] sm:$0xff] %vm2095, %v7597
      %7671 = vst.msk [vmem:[#allocation3 + $0xb8] sm:$0xff] %vm2095, %v7599
      %7672 = vst.msk [vmem:[#allocation3 + $0xc0] sm:$0xff] %vm2095, %v7601
      %7673 = vst.msk [vmem:[#allocation3 + $0xc8] sm:$0xff] %vm2095, %v7603
      %7674 = vst.msk [vmem:[#allocation3 + $0xd0] sm:$0xff] %vm2095, %v7605
      %7675 = vst.msk [vmem:[#allocation3 + $0xd8] sm:$0xff] %vm2095, %v7607
      %7676 = vst.msk [vmem:[#allocation3 + $0xe0] sm:$0xff] %vm2095, %v7609
      %7677 = vst.msk [vmem:[#allocation3 + $0xe8] sm:$0xff] %vm2095, %v7611
      %7678 = vst.msk [vmem:[#allocation3 + $0xf0] sm:$0xff] %vm2095, %v7613
      %7679 = vst.msk [vmem:[#allocation3 + $0xf8] sm:$0xff] %vm2095, %v7615
      %v7680 = vld [vmem:[#allocation3] sm:$0xff]
      %v7681 = vld [vmem:[#allocation3 + $0x8] sm:$0xff]
      %v7682 = vld [vmem:[#allocation3 + $0x10] sm:$0xff]
      %v7683 = vld [vmem:[#allocation3 + $0x18] sm:$0xff]
      %v7684 = vld [vmem:[#allocation3 + $0x20] sm:$0xff]
      %v7685 = vld [vmem:[#allocation3 + $0x28] sm:$0xff]
      %v7686 = vld [vmem:[#allocation3 + $0x30] sm:$0xff]
      %v7687 = vld [vmem:[#allocation3 + $0x38] sm:$0xff]
      %v7688 = vld [vmem:[#allocation3 + $0x40] sm:$0xff]
      %v7689 = vld [vmem:[#allocation3 + $0x48] sm:$0xff]
      %v7690 = vld [vmem:[#allocation3 + $0x50] sm:$0xff]
      %v7691 = vld [vmem:[#allocation3 + $0x58] sm:$0xff]
      %v7692 = vld [vmem:[#allocation3 + $0x60] sm:$0xff]
      %v7693 = vld [vmem:[#allocation3 + $0x68] sm:$0xff]
      %v7694 = vld [vmem:[#allocation3 + $0x70] sm:$0xff]
      %v7695 = vld [vmem:[#allocation3 + $0x78] sm:$0xff]
      %v7696 = vld [vmem:[#allocation3 + $0x80] sm:$0xff]
      %v7697 = vld [vmem:[#allocation3 + $0x88] sm:$0xff]
      %v7698 = vld [vmem:[#allocation3 + $0x90] sm:$0xff]
      %v7699 = vld [vmem:[#allocation3 + $0x98] sm:$0xff]
      %v7700 = vld [vmem:[#allocation3 + $0xa0] sm:$0xff]
      %v7701 = vld [vmem:[#allocation3 + $0xa8] sm:$0xff]
      %v7702 = vld [vmem:[#allocation3 + $0xb0] sm:$0xff]
      %v7703 = vld [vmem:[#allocation3 + $0xb8] sm:$0xff]
      %v7704 = vld [vmem:[#allocation3 + $0xc0] sm:$0xff]
      %v7705 = vld [vmem:[#allocation3 + $0xc8] sm:$0xff]
      %v7706 = vld [vmem:[#allocation3 + $0xd0] sm:$0xff]
      %v7707 = vld [vmem:[#allocation3 + $0xd8] sm:$0xff]
      %v7708 = vld [vmem:[#allocation3 + $0xe0] sm:$0xff]
      %v7709 = vld [vmem:[#allocation3 + $0xe8] sm:$0xff]
      %v7710 = vld [vmem:[#allocation3 + $0xf0] sm:$0xff]
      %v7711 = vld [vmem:[#allocation3 + $0xf8] sm:$0xff]
      %v7712 = vld [vmem:[%s8] sm:$0xff]
      %v7713 = vld [vmem:[%s8 + $0x8] sm:$0xff]
      %v7714 = vld [vmem:[%s8 + $0x10] sm:$0xff]
      %v7715 = vld [vmem:[%s8 + $0x18] sm:$0xff]
      %v7716 = vld [vmem:[%s8 + $0x20] sm:$0xf]
      %v7717 = vld [vmem:[%s9] sm:$0x1]
      %v7719 = vlaneseq
      %v7720 = vshrl.u32 %v7719, 7
      %v7721 = vsub.s32 0, %v7720
      %v7722 = vrot.slane %v7717, %v7721
      %v7725 = vsel %vm2172, %v7680, 0
      %v7728 = vsel %vm2172, %v7681, 0
      %v7731 = vsel %vm2172, %v7682, 0
      %v7734 = vsel %vm2172, %v7683, 0
      %v7737 = vsel %vm2172, %v7684, 0
      %v7740 = vsel %vm2172, %v7685, 0
      %v7743 = vsel %vm2172, %v7686, 0
      %v7746 = vsel %vm2172, %v7687, 0
      %v7749 = vsel %vm2172, %v7688, 0
      %v7752 = vsel %vm2172, %v7689, 0
      %v7755 = vsel %vm2172, %v7690, 0
      %v7758 = vsel %vm2172, %v7691, 0
      %v7761 = vsel %vm2172, %v7692, 0
      %v7764 = vsel %vm2172, %v7693, 0
      %v7767 = vsel %vm2172, %v7694, 0
      %v7770 = vsel %vm2172, %v7695, 0
      %v7773 = vsel %vm2172, %v7696, 0
      %v7776 = vsel %vm2172, %v7697, 0
      %v7779 = vsel %vm2172, %v7698, 0
      %v7782 = vsel %vm2172, %v7699, 0
      %v7785 = vsel %vm2172, %v7700, 0
      %v7788 = vsel %vm2172, %v7701, 0
      %v7791 = vsel %vm2172, %v7702, 0
      %v7794 = vsel %vm2172, %v7703, 0
      %v7797 = vsel %vm2172, %v7704, 0
      %v7800 = vsel %vm2172, %v7705, 0
      %v7803 = vsel %vm2172, %v7706, 0
      %v7806 = vsel %vm2172, %v7707, 0
      %v7809 = vsel %vm2172, %v7708, 0
      %v7812 = vsel %vm2172, %v7709, 0
      %v7815 = vsel %vm2172, %v7710, 0
      %v7818 = vsel %vm2172, %v7711, 0
      %v7821 = vsel %vm2269, %v7716, 0
      %7823 = vmatprep.subr.mxu0 0.0
      %7824 = vmatpush1.msra.mxu0 %v7712
      %7825 = vmatprep.subr.mxu0 0.0
      %7826 = vmatpush1.msra.mxu0 %v7713
      %7827 = vmatprep.subr.mxu0 0.0
      %7828 = vmatpush1.msra.mxu0 %v7714
      %7829 = vmatprep.subr.mxu0 0.0
      %7830 = vmatpush1.msra.mxu0 %v7715
      %7831 = vmatprep.subr.mxu0 0.0
      %7832 = vmatpush1.msra.mxu0 %v7821
      %7833 = vmatprep.subr.mxu0 0.0
      %7834 = vmatpush1.msra.mxu0 0.0
      %7835 = vmatprep.subr.mxu0 0.0
      %7836 = vmatpush1.msra.mxu0 0.0
      %7837 = vmatprep.subr.mxu0 0.0
      %7838 = vmatpush1.msra.mxu0 0.0
      %7839 = vmatprep.subr.mxu0 0.0
      %7840 = vmatpush1.msra.mxu0 0.0
      %7841 = vmatprep.subr.mxu0 0.0
      %7842 = vmatpush1.msra.mxu0 0.0
      %7843 = vmatprep.subr.mxu0 0.0
      %7844 = vmatpush1.msra.mxu0 0.0
      %7845 = vmatprep.subr.mxu0 0.0
      %7846 = vmatpush1.msra.mxu0 0.0
      %7847 = vmatprep.subr.mxu0 0.0
      %7848 = vmatpush1.msra.mxu0 0.0
      %7849 = vmatprep.subr.mxu0 0.0
      %7850 = vmatpush1.msra.mxu0 0.0
      %7851 = vmatprep.subr.mxu0 0.0
      %7852 = vmatpush1.msra.mxu0 0.0
      %7853 = vmatprep.subr.mxu0 0.0
      %7854 = vmatpush1.msra.mxu0 0.0
      %7855 = vmatprep.subr.mxu0 0.0
      %7856 = vmatpush1.msra.mxu0 0.0
      %7857 = vmatprep.subr.mxu0 0.0
      %7858 = vmatpush1.msra.mxu0 0.0
      %7859 = vmatprep.subr.mxu0 0.0
      %7860 = vmatpush1.msra.mxu0 0.0
      %7861 = vmatprep.subr.mxu0 0.0
      %7862 = vmatpush1.msra.mxu0 0.0
      %7863 = vmatprep.subr.mxu0 0.0
      %7864 = vmatpush1.msra.mxu0 0.0
      %7865 = vmatprep.subr.mxu0 0.0
      %7866 = vmatpush1.msra.mxu0 0.0
      %7867 = vmatprep.subr.mxu0 0.0
      %7868 = vmatpush1.msra.mxu0 0.0
      %7869 = vmatprep.subr.mxu0 0.0
      %7870 = vmatpush1.msra.mxu0 0.0
      %7871 = vmatprep.subr.mxu0 0.0
      %7872 = vmatpush1.msra.mxu0 0.0
      %7873 = vmatprep.subr.mxu0 0.0
      %7874 = vmatpush1.msra.mxu0 0.0
      %7875 = vmatprep.subr.mxu0 0.0
      %7876 = vmatpush1.msra.mxu0 0.0
      %7877 = vmatprep.subr.mxu0 0.0
      %7878 = vmatpush1.msra.mxu0 0.0
      %7879 = vmatprep.subr.mxu0 0.0
      %7880 = vmatpush1.msra.mxu0 0.0
      %7881 = vmatprep.subr.mxu0 0.0
      %7882 = vmatpush1.msra.mxu0 0.0
      %7883 = vmatprep.subr.mxu0 0.0
      %7884 = vmatpush1.msra.mxu0 0.0
      %7885 = vmatprep.subr.mxu0 0.0
      %7886 = vmatpush1.msra.mxu0 0.0
      %7887 = vmatprep.mubr.f32.mxu0 0.0
      %7888 = vmatmul.mubr.f32.gmra.mrb[0].mxu0 %v7725
      %v7889 = vpop.f32.mrb[0].mxu0
      %v7890 = vadd.f32 %v7722, %v7889
      %v7891 = vpop.f32.mrb[0].mxu0
      %7892 = vmatprep.mubr.f32.mxu0 0.0
      %7893 = vmatmul.mubr.f32.gmra.mrb[0].mxu0 %v7728
      %v7894 = vpop.f32.mrb[0].mxu0
      %v7895 = vadd.f32 %v7722, %v7894
      %v7896 = vpop.f32.mrb[0].mxu0
      %7897 = vmatprep.mubr.f32.mxu0 0.0
      %7898 = vmatmul.mubr.f32.gmra.mrb[0].mxu0 %v7731
      %v7899 = vpop.f32.mrb[0].mxu0
      %v7900 = vadd.f32 %v7722, %v7899
      %v7901 = vpop.f32.mrb[0].mxu0
      %7902 = vmatprep.mubr.f32.mxu0 0.0
      %7903 = vmatmul.mubr.f32.gmra.mrb[0].mxu0 %v7734
      %v7904 = vpop.f32.mrb[0].mxu0
      %v7905 = vadd.f32 %v7722, %v7904
      %v7906 = vpop.f32.mrb[0].mxu0
      %7907 = vmatprep.mubr.f32.mxu0 0.0
      %7908 = vmatmul.mubr.f32.gmra.mrb[0].mxu0 %v7737
      %v7909 = vpop.f32.mrb[0].mxu0
      %v7910 = vadd.f32 %v7722, %v7909
      %v7911 = vpop.f32.mrb[0].mxu0
      %7912 = vmatprep.mubr.f32.mxu0 0.0
      %7913 = vmatmul.mubr.f32.gmra.mrb[0].mxu0 %v7740
      %v7914 = vpop.f32.mrb[0].mxu0
      %v7915 = vadd.f32 %v7722, %v7914
      %v7916 = vpop.f32.mrb[0].mxu0
      %7917 = vmatprep.mubr.f32.mxu0 0.0
      %7918 = vmatmul.mubr.f32.gmra.mrb[0].mxu0 %v7743
      %v7919 = vpop.f32.mrb[0].mxu0
      %v7920 = vadd.f32 %v7722, %v7919
      %v7921 = vpop.f32.mrb[0].mxu0
      %7922 = vmatprep.mubr.f32.mxu0 0.0
      %7923 = vmatmul.mubr.f32.gmra.mrb[0].mxu0 %v7746
      %v7924 = vpop.f32.mrb[0].mxu0
      %v7925 = vadd.f32 %v7722, %v7924
      %v7926 = vpop.f32.mrb[0].mxu0
      %7927 = vmatprep.mubr.f32.mxu0 0.0
      %7928 = vmatmul.mubr.f32.gmra.mrb[0].mxu0 %v7749
      %v7929 = vpop.f32.mrb[0].mxu0
      %v7930 = vadd.f32 %v7722, %v7929
      %v7931 = vpop.f32.mrb[0].mxu0
      %7932 = vmatprep.mubr.f32.mxu0 0.0
      %7933 = vmatmul.mubr.f32.gmra.mrb[0].mxu0 %v7752
      %v7934 = vpop.f32.mrb[0].mxu0
      %v7935 = vadd.f32 %v7722, %v7934
      %v7936 = vpop.f32.mrb[0].mxu0
      %7937 = vmatprep.mubr.f32.mxu0 0.0
      %7938 = vmatmul.mubr.f32.gmra.mrb[0].mxu0 %v7755
      %v7939 = vpop.f32.mrb[0].mxu0
      %v7940 = vadd.f32 %v7722, %v7939
      %v7941 = vpop.f32.mrb[0].mxu0
      %7942 = vmatprep.mubr.f32.mxu0 0.0
      %7943 = vmatmul.mubr.f32.gmra.mrb[0].mxu0 %v7758
      %v7944 = vpop.f32.mrb[0].mxu0
      %v7945 = vadd.f32 %v7722, %v7944
      %v7946 = vpop.f32.mrb[0].mxu0
      %7947 = vmatprep.mubr.f32.mxu0 0.0
      %7948 = vmatmul.mubr.f32.gmra.mrb[0].mxu0 %v7761
      %v7949 = vpop.f32.mrb[0].mxu0
      %v7950 = vadd.f32 %v7722, %v7949
      %v7951 = vpop.f32.mrb[0].mxu0
      %7952 = vmatprep.mubr.f32.mxu0 0.0
      %7953 = vmatmul.mubr.f32.gmra.mrb[0].mxu0 %v7764
      %v7954 = vpop.f32.mrb[0].mxu0
      %v7955 = vadd.f32 %v7722, %v7954
      %v7956 = vpop.f32.mrb[0].mxu0
      %7957 = vmatprep.mubr.f32.mxu0 0.0
      %7958 = vmatmul.mubr.f32.gmra.mrb[0].mxu0 %v7767
      %v7959 = vpop.f32.mrb[0].mxu0
      %v7960 = vadd.f32 %v7722, %v7959
      %v7961 = vpop.f32.mrb[0].mxu0
      %7962 = vmatprep.mubr.f32.mxu0 0.0
      %7963 = vmatmul.mubr.f32.gmra.mrb[0].mxu0 %v7770
      %v7964 = vpop.f32.mrb[0].mxu0
      %v7965 = vadd.f32 %v7722, %v7964
      %v7966 = vpop.f32.mrb[0].mxu0
      %7967 = vmatprep.mubr.f32.mxu0 0.0
      %7968 = vmatmul.mubr.f32.gmra.mrb[0].mxu0 %v7773
      %v7969 = vpop.f32.mrb[0].mxu0
      %v7970 = vadd.f32 %v7722, %v7969
      %v7971 = vpop.f32.mrb[0].mxu0
      %7972 = vmatprep.mubr.f32.mxu0 0.0
      %7973 = vmatmul.mubr.f32.gmra.mrb[0].mxu0 %v7776
      %v7974 = vpop.f32.mrb[0].mxu0
      %v7975 = vadd.f32 %v7722, %v7974
      %v7976 = vpop.f32.mrb[0].mxu0
      %7977 = vmatprep.mubr.f32.mxu0 0.0
      %7978 = vmatmul.mubr.f32.gmra.mrb[0].mxu0 %v7779
      %v7979 = vpop.f32.mrb[0].mxu0
      %v7980 = vadd.f32 %v7722, %v7979
      %v7981 = vpop.f32.mrb[0].mxu0
      %7982 = vmatprep.mubr.f32.mxu0 0.0
      %7983 = vmatmul.mubr.f32.gmra.mrb[0].mxu0 %v7782
      %v7984 = vpop.f32.mrb[0].mxu0
      %v7985 = vadd.f32 %v7722, %v7984
      %v7986 = vpop.f32.mrb[0].mxu0
      %7987 = vmatprep.mubr.f32.mxu0 0.0
      %7988 = vmatmul.mubr.f32.gmra.mrb[0].mxu0 %v7785
      %v7989 = vpop.f32.mrb[0].mxu0
      %v7990 = vadd.f32 %v7722, %v7989
      %v7991 = vpop.f32.mrb[0].mxu0
      %7992 = vmatprep.mubr.f32.mxu0 0.0
      %7993 = vmatmul.mubr.f32.gmra.mrb[0].mxu0 %v7788
      %v7994 = vpop.f32.mrb[0].mxu0
      %v7995 = vadd.f32 %v7722, %v7994
      %v7996 = vpop.f32.mrb[0].mxu0
      %7997 = vmatprep.mubr.f32.mxu0 0.0
      %7998 = vmatmul.mubr.f32.gmra.mrb[0].mxu0 %v7791
      %v7999 = vpop.f32.mrb[0].mxu0
      %v8000 = vadd.f32 %v7722, %v7999
      %v8001 = vpop.f32.mrb[0].mxu0
      %8002 = vmatprep.mubr.f32.mxu0 0.0
      %8003 = vmatmul.mubr.f32.gmra.mrb[0].mxu0 %v7794
      %v8004 = vpop.f32.mrb[0].mxu0
      %v8005 = vadd.f32 %v7722, %v8004
      %v8006 = vpop.f32.mrb[0].mxu0
      %8007 = vmatprep.mubr.f32.mxu0 0.0
      %8008 = vmatmul.mubr.f32.gmra.mrb[0].mxu0 %v7797
      %v8009 = vpop.f32.mrb[0].mxu0
      %v8010 = vadd.f32 %v7722, %v8009
      %v8011 = vpop.f32.mrb[0].mxu0
      %8012 = vmatprep.mubr.f32.mxu0 0.0
      %8013 = vmatmul.mubr.f32.gmra.mrb[0].mxu0 %v7800
      %v8014 = vpop.f32.mrb[0].mxu0
      %v8015 = vadd.f32 %v7722, %v8014
      %v8016 = vpop.f32.mrb[0].mxu0
      %8017 = vmatprep.mubr.f32.mxu0 0.0
      %8018 = vmatmul.mubr.f32.gmra.mrb[0].mxu0 %v7803
      %v8019 = vpop.f32.mrb[0].mxu0
      %v8020 = vadd.f32 %v7722, %v8019
      %v8021 = vpop.f32.mrb[0].mxu0
      %8022 = vmatprep.mubr.f32.mxu0 0.0
      %8023 = vmatmul.mubr.f32.gmra.mrb[0].mxu0 %v7806
      %v8024 = vpop.f32.mrb[0].mxu0
      %v8025 = vadd.f32 %v7722, %v8024
      %v8026 = vpop.f32.mrb[0].mxu0
      %8027 = vmatprep.mubr.f32.mxu0 0.0
      %8028 = vmatmul.mubr.f32.gmra.mrb[0].mxu0 %v7809
      %v8029 = vpop.f32.mrb[0].mxu0
      %v8030 = vadd.f32 %v7722, %v8029
      %v8031 = vpop.f32.mrb[0].mxu0
      %8032 = vmatprep.mubr.f32.mxu0 0.0
      %8033 = vmatmul.mubr.f32.gmra.mrb[0].mxu0 %v7812
      %v8034 = vpop.f32.mrb[0].mxu0
      %v8035 = vadd.f32 %v7722, %v8034
      %v8036 = vpop.f32.mrb[0].mxu0
      %8037 = vmatprep.mubr.f32.mxu0 0.0
      %8038 = vmatmul.mubr.f32.gmra.mrb[0].mxu0 %v7815
      %v8039 = vpop.f32.mrb[0].mxu0
      %v8040 = vadd.f32 %v7722, %v8039
      %v8041 = vpop.f32.mrb[0].mxu0
      %8042 = vmatprep.mubr.f32.mxu0 0.0
      %8043 = vmatmul.mubr.f32.gmra.mrb[0].mxu0 %v7818
      %v8044 = vpop.f32.mrb[0].mxu0
      %v8045 = vadd.f32 %v7722, %v8044
      %v8046 = vpop.f32.mrb[0].mxu0
      %8047 = vdwg.mxu0
      %v8048 = vmin.f32 %v7890, 20.0
      %v8049 = vmin.f32 %v7895, 20.0
      %v8050 = vmin.f32 %v7900, 20.0
      %v8051 = vmin.f32 %v7905, 20.0
      %v8052 = vmin.f32 %v7910, 20.0
      %v8053 = vmin.f32 %v7915, 20.0
      %v8054 = vmin.f32 %v7920, 20.0
      %v8055 = vmin.f32 %v7925, 20.0
      %v8056 = vmin.f32 %v7930, 20.0
      %v8057 = vmin.f32 %v7935, 20.0
      %v8058 = vmin.f32 %v7940, 20.0
      %v8059 = vmin.f32 %v7945, 20.0
      %v8060 = vmin.f32 %v7950, 20.0
      %v8061 = vmin.f32 %v7955, 20.0
      %v8062 = vmin.f32 %v7960, 20.0
      %v8063 = vmin.f32 %v7965, 20.0
      %v8064 = vmin.f32 %v7970, 20.0
      %v8065 = vmin.f32 %v7975, 20.0
      %v8066 = vmin.f32 %v7980, 20.0
      %v8067 = vmin.f32 %v7985, 20.0
      %v8068 = vmin.f32 %v7990, 20.0
      %v8069 = vmin.f32 %v7995, 20.0
      %v8070 = vmin.f32 %v8000, 20.0
      %v8071 = vmin.f32 %v8005, 20.0
      %v8072 = vmin.f32 %v8010, 20.0
      %v8073 = vmin.f32 %v8015, 20.0
      %v8074 = vmin.f32 %v8020, 20.0
      %v8075 = vmin.f32 %v8025, 20.0
      %v8076 = vmin.f32 %v8030, 20.0
      %v8077 = vmin.f32 %v8035, 20.0
      %v8078 = vmin.f32 %v8040, 20.0
      %v8079 = vmin.f32 %v8045, 20.0
      %v8080 = vmul.f32 %v8048, 1.442695
      %v8081 = vpow.pop %v8080
      %v8082 = vmul.f32 %v8049, 1.442695
      %v8083 = vpow.pop %v8082
      %v8084 = vmul.f32 %v8050, 1.442695
      %v8085 = vpow.pop %v8084
      %v8086 = vmul.f32 %v8051, 1.442695
      %v8087 = vpow.pop %v8086
      %v8088 = vmul.f32 %v8052, 1.442695
      %v8089 = vpow.pop %v8088
      %v8090 = vmul.f32 %v8053, 1.442695
      %v8091 = vpow.pop %v8090
      %v8092 = vmul.f32 %v8054, 1.442695
      %v8093 = vpow.pop %v8092
      %v8094 = vmul.f32 %v8055, 1.442695
      %v8095 = vpow.pop %v8094
      %v8096 = vmul.f32 %v8056, 1.442695
      %v8097 = vpow.pop %v8096
      %v8098 = vmul.f32 %v8057, 1.442695
      %v8099 = vpow.pop %v8098
      %v8100 = vmul.f32 %v8058, 1.442695
      %v8101 = vpow.pop %v8100
      %v8102 = vmul.f32 %v8059, 1.442695
      %v8103 = vpow.pop %v8102
      %v8104 = vmul.f32 %v8060, 1.442695
      %v8105 = vpow.pop %v8104
      %v8106 = vmul.f32 %v8061, 1.442695
      %v8107 = vpow.pop %v8106
      %v8108 = vmul.f32 %v8062, 1.442695
      %v8109 = vpow.pop %v8108
      %v8110 = vmul.f32 %v8063, 1.442695
      %v8111 = vpow.pop %v8110
      %v8112 = vmul.f32 %v8064, 1.442695
      %v8113 = vpow.pop %v8112
      %v8114 = vmul.f32 %v8065, 1.442695
      %v8115 = vpow.pop %v8114
      %v8116 = vmul.f32 %v8066, 1.442695
      %v8117 = vpow.pop %v8116
      %v8118 = vmul.f32 %v8067, 1.442695
      %v8119 = vpow.pop %v8118
      %v8120 = vmul.f32 %v8068, 1.442695
      %v8121 = vpow.pop %v8120
      %v8122 = vmul.f32 %v8069, 1.442695
      %v8123 = vpow.pop %v8122
      %v8124 = vmul.f32 %v8070, 1.442695
      %v8125 = vpow.pop %v8124
      %v8126 = vmul.f32 %v8071, 1.442695
      %v8127 = vpow.pop %v8126
      %v8128 = vmul.f32 %v8072, 1.442695
      %v8129 = vpow.pop %v8128
      %v8130 = vmul.f32 %v8073, 1.442695
      %v8131 = vpow.pop %v8130
      %v8132 = vmul.f32 %v8074, 1.442695
      %v8133 = vpow.pop %v8132
      %v8134 = vmul.f32 %v8075, 1.442695
      %v8135 = vpow.pop %v8134
      %v8136 = vmul.f32 %v8076, 1.442695
      %v8137 = vpow.pop %v8136
      %v8138 = vmul.f32 %v8077, 1.442695
      %v8139 = vpow.pop %v8138
      %v8140 = vmul.f32 %v8078, 1.442695
      %v8141 = vpow.pop %v8140
      %v8142 = vmul.f32 %v8079, 1.442695
      %v8143 = vpow.pop %v8142
      %v8144 = vadd.f32 %v8081, 2.0
      %v8145 = vadd.f32 %v8083, 2.0
      %v8146 = vadd.f32 %v8085, 2.0
      %v8147 = vadd.f32 %v8087, 2.0
      %v8148 = vadd.f32 %v8089, 2.0
      %v8149 = vadd.f32 %v8091, 2.0
      %v8150 = vadd.f32 %v8093, 2.0
      %v8151 = vadd.f32 %v8095, 2.0
      %v8152 = vadd.f32 %v8097, 2.0
      %v8153 = vadd.f32 %v8099, 2.0
      %v8154 = vadd.f32 %v8101, 2.0
      %v8155 = vadd.f32 %v8103, 2.0
      %v8156 = vadd.f32 %v8105, 2.0
      %v8157 = vadd.f32 %v8107, 2.0
      %v8158 = vadd.f32 %v8109, 2.0
      %v8159 = vadd.f32 %v8111, 2.0
      %v8160 = vadd.f32 %v8113, 2.0
      %v8161 = vadd.f32 %v8115, 2.0
      %v8162 = vadd.f32 %v8117, 2.0
      %v8163 = vadd.f32 %v8119, 2.0
      %v8164 = vadd.f32 %v8121, 2.0
      %v8165 = vadd.f32 %v8123, 2.0
      %v8166 = vadd.f32 %v8125, 2.0
      %v8167 = vadd.f32 %v8127, 2.0
      %v8168 = vadd.f32 %v8129, 2.0
      %v8169 = vadd.f32 %v8131, 2.0
      %v8170 = vadd.f32 %v8133, 2.0
      %v8171 = vadd.f32 %v8135, 2.0
      %v8172 = vadd.f32 %v8137, 2.0
      %v8173 = vadd.f32 %v8139, 2.0
      %v8174 = vadd.f32 %v8141, 2.0
      %v8175 = vadd.f32 %v8143, 2.0
      %v8176 = vmul.f32 %v8081, %v8144
      %v8177 = vmul.f32 %v8083, %v8145
      %v8178 = vmul.f32 %v8085, %v8146
      %v8179 = vmul.f32 %v8087, %v8147
      %v8180 = vmul.f32 %v8089, %v8148
      %v8181 = vmul.f32 %v8091, %v8149
      %v8182 = vmul.f32 %v8093, %v8150
      %v8183 = vmul.f32 %v8095, %v8151
      %v8184 = vmul.f32 %v8097, %v8152
      %v8185 = vmul.f32 %v8099, %v8153
      %v8186 = vmul.f32 %v8101, %v8154
      %v8187 = vmul.f32 %v8103, %v8155
      %v8188 = vmul.f32 %v8105, %v8156
      %v8189 = vmul.f32 %v8107, %v8157
      %v8190 = vmul.f32 %v8109, %v8158
      %v8191 = vmul.f32 %v8111, %v8159
      %v8192 = vmul.f32 %v8113, %v8160
      %v8193 = vmul.f32 %v8115, %v8161
      %v8194 = vmul.f32 %v8117, %v8162
      %v8195 = vmul.f32 %v8119, %v8163
      %v8196 = vmul.f32 %v8121, %v8164
      %v8197 = vmul.f32 %v8123, %v8165
      %v8198 = vmul.f32 %v8125, %v8166
      %v8199 = vmul.f32 %v8127, %v8167
      %v8200 = vmul.f32 %v8129, %v8168
      %v8201 = vmul.f32 %v8131, %v8169
      %v8202 = vmul.f32 %v8133, %v8170
      %v8203 = vmul.f32 %v8135, %v8171
      %v8204 = vmul.f32 %v8137, %v8172
      %v8205 = vmul.f32 %v8139, %v8173
      %v8206 = vmul.f32 %v8141, %v8174
      %v8207 = vmul.f32 %v8143, %v8175
      %vm8208 = vcmp.gt.f32.partialorder %v7890, 20.0
      %vm8209 = vcmp.gt.f32.partialorder %v7895, 20.0
      %vm8210 = vcmp.gt.f32.partialorder %v7900, 20.0
      %vm8211 = vcmp.gt.f32.partialorder %v7905, 20.0
      %vm8212 = vcmp.gt.f32.partialorder %v7910, 20.0
      %vm8213 = vcmp.gt.f32.partialorder %v7915, 20.0
      %vm8214 = vcmp.gt.f32.partialorder %v7920, 20.0
      %vm8215 = vcmp.gt.f32.partialorder %v7925, 20.0
      %vm8216 = vcmp.gt.f32.partialorder %v7930, 20.0
      %vm8217 = vcmp.gt.f32.partialorder %v7935, 20.0
      %vm8218 = vcmp.gt.f32.partialorder %v7940, 20.0
      %vm8219 = vcmp.gt.f32.partialorder %v7945, 20.0
      %vm8220 = vcmp.gt.f32.partialorder %v7950, 20.0
      %vm8221 = vcmp.gt.f32.partialorder %v7955, 20.0
      %vm8222 = vcmp.gt.f32.partialorder %v7960, 20.0
      %vm8223 = vcmp.gt.f32.partialorder %v7965, 20.0
      %vm8224 = vcmp.gt.f32.partialorder %v7970, 20.0
      %vm8225 = vcmp.gt.f32.partialorder %v7975, 20.0
      %vm8226 = vcmp.gt.f32.partialorder %v7980, 20.0
      %vm8227 = vcmp.gt.f32.partialorder %v7985, 20.0
      %vm8228 = vcmp.gt.f32.partialorder %v7990, 20.0
      %vm8229 = vcmp.gt.f32.partialorder %v7995, 20.0
      %vm8230 = vcmp.gt.f32.partialorder %v8000, 20.0
      %vm8231 = vcmp.gt.f32.partialorder %v8005, 20.0
      %vm8232 = vcmp.gt.f32.partialorder %v8010, 20.0
      %vm8233 = vcmp.gt.f32.partialorder %v8015, 20.0
      %vm8234 = vcmp.gt.f32.partialorder %v8020, 20.0
      %vm8235 = vcmp.gt.f32.partialorder %v8025, 20.0
      %vm8236 = vcmp.gt.f32.partialorder %v8030, 20.0
      %vm8237 = vcmp.gt.f32.partialorder %v8035, 20.0
      %vm8238 = vcmp.gt.f32.partialorder %v8040, 20.0
      %vm8239 = vcmp.gt.f32.partialorder %v8045, 20.0
      %v8240 = vmul.f32 %v7890, %v8176
      %v8241 = vmul.f32 %v7895, %v8177
      %v8242 = vmul.f32 %v7900, %v8178
      %v8243 = vmul.f32 %v7905, %v8179
      %v8244 = vmul.f32 %v7910, %v8180
      %v8245 = vmul.f32 %v7915, %v8181
      %v8246 = vmul.f32 %v7920, %v8182
      %v8247 = vmul.f32 %v7925, %v8183
      %v8248 = vmul.f32 %v7930, %v8184
      %v8249 = vmul.f32 %v7935, %v8185
      %v8250 = vmul.f32 %v7940, %v8186
      %v8251 = vmul.f32 %v7945, %v8187
      %v8252 = vmul.f32 %v7950, %v8188
      %v8253 = vmul.f32 %v7955, %v8189
      %v8254 = vmul.f32 %v7960, %v8190
      %v8255 = vmul.f32 %v7965, %v8191
      %v8256 = vmul.f32 %v7970, %v8192
      %v8257 = vmul.f32 %v7975, %v8193
      %v8258 = vmul.f32 %v7980, %v8194
      %v8259 = vmul.f32 %v7985, %v8195
      %v8260 = vmul.f32 %v7990, %v8196
      %v8261 = vmul.f32 %v7995, %v8197
      %v8262 = vmul.f32 %v8000, %v8198
      %v8263 = vmul.f32 %v8005, %v8199
      %v8264 = vmul.f32 %v8010, %v8200
      %v8265 = vmul.f32 %v8015, %v8201
      %v8266 = vmul.f32 %v8020, %v8202
      %v8267 = vmul.f32 %v8025, %v8203
      %v8268 = vmul.f32 %v8030, %v8204
      %v8269 = vmul.f32 %v8035, %v8205
      %v8270 = vmul.f32 %v8040, %v8206
      %v8271 = vmul.f32 %v8045, %v8207
      %v8272 = vadd.f32 %v8176, 2.0
      %v8273 = vadd.f32 %v8177, 2.0
      %v8274 = vadd.f32 %v8178, 2.0
      %v8275 = vadd.f32 %v8179, 2.0
      %v8276 = vadd.f32 %v8180, 2.0
      %v8277 = vadd.f32 %v8181, 2.0
      %v8278 = vadd.f32 %v8182, 2.0
      %v8279 = vadd.f32 %v8183, 2.0
      %v8280 = vadd.f32 %v8184, 2.0
      %v8281 = vadd.f32 %v8185, 2.0
      %v8282 = vadd.f32 %v8186, 2.0
      %v8283 = vadd.f32 %v8187, 2.0
      %v8284 = vadd.f32 %v8188, 2.0
      %v8285 = vadd.f32 %v8189, 2.0
      %v8286 = vadd.f32 %v8190, 2.0
      %v8287 = vadd.f32 %v8191, 2.0
      %v8288 = vadd.f32 %v8192, 2.0
      %v8289 = vadd.f32 %v8193, 2.0
      %v8290 = vadd.f32 %v8194, 2.0
      %v8291 = vadd.f32 %v8195, 2.0
      %v8292 = vadd.f32 %v8196, 2.0
      %v8293 = vadd.f32 %v8197, 2.0
      %v8294 = vadd.f32 %v8198, 2.0
      %v8295 = vadd.f32 %v8199, 2.0
      %v8296 = vadd.f32 %v8200, 2.0
      %v8297 = vadd.f32 %v8201, 2.0
      %v8298 = vadd.f32 %v8202, 2.0
      %v8299 = vadd.f32 %v8203, 2.0
      %v8300 = vadd.f32 %v8204, 2.0
      %v8301 = vadd.f32 %v8205, 2.0
      %v8302 = vadd.f32 %v8206, 2.0
      %v8303 = vadd.f32 %v8207, 2.0
      %v8304 = vrcp.pop %v8272
      %v8305 = vmul.f32 %v8240, %v8304
      %v8306 = vrcp.pop %v8273
      %v8307 = vmul.f32 %v8241, %v8306
      %v8308 = vrcp.pop %v8274
      %v8309 = vmul.f32 %v8242, %v8308
      %v8310 = vrcp.pop %v8275
      %v8311 = vmul.f32 %v8243, %v8310
      %v8312 = vrcp.pop %v8276
      %v8313 = vmul.f32 %v8244, %v8312
      %v8314 = vrcp.pop %v8277
      %v8315 = vmul.f32 %v8245, %v8314
      %v8316 = vrcp.pop %v8278
      %v8317 = vmul.f32 %v8246, %v8316
      %v8318 = vrcp.pop %v8279
      %v8319 = vmul.f32 %v8247, %v8318
      %v8320 = vrcp.pop %v8280
      %v8321 = vmul.f32 %v8248, %v8320
      %v8322 = vrcp.pop %v8281
      %v8323 = vmul.f32 %v8249, %v8322
      %v8324 = vrcp.pop %v8282
      %v8325 = vmul.f32 %v8250, %v8324
      %v8326 = vrcp.pop %v8283
      %v8327 = vmul.f32 %v8251, %v8326
      %v8328 = vrcp.pop %v8284
      %v8329 = vmul.f32 %v8252, %v8328
      %v8330 = vrcp.pop %v8285
      %v8331 = vmul.f32 %v8253, %v8330
      %v8332 = vrcp.pop %v8286
      %v8333 = vmul.f32 %v8254, %v8332
      %v8334 = vrcp.pop %v8287
      %v8335 = vmul.f32 %v8255, %v8334
      %v8336 = vrcp.pop %v8288
      %v8337 = vmul.f32 %v8256, %v8336
      %v8338 = vrcp.pop %v8289
      %v8339 = vmul.f32 %v8257, %v8338
      %v8340 = vrcp.pop %v8290
      %v8341 = vmul.f32 %v8258, %v8340
      %v8342 = vrcp.pop %v8291
      %v8343 = vmul.f32 %v8259, %v8342
      %v8344 = vrcp.pop %v8292
      %v8345 = vmul.f32 %v8260, %v8344
      %v8346 = vrcp.pop %v8293
      %v8347 = vmul.f32 %v8261, %v8346
      %v8348 = vrcp.pop %v8294
      %v8349 = vmul.f32 %v8262, %v8348
      %v8350 = vrcp.pop %v8295
      %v8351 = vmul.f32 %v8263, %v8350
      %v8352 = vrcp.pop %v8296
      %v8353 = vmul.f32 %v8264, %v8352
      %v8354 = vrcp.pop %v8297
      %v8355 = vmul.f32 %v8265, %v8354
      %v8356 = vrcp.pop %v8298
      %v8357 = vmul.f32 %v8266, %v8356
      %v8358 = vrcp.pop %v8299
      %v8359 = vmul.f32 %v8267, %v8358
      %v8360 = vrcp.pop %v8300
      %v8361 = vmul.f32 %v8268, %v8360
      %v8362 = vrcp.pop %v8301
      %v8363 = vmul.f32 %v8269, %v8362
      %v8364 = vrcp.pop %v8302
      %v8365 = vmul.f32 %v8270, %v8364
      %v8366 = vrcp.pop %v8303
      %v8367 = vmul.f32 %v8271, %v8366
      %v8368 = vsel %vm8208, %v7890, %v8305
      %v8369 = vsel %vm8209, %v7895, %v8307
      %v8370 = vsel %vm8210, %v7900, %v8309
      %v8371 = vsel %vm8211, %v7905, %v8311
      %v8372 = vsel %vm8212, %v7910, %v8313
      %v8373 = vsel %vm8213, %v7915, %v8315
      %v8374 = vsel %vm8214, %v7920, %v8317
      %v8375 = vsel %vm8215, %v7925, %v8319
      %v8376 = vsel %vm8216, %v7930, %v8321
      %v8377 = vsel %vm8217, %v7935, %v8323
      %v8378 = vsel %vm8218, %v7940, %v8325
      %v8379 = vsel %vm8219, %v7945, %v8327
      %v8380 = vsel %vm8220, %v7950, %v8329
      %v8381 = vsel %vm8221, %v7955, %v8331
      %v8382 = vsel %vm8222, %v7960, %v8333
      %v8383 = vsel %vm8223, %v7965, %v8335
      %v8384 = vsel %vm8224, %v7970, %v8337
      %v8385 = vsel %vm8225, %v7975, %v8339
      %v8386 = vsel %vm8226, %v7980, %v8341
      %v8387 = vsel %vm8227, %v7985, %v8343
      %v8388 = vsel %vm8228, %v7990, %v8345
      %v8389 = vsel %vm8229, %v7995, %v8347
      %v8390 = vsel %vm8230, %v8000, %v8349
      %v8391 = vsel %vm8231, %v8005, %v8351
      %v8392 = vsel %vm8232, %v8010, %v8353
      %v8393 = vsel %vm8233, %v8015, %v8355
      %v8394 = vsel %vm8234, %v8020, %v8357
      %v8395 = vsel %vm8235, %v8025, %v8359
      %v8396 = vsel %vm8236, %v8030, %v8361
      %v8397 = vsel %vm8237, %v8035, %v8363
      %v8398 = vsel %vm8238, %v8040, %v8365
      %v8399 = vsel %vm8239, %v8045, %v8367
      %v8400 = vadd.f32 %v8368, %v5940
      %v8401 = vadd.f32 %v8369, %v5941
      %v8402 = vadd.f32 %v8370, %v5942
      %v8403 = vadd.f32 %v8371, %v5943
      %v8404 = vadd.f32 %v8372, %v5944
      %v8405 = vadd.f32 %v8373, %v5945
      %v8406 = vadd.f32 %v8374, %v5946
      %v8407 = vadd.f32 %v8375, %v5947
      %v8408 = vadd.f32 %v8376, %v5948
      %v8409 = vadd.f32 %v8377, %v5949
      %v8410 = vadd.f32 %v8378, %v5950
      %v8411 = vadd.f32 %v8379, %v5951
      %v8412 = vadd.f32 %v8380, %v5952
      %v8413 = vadd.f32 %v8381, %v5953
      %v8414 = vadd.f32 %v8382, %v5954
      %v8415 = vadd.f32 %v8383, %v5955
      %v8416 = vadd.f32 %v8384, %v5956
      %v8417 = vadd.f32 %v8385, %v5957
      %v8418 = vadd.f32 %v8386, %v5958
      %v8419 = vadd.f32 %v8387, %v5959
      %v8420 = vadd.f32 %v8388, %v5960
      %v8421 = vadd.f32 %v8389, %v5961
      %v8422 = vadd.f32 %v8390, %v5962
      %v8423 = vadd.f32 %v8391, %v5963
      %v8424 = vadd.f32 %v8392, %v5964
      %v8425 = vadd.f32 %v8393, %v5965
      %v8426 = vadd.f32 %v8394, %v5966
      %v8427 = vadd.f32 %v8395, %v5967
      %v8428 = vadd.f32 %v8396, %v5968
      %v8429 = vadd.f32 %v8397, %v5969
      %v8430 = vadd.f32 %v8398, %v5970
      %v8431 = vadd.f32 %v8399, %v5971
      %8432 = vst.msk [vmem:[%s373] sm:$0xff] %vm408, %v8400
      %8433 = vst.msk [vmem:[%s373 + $0x8] sm:$0xff] %vm408, %v8401
      %8434 = vst.msk [vmem:[%s373 + $0x10] sm:$0xff] %vm408, %v8402
      %8435 = vst.msk [vmem:[%s373 + $0x18] sm:$0xff] %vm408, %v8403
      %8436 = vst.msk [vmem:[%s373 + $0x20] sm:$0xff] %vm408, %v8404
      %8437 = vst.msk [vmem:[%s373 + $0x28] sm:$0xff] %vm408, %v8405
      %8438 = vst.msk [vmem:[%s373 + $0x30] sm:$0xff] %vm408, %v8406
      %8439 = vst.msk [vmem:[%s373 + $0x38] sm:$0xff] %vm408, %v8407
      %8440 = vst.msk [vmem:[%s373 + $0x40] sm:$0xff] %vm408, %v8408
      %8441 = vst.msk [vmem:[%s373 + $0x48] sm:$0xff] %vm408, %v8409
      %8442 = vst.msk [vmem:[%s373 + $0x50] sm:$0xff] %vm408, %v8410
      %8443 = vst.msk [vmem:[%s373 + $0x58] sm:$0xff] %vm408, %v8411
      %8444 = vst.msk [vmem:[%s373 + $0x60] sm:$0xff] %vm408, %v8412
      %8445 = vst.msk [vmem:[%s373 + $0x68] sm:$0xff] %vm408, %v8413
      %8446 = vst.msk [vmem:[%s373 + $0x70] sm:$0xff] %vm408, %v8414
      %8447 = vst.msk [vmem:[%s373 + $0x78] sm:$0xff] %vm408, %v8415
      %8448 = vst.msk [vmem:[%s373 + $0x80] sm:$0xff] %vm408, %v8416
      %8449 = vst.msk [vmem:[%s373 + $0x88] sm:$0xff] %vm408, %v8417
      %8450 = vst.msk [vmem:[%s373 + $0x90] sm:$0xff] %vm408, %v8418
      %8451 = vst.msk [vmem:[%s373 + $0x98] sm:$0xff] %vm408, %v8419
      %8452 = vst.msk [vmem:[%s373 + $0xa0] sm:$0xff] %vm408, %v8420
      %8453 = vst.msk [vmem:[%s373 + $0xa8] sm:$0xff] %vm408, %v8421
      %8454 = vst.msk [vmem:[%s373 + $0xb0] sm:$0xff] %vm408, %v8422
      %8455 = vst.msk [vmem:[%s373 + $0xb8] sm:$0xff] %vm408, %v8423
      %8456 = vst.msk [vmem:[%s373 + $0xc0] sm:$0xff] %vm408, %v8424
      %8457 = vst.msk [vmem:[%s373 + $0xc8] sm:$0xff] %vm408, %v8425
      %8458 = vst.msk [vmem:[%s373 + $0xd0] sm:$0xff] %vm408, %v8426
      %8459 = vst.msk [vmem:[%s373 + $0xd8] sm:$0xff] %vm408, %v8427
      %8460 = vst.msk [vmem:[%s373 + $0xe0] sm:$0xff] %vm408, %v8428
      %8461 = vst.msk [vmem:[%s373 + $0xe8] sm:$0xff] %vm408, %v8429
      %8462 = vst.msk [vmem:[%s373 + $0xf0] sm:$0xff] %vm408, %v8430
      %8463 = vst.msk [vmem:[%s373 + $0xf8] sm:$0xff] %vm408, %v8431
      %p8464 = scmp.lt.s32.totalorder %s21, 1
      %s8465 = scalar_select %p8464, %s21, 1
      %s8466 = smul.addr %s8465, 32
      %s8467 = smul.addr %s8466, 8
      %s8468 = scalar_lea.vmem %s10, %s8467
      // Predicated region
      $region61: #{midblock_forward.1} parent=59 // pred_check
        %p8469 = pneg %p259
      $region62: #{midblock_forward.1} parent=59 // pred_check_branch
        %8471 = sbr.rel (%p8469) target = $region64
      $region63: #{midblock_forward.1} parent=59 // pred_region
        _
      $region64: #{midblock_forward.1} parent=59 // pred_fallthru
        _
    $region60: #{midblock_forward.1} parent=5 // pred_fallthru
      _
    %p8472 = scmp.le.s32.totalorder 2, %s16
    // Predicated region
    $region65: #{midblock_forward.1} parent=5 // pred_check
      %p8473 = pneg %p8472
    $region66: #{midblock_forward.1} parent=5 // pred_check_branch
      %8475 = sbr.rel (%p8473) target = $region68
    $region67: #{midblock_forward.1} parent=5 // pred_region
      %s8476 = ssub.s32 %s16, 2
      // Predicated region
      $region69: #{midblock_forward.1} parent=67 // pred_check
        %p8477 = pneg %p265
      $region70: #{midblock_forward.1} parent=67 // pred_check_branch
        %8479 = sbr.rel (%p8477) target = $region72
      $region71: #{midblock_forward.1} parent=67 // pred_region
        %p8480 = scmp.lt.s32.totalorder %s22, 1
        %s8481 = scalar_select %p8480, %s22, 1
        %s8482 = smul.addr %s8481, 32
        %s8483 = smul.addr %s8482, 8
        %s8484 = scalar_lea.vmem %s10, %s8483
      $region72: #{midblock_forward.1} parent=67 // pred_fallthru
        _
    $region68: #{midblock_forward.1} parent=5 // pred_fallthru
      _
  $region6: #{midblock_forward.1} parent=0 // loop_footer
    %s20 = sadd.s32 1, %s16
  $region7: #{midblock_forward.1} parent=0 // loop_footer_branch
    %15 = sbr.rel target = $region3
  $region8: #{midblock_forward.1} parent=0 // loop_exit
    _

</llo_original>
